<compile_context>
chip_gen: v7x
topology: tpu7x:2x2x1
jax: 0.10.0
libtpu: 0.0.40
codegen_flags: <defaults>
</compile_context>

<pallas_src>
import functools
import math

import jax
import jax.numpy as jnp
from jax.experimental import pallas as pl
from jax.experimental.pallas import tpu as pltpu

_SQRT_HALF = 1.0 / math.sqrt(2.0)


# ----------------------------------------------------------------------------
# In-kernel helpers
# ----------------------------------------------------------------------------
def _gelu_erf(x):
    """GELU(x) = 0.5*x*(1 + erf(x/sqrt(2))) with an A&S 7.1.26 erf approximation.

    Only mul/add/exp/reciprocal: exp and the approx reciprocal both go to the
    EUP slot, keeping VALU pressure low. f32 in / f32 out (v5e friendly).
    """
    z = x * _SQRT_HALF
    a = jnp.abs(z)
    t = pl.reciprocal(1.0 + 0.3275911 * a, approx=True)
    poly = t * (0.254829592 + t * (-0.284496736 + t * (1.421413741
               + t * (-1.453152027 + t * 1.061405429))))
    erf_abs = 1.0 - poly * jnp.exp(-a * a)
    erf = jnp.where(z >= 0, erf_abs, -erf_abs)
    return 0.5 * x * (1.0 + erf)


# ----------------------------------------------------------------------------
# Fused kernel: conv3x3(+bias) -> GELU -> conv1x1(+bias) for one (image, H-tile)
# ----------------------------------------------------------------------------
def _mask_head_kernel(x_ref, top_ref, bot_ref, w1_ref, b1_ref, w2_ref, b2_ref,
                      o_ref, xp_ref, *, tile_h, width, cin):
    # x_ref   : (Cin, tile_h*W) f32   main input rows, spatially flattened on lanes
    # top_ref : (Cin, W)        f32   input row above the tile (zeros at image top)
    # bot_ref : (Cin, W)        f32   input row below the tile (zeros at image bottom)
    # w1_ref  : (3, Cmid, 3*Cin) bf16 conv1 weights, K-packed per kernel row di
    # b1_ref  : (Cmid, 1) f32 ; w2_ref : (Cout, Cmid) f32 ; b2_ref : (Cout, 1) f32
    # o_ref   : (Cout, tile_h*W) f32  lane-dense output block
    # xp_ref  : (3*Cin, (tile_h+2)*W) bf16 VMEM scratch (dj-shifted, K-packed slabs)
    rows = tile_h * width
    rext = (tile_h + 2) * width
    cmid = w1_ref.shape[1]

    # ---- Assemble the H-haloed, flattened input and fuse the bf16 cast.
    xe = jnp.concatenate([top_ref[...], x_ref[...], bot_ref[...]], axis=1)
    xe = xe.astype(jnp.bfloat16)                               # (Cin, rext)

    # ---- Build the three column-shifted slabs ONCE (reused by all 3 row taps).
    # Column-validity masks zero the W-padding positions (fused zero padding).
    col = jax.lax.broadcasted_iota(jnp.int32, (1, rext), 1) % width
    keep_l = (col != 0).astype(jnp.bfloat16)                   # w-1 exists
    keep_r = (col != width - 1).astype(jnp.bfloat16)           # w+1 exists
    zcol = jnp.zeros((cin, 1), jnp.bfloat16)
    left = jnp.concatenate([zcol, xe[:, :rext - 1]], axis=1)   # value at column w-1
    right = jnp.concatenate([xe[:, 1:], zcol], axis=1)         # value at column w+1
    xp_ref[0 * cin:1 * cin, :] = left * keep_l                 # dj = 0
    xp_ref[1 * cin:2 * cin, :] = xe                            # dj = 1
    xp_ref[2 * cin:3 * cin, :] = right * keep_r                # dj = 2

    # ---- 3 K-packed MXU calls (K = 3*Cin), f32 accumulation.
    # The di selection is a static lane-offset slice of the scratch (offset di*W).
    acc = jnp.zeros((cmid, rows), jnp.float32)
    for di in range(3):
        acc = acc + jnp.dot(
            w1_ref[di], xp_ref[:, di * width:di * width + rows],
            preferred_element_type=jnp.float32)

    # ---- bias + GELU (f32 elementwise).
    hid = _gelu_erf(acc + b1_ref[...])

    # ---- 1x1 conv (f32) and lane-dense (Cout, rows) store.
    o_ref[...] = jnp.dot(w2_ref[...], hid,
                         preferred_element_type=jnp.float32) + b2_ref[...]


# ----------------------------------------------------------------------------
# Tiling / VMEM helpers
# ----------------------------------------------------------------------------
def _pick_row_tile(H, W, target_rows=1024):
    """Pick an H-tile height th.

    Guarantees a legal BlockSpec: either th*W is a multiple of 128 (lane-dense
    flattened blocks) or th == H (every block equals the full array dims, which
    always satisfies the (8,128) rule regardless of shape).
    """
    cands = [t for t in range(1, H + 1) if H % t == 0 and (t * W) % 128 == 0]
    if not cands:
        return H
    fits = [t for t in cands if t * W <= target_rows]
    return max(fits) if fits else min(cands)


def _vmem_limit_bytes(cin, cmid, cout, th, W):
    rows = th * W
    rext = (th + 2) * W
    lane = lambda n: ((n + 127) // 128) * 128
    est = (2 * cin * rows * 4              # main input block, double-buffered (f32)
           + 2 * 2 * cin * lane(W) * 4     # halo rows
           + 2 * 3 * cmid * 3 * cin * 2    # packed conv1 weights (bf16)
           + 2 * cout * rows * 4           # output block
           + 3 * cin * rext * 2            # xp scratch
           + 4 * cin * rext * 2            # in-kernel temporaries (xe/left/right)
           + 2 * cmid * rows * 4)          # f32 accumulator / hidden
    return int(min(max(2 * est, 32 * 1024 * 1024), 64 * 1024 * 1024))


# ----------------------------------------------------------------------------
# Wrapper (layout plumbing only; all compute is inside the single pallas_call)
# ----------------------------------------------------------------------------
def image_mask_predictor_forward(params, x_nchw, ratio=0.5, *, target_rows=1024):
    # `ratio` is accepted but unused, exactly like the reference forward().
    del ratio
    w1, b1, w2, b2 = params["w1"], params["b1"], params["w2"], params["b2"]
    N, Cin, H, W = x_nchw.shape
    Cmid = w1.shape[0]          # 128
    Cout = w2.shape[0]          # 2
    assert w1.shape[1:] == (Cin, 3, 3) and w2.shape[1:] == (Cmid, 1, 1)

    th = _pick_row_tile(H, W, target_rows)
    hb = H // th
    rows = th * W

    # NCHW is already the layout we want (channels on sublanes, flattened H*W on
    # lanes): no transpose, no pad, no cast pass over the activations in HBM.
    x3 = x_nchw.reshape(N, Cin, H * W)

    # Tiny halo arrays: the single input row above / below each H-tile (zeros at
    # the image border).  ~2/th of the input -> replaces jnp.pad AND overlapping
    # halo windows, keeping the main input BlockSpec a plain tiled block.
    x5 = x_nchw.reshape(N, Cin, hb, th, W)
    zrow = jnp.zeros((N, Cin, 1, W), x_nchw.dtype)
    top = jnp.concatenate([zrow, x5[:, :, :-1, th - 1, :]], axis=2)
    bot = jnp.concatenate([x5[:, :, 1:, 0, :], zrow], axis=2)
    top = jnp.transpose(top, (0, 2, 1, 3))            # (N, hb, Cin, W)
    bot = jnp.transpose(bot, (0, 2, 1, 3))            # (N, hb, Cin, W)

    # conv1 weights K-packed per kernel row: w1p[di, m, dj*Cin + c] = w1[m, c, di, dj]
    w1p = jnp.transpose(w1, (2, 0, 3, 1)).reshape(3, Cmid, 3 * Cin).astype(jnp.bfloat16)
    b1c = b1.reshape(Cmid, 1).astype(jnp.float32)
    w2c = w2.reshape(Cout, Cmid).astype(jnp.float32)
    b2c = b2.reshape(Cout, 1).astype(jnp.float32)

    kernel = functools.partial(_mask_head_kernel, tile_h=th, width=W, cin=Cin)

    out = pl.pallas_call(
        kernel,
        out_shape=jax.ShapeDtypeStruct((N, hb, Cout, rows), jnp.float32),
        grid_spec=pltpu.PrefetchScalarGridSpec(
            num_scalar_prefetch=0,
            grid=(N, hb),
            in_specs=[
                pl.BlockSpec((None, Cin, rows), lambda n, h: (n, 0, h)),
                pl.BlockSpec((None, None, Cin, W), lambda n, h: (n, h, 0, 0)),
                pl.BlockSpec((None, None, Cin, W), lambda n, h: (n, h, 0, 0)),
                pl.BlockSpec((3, Cmid, 3 * Cin), lambda n, h: (0, 0, 0)),
                pl.BlockSpec((Cmid, 1), lambda n, h: (0, 0)),
                pl.BlockSpec((Cout, Cmid), lambda n, h: (0, 0)),
                pl.BlockSpec((Cout, 1), lambda n, h: (0, 0)),
            ],
            out_specs=pl.BlockSpec((None, None, Cout, rows),
                                   lambda n, h: (n, h, 0, 0)),
            scratch_shapes=[pltpu.VMEM((3 * Cin, (th + 2) * W), jnp.bfloat16)],
        ),
        compiler_params=pltpu.CompilerParams(
            dimension_semantics=("parallel", "parallel"),
            vmem_limit_bytes=_vmem_limit_bytes(Cin, Cmid, Cout, th, W)),
    )(x3, top, bot, w1p, b1c, w2c, b2c)

    # Un-flatten: (N, hb, Cout, th*W) -> (N, Cout, H, W).  Output is only 2
    # channels, so this transpose pass is negligible HBM traffic.
    out = out.reshape(N, hb, Cout, th, W)
    return jnp.transpose(out, (0, 2, 1, 3, 4)).reshape(N, Cout, H, W)


# ----------------------------------------------------------------------------
# Pure-JAX reference (mirrors the kernel's bf16 conv1 operands) and param init
# ----------------------------------------------------------------------------
def _reference_forward(params, x_nchw):
    w1, b1, w2, b2 = params["w1"], params["b1"], params["w2"], params["b2"]
    xb = x_nchw.astype(jnp.bfloat16).astype(jnp.float32)
    w1b = w1.astype(jnp.bfloat16).astype(jnp.float32)
    y = jax.lax.conv_general_dilated(
        xb, w1b, window_strides=(1, 1), padding=((1, 1), (1, 1)),
        dimension_numbers=("NCHW", "OIHW", "NCHW"),
        precision=jax.lax.Precision.HIGHEST) + b1.reshape(1, -1, 1, 1)
    y = jax.nn.gelu(y, approximate=False)
    z = jnp.einsum("nchw,oc->nohw", y, w2.reshape(w2.shape[0], w2.shape[1]),
                   precision=jax.lax.Precision.HIGHEST) + b2.reshape(1, -1, 1, 1)
    return z


def make_params(embed_dim=384, key=None):
    """Matches torch Conv2d default init (kaiming_uniform_(a=sqrt(5)) + uniform bias)."""
    if key is None:
        key = jax.random.PRNGKey(0)
    k1, k2, k3, k4 = jax.random.split(key, 4)
    b1_bound = 1.0 / math.sqrt(embed_dim * 3 * 3)
    b2_bound = 1.0 / math.sqrt(128)
    return {
        "w1": jax.random.uniform(k1, (128, embed_dim, 3, 3), jnp.float32,
                                 -b1_bound, b1_bound),
        "b1": jax.random.uniform(k2, (128,), jnp.float32, -b1_bound, b1_bound),
        "w2": jax.random.uniform(k3, (2, 128, 1, 1), jnp.float32,
                                 -b2_bound, b2_bound),
        "b2": jax.random.uniform(k4, (2,), jnp.float32, -b2_bound, b2_bound),
    }


# ----------------------------------------------------------------------------
if __name__ == "__main__":
    key = jax.random.PRNGKey(0)
    kp, kx = jax.random.split(key)

    EMBED_DIM = 384                          # module default
    params = make_params(embed_dim=EMBED_DIM, key=kp)
    x = jax.random.normal(kx, (2, EMBED_DIM, 16, 16), jnp.float32)   # small NCHW input

    fwd = jax.jit(image_mask_predictor_forward)
    out = fwd(params, x)
    jax.block_until_ready(out)

    assert out.shape == (2, 2, 16, 16), out.shape
    assert bool(jnp.all(jnp.isfinite(out)))

    ref = _reference_forward(params, x)
    max_err = float(jnp.max(jnp.abs(out - ref)))
    assert bool(jnp.allclose(out, ref, atol=1e-2, rtol=1e-2)), max_err

    print("KERNEL_OK")
</pallas_src>

<mosaic_0001>
module attributes {stable_mosaic.version = 11 : i64} {
  func.func @_mask_head_kernel(%arg0: i32, %arg1: i32, %arg2: memref<1x384x256xf32, #tpu.memory_space<vmem>>, %arg3: memref<1x1x384x16xf32, #tpu.memory_space<vmem>>, %arg4: memref<1x1x384x16xf32, #tpu.memory_space<vmem>>, %arg5: memref<3x128x1152xbf16, #tpu.memory_space<vmem>>, %arg6: memref<128x1xf32, #tpu.memory_space<vmem>>, %arg7: memref<2x128xf32, #tpu.memory_space<vmem>>, %arg8: memref<2x1xf32, #tpu.memory_space<vmem>>, %arg9: memref<1x1x2x256xf32, #tpu.memory_space<vmem>>, %arg10: memref<1152x288xbf16, #tpu.memory_space<vmem>>) attributes {dimension_semantics = [#tpu.dimension_semantics<parallel>, #tpu.dimension_semantics<parallel>], iteration_bounds = array<i64: 2, 1>, scalar_prefetch = 0 : i64, scratch_operands = 1 : i64, tpu.core_type = #tpu.core_type<tc>, window_params = [{transform_indices = @transform_0, window_bounds = array<i64: 1, 384, 256>}, {transform_indices = @transform_1, window_bounds = array<i64: 1, 1, 384, 16>}, {transform_indices = @transform_2, window_bounds = array<i64: 1, 1, 384, 16>}, {pipeline_mode = #tpu.pipeline_mode<synchronous>, transform_indices = @transform_3, window_bounds = array<i64: 3, 128, 1152>}, {pipeline_mode = #tpu.pipeline_mode<synchronous>, transform_indices = @transform_4, window_bounds = array<i64: 128, 1>}, {pipeline_mode = #tpu.pipeline_mode<synchronous>, transform_indices = @transform_5, window_bounds = array<i64: 2, 128>}, {pipeline_mode = #tpu.pipeline_mode<synchronous>, transform_indices = @transform_6, window_bounds = array<i64: 2, 1>}, {transform_indices = @transform_7, window_bounds = array<i64: 1, 1, 2, 256>}]} {
    %c0 = arith.constant 0 : index
    %c0_0 = arith.constant 0 : index
    %c0_1 = arith.constant 0 : index
    %c0_2 = arith.constant 0 : index
    %0 = vector.load %arg3[%c0, %c0_0, %c0_1, %c0_2] : memref<1x1x384x16xf32, #tpu.memory_space<vmem>>, vector<1x1x384x16xf32>
    %1 = vector.shape_cast %0 : vector<1x1x384x16xf32> to vector<384x16xf32>
    %c0_3 = arith.constant 0 : index
    %c0_4 = arith.constant 0 : index
    %c0_5 = arith.constant 0 : index
    %2 = vector.load %arg2[%c0_3, %c0_4, %c0_5] : memref<1x384x256xf32, #tpu.memory_space<vmem>>, vector<1x384x256xf32>
    %3 = vector.shape_cast %2 : vector<1x384x256xf32> to vector<384x256xf32>
    %c0_6 = arith.constant 0 : index
    %c0_7 = arith.constant 0 : index
    %c0_8 = arith.constant 0 : index
    %c0_9 = arith.constant 0 : index
    %4 = vector.load %arg4[%c0_6, %c0_7, %c0_8, %c0_9] : memref<1x1x384x16xf32, #tpu.memory_space<vmem>>, vector<1x1x384x16xf32>
    %5 = vector.shape_cast %4 : vector<1x1x384x16xf32> to vector<384x16xf32>
    %6 = tpu.concatenate %1, %3, %5 in 1 : vector<384x16xf32>, vector<384x256xf32>, vector<384x16xf32> -> vector<384x288xf32>
    %7 = arith.truncf %6 : vector<384x288xf32> to vector<384x288xbf16>
    %8 = tpu.iota {dimensions = array<i32: 1>} : vector<1x288xi32>
    %c16_i32 = arith.constant 16 : i32
    %c0_i32 = arith.constant 0 : i32
    %9 = arith.cmpi eq, %c16_i32, %c0_i32 : i32
    %c1_i32 = arith.constant 1 : i32
    %10 = arith.select %9, %c1_i32, %c16_i32 : i32
    %11 = vector.broadcast %10 : i32 to vector<1x288xi32>
    %12 = arith.remsi %8, %11 : vector<1x288xi32>
    %c0_i32_10 = arith.constant 0 : i32
    %13 = vector.broadcast %c0_i32_10 : i32 to vector<1x288xi32>
    %14 = arith.cmpi ne, %12, %13 : vector<1x288xi32>
    %c0_i32_11 = arith.constant 0 : i32
    %15 = vector.broadcast %c0_i32_11 : i32 to vector<1x288xi32>
    %16 = arith.cmpi slt, %12, %15 : vector<1x288xi32>
    %c0_i32_12 = arith.constant 0 : i32
    %17 = arith.cmpi slt, %10, %c0_i32_12 : i32
    %18 = vector.broadcast %17 : i1 to vector<1x288xi1>
    %19 = vector.broadcast %18 : vector<1x288xi1> to vector<1x288xi1>
    %20 = arith.xori %16, %19 : vector<1x288xi1>
    %21 = arith.andi %20, %14 : vector<1x288xi1>
    %22 = vector.broadcast %10 : i32 to vector<1x288xi32>
    %23 = arith.addi %12, %22 : vector<1x288xi32>
    %24 = arith.select %21, %23, %12 : vector<1x288xi1>, vector<1x288xi32>
    %c0_i32_13 = arith.constant 0 : i32
    %25 = vector.broadcast %c0_i32_13 : i32 to vector<1x288xi32>
    %26 = arith.cmpi ne, %24, %25 : vector<1x288xi32>
    %27 = arith.extui %26 : vector<1x288xi1> to vector<1x288xi32>
    %28 = arith.sitofp %27 : vector<1x288xi32> to vector<1x288xf32>
    %29 = arith.truncf %28 : vector<1x288xf32> to vector<1x288xbf16>
    %c15_i32 = arith.constant 15 : i32
    %30 = vector.broadcast %c15_i32 : i32 to vector<1x288xi32>
    %31 = arith.cmpi ne, %24, %30 : vector<1x288xi32>
    %32 = arith.extui %31 : vector<1x288xi1> to vector<1x288xi32>
    %33 = arith.sitofp %32 : vector<1x288xi32> to vector<1x288xf32>
    %34 = arith.truncf %33 : vector<1x288xf32> to vector<1x288xbf16>
    %cst = arith.constant 0.000000e+00 : bf16
    %35 = vector.broadcast %cst : bf16 to vector<384x1xbf16>
    %36 = vector.extract_strided_slice %7 {offsets = [0, 0], sizes = [384, 287], strides = [1, 1]} : vector<384x288xbf16> to vector<384x287xbf16>
    %37 = tpu.concatenate %35, %36 in 1 : vector<384x1xbf16>, vector<384x287xbf16> -> vector<384x288xbf16>
    %38 = vector.extract_strided_slice %7 {offsets = [0, 1], sizes = [384, 287], strides = [1, 1]} : vector<384x288xbf16> to vector<384x287xbf16>
    %39 = tpu.concatenate %38, %35 in 1 : vector<384x287xbf16>, vector<384x1xbf16> -> vector<384x288xbf16>
    %40 = vector.broadcast %29 : vector<1x288xbf16> to vector<384x288xbf16>
    %41 = arith.mulf %37, %40 : vector<384x288xbf16>
    %c0_14 = arith.constant 0 : index
    %c0_15 = arith.constant 0 : index
    %42 = vector.load %arg10[%c0_14, %c0_15] : memref<1152x288xbf16, #tpu.memory_space<vmem>>, vector<384x288xbf16>
    tpu.vector_store %arg10[%c0_14, %c0_15], %41 {strides = array<i32>} : memref<1152x288xbf16, #tpu.memory_space<vmem>>, vector<384x288xbf16>,
    %c384 = arith.constant 384 : index
    %c0_16 = arith.constant 0 : index
    %43 = vector.load %arg10[%c384, %c0_16] : memref<1152x288xbf16, #tpu.memory_space<vmem>>, vector<384x288xbf16>
    tpu.vector_store %arg10[%c384, %c0_16], %7 {strides = array<i32>} : memref<1152x288xbf16, #tpu.memory_space<vmem>>, vector<384x288xbf16>,
    %44 = vector.broadcast %34 : vector<1x288xbf16> to vector<384x288xbf16>
    %45 = arith.mulf %39, %44 : vector<384x288xbf16>
    %c768 = arith.constant 768 : index
    %c0_17 = arith.constant 0 : index
    %46 = vector.load %arg10[%c768, %c0_17] : memref<1152x288xbf16, #tpu.memory_space<vmem>>, vector<384x288xbf16>
    tpu.vector_store %arg10[%c768, %c0_17], %45 {strides = array<i32>} : memref<1152x288xbf16, #tpu.memory_space<vmem>>, vector<384x288xbf16>,
    %cst_18 = arith.constant 0.000000e+00 : f32
    %47 = vector.broadcast %cst_18 : f32 to vector<128x256xf32>
    %c0_19 = arith.constant 0 : index
    %c0_20 = arith.constant 0 : index
    %c0_21 = arith.constant 0 : index
    %48 = vector.load %arg5[%c0_19, %c0_20, %c0_21] : memref<3x128x1152xbf16, #tpu.memory_space<vmem>>, vector<1x128x1152xbf16>
    %49 = vector.shape_cast %48 : vector<1x128x1152xbf16> to vector<128x1152xbf16>
    %c0_22 = arith.constant 0 : index
    %c0_23 = arith.constant 0 : index
    %50 = vector.load %arg10[%c0_22, %c0_23] : memref<1152x288xbf16, #tpu.memory_space<vmem>>, vector<1152x256xbf16>
    %cst_24 = arith.constant dense<0.000000e+00> : vector<128x256xf32>
    %51 = tpu.matmul %49, %50, %cst_24 {dimension_numbers = #tpu.dot_dimension_numbers<[1], [0], [0], [1], [0, 0, 1, 1], [], []>} : vector<128x1152xbf16>, vector<1152x256xbf16>, vector<128x256xf32> -> vector<128x256xf32>
    %52 = arith.addf %47, %51 : vector<128x256xf32>
    %c1 = arith.constant 1 : index
    %c0_25 = arith.constant 0 : index
    %c0_26 = arith.constant 0 : index
    %53 = vector.load %arg5[%c1, %c0_25, %c0_26] : memref<3x128x1152xbf16, #tpu.memory_space<vmem>>, vector<1x128x1152xbf16>
    %54 = vector.shape_cast %53 : vector<1x128x1152xbf16> to vector<128x1152xbf16>
    %c0_27 = arith.constant 0 : index
    %c16 = arith.constant 16 : index
    %55 = vector.load %arg10[%c0_27, %c16] : memref<1152x288xbf16, #tpu.memory_space<vmem>>, vector<1152x256xbf16>
    %cst_28 = arith.constant dense<0.000000e+00> : vector<128x256xf32>
    %56 = tpu.matmul %54, %55, %cst_28 {dimension_numbers = #tpu.dot_dimension_numbers<[1], [0], [0], [1], [0, 0, 1, 1], [], []>} : vector<128x1152xbf16>, vector<1152x256xbf16>, vector<128x256xf32> -> vector<128x256xf32>
    %57 = arith.addf %52, %56 : vector<128x256xf32>
    %c2 = arith.constant 2 : index
    %c0_29 = arith.constant 0 : index
    %c0_30 = arith.constant 0 : index
    %58 = vector.load %arg5[%c2, %c0_29, %c0_30] : memref<3x128x1152xbf16, #tpu.memory_space<vmem>>, vector<1x128x1152xbf16>
    %59 = vector.shape_cast %58 : vector<1x128x1152xbf16> to vector<128x1152xbf16>
    %c0_31 = arith.constant 0 : index
    %c32 = arith.constant 32 : index
    %60 = vector.load %arg10[%c0_31, %c32] : memref<1152x288xbf16, #tpu.memory_space<vmem>>, vector<1152x256xbf16>
    %cst_32 = arith.constant dense<0.000000e+00> : vector<128x256xf32>
    %61 = tpu.matmul %59, %60, %cst_32 {dimension_numbers = #tpu.dot_dimension_numbers<[1], [0], [0], [1], [0, 0, 1, 1], [], []>} : vector<128x1152xbf16>, vector<1152x256xbf16>, vector<128x256xf32> -> vector<128x256xf32>
    %62 = arith.addf %57, %61 : vector<128x256xf32>
    %c0_33 = arith.constant 0 : index
    %c0_34 = arith.constant 0 : index
    %63 = vector.load %arg6[%c0_33, %c0_34] : memref<128x1xf32, #tpu.memory_space<vmem>>, vector<128x1xf32>
    %64 = vector.broadcast %63 : vector<128x1xf32> to vector<128x256xf32>
    %65 = arith.addf %62, %64 : vector<128x256xf32>
    %cst_35 = arith.constant 0.707106769 : f32
    %66 = vector.broadcast %cst_35 : f32 to vector<128x256xf32>
    %67 = arith.mulf %65, %66 : vector<128x256xf32>
    %68 = math.absf %67 : vector<128x256xf32>
    %cst_36 = arith.constant 0.327591091 : f32
    %69 = vector.broadcast %cst_36 : f32 to vector<128x256xf32>
    %70 = arith.mulf %69, %68 : vector<128x256xf32>
    %cst_37 = arith.constant 1.000000e+00 : f32
    %71 = vector.broadcast %cst_37 : f32 to vector<128x256xf32>
    %72 = arith.addf %71, %70 : vector<128x256xf32>
    %73 = tpu.reciprocal %72 {approx = true} : vector<128x256xf32> -> vector<128x256xf32>
    %cst_38 = arith.constant 1.06140542 : f32
    %74 = vector.broadcast %cst_38 : f32 to vector<128x256xf32>
    %75 = arith.mulf %73, %74 : vector<128x256xf32>
    %cst_39 = arith.constant -1.45315206 : f32
    %76 = vector.broadcast %cst_39 : f32 to vector<128x256xf32>
    %77 = arith.addf %76, %75 : vector<128x256xf32>
    %78 = arith.mulf %73, %77 : vector<128x256xf32>
    %cst_40 = arith.constant 1.42141378 : f32
    %79 = vector.broadcast %cst_40 : f32 to vector<128x256xf32>
    %80 = arith.addf %79, %78 : vector<128x256xf32>
    %81 = arith.mulf %73, %80 : vector<128x256xf32>
    %cst_41 = arith.constant -0.284496725 : f32
    %82 = vector.broadcast %cst_41 : f32 to vector<128x256xf32>
    %83 = arith.addf %82, %81 : vector<128x256xf32>
    %84 = arith.mulf %73, %83 : vector<128x256xf32>
    %cst_42 = arith.constant 0.254829586 : f32
    %85 = vector.broadcast %cst_42 : f32 to vector<128x256xf32>
    %86 = arith.addf %85, %84 : vector<128x256xf32>
    %87 = arith.mulf %73, %86 : vector<128x256xf32>
    %cst_43 = arith.constant 0.000000e+00 : f32
    %88 = vector.broadcast %cst_43 : f32 to vector<128x256xf32>
    %89 = arith.subf %88, %68 : vector<128x256xf32>
    %90 = arith.mulf %89, %68 : vector<128x256xf32>
    %91 = math.exp %90 : vector<128x256xf32>
    %92 = arith.mulf %87, %91 : vector<128x256xf32>
    %cst_44 = arith.constant 1.000000e+00 : f32
    %93 = vector.broadcast %cst_44 : f32 to vector<128x256xf32>
    %94 = arith.subf %93, %92 : vector<128x256xf32>
    %cst_45 = arith.constant 0.000000e+00 : f32
    %95 = vector.broadcast %cst_45 : f32 to vector<128x256xf32>
    %96 = arith.cmpf oge, %67, %95 : vector<128x256xf32>
    %cst_46 = arith.constant 0.000000e+00 : f32
    %97 = vector.broadcast %cst_46 : f32 to vector<128x256xf32>
    %98 = arith.subf %97, %94 : vector<128x256xf32>
    %99 = arith.select %96, %94, %98 : vector<128x256xi1>, vector<128x256xf32>
    %cst_47 = arith.constant 5.000000e-01 : f32
    %100 = vector.broadcast %cst_47 : f32 to vector<128x256xf32>
    %101 = arith.mulf %100, %65 : vector<128x256xf32>
    %cst_48 = arith.constant 1.000000e+00 : f32
    %102 = vector.broadcast %cst_48 : f32 to vector<128x256xf32>
    %103 = arith.addf %102, %99 : vector<128x256xf32>
    %104 = arith.mulf %101, %103 : vector<128x256xf32>
    %c0_49 = arith.constant 0 : index
    %c0_50 = arith.constant 0 : index
    %105 = vector.load %arg7[%c0_49, %c0_50] : memref<2x128xf32, #tpu.memory_space<vmem>>, vector<2x128xf32>
    %cst_51 = arith.constant dense<0.000000e+00> : vector<2x256xf32>
    %106 = tpu.matmul %105, %104, %cst_51 {dimension_numbers = #tpu.dot_dimension_numbers<[1], [0], [0], [1], [0, 0, 1, 1], [], []>} : vector<2x128xf32>, vector<128x256xf32>, vector<2x256xf32> -> vector<2x256xf32>
    %c0_52 = arith.constant 0 : index
    %c0_53 = arith.constant 0 : index
    %107 = vector.load %arg8[%c0_52, %c0_53] : memref<2x1xf32, #tpu.memory_space<vmem>>, vector<2x1xf32>
    %108 = vector.broadcast %107 : vector<2x1xf32> to vector<2x256xf32>
    %109 = arith.addf %106, %108 : vector<2x256xf32>
    %c0_54 = arith.constant 0 : index
    %c0_55 = arith.constant 0 : index
    %c0_56 = arith.constant 0 : index
    %c0_57 = arith.constant 0 : index
    %110 = vector.load %arg9[%c0_54, %c0_55, %c0_56, %c0_57] : memref<1x1x2x256xf32, #tpu.memory_space<vmem>>, vector<1x1x2x256xf32>
    %111 = vector.shape_cast %110 : vector<1x1x2x256xf32> to vector<2x256xf32>
    %112 = vector.shape_cast %109 : vector<2x256xf32> to vector<1x1x2x256xf32>
    tpu.vector_store %arg9[%c0_54, %c0_55, %c0_56, %c0_57], %112 {strides = array<i32>} : memref<1x1x2x256xf32, #tpu.memory_space<vmem>>, vector<1x1x2x256xf32>,
    return
  }
  func.func @transform_0(%arg0: i32, %arg1: i32) -> (i32, i32, i32) {
    %c0_i32 = arith.constant 0 : i32
    %c0_i32_0 = arith.constant 0 : i32
    return %arg0, %c0_i32, %arg1 : i32, i32, i32
  }
  func.func @transform_1(%arg0: i32, %arg1: i32) -> (i32, i32, i32, i32) {
    %c0_i32 = arith.constant 0 : i32
    %c0_i32_0 = arith.constant 0 : i32
    %c0_i32_1 = arith.constant 0 : i32
    return %arg0, %arg1, %c0_i32, %c0_i32_0 : i32, i32, i32, i32
  }
  func.func @transform_2(%arg0: i32, %arg1: i32) -> (i32, i32, i32, i32) {
    %c0_i32 = arith.constant 0 : i32
    %c0_i32_0 = arith.constant 0 : i32
    %c0_i32_1 = arith.constant 0 : i32
    return %arg0, %arg1, %c0_i32, %c0_i32_0 : i32, i32, i32, i32
  }
  func.func @transform_3(%arg0: i32, %arg1: i32) -> (i32, i32, i32) {
    %c0_i32 = arith.constant 0 : i32
    %c0_i32_0 = arith.constant 0 : i32
    %c0_i32_1 = arith.constant 0 : i32
    %c0_i32_2 = arith.constant 0 : i32
    return %c0_i32, %c0_i32_0, %c0_i32_1 : i32, i32, i32
  }
  func.func @transform_4(%arg0: i32, %arg1: i32) -> (i32, i32) {
    %c0_i32 = arith.constant 0 : i32
    %c0_i32_0 = arith.constant 0 : i32
    %c0_i32_1 = arith.constant 0 : i32
    return %c0_i32, %c0_i32_0 : i32, i32
  }
  func.func @transform_5(%arg0: i32, %arg1: i32) -> (i32, i32) {
    %c0_i32 = arith.constant 0 : i32
    %c0_i32_0 = arith.constant 0 : i32
    %c0_i32_1 = arith.constant 0 : i32
    return %c0_i32, %c0_i32_0 : i32, i32
  }
  func.func @transform_6(%arg0: i32, %arg1: i32) -> (i32, i32) {
    %c0_i32 = arith.constant 0 : i32
    %c0_i32_0 = arith.constant 0 : i32
    %c0_i32_1 = arith.constant 0 : i32
    return %c0_i32, %c0_i32_0 : i32, i32
  }
  func.func @transform_7(%arg0: i32, %arg1: i32) -> (i32, i32, i32, i32) {
    %c0_i32 = arith.constant 0 : i32
    %c0_i32_0 = arith.constant 0 : i32
    %c0_i32_1 = arith.constant 0 : i32
    return %arg0, %arg1, %c0_i32, %c0_i32_0 : i32, i32, i32, i32
  }
}

</mosaic_0001>

<llo_original>
// kernel: image_mask_predictor_forward.1
$region0: #{image_mask_predictor_forward.1}
  #allocation0 [shape = 'u32[]', space=smem, size = 0x4, offset = 0x4, fixed_abs, tag = 'smem constant byte address 0x4 - core index']
  #allocation1 [shape = 'u32[144,128]{1,0:T(1,128)}', space=vmem, size = 0x12000, scoped, tag = 'internal scratch']
  #allocation2 [shape = 'bf16[1152,288]{1,0:T(16,128)(2,1)}', space=vmem, size = 0xd8000, scoped, tag = 'scratch operand']
  %s0 = inlined_call_operand.vmem [shape: f32[2,384,256], index: 0, kind: input, shape index: {}]
  %s1 = inlined_call_operand.vmem [shape: f32[2,1,384,16], index: 1, kind: input, shape index: {}, may-alias: {1,2}]
  %s2 = inlined_call_operand.vmem [shape: f32[2,1,384,16], index: 2, kind: input, shape index: {}, may-alias: {1,2}]
  %s3 = inlined_call_operand.vmem [shape: bf16[3,128,1152], index: 3, kind: input, shape index: {}]
  %s4 = inlined_call_operand.vmem [shape: f32[128,1], index: 4, kind: input, shape index: {}]
  %s5 = inlined_call_operand.vmem [shape: f32[2,128], index: 5, kind: input, shape index: {}]
  %s6 = inlined_call_operand.vmem [shape: f32[2,1], index: 6, kind: input, shape index: {}]
  %s7 = inlined_call_operand.vmem [shape: f32[2,1,2,256], index: 7, kind: output, shape index: {}]
  %s8 = sld [smem:[#allocation0]]
  $region61: #{image_mask_predictor_forward.1} parent=0
    _
  %s10 = ssub.s32 1, %s8
  %s11 = scalar_select 0, %s10, %s8
  loop: start=0, step=1, limit=4
  $region2: #{image_mask_predictor_forward.1} parent=0 // loop_pre_header
    _
  $region3: #{image_mask_predictor_forward.1} parent=0 // loop_header
    %s13 = sphi 0, %s17
    %p14 = scmp.ge.s32.totalorder %s13, 4
    %s20 = sphi 0, %s32
    %s21 = sphi 0, %s28
    %s22 = sphi 0, %s20
    %s23 = sphi 0, %s21
    %s24 = sphi 0, %s22
    %s25 = sphi 0, %s23
    %s37 = sphi 0, %s39
    %s40 = sphi 0, %s37
    %s41 = sphi 0, %s40
    %s57 = sphi 0, %s41
    %s65 = sphi 0, %s67
    %s68 = sphi 0, %s65
    %s69 = sphi 0, %s68
    %s85 = sphi 0, %s69
    %s93 = sphi 0, %s95
    %s96 = sphi 0, %s93
    %s97 = sphi 0, %s96
    %s113 = sphi 0, %s97
    %s117 = sphi 0, %s117
    %s119 = sphi 0, %s117
    %s120 = sphi 0, %s119
    %s134 = sphi 0, %s120
    %s138 = sphi 0, %s138
    %s140 = sphi 0, %s138
    %s141 = sphi 0, %s140
    %s155 = sphi 0, %s141
    %s159 = sphi 0, %s159
    %s161 = sphi 0, %s159
    %s162 = sphi 0, %s161
    %s176 = sphi 0, %s162
    %s180 = sphi 0, %s180
    %s182 = sphi 0, %s180
    %s183 = sphi 0, %s182
    %s197 = sphi 0, %s183
    %s205 = sphi 0, %s207
    %s208 = sphi 0, %s205
    %s209 = sphi 0, %s208
    %s225 = sphi 0, %s209
  $region4: #{image_mask_predictor_forward.1} parent=0 // loop_header_branch
    %16 = sbr.rel (%p14) target = $region8
  $region5: #{image_mask_predictor_forward.1} parent=0 // loop_body
    %s18 = ssub.s32 %s13, 1
    %s19 = ssub.s32 %s13, 2
    %s26 = sadd.s32 1, %s21
    %p27 = scmp.ge.s32.totalorder %s26, 1
    %s28 = scalar_select %p27, 0, %s26
    %s29 = sadd.s32 1, %s20
    %s30 = scalar_select %p27, %s29, %s20
    %p31 = scmp.ge.s32.totalorder %s30, 2
    %s32 = scalar_select %p31, 0, %s30
    %s33 = ssub.s32 %s20, %s32
    %s34 = ssub.s32 %s21, %s28
    %s35 = sor.u32 %s33, %s34
    %p36 = scmp.eq.s32.totalorder %s35, 0
    %s38 = sadd.s32 %s37, 1
    %s39 = scalar_select %p36, %s37, %s38
    %p42 = pneg %p36
    %p43 = scmp.eq.s32.totalorder %s13, 1
    %p44 = por %p42, %p43
    %p45 = scmp.ne.s32.totalorder %s37, %s40
    %p46 = scmp.eq.s32.totalorder %s13, 0
    %p47 = por %p45, %p46
    %p48 = scmp.ne.s32.totalorder %s37, %s40
    %p49 = scmp.eq.s32.totalorder %s18, 1
    %p50 = por %p48, %p49
    %p51 = scmp.ne.s32.totalorder %s40, %s41
    %p52 = scmp.eq.s32.totalorder %s18, 0
    %p53 = por %p51, %p52
    %p54 = scmp.ne.s32.totalorder %s40, %s41
    %p55 = scmp.eq.s32.totalorder %s19, 1
    %p56 = por %p54, %p55
    %p58 = scmp.ne.s32.totalorder %s41, %s57
    %p59 = scmp.eq.s32.totalorder %s19, 0
    %p60 = por %p58, %p59
    %s61 = ssub.s32 %s20, %s32
    %s62 = ssub.s32 %s21, %s28
    %s63 = sor.u32 %s61, %s62
    %p64 = scmp.eq.s32.totalorder %s63, 0
    %s66 = sadd.s32 %s65, 1
    %s67 = scalar_select %p64, %s65, %s66
    %p70 = pneg %p64
    %p71 = scmp.eq.s32.totalorder %s13, 1
    %p72 = por %p70, %p71
    %p73 = scmp.ne.s32.totalorder %s65, %s68
    %p74 = scmp.eq.s32.totalorder %s13, 0
    %p75 = por %p73, %p74
    %p76 = scmp.ne.s32.totalorder %s65, %s68
    %p77 = scmp.eq.s32.totalorder %s18, 1
    %p78 = por %p76, %p77
    %p79 = scmp.ne.s32.totalorder %s68, %s69
    %p80 = scmp.eq.s32.totalorder %s18, 0
    %p81 = por %p79, %p80
    %p82 = scmp.ne.s32.totalorder %s68, %s69
    %p83 = scmp.eq.s32.totalorder %s19, 1
    %p84 = por %p82, %p83
    %p86 = scmp.ne.s32.totalorder %s69, %s85
    %p87 = scmp.eq.s32.totalorder %s19, 0
    %p88 = por %p86, %p87
    %s89 = ssub.s32 %s20, %s32
    %s90 = ssub.s32 %s21, %s28
    %s91 = sor.u32 %s89, %s90
    %p92 = scmp.eq.s32.totalorder %s91, 0
    %s94 = sadd.s32 %s93, 1
    %s95 = scalar_select %p92, %s93, %s94
    %p98 = pneg %p92
    %p99 = scmp.eq.s32.totalorder %s13, 1
    %p100 = por %p98, %p99
    %p101 = scmp.ne.s32.totalorder %s93, %s96
    %p102 = scmp.eq.s32.totalorder %s13, 0
    %p103 = por %p101, %p102
    %p104 = scmp.ne.s32.totalorder %s93, %s96
    %p105 = scmp.eq.s32.totalorder %s18, 1
    %p106 = por %p104, %p105
    %p107 = scmp.ne.s32.totalorder %s96, %s97
    %p108 = scmp.eq.s32.totalorder %s18, 0
    %p109 = por %p107, %p108
    %p110 = scmp.ne.s32.totalorder %s96, %s97
    %p111 = scmp.eq.s32.totalorder %s19, 1
    %p112 = por %p110, %p111
    %p114 = scmp.ne.s32.totalorder %s97, %s113
    %p115 = scmp.eq.s32.totalorder %s19, 0
    %p116 = por %p114, %p115
    %s118 = sadd.s32 %s117, 1
    %p121 = scmp.eq.s32.totalorder %s13, 1
    %p122 = scmp.ne.s32.totalorder %s117, %s119
    %p123 = scmp.eq.s32.totalorder %s13, 0
    %p124 = por %p122, %p123
    %p125 = scmp.ne.s32.totalorder %s117, %s119
    %p126 = scmp.eq.s32.totalorder %s18, 1
    %p127 = por %p125, %p126
    %p128 = scmp.ne.s32.totalorder %s119, %s120
    %p129 = scmp.eq.s32.totalorder %s18, 0
    %p130 = por %p128, %p129
    %p131 = scmp.ne.s32.totalorder %s119, %s120
    %p132 = scmp.eq.s32.totalorder %s19, 1
    %p133 = por %p131, %p132
    %p135 = scmp.ne.s32.totalorder %s120, %s134
    %p136 = scmp.eq.s32.totalorder %s19, 0
    %p137 = por %p135, %p136
    %s139 = sadd.s32 %s138, 1
    %p142 = scmp.eq.s32.totalorder %s13, 1
    %p143 = scmp.ne.s32.totalorder %s138, %s140
    %p144 = scmp.eq.s32.totalorder %s13, 0
    %p145 = por %p143, %p144
    %p146 = scmp.ne.s32.totalorder %s138, %s140
    %p147 = scmp.eq.s32.totalorder %s18, 1
    %p148 = por %p146, %p147
    %p149 = scmp.ne.s32.totalorder %s140, %s141
    %p150 = scmp.eq.s32.totalorder %s18, 0
    %p151 = por %p149, %p150
    %p152 = scmp.ne.s32.totalorder %s140, %s141
    %p153 = scmp.eq.s32.totalorder %s19, 1
    %p154 = por %p152, %p153
    %p156 = scmp.ne.s32.totalorder %s141, %s155
    %p157 = scmp.eq.s32.totalorder %s19, 0
    %p158 = por %p156, %p157
    %s160 = sadd.s32 %s159, 1
    %p163 = scmp.eq.s32.totalorder %s13, 1
    %p164 = scmp.ne.s32.totalorder %s159, %s161
    %p165 = scmp.eq.s32.totalorder %s13, 0
    %p166 = por %p164, %p165
    %p167 = scmp.ne.s32.totalorder %s159, %s161
    %p168 = scmp.eq.s32.totalorder %s18, 1
    %p169 = por %p167, %p168
    %p170 = scmp.ne.s32.totalorder %s161, %s162
    %p171 = scmp.eq.s32.totalorder %s18, 0
    %p172 = por %p170, %p171
    %p173 = scmp.ne.s32.totalorder %s161, %s162
    %p174 = scmp.eq.s32.totalorder %s19, 1
    %p175 = por %p173, %p174
    %p177 = scmp.ne.s32.totalorder %s162, %s176
    %p178 = scmp.eq.s32.totalorder %s19, 0
    %p179 = por %p177, %p178
    %s181 = sadd.s32 %s180, 1
    %p184 = scmp.eq.s32.totalorder %s13, 1
    %p185 = scmp.ne.s32.totalorder %s180, %s182
    %p186 = scmp.eq.s32.totalorder %s13, 0
    %p187 = por %p185, %p186
    %p188 = scmp.ne.s32.totalorder %s180, %s182
    %p189 = scmp.eq.s32.totalorder %s18, 1
    %p190 = por %p188, %p189
    %p191 = scmp.ne.s32.totalorder %s182, %s183
    %p192 = scmp.eq.s32.totalorder %s18, 0
    %p193 = por %p191, %p192
    %p194 = scmp.ne.s32.totalorder %s182, %s183
    %p195 = scmp.eq.s32.totalorder %s19, 1
    %p196 = por %p194, %p195
    %p198 = scmp.ne.s32.totalorder %s183, %s197
    %p199 = scmp.eq.s32.totalorder %s19, 0
    %p200 = por %p198, %p199
    %s201 = ssub.s32 %s20, %s32
    %s202 = ssub.s32 %s21, %s28
    %s203 = sor.u32 %s201, %s202
    %p204 = scmp.eq.s32.totalorder %s203, 0
    %s206 = sadd.s32 %s205, 1
    %s207 = scalar_select %p204, %s205, %s206
    %p210 = pneg %p204
    %p211 = scmp.eq.s32.totalorder %s13, 1
    %p212 = por %p210, %p211
    %p213 = scmp.ne.s32.totalorder %s205, %s208
    %p214 = scmp.eq.s32.totalorder %s13, 0
    %p215 = por %p213, %p214
    %p216 = scmp.ne.s32.totalorder %s205, %s208
    %p217 = scmp.eq.s32.totalorder %s18, 1
    %p218 = por %p216, %p217
    %p219 = scmp.ne.s32.totalorder %s208, %s209
    %p220 = scmp.eq.s32.totalorder %s18, 0
    %p221 = por %p219, %p220
    %p222 = scmp.ne.s32.totalorder %s208, %s209
    %p223 = scmp.eq.s32.totalorder %s19, 1
    %p224 = por %p222, %p223
    %p226 = scmp.ne.s32.totalorder %s209, %s225
    %p227 = scmp.eq.s32.totalorder %s19, 0
    %p228 = por %p226, %p227
    %p229 = scmp.le.s32.totalorder 1, %s13
    %p230 = scmp.lt.s32.totalorder %s13, 3
    %p231 = pnand %p229, %p230
    %p232 = pneg %p231
    // Predicated region
    $region9: #{image_mask_predictor_forward.1} parent=5 // pred_check
      _
    $region10: #{image_mask_predictor_forward.1} parent=5 // pred_check_branch
      %234 = sbr.rel (%p231) target = $region12
    $region11: #{image_mask_predictor_forward.1} parent=5 // pred_region
      %s235 = ssub.s32 %s13, 1
      // Predicated region
      $region13: #{image_mask_predictor_forward.1} parent=11 // pred_check
        %p236 = pneg %p130
      $region14: #{image_mask_predictor_forward.1} parent=11 // pred_check_branch
        %238 = sbr.rel (%p236) target = $region16
      $region15: #{image_mask_predictor_forward.1} parent=11 // pred_region
        _
      $region16: #{image_mask_predictor_forward.1} parent=11 // pred_fallthru
        _
      // Predicated region
      $region17: #{image_mask_predictor_forward.1} parent=11 // pred_check
        %p239 = pneg %p151
      $region18: #{image_mask_predictor_forward.1} parent=11 // pred_check_branch
        %241 = sbr.rel (%p239) target = $region20
      $region19: #{image_mask_predictor_forward.1} parent=11 // pred_region
        _
      $region20: #{image_mask_predictor_forward.1} parent=11 // pred_fallthru
        _
      // Predicated region
      $region21: #{image_mask_predictor_forward.1} parent=11 // pred_check
        %p242 = pneg %p172
      $region22: #{image_mask_predictor_forward.1} parent=11 // pred_check_branch
        %244 = sbr.rel (%p242) target = $region24
      $region23: #{image_mask_predictor_forward.1} parent=11 // pred_region
        _
      $region24: #{image_mask_predictor_forward.1} parent=11 // pred_fallthru
        _
      // Predicated region
      $region25: #{image_mask_predictor_forward.1} parent=11 // pred_check
        %p245 = pneg %p193
      $region26: #{image_mask_predictor_forward.1} parent=11 // pred_check_branch
        %247 = sbr.rel (%p245) target = $region28
      $region27: #{image_mask_predictor_forward.1} parent=11 // pred_region
        _
      $region28: #{image_mask_predictor_forward.1} parent=11 // pred_fallthru
        _
    $region12: #{image_mask_predictor_forward.1} parent=5 // pred_fallthru
      _
    %p248 = scmp.lt.s32.totalorder %s13, 2
    // Predicated region
    $region29: #{image_mask_predictor_forward.1} parent=5 // pred_check
      %p249 = pneg %p248
    $region30: #{image_mask_predictor_forward.1} parent=5 // pred_check_branch
      %251 = sbr.rel (%p249) target = $region32
    $region31: #{image_mask_predictor_forward.1} parent=5 // pred_region
      // Predicated region
      $region33: #{image_mask_predictor_forward.1} parent=31 // pred_check
        %p252 = pneg %p47
      $region34: #{image_mask_predictor_forward.1} parent=31 // pred_check_branch
        %254 = sbr.rel (%p252) target = $region36
      $region35: #{image_mask_predictor_forward.1} parent=31 // pred_region
        %s255 = smul.u32 2, %s21
        %p256 = scmp.lt.s32.totalorder %s20, 1
        %s257 = scalar_select %p256, %s20, 1
        %p258 = scmp.lt.s32.totalorder %s255, 1
        %s259 = scalar_select %p258, %s255, 1
        %s260 = smul.addr %s257, 96
        %s261 = sadd.s32 %s259, %s260
        %s262 = smul.addr %s261, 8
        %s263 = scalar_lea.vmem %s0, %s262
        %s264 = smul.u32 2, %s21
      $region36: #{image_mask_predictor_forward.1} parent=31 // pred_fallthru
        _
      // Predicated region
      $region37: #{image_mask_predictor_forward.1} parent=31 // pred_check
        %p265 = pneg %p75
      $region38: #{image_mask_predictor_forward.1} parent=31 // pred_check_branch
        %267 = sbr.rel (%p265) target = $region40
      $region39: #{image_mask_predictor_forward.1} parent=31 // pred_region
        %p268 = scmp.lt.s32.totalorder %s20, 1
        %s269 = scalar_select %p268, %s20, 1
        %p270 = scmp.lt.s32.totalorder %s21, 0
        %s271 = scalar_select %p270, %s21, 0
        %s272 = smul.addr %s271, 48
        %s273 = smul.addr %s269, 48
        %s274 = sadd.s32 %s272, %s273
        %s275 = smul.addr %s274, 8
        %s276 = scalar_lea.vmem %s1, %s275
      $region40: #{image_mask_predictor_forward.1} parent=31 // pred_fallthru
        _
      // Predicated region
      $region41: #{image_mask_predictor_forward.1} parent=31 // pred_check
        %p277 = pneg %p103
      $region42: #{image_mask_predictor_forward.1} parent=31 // pred_check_branch
        %279 = sbr.rel (%p277) target = $region44
      $region43: #{image_mask_predictor_forward.1} parent=31 // pred_region
        %p280 = scmp.lt.s32.totalorder %s20, 1
        %s281 = scalar_select %p280, %s20, 1
        %p282 = scmp.lt.s32.totalorder %s21, 0
        %s283 = scalar_select %p282, %s21, 0
        %s284 = smul.addr %s283, 48
        %s285 = smul.addr %s281, 48
        %s286 = sadd.s32 %s284, %s285
        %s287 = smul.addr %s286, 8
        %s288 = scalar_lea.vmem %s2, %s287
      $region44: #{image_mask_predictor_forward.1} parent=31 // pred_fallthru
        _
    $region32: #{image_mask_predictor_forward.1} parent=5 // pred_fallthru
      _
    %p289 = scmp.le.s32.totalorder 1, %s13
    %p290 = scmp.lt.s32.totalorder %s13, 3
    %p291 = pnand %p289, %p290
    %p292 = pneg %p291
    // Predicated region
    $region45: #{image_mask_predictor_forward.1} parent=5 // pred_check
      _
    $region46: #{image_mask_predictor_forward.1} parent=5 // pred_check_branch
      %294 = sbr.rel (%p291) target = $region48
    $region47: #{image_mask_predictor_forward.1} parent=5 // pred_region
      %s295 = ssub.s32 %s13, 1
      %s296 = smul.u32 2, %s23
      %p297 = scmp.lt.s32.totalorder %s22, 1
      %s298 = scalar_select %p297, %s22, 1
      %p299 = scmp.lt.s32.totalorder %s296, 1
      %s300 = scalar_select %p299, %s296, 1
      %s301 = smul.addr %s298, 96
      %s302 = sadd.s32 %s300, %s301
      %s303 = smul.addr %s302, 8
      %s304 = scalar_lea.vmem %s0, %s303
      %p305 = pneg %p53
      %p306 = pneg %p50
      %p307 = scmp.lt.s32.totalorder %s22, 1
      %s308 = scalar_select %p307, %s22, 1
      %p309 = scmp.lt.s32.totalorder %s23, 0
      %s310 = scalar_select %p309, %s23, 0
      %s311 = smul.addr %s310, 48
      %s312 = smul.addr %s308, 48
      %s313 = sadd.s32 %s311, %s312
      %s314 = smul.addr %s313, 8
      %s315 = scalar_lea.vmem %s1, %s314
      %p316 = pneg %p81
      %p317 = pneg %p78
      %p318 = scmp.lt.s32.totalorder %s22, 1
      %s319 = scalar_select %p318, %s22, 1
      %p320 = scmp.lt.s32.totalorder %s23, 0
      %s321 = scalar_select %p320, %s23, 0
      %s322 = smul.addr %s321, 48
      %s323 = smul.addr %s319, 48
      %s324 = sadd.s32 %s322, %s323
      %s325 = smul.addr %s324, 8
      %s326 = scalar_lea.vmem %s2, %s325
      %p327 = pneg %p109
      %p328 = pneg %p106
      %p329 = pneg %p130
      %p330 = pneg %p127
      %p331 = pneg %p151
      %p332 = pneg %p148
      %p333 = pneg %p172
      %p334 = pneg %p169
      %p335 = pneg %p193
      %p336 = pneg %p190
      %p337 = pneg %p221
      %p338 = pneg %p218
      %p339 = scmp.lt.s32.totalorder %s22, 1
      %s340 = scalar_select %p339, %s22, 1
      %p341 = scmp.lt.s32.totalorder %s23, 0
      %s342 = scalar_select %p341, %s23, 0
      %s343 = smul.addr %s342, 2
      %s344 = smul.addr %s340, 2
      %s345 = sadd.s32 %s343, %s344
      %s346 = smul.addr %s345, 2
      %s347 = scalar_lea.vmem %s7, %s346
      %s348 = smul.u32 2, %s23
      %p349 = scmp.lt.s32.totalorder %s22, 1
      %s350 = scalar_select %p349, %s22, 1
      %p351 = scmp.lt.s32.totalorder %s348, 1
      %s352 = scalar_select %p351, %s348, 1
      %s353 = smul.addr %s350, 96
      %s354 = sadd.s32 %s352, %s353
      %s355 = smul.addr %s354, 8
      %s356 = scalar_lea.vmem %s0, %s355
      %s357 = smul.u32 2, %s23
      %p358 = scmp.lt.s32.totalorder %s22, 1
      %s359 = scalar_select %p358, %s22, 1
      %p360 = scmp.lt.s32.totalorder %s23, 0
      %s361 = scalar_select %p360, %s23, 0
      %s362 = smul.addr %s361, 48
      %s363 = smul.addr %s359, 48
      %s364 = sadd.s32 %s362, %s363
      %s365 = smul.addr %s364, 8
      %s366 = scalar_lea.vmem %s1, %s365
      %p367 = scmp.lt.s32.totalorder %s22, 1
      %s368 = scalar_select %p367, %s22, 1
      %p369 = scmp.lt.s32.totalorder %s23, 0
      %s370 = scalar_select %p369, %s23, 0
      %s371 = smul.addr %s370, 48
      %s372 = smul.addr %s368, 48
      %s373 = sadd.s32 %s371, %s372
      %s374 = smul.addr %s373, 8
      %s375 = scalar_lea.vmem %s2, %s374
      %p376 = scmp.lt.s32.totalorder %s22, 1
      %s377 = scalar_select %p376, %s22, 1
      %p378 = scmp.lt.s32.totalorder %s23, 0
      %s379 = scalar_select %p378, %s23, 0
      %s380 = smul.addr %s379, 2
      %s381 = smul.addr %s377, 2
      %s382 = sadd.s32 %s380, %s381
      %s383 = smul.addr %s382, 2
      %s384 = scalar_lea.vmem %s7, %s383
      %v386 = vld [vmem:[%s366] sm:$0xff]
      %v387 = vld [vmem:[%s366 + $0x8] sm:$0xff]
      %v388 = vld [vmem:[%s366 + $0x10] sm:$0xff]
      %v389 = vld [vmem:[%s366 + $0x18] sm:$0xff]
      %v390 = vld [vmem:[%s366 + $0x20] sm:$0xff]
      %v391 = vld [vmem:[%s366 + $0x28] sm:$0xff]
      %v392 = vld [vmem:[%s366 + $0x30] sm:$0xff]
      %v393 = vld [vmem:[%s366 + $0x38] sm:$0xff]
      %v394 = vld [vmem:[%s366 + $0x40] sm:$0xff]
      %v395 = vld [vmem:[%s366 + $0x48] sm:$0xff]
      %v396 = vld [vmem:[%s366 + $0x50] sm:$0xff]
      %v397 = vld [vmem:[%s366 + $0x58] sm:$0xff]
      %v398 = vld [vmem:[%s366 + $0x60] sm:$0xff]
      %v399 = vld [vmem:[%s366 + $0x68] sm:$0xff]
      %v400 = vld [vmem:[%s366 + $0x70] sm:$0xff]
      %v401 = vld [vmem:[%s366 + $0x78] sm:$0xff]
      %v402 = vld [vmem:[%s366 + $0x80] sm:$0xff]
      %v403 = vld [vmem:[%s366 + $0x88] sm:$0xff]
      %v404 = vld [vmem:[%s366 + $0x90] sm:$0xff]
      %v405 = vld [vmem:[%s366 + $0x98] sm:$0xff]
      %v406 = vld [vmem:[%s366 + $0xa0] sm:$0xff]
      %v407 = vld [vmem:[%s366 + $0xa8] sm:$0xff]
      %v408 = vld [vmem:[%s366 + $0xb0] sm:$0xff]
      %v409 = vld [vmem:[%s366 + $0xb8] sm:$0xff]
      %v410 = vld [vmem:[%s366 + $0xc0] sm:$0xff]
      %v411 = vld [vmem:[%s366 + $0xc8] sm:$0xff]
      %v412 = vld [vmem:[%s366 + $0xd0] sm:$0xff]
      %v413 = vld [vmem:[%s366 + $0xd8] sm:$0xff]
      %v414 = vld [vmem:[%s366 + $0xe0] sm:$0xff]
      %v415 = vld [vmem:[%s366 + $0xe8] sm:$0xff]
      %v416 = vld [vmem:[%s366 + $0xf0] sm:$0xff]
      %v417 = vld [vmem:[%s366 + $0xf8] sm:$0xff]
      %v418 = vld [vmem:[%s366 + $0x100] sm:$0xff]
      %v419 = vld [vmem:[%s366 + $0x108] sm:$0xff]
      %v420 = vld [vmem:[%s366 + $0x110] sm:$0xff]
      %v421 = vld [vmem:[%s366 + $0x118] sm:$0xff]
      %v422 = vld [vmem:[%s366 + $0x120] sm:$0xff]
      %v423 = vld [vmem:[%s366 + $0x128] sm:$0xff]
      %v424 = vld [vmem:[%s366 + $0x130] sm:$0xff]
      %v425 = vld [vmem:[%s366 + $0x138] sm:$0xff]
      %v426 = vld [vmem:[%s366 + $0x140] sm:$0xff]
      %v427 = vld [vmem:[%s366 + $0x148] sm:$0xff]
      %v428 = vld [vmem:[%s366 + $0x150] sm:$0xff]
      %v429 = vld [vmem:[%s366 + $0x158] sm:$0xff]
      %v430 = vld [vmem:[%s366 + $0x160] sm:$0xff]
      %v431 = vld [vmem:[%s366 + $0x168] sm:$0xff]
      %v432 = vld [vmem:[%s366 + $0x170] sm:$0xff]
      %v433 = vld [vmem:[%s366 + $0x178] sm:$0xff]
      %v434 = vld [vmem:[%s356] sm:$0xff]
      %v435 = vld [vmem:[%s356 + $0x8] sm:$0xff]
      %v436 = vld [vmem:[%s356 + $0x10] sm:$0xff]
      %v437 = vld [vmem:[%s356 + $0x18] sm:$0xff]
      %v438 = vld [vmem:[%s356 + $0x20] sm:$0xff]
      %v439 = vld [vmem:[%s356 + $0x28] sm:$0xff]
      %v440 = vld [vmem:[%s356 + $0x30] sm:$0xff]
      %v441 = vld [vmem:[%s356 + $0x38] sm:$0xff]
      %v442 = vld [vmem:[%s356 + $0x40] sm:$0xff]
      %v443 = vld [vmem:[%s356 + $0x48] sm:$0xff]
      %v444 = vld [vmem:[%s356 + $0x50] sm:$0xff]
      %v445 = vld [vmem:[%s356 + $0x58] sm:$0xff]
      %v446 = vld [vmem:[%s356 + $0x60] sm:$0xff]
      %v447 = vld [vmem:[%s356 + $0x68] sm:$0xff]
      %v448 = vld [vmem:[%s356 + $0x70] sm:$0xff]
      %v449 = vld [vmem:[%s356 + $0x78] sm:$0xff]
      %v450 = vld [vmem:[%s356 + $0x80] sm:$0xff]
      %v451 = vld [vmem:[%s356 + $0x88] sm:$0xff]
      %v452 = vld [vmem:[%s356 + $0x90] sm:$0xff]
      %v453 = vld [vmem:[%s356 + $0x98] sm:$0xff]
      %v454 = vld [vmem:[%s356 + $0xa0] sm:$0xff]
      %v455 = vld [vmem:[%s356 + $0xa8] sm:$0xff]
      %v456 = vld [vmem:[%s356 + $0xb0] sm:$0xff]
      %v457 = vld [vmem:[%s356 + $0xb8] sm:$0xff]
      %v458 = vld [vmem:[%s356 + $0xc0] sm:$0xff]
      %v459 = vld [vmem:[%s356 + $0xc8] sm:$0xff]
      %v460 = vld [vmem:[%s356 + $0xd0] sm:$0xff]
      %v461 = vld [vmem:[%s356 + $0xd8] sm:$0xff]
      %v462 = vld [vmem:[%s356 + $0xe0] sm:$0xff]
      %v463 = vld [vmem:[%s356 + $0xe8] sm:$0xff]
      %v464 = vld [vmem:[%s356 + $0xf0] sm:$0xff]
      %v465 = vld [vmem:[%s356 + $0xf8] sm:$0xff]
      %v466 = vld [vmem:[%s356 + $0x100] sm:$0xff]
      %v467 = vld [vmem:[%s356 + $0x108] sm:$0xff]
      %v468 = vld [vmem:[%s356 + $0x110] sm:$0xff]
      %v469 = vld [vmem:[%s356 + $0x118] sm:$0xff]
      %v470 = vld [vmem:[%s356 + $0x120] sm:$0xff]
      %v471 = vld [vmem:[%s356 + $0x128] sm:$0xff]
      %v472 = vld [vmem:[%s356 + $0x130] sm:$0xff]
      %v473 = vld [vmem:[%s356 + $0x138] sm:$0xff]
      %v474 = vld [vmem:[%s356 + $0x140] sm:$0xff]
      %v475 = vld [vmem:[%s356 + $0x148] sm:$0xff]
      %v476 = vld [vmem:[%s356 + $0x150] sm:$0xff]
      %v477 = vld [vmem:[%s356 + $0x158] sm:$0xff]
      %v478 = vld [vmem:[%s356 + $0x160] sm:$0xff]
      %v479 = vld [vmem:[%s356 + $0x168] sm:$0xff]
      %v480 = vld [vmem:[%s356 + $0x170] sm:$0xff]
      %v481 = vld [vmem:[%s356 + $0x178] sm:$0xff]
      %v482 = vld [vmem:[%s356 + $0x180] sm:$0xff]
      %v483 = vld [vmem:[%s356 + $0x188] sm:$0xff]
      %v484 = vld [vmem:[%s356 + $0x190] sm:$0xff]
      %v485 = vld [vmem:[%s356 + $0x198] sm:$0xff]
      %v486 = vld [vmem:[%s356 + $0x1a0] sm:$0xff]
      %v487 = vld [vmem:[%s356 + $0x1a8] sm:$0xff]
      %v488 = vld [vmem:[%s356 + $0x1b0] sm:$0xff]
      %v489 = vld [vmem:[%s356 + $0x1b8] sm:$0xff]
      %v490 = vld [vmem:[%s356 + $0x1c0] sm:$0xff]
      %v491 = vld [vmem:[%s356 + $0x1c8] sm:$0xff]
      %v492 = vld [vmem:[%s356 + $0x1d0] sm:$0xff]
      %v493 = vld [vmem:[%s356 + $0x1d8] sm:$0xff]
      %v494 = vld [vmem:[%s356 + $0x1e0] sm:$0xff]
      %v495 = vld [vmem:[%s356 + $0x1e8] sm:$0xff]
      %v496 = vld [vmem:[%s356 + $0x1f0] sm:$0xff]
      %v497 = vld [vmem:[%s356 + $0x1f8] sm:$0xff]
      %v498 = vld [vmem:[%s356 + $0x200] sm:$0xff]
      %v499 = vld [vmem:[%s356 + $0x208] sm:$0xff]
      %v500 = vld [vmem:[%s356 + $0x210] sm:$0xff]
      %v501 = vld [vmem:[%s356 + $0x218] sm:$0xff]
      %v502 = vld [vmem:[%s356 + $0x220] sm:$0xff]
      %v503 = vld [vmem:[%s356 + $0x228] sm:$0xff]
      %v504 = vld [vmem:[%s356 + $0x230] sm:$0xff]
      %v505 = vld [vmem:[%s356 + $0x238] sm:$0xff]
      %v506 = vld [vmem:[%s356 + $0x240] sm:$0xff]
      %v507 = vld [vmem:[%s356 + $0x248] sm:$0xff]
      %v508 = vld [vmem:[%s356 + $0x250] sm:$0xff]
      %v509 = vld [vmem:[%s356 + $0x258] sm:$0xff]
      %v510 = vld [vmem:[%s356 + $0x260] sm:$0xff]
      %v511 = vld [vmem:[%s356 + $0x268] sm:$0xff]
      %v512 = vld [vmem:[%s356 + $0x270] sm:$0xff]
      %v513 = vld [vmem:[%s356 + $0x278] sm:$0xff]
      %v514 = vld [vmem:[%s356 + $0x280] sm:$0xff]
      %v515 = vld [vmem:[%s356 + $0x288] sm:$0xff]
      %v516 = vld [vmem:[%s356 + $0x290] sm:$0xff]
      %v517 = vld [vmem:[%s356 + $0x298] sm:$0xff]
      %v518 = vld [vmem:[%s356 + $0x2a0] sm:$0xff]
      %v519 = vld [vmem:[%s356 + $0x2a8] sm:$0xff]
      %v520 = vld [vmem:[%s356 + $0x2b0] sm:$0xff]
      %v521 = vld [vmem:[%s356 + $0x2b8] sm:$0xff]
      %v522 = vld [vmem:[%s356 + $0x2c0] sm:$0xff]
      %v523 = vld [vmem:[%s356 + $0x2c8] sm:$0xff]
      %v524 = vld [vmem:[%s356 + $0x2d0] sm:$0xff]
      %v525 = vld [vmem:[%s356 + $0x2d8] sm:$0xff]
      %v526 = vld [vmem:[%s356 + $0x2e0] sm:$0xff]
      %v527 = vld [vmem:[%s356 + $0x2e8] sm:$0xff]
      %v528 = vld [vmem:[%s356 + $0x2f0] sm:$0xff]
      %v529 = vld [vmem:[%s356 + $0x2f8] sm:$0xff]
      %v530 = vld [vmem:[%s375] sm:$0xff]
      %v531 = vld [vmem:[%s375 + $0x8] sm:$0xff]
      %v532 = vld [vmem:[%s375 + $0x10] sm:$0xff]
      %v533 = vld [vmem:[%s375 + $0x18] sm:$0xff]
      %v534 = vld [vmem:[%s375 + $0x20] sm:$0xff]
      %v535 = vld [vmem:[%s375 + $0x28] sm:$0xff]
      %v536 = vld [vmem:[%s375 + $0x30] sm:$0xff]
      %v537 = vld [vmem:[%s375 + $0x38] sm:$0xff]
      %v538 = vld [vmem:[%s375 + $0x40] sm:$0xff]
      %v539 = vld [vmem:[%s375 + $0x48] sm:$0xff]
      %v540 = vld [vmem:[%s375 + $0x50] sm:$0xff]
      %v541 = vld [vmem:[%s375 + $0x58] sm:$0xff]
      %v542 = vld [vmem:[%s375 + $0x60] sm:$0xff]
      %v543 = vld [vmem:[%s375 + $0x68] sm:$0xff]
      %v544 = vld [vmem:[%s375 + $0x70] sm:$0xff]
      %v545 = vld [vmem:[%s375 + $0x78] sm:$0xff]
      %v546 = vld [vmem:[%s375 + $0x80] sm:$0xff]
      %v547 = vld [vmem:[%s375 + $0x88] sm:$0xff]
      %v548 = vld [vmem:[%s375 + $0x90] sm:$0xff]
      %v549 = vld [vmem:[%s375 + $0x98] sm:$0xff]
      %v550 = vld [vmem:[%s375 + $0xa0] sm:$0xff]
      %v551 = vld [vmem:[%s375 + $0xa8] sm:$0xff]
      %v552 = vld [vmem:[%s375 + $0xb0] sm:$0xff]
      %v553 = vld [vmem:[%s375 + $0xb8] sm:$0xff]
      %v554 = vld [vmem:[%s375 + $0xc0] sm:$0xff]
      %v555 = vld [vmem:[%s375 + $0xc8] sm:$0xff]
      %v556 = vld [vmem:[%s375 + $0xd0] sm:$0xff]
      %v557 = vld [vmem:[%s375 + $0xd8] sm:$0xff]
      %v558 = vld [vmem:[%s375 + $0xe0] sm:$0xff]
      %v559 = vld [vmem:[%s375 + $0xe8] sm:$0xff]
      %v560 = vld [vmem:[%s375 + $0xf0] sm:$0xff]
      %v561 = vld [vmem:[%s375 + $0xf8] sm:$0xff]
      %v562 = vld [vmem:[%s375 + $0x100] sm:$0xff]
      %v563 = vld [vmem:[%s375 + $0x108] sm:$0xff]
      %v564 = vld [vmem:[%s375 + $0x110] sm:$0xff]
      %v565 = vld [vmem:[%s375 + $0x118] sm:$0xff]
      %v566 = vld [vmem:[%s375 + $0x120] sm:$0xff]
      %v567 = vld [vmem:[%s375 + $0x128] sm:$0xff]
      %v568 = vld [vmem:[%s375 + $0x130] sm:$0xff]
      %v569 = vld [vmem:[%s375 + $0x138] sm:$0xff]
      %v570 = vld [vmem:[%s375 + $0x140] sm:$0xff]
      %v571 = vld [vmem:[%s375 + $0x148] sm:$0xff]
      %v572 = vld [vmem:[%s375 + $0x150] sm:$0xff]
      %v573 = vld [vmem:[%s375 + $0x158] sm:$0xff]
      %v574 = vld [vmem:[%s375 + $0x160] sm:$0xff]
      %v575 = vld [vmem:[%s375 + $0x168] sm:$0xff]
      %v576 = vld [vmem:[%s375 + $0x170] sm:$0xff]
      %v577 = vld [vmem:[%s375 + $0x178] sm:$0xff]
      %674 = vrot.lane.b32.xlu0 %v434, 16
      %v675 = vpop.permute.xlu0 %674
      %676 = vrot.lane.b32.xlu0 %v435, 16
      %v677 = vpop.permute.xlu0 %676
      %678 = vrot.lane.b32.xlu0 %v436, 16
      %v679 = vpop.permute.xlu0 %678
      %680 = vrot.lane.b32.xlu0 %v437, 16
      %v681 = vpop.permute.xlu0 %680
      %682 = vrot.lane.b32.xlu0 %v438, 16
      %v683 = vpop.permute.xlu0 %682
      %684 = vrot.lane.b32.xlu0 %v439, 16
      %v685 = vpop.permute.xlu0 %684
      %686 = vrot.lane.b32.xlu0 %v440, 16
      %v687 = vpop.permute.xlu0 %686
      %688 = vrot.lane.b32.xlu0 %v441, 16
      %v689 = vpop.permute.xlu0 %688
      %690 = vrot.lane.b32.xlu0 %v442, 16
      %v691 = vpop.permute.xlu0 %690
      %692 = vrot.lane.b32.xlu0 %v443, 16
      %v693 = vpop.permute.xlu0 %692
      %694 = vrot.lane.b32.xlu0 %v444, 16
      %v695 = vpop.permute.xlu0 %694
      %696 = vrot.lane.b32.xlu0 %v445, 16
      %v697 = vpop.permute.xlu0 %696
      %698 = vrot.lane.b32.xlu0 %v446, 16
      %v699 = vpop.permute.xlu0 %698
      %700 = vrot.lane.b32.xlu0 %v447, 16
      %v701 = vpop.permute.xlu0 %700
      %702 = vrot.lane.b32.xlu0 %v448, 16
      %v703 = vpop.permute.xlu0 %702
      %704 = vrot.lane.b32.xlu0 %v449, 16
      %v705 = vpop.permute.xlu0 %704
      %706 = vrot.lane.b32.xlu0 %v450, 16
      %v707 = vpop.permute.xlu0 %706
      %708 = vrot.lane.b32.xlu0 %v451, 16
      %v709 = vpop.permute.xlu0 %708
      %710 = vrot.lane.b32.xlu0 %v452, 16
      %v711 = vpop.permute.xlu0 %710
      %712 = vrot.lane.b32.xlu0 %v453, 16
      %v713 = vpop.permute.xlu0 %712
      %714 = vrot.lane.b32.xlu0 %v454, 16
      %v715 = vpop.permute.xlu0 %714
      %716 = vrot.lane.b32.xlu0 %v455, 16
      %v717 = vpop.permute.xlu0 %716
      %718 = vrot.lane.b32.xlu0 %v456, 16
      %v719 = vpop.permute.xlu0 %718
      %720 = vrot.lane.b32.xlu0 %v457, 16
      %v721 = vpop.permute.xlu0 %720
      %722 = vrot.lane.b32.xlu0 %v458, 16
      %v723 = vpop.permute.xlu0 %722
      %724 = vrot.lane.b32.xlu0 %v459, 16
      %v725 = vpop.permute.xlu0 %724
      %726 = vrot.lane.b32.xlu0 %v460, 16
      %v727 = vpop.permute.xlu0 %726
      %728 = vrot.lane.b32.xlu0 %v461, 16
      %v729 = vpop.permute.xlu0 %728
      %730 = vrot.lane.b32.xlu0 %v462, 16
      %v731 = vpop.permute.xlu0 %730
      %732 = vrot.lane.b32.xlu0 %v463, 16
      %v733 = vpop.permute.xlu0 %732
      %734 = vrot.lane.b32.xlu0 %v464, 16
      %v735 = vpop.permute.xlu0 %734
      %736 = vrot.lane.b32.xlu0 %v465, 16
      %v737 = vpop.permute.xlu0 %736
      %738 = vrot.lane.b32.xlu0 %v466, 16
      %v739 = vpop.permute.xlu0 %738
      %740 = vrot.lane.b32.xlu0 %v467, 16
      %v741 = vpop.permute.xlu0 %740
      %742 = vrot.lane.b32.xlu0 %v468, 16
      %v743 = vpop.permute.xlu0 %742
      %744 = vrot.lane.b32.xlu0 %v469, 16
      %v745 = vpop.permute.xlu0 %744
      %746 = vrot.lane.b32.xlu0 %v470, 16
      %v747 = vpop.permute.xlu0 %746
      %748 = vrot.lane.b32.xlu0 %v471, 16
      %v749 = vpop.permute.xlu0 %748
      %750 = vrot.lane.b32.xlu0 %v472, 16
      %v751 = vpop.permute.xlu0 %750
      %752 = vrot.lane.b32.xlu0 %v473, 16
      %v753 = vpop.permute.xlu0 %752
      %754 = vrot.lane.b32.xlu0 %v474, 16
      %v755 = vpop.permute.xlu0 %754
      %756 = vrot.lane.b32.xlu0 %v475, 16
      %v757 = vpop.permute.xlu0 %756
      %758 = vrot.lane.b32.xlu0 %v476, 16
      %v759 = vpop.permute.xlu0 %758
      %760 = vrot.lane.b32.xlu0 %v477, 16
      %v761 = vpop.permute.xlu0 %760
      %762 = vrot.lane.b32.xlu0 %v478, 16
      %v763 = vpop.permute.xlu0 %762
      %764 = vrot.lane.b32.xlu0 %v479, 16
      %v765 = vpop.permute.xlu0 %764
      %766 = vrot.lane.b32.xlu0 %v480, 16
      %v767 = vpop.permute.xlu0 %766
      %768 = vrot.lane.b32.xlu0 %v481, 16
      %v769 = vpop.permute.xlu0 %768
      %770 = vrot.lane.b32.xlu0 %v482, 16
      %v771 = vpop.permute.xlu0 %770
      %772 = vrot.lane.b32.xlu0 %v483, 16
      %v773 = vpop.permute.xlu0 %772
      %774 = vrot.lane.b32.xlu0 %v484, 16
      %v775 = vpop.permute.xlu0 %774
      %776 = vrot.lane.b32.xlu0 %v485, 16
      %v777 = vpop.permute.xlu0 %776
      %778 = vrot.lane.b32.xlu0 %v486, 16
      %v779 = vpop.permute.xlu0 %778
      %780 = vrot.lane.b32.xlu0 %v487, 16
      %v781 = vpop.permute.xlu0 %780
      %782 = vrot.lane.b32.xlu0 %v488, 16
      %v783 = vpop.permute.xlu0 %782
      %784 = vrot.lane.b32.xlu0 %v489, 16
      %v785 = vpop.permute.xlu0 %784
      %786 = vrot.lane.b32.xlu0 %v490, 16
      %v787 = vpop.permute.xlu0 %786
      %788 = vrot.lane.b32.xlu0 %v491, 16
      %v789 = vpop.permute.xlu0 %788
      %790 = vrot.lane.b32.xlu0 %v492, 16
      %v791 = vpop.permute.xlu0 %790
      %792 = vrot.lane.b32.xlu0 %v493, 16
      %v793 = vpop.permute.xlu0 %792
      %794 = vrot.lane.b32.xlu0 %v494, 16
      %v795 = vpop.permute.xlu0 %794
      %796 = vrot.lane.b32.xlu0 %v495, 16
      %v797 = vpop.permute.xlu0 %796
      %798 = vrot.lane.b32.xlu0 %v496, 16
      %v799 = vpop.permute.xlu0 %798
      %800 = vrot.lane.b32.xlu0 %v497, 16
      %v801 = vpop.permute.xlu0 %800
      %802 = vrot.lane.b32.xlu0 %v498, 16
      %v803 = vpop.permute.xlu0 %802
      %804 = vrot.lane.b32.xlu0 %v499, 16
      %v805 = vpop.permute.xlu0 %804
      %806 = vrot.lane.b32.xlu0 %v500, 16
      %v807 = vpop.permute.xlu0 %806
      %808 = vrot.lane.b32.xlu0 %v501, 16
      %v809 = vpop.permute.xlu0 %808
      %810 = vrot.lane.b32.xlu0 %v502, 16
      %v811 = vpop.permute.xlu0 %810
      %812 = vrot.lane.b32.xlu0 %v503, 16
      %v813 = vpop.permute.xlu0 %812
      %814 = vrot.lane.b32.xlu0 %v504, 16
      %v815 = vpop.permute.xlu0 %814
      %816 = vrot.lane.b32.xlu0 %v505, 16
      %v817 = vpop.permute.xlu0 %816
      %818 = vrot.lane.b32.xlu0 %v506, 16
      %v819 = vpop.permute.xlu0 %818
      %820 = vrot.lane.b32.xlu0 %v507, 16
      %v821 = vpop.permute.xlu0 %820
      %822 = vrot.lane.b32.xlu0 %v508, 16
      %v823 = vpop.permute.xlu0 %822
      %824 = vrot.lane.b32.xlu0 %v509, 16
      %v825 = vpop.permute.xlu0 %824
      %826 = vrot.lane.b32.xlu0 %v510, 16
      %v827 = vpop.permute.xlu0 %826
      %828 = vrot.lane.b32.xlu0 %v511, 16
      %v829 = vpop.permute.xlu0 %828
      %830 = vrot.lane.b32.xlu0 %v512, 16
      %v831 = vpop.permute.xlu0 %830
      %832 = vrot.lane.b32.xlu0 %v513, 16
      %v833 = vpop.permute.xlu0 %832
      %834 = vrot.lane.b32.xlu0 %v514, 16
      %v835 = vpop.permute.xlu0 %834
      %836 = vrot.lane.b32.xlu0 %v515, 16
      %v837 = vpop.permute.xlu0 %836
      %838 = vrot.lane.b32.xlu0 %v516, 16
      %v839 = vpop.permute.xlu0 %838
      %840 = vrot.lane.b32.xlu0 %v517, 16
      %v841 = vpop.permute.xlu0 %840
      %842 = vrot.lane.b32.xlu0 %v518, 16
      %v843 = vpop.permute.xlu0 %842
      %844 = vrot.lane.b32.xlu0 %v519, 16
      %v845 = vpop.permute.xlu0 %844
      %846 = vrot.lane.b32.xlu0 %v520, 16
      %v847 = vpop.permute.xlu0 %846
      %848 = vrot.lane.b32.xlu0 %v521, 16
      %v849 = vpop.permute.xlu0 %848
      %850 = vrot.lane.b32.xlu0 %v522, 16
      %v851 = vpop.permute.xlu0 %850
      %852 = vrot.lane.b32.xlu0 %v523, 16
      %v853 = vpop.permute.xlu0 %852
      %854 = vrot.lane.b32.xlu0 %v524, 16
      %v855 = vpop.permute.xlu0 %854
      %856 = vrot.lane.b32.xlu0 %v525, 16
      %v857 = vpop.permute.xlu0 %856
      %858 = vrot.lane.b32.xlu0 %v526, 16
      %v859 = vpop.permute.xlu0 %858
      %860 = vrot.lane.b32.xlu0 %v527, 16
      %v861 = vpop.permute.xlu0 %860
      %862 = vrot.lane.b32.xlu0 %v528, 16
      %v863 = vpop.permute.xlu0 %862
      %864 = vrot.lane.b32.xlu0 %v529, 16
      %v865 = vpop.permute.xlu0 %864
      %vm866 = vcmask 130048
      %v867 = vsel %vm866, %v675, %v677
      %v868 = vsel %vm866, %v679, %v681
      %v869 = vsel %vm866, %v683, %v685
      %v870 = vsel %vm866, %v687, %v689
      %v871 = vsel %vm866, %v691, %v693
      %v872 = vsel %vm866, %v695, %v697
      %v873 = vsel %vm866, %v699, %v701
      %v874 = vsel %vm866, %v703, %v705
      %v875 = vsel %vm866, %v707, %v709
      %v876 = vsel %vm866, %v711, %v713
      %v877 = vsel %vm866, %v715, %v717
      %v878 = vsel %vm866, %v719, %v721
      %v879 = vsel %vm866, %v723, %v725
      %v880 = vsel %vm866, %v727, %v729
      %v881 = vsel %vm866, %v731, %v733
      %v882 = vsel %vm866, %v735, %v737
      %v883 = vsel %vm866, %v739, %v741
      %v884 = vsel %vm866, %v743, %v745
      %v885 = vsel %vm866, %v747, %v749
      %v886 = vsel %vm866, %v751, %v753
      %v887 = vsel %vm866, %v755, %v757
      %v888 = vsel %vm866, %v759, %v761
      %v889 = vsel %vm866, %v763, %v765
      %v890 = vsel %vm866, %v767, %v769
      %v891 = vsel %vm866, %v771, %v773
      %v892 = vsel %vm866, %v775, %v777
      %v893 = vsel %vm866, %v779, %v781
      %v894 = vsel %vm866, %v783, %v785
      %v895 = vsel %vm866, %v787, %v789
      %v896 = vsel %vm866, %v791, %v793
      %v897 = vsel %vm866, %v795, %v797
      %v898 = vsel %vm866, %v799, %v801
      %v899 = vsel %vm866, %v803, %v805
      %v900 = vsel %vm866, %v807, %v809
      %v901 = vsel %vm866, %v811, %v813
      %v902 = vsel %vm866, %v815, %v817
      %v903 = vsel %vm866, %v819, %v821
      %v904 = vsel %vm866, %v823, %v825
      %v905 = vsel %vm866, %v827, %v829
      %v906 = vsel %vm866, %v831, %v833
      %v907 = vsel %vm866, %v835, %v837
      %v908 = vsel %vm866, %v839, %v841
      %v909 = vsel %vm866, %v843, %v845
      %v910 = vsel %vm866, %v847, %v849
      %v911 = vsel %vm866, %v851, %v853
      %v912 = vsel %vm866, %v855, %v857
      %v913 = vsel %vm866, %v859, %v861
      %v914 = vsel %vm866, %v863, %v865
      %1107 = vrot.lane.b32.xlu0 %v530, 16
      %v1108 = vpop.permute.xlu0 %1107
      %1109 = vrot.lane.b32.xlu0 %v531, 16
      %v1110 = vpop.permute.xlu0 %1109
      %1111 = vrot.lane.b32.xlu0 %v532, 16
      %v1112 = vpop.permute.xlu0 %1111
      %1113 = vrot.lane.b32.xlu0 %v533, 16
      %v1114 = vpop.permute.xlu0 %1113
      %1115 = vrot.lane.b32.xlu0 %v534, 16
      %v1116 = vpop.permute.xlu0 %1115
      %1117 = vrot.lane.b32.xlu0 %v535, 16
      %v1118 = vpop.permute.xlu0 %1117
      %1119 = vrot.lane.b32.xlu0 %v536, 16
      %v1120 = vpop.permute.xlu0 %1119
      %1121 = vrot.lane.b32.xlu0 %v537, 16
      %v1122 = vpop.permute.xlu0 %1121
      %1123 = vrot.lane.b32.xlu0 %v538, 16
      %v1124 = vpop.permute.xlu0 %1123
      %1125 = vrot.lane.b32.xlu0 %v539, 16
      %v1126 = vpop.permute.xlu0 %1125
      %1127 = vrot.lane.b32.xlu0 %v540, 16
      %v1128 = vpop.permute.xlu0 %1127
      %1129 = vrot.lane.b32.xlu0 %v541, 16
      %v1130 = vpop.permute.xlu0 %1129
      %1131 = vrot.lane.b32.xlu0 %v542, 16
      %v1132 = vpop.permute.xlu0 %1131
      %1133 = vrot.lane.b32.xlu0 %v543, 16
      %v1134 = vpop.permute.xlu0 %1133
      %1135 = vrot.lane.b32.xlu0 %v544, 16
      %v1136 = vpop.permute.xlu0 %1135
      %1137 = vrot.lane.b32.xlu0 %v545, 16
      %v1138 = vpop.permute.xlu0 %1137
      %1139 = vrot.lane.b32.xlu0 %v546, 16
      %v1140 = vpop.permute.xlu0 %1139
      %1141 = vrot.lane.b32.xlu0 %v547, 16
      %v1142 = vpop.permute.xlu0 %1141
      %1143 = vrot.lane.b32.xlu0 %v548, 16
      %v1144 = vpop.permute.xlu0 %1143
      %1145 = vrot.lane.b32.xlu0 %v549, 16
      %v1146 = vpop.permute.xlu0 %1145
      %1147 = vrot.lane.b32.xlu0 %v550, 16
      %v1148 = vpop.permute.xlu0 %1147
      %1149 = vrot.lane.b32.xlu0 %v551, 16
      %v1150 = vpop.permute.xlu0 %1149
      %1151 = vrot.lane.b32.xlu0 %v552, 16
      %v1152 = vpop.permute.xlu0 %1151
      %1153 = vrot.lane.b32.xlu0 %v553, 16
      %v1154 = vpop.permute.xlu0 %1153
      %1155 = vrot.lane.b32.xlu0 %v554, 16
      %v1156 = vpop.permute.xlu0 %1155
      %1157 = vrot.lane.b32.xlu0 %v555, 16
      %v1158 = vpop.permute.xlu0 %1157
      %1159 = vrot.lane.b32.xlu0 %v556, 16
      %v1160 = vpop.permute.xlu0 %1159
      %1161 = vrot.lane.b32.xlu0 %v557, 16
      %v1162 = vpop.permute.xlu0 %1161
      %1163 = vrot.lane.b32.xlu0 %v558, 16
      %v1164 = vpop.permute.xlu0 %1163
      %1165 = vrot.lane.b32.xlu0 %v559, 16
      %v1166 = vpop.permute.xlu0 %1165
      %1167 = vrot.lane.b32.xlu0 %v560, 16
      %v1168 = vpop.permute.xlu0 %1167
      %1169 = vrot.lane.b32.xlu0 %v561, 16
      %v1170 = vpop.permute.xlu0 %1169
      %1171 = vrot.lane.b32.xlu0 %v562, 16
      %v1172 = vpop.permute.xlu0 %1171
      %1173 = vrot.lane.b32.xlu0 %v563, 16
      %v1174 = vpop.permute.xlu0 %1173
      %1175 = vrot.lane.b32.xlu0 %v564, 16
      %v1176 = vpop.permute.xlu0 %1175
      %1177 = vrot.lane.b32.xlu0 %v565, 16
      %v1178 = vpop.permute.xlu0 %1177
      %1179 = vrot.lane.b32.xlu0 %v566, 16
      %v1180 = vpop.permute.xlu0 %1179
      %1181 = vrot.lane.b32.xlu0 %v567, 16
      %v1182 = vpop.permute.xlu0 %1181
      %1183 = vrot.lane.b32.xlu0 %v568, 16
      %v1184 = vpop.permute.xlu0 %1183
      %1185 = vrot.lane.b32.xlu0 %v569, 16
      %v1186 = vpop.permute.xlu0 %1185
      %1187 = vrot.lane.b32.xlu0 %v570, 16
      %v1188 = vpop.permute.xlu0 %1187
      %1189 = vrot.lane.b32.xlu0 %v571, 16
      %v1190 = vpop.permute.xlu0 %1189
      %1191 = vrot.lane.b32.xlu0 %v572, 16
      %v1192 = vpop.permute.xlu0 %1191
      %1193 = vrot.lane.b32.xlu0 %v573, 16
      %v1194 = vpop.permute.xlu0 %1193
      %1195 = vrot.lane.b32.xlu0 %v574, 16
      %v1196 = vpop.permute.xlu0 %1195
      %1197 = vrot.lane.b32.xlu0 %v575, 16
      %v1198 = vpop.permute.xlu0 %1197
      %1199 = vrot.lane.b32.xlu0 %v576, 16
      %v1200 = vpop.permute.xlu0 %1199
      %1201 = vrot.lane.b32.xlu0 %v577, 16
      %v1202 = vpop.permute.xlu0 %1201
      %v1251 = vsel %vm866, %v386, %v675
      %v1252 = vsel %vm866, %v387, %v679
      %v1253 = vsel %vm866, %v388, %v683
      %v1254 = vsel %vm866, %v389, %v687
      %v1255 = vsel %vm866, %v390, %v691
      %v1256 = vsel %vm866, %v391, %v695
      %v1257 = vsel %vm866, %v392, %v699
      %v1258 = vsel %vm866, %v393, %v703
      %v1259 = vsel %vm866, %v394, %v707
      %v1260 = vsel %vm866, %v395, %v711
      %v1261 = vsel %vm866, %v396, %v715
      %v1262 = vsel %vm866, %v397, %v719
      %v1263 = vsel %vm866, %v398, %v723
      %v1264 = vsel %vm866, %v399, %v727
      %v1265 = vsel %vm866, %v400, %v731
      %v1266 = vsel %vm866, %v401, %v735
      %v1267 = vsel %vm866, %v402, %v739
      %v1268 = vsel %vm866, %v403, %v743
      %v1269 = vsel %vm866, %v404, %v747
      %v1270 = vsel %vm866, %v405, %v751
      %v1271 = vsel %vm866, %v406, %v755
      %v1272 = vsel %vm866, %v407, %v759
      %v1273 = vsel %vm866, %v408, %v763
      %v1274 = vsel %vm866, %v409, %v767
      %v1275 = vsel %vm866, %v410, %v771
      %v1276 = vsel %vm866, %v411, %v775
      %v1277 = vsel %vm866, %v412, %v779
      %v1278 = vsel %vm866, %v413, %v783
      %v1279 = vsel %vm866, %v414, %v787
      %v1280 = vsel %vm866, %v415, %v791
      %v1281 = vsel %vm866, %v416, %v795
      %v1282 = vsel %vm866, %v417, %v799
      %v1283 = vsel %vm866, %v418, %v803
      %v1284 = vsel %vm866, %v419, %v807
      %v1285 = vsel %vm866, %v420, %v811
      %v1286 = vsel %vm866, %v421, %v815
      %v1287 = vsel %vm866, %v422, %v819
      %v1288 = vsel %vm866, %v423, %v823
      %v1289 = vsel %vm866, %v424, %v827
      %v1290 = vsel %vm866, %v425, %v831
      %v1291 = vsel %vm866, %v426, %v835
      %v1292 = vsel %vm866, %v427, %v839
      %v1293 = vsel %vm866, %v428, %v843
      %v1294 = vsel %vm866, %v429, %v847
      %v1295 = vsel %vm866, %v430, %v851
      %v1296 = vsel %vm866, %v431, %v855
      %v1297 = vsel %vm866, %v432, %v859
      %v1298 = vsel %vm866, %v433, %v863
      %v1299 = vsel %vm866, %v677, %v1108
      %v1300 = vsel %vm866, %v681, %v1110
      %v1301 = vsel %vm866, %v685, %v1112
      %v1302 = vsel %vm866, %v689, %v1114
      %v1303 = vsel %vm866, %v693, %v1116
      %v1304 = vsel %vm866, %v697, %v1118
      %v1305 = vsel %vm866, %v701, %v1120
      %v1306 = vsel %vm866, %v705, %v1122
      %v1307 = vsel %vm866, %v709, %v1124
      %v1308 = vsel %vm866, %v713, %v1126
      %v1309 = vsel %vm866, %v717, %v1128
      %v1310 = vsel %vm866, %v721, %v1130
      %v1311 = vsel %vm866, %v725, %v1132
      %v1312 = vsel %vm866, %v729, %v1134
      %v1313 = vsel %vm866, %v733, %v1136
      %v1314 = vsel %vm866, %v737, %v1138
      %v1315 = vsel %vm866, %v741, %v1140
      %v1316 = vsel %vm866, %v745, %v1142
      %v1317 = vsel %vm866, %v749, %v1144
      %v1318 = vsel %vm866, %v753, %v1146
      %v1319 = vsel %vm866, %v757, %v1148
      %v1320 = vsel %vm866, %v761, %v1150
      %v1321 = vsel %vm866, %v765, %v1152
      %v1322 = vsel %vm866, %v769, %v1154
      %v1323 = vsel %vm866, %v773, %v1156
      %v1324 = vsel %vm866, %v777, %v1158
      %v1325 = vsel %vm866, %v781, %v1160
      %v1326 = vsel %vm866, %v785, %v1162
      %v1327 = vsel %vm866, %v789, %v1164
      %v1328 = vsel %vm866, %v793, %v1166
      %v1329 = vsel %vm866, %v797, %v1168
      %v1330 = vsel %vm866, %v801, %v1170
      %v1331 = vsel %vm866, %v805, %v1172
      %v1332 = vsel %vm866, %v809, %v1174
      %v1333 = vsel %vm866, %v813, %v1176
      %v1334 = vsel %vm866, %v817, %v1178
      %v1335 = vsel %vm866, %v821, %v1180
      %v1336 = vsel %vm866, %v825, %v1182
      %v1337 = vsel %vm866, %v829, %v1184
      %v1338 = vsel %vm866, %v833, %v1186
      %v1339 = vsel %vm866, %v837, %v1188
      %v1340 = vsel %vm866, %v841, %v1190
      %v1341 = vsel %vm866, %v845, %v1192
      %v1342 = vsel %vm866, %v849, %v1194
      %v1343 = vsel %vm866, %v853, %v1196
      %v1344 = vsel %vm866, %v857, %v1198
      %v1345 = vsel %vm866, %v861, %v1200
      %v1346 = vsel %vm866, %v865, %v1202
      %v1347 = vpack.c.bf16 %v1252, %v1251
      %v1348 = vpack.c.bf16 %v868, %v867
      %v1349 = vpack.c.bf16 %v1300, %v1299
      %v1350 = vpack.c.bf16 %v1254, %v1253
      %v1351 = vpack.c.bf16 %v870, %v869
      %v1352 = vpack.c.bf16 %v1302, %v1301
      %v1353 = vpack.c.bf16 %v1256, %v1255
      %v1354 = vpack.c.bf16 %v872, %v871
      %v1355 = vpack.c.bf16 %v1304, %v1303
      %v1356 = vpack.c.bf16 %v1258, %v1257
      %v1357 = vpack.c.bf16 %v874, %v873
      %v1358 = vpack.c.bf16 %v1306, %v1305
      %v1359 = vpack.c.bf16 %v1260, %v1259
      %v1360 = vpack.c.bf16 %v876, %v875
      %v1361 = vpack.c.bf16 %v1308, %v1307
      %v1362 = vpack.c.bf16 %v1262, %v1261
      %v1363 = vpack.c.bf16 %v878, %v877
      %v1364 = vpack.c.bf16 %v1310, %v1309
      %v1365 = vpack.c.bf16 %v1264, %v1263
      %v1366 = vpack.c.bf16 %v880, %v879
      %v1367 = vpack.c.bf16 %v1312, %v1311
      %v1368 = vpack.c.bf16 %v1266, %v1265
      %v1369 = vpack.c.bf16 %v882, %v881
      %v1370 = vpack.c.bf16 %v1314, %v1313
      %v1371 = vpack.c.bf16 %v1268, %v1267
      %v1372 = vpack.c.bf16 %v884, %v883
      %v1373 = vpack.c.bf16 %v1316, %v1315
      %v1374 = vpack.c.bf16 %v1270, %v1269
      %v1375 = vpack.c.bf16 %v886, %v885
      %v1376 = vpack.c.bf16 %v1318, %v1317
      %v1377 = vpack.c.bf16 %v1272, %v1271
      %v1378 = vpack.c.bf16 %v888, %v887
      %v1379 = vpack.c.bf16 %v1320, %v1319
      %v1380 = vpack.c.bf16 %v1274, %v1273
      %v1381 = vpack.c.bf16 %v890, %v889
      %v1382 = vpack.c.bf16 %v1322, %v1321
      %v1383 = vpack.c.bf16 %v1276, %v1275
      %v1384 = vpack.c.bf16 %v892, %v891
      %v1385 = vpack.c.bf16 %v1324, %v1323
      %v1386 = vpack.c.bf16 %v1278, %v1277
      %v1387 = vpack.c.bf16 %v894, %v893
      %v1388 = vpack.c.bf16 %v1326, %v1325
      %v1389 = vpack.c.bf16 %v1280, %v1279
      %v1390 = vpack.c.bf16 %v896, %v895
      %v1391 = vpack.c.bf16 %v1328, %v1327
      %v1392 = vpack.c.bf16 %v1282, %v1281
      %v1393 = vpack.c.bf16 %v898, %v897
      %v1394 = vpack.c.bf16 %v1330, %v1329
      %v1395 = vpack.c.bf16 %v1284, %v1283
      %v1396 = vpack.c.bf16 %v900, %v899
      %v1397 = vpack.c.bf16 %v1332, %v1331
      %v1398 = vpack.c.bf16 %v1286, %v1285
      %v1399 = vpack.c.bf16 %v902, %v901
      %v1400 = vpack.c.bf16 %v1334, %v1333
      %v1401 = vpack.c.bf16 %v1288, %v1287
      %v1402 = vpack.c.bf16 %v904, %v903
      %v1403 = vpack.c.bf16 %v1336, %v1335
      %v1404 = vpack.c.bf16 %v1290, %v1289
      %v1405 = vpack.c.bf16 %v906, %v905
      %v1406 = vpack.c.bf16 %v1338, %v1337
      %v1407 = vpack.c.bf16 %v1292, %v1291
      %v1408 = vpack.c.bf16 %v908, %v907
      %v1409 = vpack.c.bf16 %v1340, %v1339
      %v1410 = vpack.c.bf16 %v1294, %v1293
      %v1411 = vpack.c.bf16 %v910, %v909
      %v1412 = vpack.c.bf16 %v1342, %v1341
      %v1413 = vpack.c.bf16 %v1296, %v1295
      %v1414 = vpack.c.bf16 %v912, %v911
      %v1415 = vpack.c.bf16 %v1344, %v1343
      %v1416 = vpack.c.bf16 %v1298, %v1297
      %v1417 = vpack.c.bf16 %v914, %v913
      %v1418 = vpack.c.bf16 %v1346, %v1345
      %v1419 = vlaneseq
      %v1420 = vand.u32 %v1419, 127
      %v1421 = vadd.s32 %v1420, 128
      %v1422 = vadd.s32 %v1420, 256
      %vm1423 = vcmp.lt.s32.totalorder %v1420, 0
      %v1424 = vsub.s32 0, %v1420
      %v1425 = vsel %vm1423, %v1424, %v1420
      %v1426 = vshrl.u32 %v1425, 4
      %v1427 = vand.u32 %v1425, 15
      %v1428 = vsub.s32 0, %v1427
      %v1429 = vsel %vm1423, %v1428, %v1427
      %vm1430 = vcmp.lt.s32.totalorder %v1421, 0
      %v1431 = vsub.s32 0, %v1421
      %v1432 = vsel %vm1430, %v1431, %v1421
      %v1433 = vshrl.u32 %v1432, 4
      %v1434 = vand.u32 %v1432, 15
      %v1435 = vsub.s32 0, %v1434
      %v1436 = vsel %vm1430, %v1435, %v1434
      %vm1437 = vcmp.lt.s32.totalorder %v1422, 0
      %v1438 = vsub.s32 0, %v1422
      %v1439 = vsel %vm1437, %v1438, %v1422
      %v1440 = vshrl.u32 %v1439, 4
      %v1441 = vand.u32 %v1439, 15
      %v1442 = vsub.s32 0, %v1441
      %v1443 = vsel %vm1437, %v1442, %v1441
      %vm1444 = vcmp.ne.s32.totalorder %v1429, 0
      %vm1445 = vcmp.ne.s32.totalorder %v1436, 0
      %vm1446 = vcmp.ne.s32.totalorder %v1443, 0
      %vm1447 = vcmp.lt.s32.totalorder %v1429, 0
      %vm1448 = vcmp.lt.s32.totalorder %v1436, 0
      %vm1449 = vcmp.lt.s32.totalorder %v1443, 0
      %vm1450 = vmand %vm1447, %vm1444
      %vm1451 = vmand %vm1448, %vm1445
      %vm1452 = vmand %vm1449, %vm1446
      %v1453 = vadd.s32 %v1429, 16
      %v1454 = vadd.s32 %v1436, 16
      %v1455 = vadd.s32 %v1443, 16
      %v1456 = vsel %vm1450, %v1453, %v1429
      %v1457 = vsel %vm1451, %v1454, %v1436
      %v1458 = vsel %vm1452, %v1455, %v1443
      %vm1459 = vcmp.ne.s32.totalorder %v1456, 0
      %vm1460 = vcmp.ne.s32.totalorder %v1457, 0
      %vm1461 = vcmp.ne.s32.totalorder %v1458, 0
      %v1462 = vsel %vm1459, 1, 0
      %v1463 = vsel %vm1460, 1, 0
      %v1464 = vsel %vm1461, 1, 0
      %v1465 = vcvt.s32.f32 %v1462
      %v1466 = vcvt.s32.f32 %v1463
      %v1467 = vcvt.s32.f32 %v1464
      %v1468 = vpack.c.bf16 %v1465, %v1465
      %v1469 = vpack.c.bf16 %v1466, %v1466
      %v1470 = vpack.c.bf16 %v1467, %v1467
      %vm1471 = vcmp.ne.s32.totalorder %v1456, 15
      %vm1472 = vcmp.ne.s32.totalorder %v1457, 15
      %vm1473 = vcmp.ne.s32.totalorder %v1458, 15
      %v1474 = vsel %vm1471, 1, 0
      %v1475 = vsel %vm1472, 1, 0
      %v1476 = vsel %vm1473, 1, 0
      %v1477 = vcvt.s32.f32 %v1474
      %v1478 = vcvt.s32.f32 %v1475
      %v1479 = vcvt.s32.f32 %v1476
      %v1480 = vpack.c.bf16 %v1477, %v1477
      %v1481 = vpack.c.bf16 %v1478, %v1478
      %v1482 = vpack.c.bf16 %v1479, %v1479
      %1555 = vrot.lane.b32.xlu0 %v1347, 1
      %v1556 = vpop.permute.xlu0 %1555
      %1557 = vrot.lane.b32.xlu0 %v1348, 1
      %v1558 = vpop.permute.xlu0 %1557
      %1559 = vrot.lane.b32.xlu0 %v1349, 1
      %v1560 = vpop.permute.xlu0 %1559
      %1561 = vrot.lane.b32.xlu0 %v1350, 1
      %v1562 = vpop.permute.xlu0 %1561
      %1563 = vrot.lane.b32.xlu0 %v1351, 1
      %v1564 = vpop.permute.xlu0 %1563
      %1565 = vrot.lane.b32.xlu0 %v1352, 1
      %v1566 = vpop.permute.xlu0 %1565
      %1567 = vrot.lane.b32.xlu0 %v1353, 1
      %v1568 = vpop.permute.xlu0 %1567
      %1569 = vrot.lane.b32.xlu0 %v1354, 1
      %v1570 = vpop.permute.xlu0 %1569
      %1571 = vrot.lane.b32.xlu0 %v1355, 1
      %v1572 = vpop.permute.xlu0 %1571
      %1573 = vrot.lane.b32.xlu0 %v1356, 1
      %v1574 = vpop.permute.xlu0 %1573
      %1575 = vrot.lane.b32.xlu0 %v1357, 1
      %v1576 = vpop.permute.xlu0 %1575
      %1577 = vrot.lane.b32.xlu0 %v1358, 1
      %v1578 = vpop.permute.xlu0 %1577
      %1579 = vrot.lane.b32.xlu0 %v1359, 1
      %v1580 = vpop.permute.xlu0 %1579
      %1581 = vrot.lane.b32.xlu0 %v1360, 1
      %v1582 = vpop.permute.xlu0 %1581
      %1583 = vrot.lane.b32.xlu0 %v1361, 1
      %v1584 = vpop.permute.xlu0 %1583
      %1585 = vrot.lane.b32.xlu0 %v1362, 1
      %v1586 = vpop.permute.xlu0 %1585
      %1587 = vrot.lane.b32.xlu0 %v1363, 1
      %v1588 = vpop.permute.xlu0 %1587
      %1589 = vrot.lane.b32.xlu0 %v1364, 1
      %v1590 = vpop.permute.xlu0 %1589
      %1591 = vrot.lane.b32.xlu0 %v1365, 1
      %v1592 = vpop.permute.xlu0 %1591
      %1593 = vrot.lane.b32.xlu0 %v1366, 1
      %v1594 = vpop.permute.xlu0 %1593
      %1595 = vrot.lane.b32.xlu0 %v1367, 1
      %v1596 = vpop.permute.xlu0 %1595
      %1597 = vrot.lane.b32.xlu0 %v1368, 1
      %v1598 = vpop.permute.xlu0 %1597
      %1599 = vrot.lane.b32.xlu0 %v1369, 1
      %v1600 = vpop.permute.xlu0 %1599
      %1601 = vrot.lane.b32.xlu0 %v1370, 1
      %v1602 = vpop.permute.xlu0 %1601
      %1603 = vrot.lane.b32.xlu0 %v1371, 1
      %v1604 = vpop.permute.xlu0 %1603
      %1605 = vrot.lane.b32.xlu0 %v1372, 1
      %v1606 = vpop.permute.xlu0 %1605
      %1607 = vrot.lane.b32.xlu0 %v1373, 1
      %v1608 = vpop.permute.xlu0 %1607
      %1609 = vrot.lane.b32.xlu0 %v1374, 1
      %v1610 = vpop.permute.xlu0 %1609
      %1611 = vrot.lane.b32.xlu0 %v1375, 1
      %v1612 = vpop.permute.xlu0 %1611
      %1613 = vrot.lane.b32.xlu0 %v1376, 1
      %v1614 = vpop.permute.xlu0 %1613
      %1615 = vrot.lane.b32.xlu0 %v1377, 1
      %v1616 = vpop.permute.xlu0 %1615
      %1617 = vrot.lane.b32.xlu0 %v1378, 1
      %v1618 = vpop.permute.xlu0 %1617
      %1619 = vrot.lane.b32.xlu0 %v1379, 1
      %v1620 = vpop.permute.xlu0 %1619
      %1621 = vrot.lane.b32.xlu0 %v1380, 1
      %v1622 = vpop.permute.xlu0 %1621
      %1623 = vrot.lane.b32.xlu0 %v1381, 1
      %v1624 = vpop.permute.xlu0 %1623
      %1625 = vrot.lane.b32.xlu0 %v1382, 1
      %v1626 = vpop.permute.xlu0 %1625
      %1627 = vrot.lane.b32.xlu0 %v1383, 1
      %v1628 = vpop.permute.xlu0 %1627
      %1629 = vrot.lane.b32.xlu0 %v1384, 1
      %v1630 = vpop.permute.xlu0 %1629
      %1631 = vrot.lane.b32.xlu0 %v1385, 1
      %v1632 = vpop.permute.xlu0 %1631
      %1633 = vrot.lane.b32.xlu0 %v1386, 1
      %v1634 = vpop.permute.xlu0 %1633
      %1635 = vrot.lane.b32.xlu0 %v1387, 1
      %v1636 = vpop.permute.xlu0 %1635
      %1637 = vrot.lane.b32.xlu0 %v1388, 1
      %v1638 = vpop.permute.xlu0 %1637
      %1639 = vrot.lane.b32.xlu0 %v1389, 1
      %v1640 = vpop.permute.xlu0 %1639
      %1641 = vrot.lane.b32.xlu0 %v1390, 1
      %v1642 = vpop.permute.xlu0 %1641
      %1643 = vrot.lane.b32.xlu0 %v1391, 1
      %v1644 = vpop.permute.xlu0 %1643
      %1645 = vrot.lane.b32.xlu0 %v1392, 1
      %v1646 = vpop.permute.xlu0 %1645
      %1647 = vrot.lane.b32.xlu0 %v1393, 1
      %v1648 = vpop.permute.xlu0 %1647
      %1649 = vrot.lane.b32.xlu0 %v1394, 1
      %v1650 = vpop.permute.xlu0 %1649
      %1651 = vrot.lane.b32.xlu0 %v1395, 1
      %v1652 = vpop.permute.xlu0 %1651
      %1653 = vrot.lane.b32.xlu0 %v1396, 1
      %v1654 = vpop.permute.xlu0 %1653
      %1655 = vrot.lane.b32.xlu0 %v1397, 1
      %v1656 = vpop.permute.xlu0 %1655
      %1657 = vrot.lane.b32.xlu0 %v1398, 1
      %v1658 = vpop.permute.xlu0 %1657
      %1659 = vrot.lane.b32.xlu0 %v1399, 1
      %v1660 = vpop.permute.xlu0 %1659
      %1661 = vrot.lane.b32.xlu0 %v1400, 1
      %v1662 = vpop.permute.xlu0 %1661
      %1663 = vrot.lane.b32.xlu0 %v1401, 1
      %v1664 = vpop.permute.xlu0 %1663
      %1665 = vrot.lane.b32.xlu0 %v1402, 1
      %v1666 = vpop.permute.xlu0 %1665
      %1667 = vrot.lane.b32.xlu0 %v1403, 1
      %v1668 = vpop.permute.xlu0 %1667
      %1669 = vrot.lane.b32.xlu0 %v1404, 1
      %v1670 = vpop.permute.xlu0 %1669
      %1671 = vrot.lane.b32.xlu0 %v1405, 1
      %v1672 = vpop.permute.xlu0 %1671
      %1673 = vrot.lane.b32.xlu0 %v1406, 1
      %v1674 = vpop.permute.xlu0 %1673
      %1675 = vrot.lane.b32.xlu0 %v1407, 1
      %v1676 = vpop.permute.xlu0 %1675
      %1677 = vrot.lane.b32.xlu0 %v1408, 1
      %v1678 = vpop.permute.xlu0 %1677
      %1679 = vrot.lane.b32.xlu0 %v1409, 1
      %v1680 = vpop.permute.xlu0 %1679
      %1681 = vrot.lane.b32.xlu0 %v1410, 1
      %v1682 = vpop.permute.xlu0 %1681
      %1683 = vrot.lane.b32.xlu0 %v1411, 1
      %v1684 = vpop.permute.xlu0 %1683
      %1685 = vrot.lane.b32.xlu0 %v1412, 1
      %v1686 = vpop.permute.xlu0 %1685
      %1687 = vrot.lane.b32.xlu0 %v1413, 1
      %v1688 = vpop.permute.xlu0 %1687
      %1689 = vrot.lane.b32.xlu0 %v1414, 1
      %v1690 = vpop.permute.xlu0 %1689
      %1691 = vrot.lane.b32.xlu0 %v1415, 1
      %v1692 = vpop.permute.xlu0 %1691
      %1693 = vrot.lane.b32.xlu0 %v1416, 1
      %v1694 = vpop.permute.xlu0 %1693
      %1695 = vrot.lane.b32.xlu0 %v1417, 1
      %v1696 = vpop.permute.xlu0 %1695
      %1697 = vrot.lane.b32.xlu0 %v1418, 1
      %v1698 = vpop.permute.xlu0 %1697
      %vm1699 = vcmask 7168
      %v1700 = vsel %vm1699, %v1556, %v1558
      %v1701 = vsel %vm1699, %v1558, %v1560
      %v1702 = vsel %vm1699, %v1562, %v1564
      %v1703 = vsel %vm1699, %v1564, %v1566
      %v1704 = vsel %vm1699, %v1568, %v1570
      %v1705 = vsel %vm1699, %v1570, %v1572
      %v1706 = vsel %vm1699, %v1574, %v1576
      %v1707 = vsel %vm1699, %v1576, %v1578
      %v1708 = vsel %vm1699, %v1580, %v1582
      %v1709 = vsel %vm1699, %v1582, %v1584
      %v1710 = vsel %vm1699, %v1586, %v1588
      %v1711 = vsel %vm1699, %v1588, %v1590
      %v1712 = vsel %vm1699, %v1592, %v1594
      %v1713 = vsel %vm1699, %v1594, %v1596
      %v1714 = vsel %vm1699, %v1598, %v1600
      %v1715 = vsel %vm1699, %v1600, %v1602
      %v1716 = vsel %vm1699, %v1604, %v1606
      %v1717 = vsel %vm1699, %v1606, %v1608
      %v1718 = vsel %vm1699, %v1610, %v1612
      %v1719 = vsel %vm1699, %v1612, %v1614
      %v1720 = vsel %vm1699, %v1616, %v1618
      %v1721 = vsel %vm1699, %v1618, %v1620
      %v1722 = vsel %vm1699, %v1622, %v1624
      %v1723 = vsel %vm1699, %v1624, %v1626
      %v1724 = vsel %vm1699, %v1628, %v1630
      %v1725 = vsel %vm1699, %v1630, %v1632
      %v1726 = vsel %vm1699, %v1634, %v1636
      %v1727 = vsel %vm1699, %v1636, %v1638
      %v1728 = vsel %vm1699, %v1640, %v1642
      %v1729 = vsel %vm1699, %v1642, %v1644
      %v1730 = vsel %vm1699, %v1646, %v1648
      %v1731 = vsel %vm1699, %v1648, %v1650
      %v1732 = vsel %vm1699, %v1652, %v1654
      %v1733 = vsel %vm1699, %v1654, %v1656
      %v1734 = vsel %vm1699, %v1658, %v1660
      %v1735 = vsel %vm1699, %v1660, %v1662
      %v1736 = vsel %vm1699, %v1664, %v1666
      %v1737 = vsel %vm1699, %v1666, %v1668
      %v1738 = vsel %vm1699, %v1670, %v1672
      %v1739 = vsel %vm1699, %v1672, %v1674
      %v1740 = vsel %vm1699, %v1676, %v1678
      %v1741 = vsel %vm1699, %v1678, %v1680
      %v1742 = vsel %vm1699, %v1682, %v1684
      %v1743 = vsel %vm1699, %v1684, %v1686
      %v1744 = vsel %vm1699, %v1688, %v1690
      %v1745 = vsel %vm1699, %v1690, %v1692
      %v1746 = vsel %vm1699, %v1694, %v1696
      %v1747 = vsel %vm1699, %v1696, %v1698
      %vm1796 = vcmask 7168
      %v1799 = vsel %vm1796, 0, %v1556
      %v1802 = vsel %vm1796, 0, %v1562
      %v1805 = vsel %vm1796, 0, %v1568
      %v1808 = vsel %vm1796, 0, %v1574
      %v1811 = vsel %vm1796, 0, %v1580
      %v1814 = vsel %vm1796, 0, %v1586
      %v1817 = vsel %vm1796, 0, %v1592
      %v1820 = vsel %vm1796, 0, %v1598
      %v1823 = vsel %vm1796, 0, %v1604
      %v1826 = vsel %vm1796, 0, %v1610
      %v1829 = vsel %vm1796, 0, %v1616
      %v1832 = vsel %vm1796, 0, %v1622
      %v1835 = vsel %vm1796, 0, %v1628
      %v1838 = vsel %vm1796, 0, %v1634
      %v1841 = vsel %vm1796, 0, %v1640
      %v1844 = vsel %vm1796, 0, %v1646
      %v1847 = vsel %vm1796, 0, %v1652
      %v1850 = vsel %vm1796, 0, %v1658
      %v1853 = vsel %vm1796, 0, %v1664
      %v1856 = vsel %vm1796, 0, %v1670
      %v1859 = vsel %vm1796, 0, %v1676
      %v1862 = vsel %vm1796, 0, %v1682
      %v1865 = vsel %vm1796, 0, %v1688
      %v1868 = vsel %vm1796, 0, %v1694
      %1870 = vrot.lane.b32.xlu0 %v1347, 127
      %v1871 = vpop.permute.xlu0 %1870
      %1872 = vrot.lane.b32.xlu0 %v1348, 127
      %v1873 = vpop.permute.xlu0 %1872
      %1874 = vrot.lane.b32.xlu0 %v1349, 127
      %v1875 = vpop.permute.xlu0 %1874
      %1876 = vrot.lane.b32.xlu0 %v1350, 127
      %v1877 = vpop.permute.xlu0 %1876
      %1878 = vrot.lane.b32.xlu0 %v1351, 127
      %v1879 = vpop.permute.xlu0 %1878
      %1880 = vrot.lane.b32.xlu0 %v1352, 127
      %v1881 = vpop.permute.xlu0 %1880
      %1882 = vrot.lane.b32.xlu0 %v1353, 127
      %v1883 = vpop.permute.xlu0 %1882
      %1884 = vrot.lane.b32.xlu0 %v1354, 127
      %v1885 = vpop.permute.xlu0 %1884
      %1886 = vrot.lane.b32.xlu0 %v1355, 127
      %v1887 = vpop.permute.xlu0 %1886
      %1888 = vrot.lane.b32.xlu0 %v1356, 127
      %v1889 = vpop.permute.xlu0 %1888
      %1890 = vrot.lane.b32.xlu0 %v1357, 127
      %v1891 = vpop.permute.xlu0 %1890
      %1892 = vrot.lane.b32.xlu0 %v1358, 127
      %v1893 = vpop.permute.xlu0 %1892
      %1894 = vrot.lane.b32.xlu0 %v1359, 127
      %v1895 = vpop.permute.xlu0 %1894
      %1896 = vrot.lane.b32.xlu0 %v1360, 127
      %v1897 = vpop.permute.xlu0 %1896
      %1898 = vrot.lane.b32.xlu0 %v1361, 127
      %v1899 = vpop.permute.xlu0 %1898
      %1900 = vrot.lane.b32.xlu0 %v1362, 127
      %v1901 = vpop.permute.xlu0 %1900
      %1902 = vrot.lane.b32.xlu0 %v1363, 127
      %v1903 = vpop.permute.xlu0 %1902
      %1904 = vrot.lane.b32.xlu0 %v1364, 127
      %v1905 = vpop.permute.xlu0 %1904
      %1906 = vrot.lane.b32.xlu0 %v1365, 127
      %v1907 = vpop.permute.xlu0 %1906
      %1908 = vrot.lane.b32.xlu0 %v1366, 127
      %v1909 = vpop.permute.xlu0 %1908
      %1910 = vrot.lane.b32.xlu0 %v1367, 127
      %v1911 = vpop.permute.xlu0 %1910
      %1912 = vrot.lane.b32.xlu0 %v1368, 127
      %v1913 = vpop.permute.xlu0 %1912
      %1914 = vrot.lane.b32.xlu0 %v1369, 127
      %v1915 = vpop.permute.xlu0 %1914
      %1916 = vrot.lane.b32.xlu0 %v1370, 127
      %v1917 = vpop.permute.xlu0 %1916
      %1918 = vrot.lane.b32.xlu0 %v1371, 127
      %v1919 = vpop.permute.xlu0 %1918
      %1920 = vrot.lane.b32.xlu0 %v1372, 127
      %v1921 = vpop.permute.xlu0 %1920
      %1922 = vrot.lane.b32.xlu0 %v1373, 127
      %v1923 = vpop.permute.xlu0 %1922
      %1924 = vrot.lane.b32.xlu0 %v1374, 127
      %v1925 = vpop.permute.xlu0 %1924
      %1926 = vrot.lane.b32.xlu0 %v1375, 127
      %v1927 = vpop.permute.xlu0 %1926
      %1928 = vrot.lane.b32.xlu0 %v1376, 127
      %v1929 = vpop.permute.xlu0 %1928
      %1930 = vrot.lane.b32.xlu0 %v1377, 127
      %v1931 = vpop.permute.xlu0 %1930
      %1932 = vrot.lane.b32.xlu0 %v1378, 127
      %v1933 = vpop.permute.xlu0 %1932
      %1934 = vrot.lane.b32.xlu0 %v1379, 127
      %v1935 = vpop.permute.xlu0 %1934
      %1936 = vrot.lane.b32.xlu0 %v1380, 127
      %v1937 = vpop.permute.xlu0 %1936
      %1938 = vrot.lane.b32.xlu0 %v1381, 127
      %v1939 = vpop.permute.xlu0 %1938
      %1940 = vrot.lane.b32.xlu0 %v1382, 127
      %v1941 = vpop.permute.xlu0 %1940
      %1942 = vrot.lane.b32.xlu0 %v1383, 127
      %v1943 = vpop.permute.xlu0 %1942
      %1944 = vrot.lane.b32.xlu0 %v1384, 127
      %v1945 = vpop.permute.xlu0 %1944
      %1946 = vrot.lane.b32.xlu0 %v1385, 127
      %v1947 = vpop.permute.xlu0 %1946
      %1948 = vrot.lane.b32.xlu0 %v1386, 127
      %v1949 = vpop.permute.xlu0 %1948
      %1950 = vrot.lane.b32.xlu0 %v1387, 127
      %v1951 = vpop.permute.xlu0 %1950
      %1952 = vrot.lane.b32.xlu0 %v1388, 127
      %v1953 = vpop.permute.xlu0 %1952
      %1954 = vrot.lane.b32.xlu0 %v1389, 127
      %v1955 = vpop.permute.xlu0 %1954
      %1956 = vrot.lane.b32.xlu0 %v1390, 127
      %v1957 = vpop.permute.xlu0 %1956
      %1958 = vrot.lane.b32.xlu0 %v1391, 127
      %v1959 = vpop.permute.xlu0 %1958
      %1960 = vrot.lane.b32.xlu0 %v1392, 127
      %v1961 = vpop.permute.xlu0 %1960
      %1962 = vrot.lane.b32.xlu0 %v1393, 127
      %v1963 = vpop.permute.xlu0 %1962
      %1964 = vrot.lane.b32.xlu0 %v1394, 127
      %v1965 = vpop.permute.xlu0 %1964
      %1966 = vrot.lane.b32.xlu0 %v1395, 127
      %v1967 = vpop.permute.xlu0 %1966
      %1968 = vrot.lane.b32.xlu0 %v1396, 127
      %v1969 = vpop.permute.xlu0 %1968
      %1970 = vrot.lane.b32.xlu0 %v1397, 127
      %v1971 = vpop.permute.xlu0 %1970
      %1972 = vrot.lane.b32.xlu0 %v1398, 127
      %v1973 = vpop.permute.xlu0 %1972
      %1974 = vrot.lane.b32.xlu0 %v1399, 127
      %v1975 = vpop.permute.xlu0 %1974
      %1976 = vrot.lane.b32.xlu0 %v1400, 127
      %v1977 = vpop.permute.xlu0 %1976
      %1978 = vrot.lane.b32.xlu0 %v1401, 127
      %v1979 = vpop.permute.xlu0 %1978
      %1980 = vrot.lane.b32.xlu0 %v1402, 127
      %v1981 = vpop.permute.xlu0 %1980
      %1982 = vrot.lane.b32.xlu0 %v1403, 127
      %v1983 = vpop.permute.xlu0 %1982
      %1984 = vrot.lane.b32.xlu0 %v1404, 127
      %v1985 = vpop.permute.xlu0 %1984
      %1986 = vrot.lane.b32.xlu0 %v1405, 127
      %v1987 = vpop.permute.xlu0 %1986
      %1988 = vrot.lane.b32.xlu0 %v1406, 127
      %v1989 = vpop.permute.xlu0 %1988
      %1990 = vrot.lane.b32.xlu0 %v1407, 127
      %v1991 = vpop.permute.xlu0 %1990
      %1992 = vrot.lane.b32.xlu0 %v1408, 127
      %v1993 = vpop.permute.xlu0 %1992
      %1994 = vrot.lane.b32.xlu0 %v1409, 127
      %v1995 = vpop.permute.xlu0 %1994
      %1996 = vrot.lane.b32.xlu0 %v1410, 127
      %v1997 = vpop.permute.xlu0 %1996
      %1998 = vrot.lane.b32.xlu0 %v1411, 127
      %v1999 = vpop.permute.xlu0 %1998
      %2000 = vrot.lane.b32.xlu0 %v1412, 127
      %v2001 = vpop.permute.xlu0 %2000
      %2002 = vrot.lane.b32.xlu0 %v1413, 127
      %v2003 = vpop.permute.xlu0 %2002
      %2004 = vrot.lane.b32.xlu0 %v1414, 127
      %v2005 = vpop.permute.xlu0 %2004
      %2006 = vrot.lane.b32.xlu0 %v1415, 127
      %v2007 = vpop.permute.xlu0 %2006
      %2008 = vrot.lane.b32.xlu0 %v1416, 127
      %v2009 = vpop.permute.xlu0 %2008
      %2010 = vrot.lane.b32.xlu0 %v1417, 127
      %v2011 = vpop.permute.xlu0 %2010
      %2012 = vrot.lane.b32.xlu0 %v1418, 127
      %v2013 = vpop.permute.xlu0 %2012
      %vm2014 = vcmask 1039360
      %v2015 = vsel %vm2014, %v1871, %v1873
      %v2016 = vsel %vm2014, %v1873, %v1875
      %v2017 = vsel %vm2014, %v1877, %v1879
      %v2018 = vsel %vm2014, %v1879, %v1881
      %v2019 = vsel %vm2014, %v1883, %v1885
      %v2020 = vsel %vm2014, %v1885, %v1887
      %v2021 = vsel %vm2014, %v1889, %v1891
      %v2022 = vsel %vm2014, %v1891, %v1893
      %v2023 = vsel %vm2014, %v1895, %v1897
      %v2024 = vsel %vm2014, %v1897, %v1899
      %v2025 = vsel %vm2014, %v1901, %v1903
      %v2026 = vsel %vm2014, %v1903, %v1905
      %v2027 = vsel %vm2014, %v1907, %v1909
      %v2028 = vsel %vm2014, %v1909, %v1911
      %v2029 = vsel %vm2014, %v1913, %v1915
      %v2030 = vsel %vm2014, %v1915, %v1917
      %v2031 = vsel %vm2014, %v1919, %v1921
      %v2032 = vsel %vm2014, %v1921, %v1923
      %v2033 = vsel %vm2014, %v1925, %v1927
      %v2034 = vsel %vm2014, %v1927, %v1929
      %v2035 = vsel %vm2014, %v1931, %v1933
      %v2036 = vsel %vm2014, %v1933, %v1935
      %v2037 = vsel %vm2014, %v1937, %v1939
      %v2038 = vsel %vm2014, %v1939, %v1941
      %v2039 = vsel %vm2014, %v1943, %v1945
      %v2040 = vsel %vm2014, %v1945, %v1947
      %v2041 = vsel %vm2014, %v1949, %v1951
      %v2042 = vsel %vm2014, %v1951, %v1953
      %v2043 = vsel %vm2014, %v1955, %v1957
      %v2044 = vsel %vm2014, %v1957, %v1959
      %v2045 = vsel %vm2014, %v1961, %v1963
      %v2046 = vsel %vm2014, %v1963, %v1965
      %v2047 = vsel %vm2014, %v1967, %v1969
      %v2048 = vsel %vm2014, %v1969, %v1971
      %v2049 = vsel %vm2014, %v1973, %v1975
      %v2050 = vsel %vm2014, %v1975, %v1977
      %v2051 = vsel %vm2014, %v1979, %v1981
      %v2052 = vsel %vm2014, %v1981, %v1983
      %v2053 = vsel %vm2014, %v1985, %v1987
      %v2054 = vsel %vm2014, %v1987, %v1989
      %v2055 = vsel %vm2014, %v1991, %v1993
      %v2056 = vsel %vm2014, %v1993, %v1995
      %v2057 = vsel %vm2014, %v1997, %v1999
      %v2058 = vsel %vm2014, %v1999, %v2001
      %v2059 = vsel %vm2014, %v2003, %v2005
      %v2060 = vsel %vm2014, %v2005, %v2007
      %v2061 = vsel %vm2014, %v2009, %v2011
      %v2062 = vsel %vm2014, %v2011, %v2013
      %vm2111 = vcmask 252928
      %v2113 = vsel %vm2111, %v1875, 0
      %v2116 = vsel %vm2111, %v1881, 0
      %v2119 = vsel %vm2111, %v1887, 0
      %v2122 = vsel %vm2111, %v1893, 0
      %v2125 = vsel %vm2111, %v1899, 0
      %v2128 = vsel %vm2111, %v1905, 0
      %v2131 = vsel %vm2111, %v1911, 0
      %v2134 = vsel %vm2111, %v1917, 0
      %v2137 = vsel %vm2111, %v1923, 0
      %v2140 = vsel %vm2111, %v1929, 0
      %v2143 = vsel %vm2111, %v1935, 0
      %v2146 = vsel %vm2111, %v1941, 0
      %v2149 = vsel %vm2111, %v1947, 0
      %v2152 = vsel %vm2111, %v1953, 0
      %v2155 = vsel %vm2111, %v1959, 0
      %v2158 = vsel %vm2111, %v1965, 0
      %v2161 = vsel %vm2111, %v1971, 0
      %v2164 = vsel %vm2111, %v1977, 0
      %v2167 = vsel %vm2111, %v1983, 0
      %v2170 = vsel %vm2111, %v1989, 0
      %v2173 = vsel %vm2111, %v1995, 0
      %v2176 = vsel %vm2111, %v2001, 0
      %v2179 = vsel %vm2111, %v2007, 0
      %v2182 = vsel %vm2111, %v2013, 0
      %v2184 = vmul.bf16 %v1799, %v1468
      %v2185 = vmul.bf16 %v1700, %v1469
      %v2186 = vmul.bf16 %v1701, %v1470
      %v2187 = vmul.bf16 %v1802, %v1468
      %v2188 = vmul.bf16 %v1702, %v1469
      %v2189 = vmul.bf16 %v1703, %v1470
      %v2190 = vmul.bf16 %v1805, %v1468
      %v2191 = vmul.bf16 %v1704, %v1469
      %v2192 = vmul.bf16 %v1705, %v1470
      %v2193 = vmul.bf16 %v1808, %v1468
      %v2194 = vmul.bf16 %v1706, %v1469
      %v2195 = vmul.bf16 %v1707, %v1470
      %v2196 = vmul.bf16 %v1811, %v1468
      %v2197 = vmul.bf16 %v1708, %v1469
      %v2198 = vmul.bf16 %v1709, %v1470
      %v2199 = vmul.bf16 %v1814, %v1468
      %v2200 = vmul.bf16 %v1710, %v1469
      %v2201 = vmul.bf16 %v1711, %v1470
      %v2202 = vmul.bf16 %v1817, %v1468
      %v2203 = vmul.bf16 %v1712, %v1469
      %v2204 = vmul.bf16 %v1713, %v1470
      %v2205 = vmul.bf16 %v1820, %v1468
      %v2206 = vmul.bf16 %v1714, %v1469
      %v2207 = vmul.bf16 %v1715, %v1470
      %v2208 = vmul.bf16 %v1823, %v1468
      %v2209 = vmul.bf16 %v1716, %v1469
      %v2210 = vmul.bf16 %v1717, %v1470
      %v2211 = vmul.bf16 %v1826, %v1468
      %v2212 = vmul.bf16 %v1718, %v1469
      %v2213 = vmul.bf16 %v1719, %v1470
      %v2214 = vmul.bf16 %v1829, %v1468
      %v2215 = vmul.bf16 %v1720, %v1469
      %v2216 = vmul.bf16 %v1721, %v1470
      %v2217 = vmul.bf16 %v1832, %v1468
      %v2218 = vmul.bf16 %v1722, %v1469
      %v2219 = vmul.bf16 %v1723, %v1470
      %v2220 = vmul.bf16 %v1835, %v1468
      %v2221 = vmul.bf16 %v1724, %v1469
      %v2222 = vmul.bf16 %v1725, %v1470
      %v2223 = vmul.bf16 %v1838, %v1468
      %v2224 = vmul.bf16 %v1726, %v1469
      %v2225 = vmul.bf16 %v1727, %v1470
      %v2226 = vmul.bf16 %v1841, %v1468
      %v2227 = vmul.bf16 %v1728, %v1469
      %v2228 = vmul.bf16 %v1729, %v1470
      %v2229 = vmul.bf16 %v1844, %v1468
      %v2230 = vmul.bf16 %v1730, %v1469
      %v2231 = vmul.bf16 %v1731, %v1470
      %v2232 = vmul.bf16 %v1847, %v1468
      %v2233 = vmul.bf16 %v1732, %v1469
      %v2234 = vmul.bf16 %v1733, %v1470
      %v2235 = vmul.bf16 %v1850, %v1468
      %v2236 = vmul.bf16 %v1734, %v1469
      %v2237 = vmul.bf16 %v1735, %v1470
      %v2238 = vmul.bf16 %v1853, %v1468
      %v2239 = vmul.bf16 %v1736, %v1469
      %v2240 = vmul.bf16 %v1737, %v1470
      %v2241 = vmul.bf16 %v1856, %v1468
      %v2242 = vmul.bf16 %v1738, %v1469
      %v2243 = vmul.bf16 %v1739, %v1470
      %v2244 = vmul.bf16 %v1859, %v1468
      %v2245 = vmul.bf16 %v1740, %v1469
      %v2246 = vmul.bf16 %v1741, %v1470
      %v2247 = vmul.bf16 %v1862, %v1468
      %v2248 = vmul.bf16 %v1742, %v1469
      %v2249 = vmul.bf16 %v1743, %v1470
      %v2250 = vmul.bf16 %v1865, %v1468
      %v2251 = vmul.bf16 %v1744, %v1469
      %v2252 = vmul.bf16 %v1745, %v1470
      %v2253 = vmul.bf16 %v1868, %v1468
      %v2254 = vmul.bf16 %v1746, %v1469
      %v2255 = vmul.bf16 %v1747, %v1470
      %2256 = vst [vmem:[#allocation2] sm:$0xff] %v2184
      %2257 = vst [vmem:[#allocation2 + $0x8] sm:$0xff] %v2185
      %vm2258 = vcmask 261120
      %2259 = vst.msk [vmem:[#allocation2 + $0x10] sm:$0xff] %vm2258, %v2186
      %2260 = vst [vmem:[#allocation2 + $0x18] sm:$0xff] %v2187
      %2261 = vst [vmem:[#allocation2 + $0x20] sm:$0xff] %v2188
      %2262 = vst.msk [vmem:[#allocation2 + $0x28] sm:$0xff] %vm2258, %v2189
      %2263 = vst [vmem:[#allocation2 + $0x30] sm:$0xff] %v2190
      %2264 = vst [vmem:[#allocation2 + $0x38] sm:$0xff] %v2191
      %2265 = vst.msk [vmem:[#allocation2 + $0x40] sm:$0xff] %vm2258, %v2192
      %2266 = vst [vmem:[#allocation2 + $0x48] sm:$0xff] %v2193
      %2267 = vst [vmem:[#allocation2 + $0x50] sm:$0xff] %v2194
      %2268 = vst.msk [vmem:[#allocation2 + $0x58] sm:$0xff] %vm2258, %v2195
      %2269 = vst [vmem:[#allocation2 + $0x60] sm:$0xff] %v2196
      %2270 = vst [vmem:[#allocation2 + $0x68] sm:$0xff] %v2197
      %2271 = vst.msk [vmem:[#allocation2 + $0x70] sm:$0xff] %vm2258, %v2198
      %2272 = vst [vmem:[#allocation2 + $0x78] sm:$0xff] %v2199
      %2273 = vst [vmem:[#allocation2 + $0x80] sm:$0xff] %v2200
      %2274 = vst.msk [vmem:[#allocation2 + $0x88] sm:$0xff] %vm2258, %v2201
      %2275 = vst [vmem:[#allocation2 + $0x90] sm:$0xff] %v2202
      %2276 = vst [vmem:[#allocation2 + $0x98] sm:$0xff] %v2203
      %2277 = vst.msk [vmem:[#allocation2 + $0xa0] sm:$0xff] %vm2258, %v2204
      %2278 = vst [vmem:[#allocation2 + $0xa8] sm:$0xff] %v2205
      %2279 = vst [vmem:[#allocation2 + $0xb0] sm:$0xff] %v2206
      %2280 = vst.msk [vmem:[#allocation2 + $0xb8] sm:$0xff] %vm2258, %v2207
      %2281 = vst [vmem:[#allocation2 + $0xc0] sm:$0xff] %v2208
      %2282 = vst [vmem:[#allocation2 + $0xc8] sm:$0xff] %v2209
      %2283 = vst.msk [vmem:[#allocation2 + $0xd0] sm:$0xff] %vm2258, %v2210
      %2284 = vst [vmem:[#allocation2 + $0xd8] sm:$0xff] %v2211
      %2285 = vst [vmem:[#allocation2 + $0xe0] sm:$0xff] %v2212
      %2286 = vst.msk [vmem:[#allocation2 + $0xe8] sm:$0xff] %vm2258, %v2213
      %2287 = vst [vmem:[#allocation2 + $0xf0] sm:$0xff] %v2214
      %2288 = vst [vmem:[#allocation2 + $0xf8] sm:$0xff] %v2215
      %2289 = vst.msk [vmem:[#allocation2 + $0x100] sm:$0xff] %vm2258, %v2216
      %2290 = vst [vmem:[#allocation2 + $0x108] sm:$0xff] %v2217
      %2291 = vst [vmem:[#allocation2 + $0x110] sm:$0xff] %v2218
      %2292 = vst.msk [vmem:[#allocation2 + $0x118] sm:$0xff] %vm2258, %v2219
      %2293 = vst [vmem:[#allocation2 + $0x120] sm:$0xff] %v2220
      %2294 = vst [vmem:[#allocation2 + $0x128] sm:$0xff] %v2221
      %2295 = vst.msk [vmem:[#allocation2 + $0x130] sm:$0xff] %vm2258, %v2222
      %2296 = vst [vmem:[#allocation2 + $0x138] sm:$0xff] %v2223
      %2297 = vst [vmem:[#allocation2 + $0x140] sm:$0xff] %v2224
      %2298 = vst.msk [vmem:[#allocation2 + $0x148] sm:$0xff] %vm2258, %v2225
      %2299 = vst [vmem:[#allocation2 + $0x150] sm:$0xff] %v2226
      %2300 = vst [vmem:[#allocation2 + $0x158] sm:$0xff] %v2227
      %2301 = vst.msk [vmem:[#allocation2 + $0x160] sm:$0xff] %vm2258, %v2228
      %2302 = vst [vmem:[#allocation2 + $0x168] sm:$0xff] %v2229
      %2303 = vst [vmem:[#allocation2 + $0x170] sm:$0xff] %v2230
      %2304 = vst.msk [vmem:[#allocation2 + $0x178] sm:$0xff] %vm2258, %v2231
      %2305 = vst [vmem:[#allocation2 + $0x180] sm:$0xff] %v2232
      %2306 = vst [vmem:[#allocation2 + $0x188] sm:$0xff] %v2233
      %2307 = vst.msk [vmem:[#allocation2 + $0x190] sm:$0xff] %vm2258, %v2234
      %2308 = vst [vmem:[#allocation2 + $0x198] sm:$0xff] %v2235
      %2309 = vst [vmem:[#allocation2 + $0x1a0] sm:$0xff] %v2236
      %2310 = vst.msk [vmem:[#allocation2 + $0x1a8] sm:$0xff] %vm2258, %v2237
      %2311 = vst [vmem:[#allocation2 + $0x1b0] sm:$0xff] %v2238
      %2312 = vst [vmem:[#allocation2 + $0x1b8] sm:$0xff] %v2239
      %2313 = vst.msk [vmem:[#allocation2 + $0x1c0] sm:$0xff] %vm2258, %v2240
      %2314 = vst [vmem:[#allocation2 + $0x1c8] sm:$0xff] %v2241
      %2315 = vst [vmem:[#allocation2 + $0x1d0] sm:$0xff] %v2242
      %2316 = vst.msk [vmem:[#allocation2 + $0x1d8] sm:$0xff] %vm2258, %v2243
      %2317 = vst [vmem:[#allocation2 + $0x1e0] sm:$0xff] %v2244
      %2318 = vst [vmem:[#allocation2 + $0x1e8] sm:$0xff] %v2245
      %2319 = vst.msk [vmem:[#allocation2 + $0x1f0] sm:$0xff] %vm2258, %v2246
      %2320 = vst [vmem:[#allocation2 + $0x1f8] sm:$0xff] %v2247
      %2321 = vst [vmem:[#allocation2 + $0x200] sm:$0xff] %v2248
      %2322 = vst.msk [vmem:[#allocation2 + $0x208] sm:$0xff] %vm2258, %v2249
      %2323 = vst [vmem:[#allocation2 + $0x210] sm:$0xff] %v2250
      %2324 = vst [vmem:[#allocation2 + $0x218] sm:$0xff] %v2251
      %2325 = vst.msk [vmem:[#allocation2 + $0x220] sm:$0xff] %vm2258, %v2252
      %2326 = vst [vmem:[#allocation2 + $0x228] sm:$0xff] %v2253
      %2327 = vst [vmem:[#allocation2 + $0x230] sm:$0xff] %v2254
      %2328 = vst.msk [vmem:[#allocation2 + $0x238] sm:$0xff] %vm2258, %v2255
      %2329 = vst [vmem:[#allocation2 + $0x240] sm:$0xff] %v1347
      %2330 = vst [vmem:[#allocation2 + $0x248] sm:$0xff] %v1348
      %2331 = vst.msk [vmem:[#allocation2 + $0x250] sm:$0xff] %vm2258, %v1349
      %2332 = vst [vmem:[#allocation2 + $0x258] sm:$0xff] %v1350
      %2333 = vst [vmem:[#allocation2 + $0x260] sm:$0xff] %v1351
      %2334 = vst.msk [vmem:[#allocation2 + $0x268] sm:$0xff] %vm2258, %v1352
      %2335 = vst [vmem:[#allocation2 + $0x270] sm:$0xff] %v1353
      %2336 = vst [vmem:[#allocation2 + $0x278] sm:$0xff] %v1354
      %2337 = vst.msk [vmem:[#allocation2 + $0x280] sm:$0xff] %vm2258, %v1355
      %2338 = vst [vmem:[#allocation2 + $0x288] sm:$0xff] %v1356
      %2339 = vst [vmem:[#allocation2 + $0x290] sm:$0xff] %v1357
      %2340 = vst.msk [vmem:[#allocation2 + $0x298] sm:$0xff] %vm2258, %v1358
      %2341 = vst [vmem:[#allocation2 + $0x2a0] sm:$0xff] %v1359
      %2342 = vst [vmem:[#allocation2 + $0x2a8] sm:$0xff] %v1360
      %2343 = vst.msk [vmem:[#allocation2 + $0x2b0] sm:$0xff] %vm2258, %v1361
      %2344 = vst [vmem:[#allocation2 + $0x2b8] sm:$0xff] %v1362
      %2345 = vst [vmem:[#allocation2 + $0x2c0] sm:$0xff] %v1363
      %2346 = vst.msk [vmem:[#allocation2 + $0x2c8] sm:$0xff] %vm2258, %v1364
      %2347 = vst [vmem:[#allocation2 + $0x2d0] sm:$0xff] %v1365
      %2348 = vst [vmem:[#allocation2 + $0x2d8] sm:$0xff] %v1366
      %2349 = vst.msk [vmem:[#allocation2 + $0x2e0] sm:$0xff] %vm2258, %v1367
      %2350 = vst [vmem:[#allocation2 + $0x2e8] sm:$0xff] %v1368
      %2351 = vst [vmem:[#allocation2 + $0x2f0] sm:$0xff] %v1369
      %2352 = vst.msk [vmem:[#allocation2 + $0x2f8] sm:$0xff] %vm2258, %v1370
      %2353 = vst [vmem:[#allocation2 + $0x300] sm:$0xff] %v1371
      %2354 = vst [vmem:[#allocation2 + $0x308] sm:$0xff] %v1372
      %2355 = vst.msk [vmem:[#allocation2 + $0x310] sm:$0xff] %vm2258, %v1373
      %2356 = vst [vmem:[#allocation2 + $0x318] sm:$0xff] %v1374
      %2357 = vst [vmem:[#allocation2 + $0x320] sm:$0xff] %v1375
      %2358 = vst.msk [vmem:[#allocation2 + $0x328] sm:$0xff] %vm2258, %v1376
      %2359 = vst [vmem:[#allocation2 + $0x330] sm:$0xff] %v1377
      %2360 = vst [vmem:[#allocation2 + $0x338] sm:$0xff] %v1378
      %2361 = vst.msk [vmem:[#allocation2 + $0x340] sm:$0xff] %vm2258, %v1379
      %2362 = vst [vmem:[#allocation2 + $0x348] sm:$0xff] %v1380
      %2363 = vst [vmem:[#allocation2 + $0x350] sm:$0xff] %v1381
      %2364 = vst.msk [vmem:[#allocation2 + $0x358] sm:$0xff] %vm2258, %v1382
      %2365 = vst [vmem:[#allocation2 + $0x360] sm:$0xff] %v1383
      %2366 = vst [vmem:[#allocation2 + $0x368] sm:$0xff] %v1384
      %2367 = vst.msk [vmem:[#allocation2 + $0x370] sm:$0xff] %vm2258, %v1385
      %2368 = vst [vmem:[#allocation2 + $0x378] sm:$0xff] %v1386
      %2369 = vst [vmem:[#allocation2 + $0x380] sm:$0xff] %v1387
      %2370 = vst.msk [vmem:[#allocation2 + $0x388] sm:$0xff] %vm2258, %v1388
      %2371 = vst [vmem:[#allocation2 + $0x390] sm:$0xff] %v1389
      %2372 = vst [vmem:[#allocation2 + $0x398] sm:$0xff] %v1390
      %2373 = vst.msk [vmem:[#allocation2 + $0x3a0] sm:$0xff] %vm2258, %v1391
      %2374 = vst [vmem:[#allocation2 + $0x3a8] sm:$0xff] %v1392
      %2375 = vst [vmem:[#allocation2 + $0x3b0] sm:$0xff] %v1393
      %2376 = vst.msk [vmem:[#allocation2 + $0x3b8] sm:$0xff] %vm2258, %v1394
      %2377 = vst [vmem:[#allocation2 + $0x3c0] sm:$0xff] %v1395
      %2378 = vst [vmem:[#allocation2 + $0x3c8] sm:$0xff] %v1396
      %2379 = vst.msk [vmem:[#allocation2 + $0x3d0] sm:$0xff] %vm2258, %v1397
      %2380 = vst [vmem:[#allocation2 + $0x3d8] sm:$0xff] %v1398
      %2381 = vst [vmem:[#allocation2 + $0x3e0] sm:$0xff] %v1399
      %2382 = vst.msk [vmem:[#allocation2 + $0x3e8] sm:$0xff] %vm2258, %v1400
      %2383 = vst [vmem:[#allocation2 + $0x3f0] sm:$0xff] %v1401
      %2384 = vst [vmem:[#allocation2 + $0x3f8] sm:$0xff] %v1402
      %2385 = vst.msk [vmem:[#allocation2 + $0x400] sm:$0xff] %vm2258, %v1403
      %2386 = vst [vmem:[#allocation2 + $0x408] sm:$0xff] %v1404
      %2387 = vst [vmem:[#allocation2 + $0x410] sm:$0xff] %v1405
      %2388 = vst.msk [vmem:[#allocation2 + $0x418] sm:$0xff] %vm2258, %v1406
      %2389 = vst [vmem:[#allocation2 + $0x420] sm:$0xff] %v1407
      %2390 = vst [vmem:[#allocation2 + $0x428] sm:$0xff] %v1408
      %2391 = vst.msk [vmem:[#allocation2 + $0x430] sm:$0xff] %vm2258, %v1409
      %2392 = vst [vmem:[#allocation2 + $0x438] sm:$0xff] %v1410
      %2393 = vst [vmem:[#allocation2 + $0x440] sm:$0xff] %v1411
      %2394 = vst.msk [vmem:[#allocation2 + $0x448] sm:$0xff] %vm2258, %v1412
      %2395 = vst [vmem:[#allocation2 + $0x450] sm:$0xff] %v1413
      %2396 = vst [vmem:[#allocation2 + $0x458] sm:$0xff] %v1414
      %2397 = vst.msk [vmem:[#allocation2 + $0x460] sm:$0xff] %vm2258, %v1415
      %2398 = vst [vmem:[#allocation2 + $0x468] sm:$0xff] %v1416
      %2399 = vst [vmem:[#allocation2 + $0x470] sm:$0xff] %v1417
      %2400 = vst.msk [vmem:[#allocation2 + $0x478] sm:$0xff] %vm2258, %v1418
      %v2401 = vmul.bf16 %v2015, %v1480
      %v2402 = vmul.bf16 %v2016, %v1481
      %v2403 = vmul.bf16 %v2113, %v1482
      %v2404 = vmul.bf16 %v2017, %v1480
      %v2405 = vmul.bf16 %v2018, %v1481
      %v2406 = vmul.bf16 %v2116, %v1482
      %v2407 = vmul.bf16 %v2019, %v1480
      %v2408 = vmul.bf16 %v2020, %v1481
      %v2409 = vmul.bf16 %v2119, %v1482
      %v2410 = vmul.bf16 %v2021, %v1480
      %v2411 = vmul.bf16 %v2022, %v1481
      %v2412 = vmul.bf16 %v2122, %v1482
      %v2413 = vmul.bf16 %v2023, %v1480
      %v2414 = vmul.bf16 %v2024, %v1481
      %v2415 = vmul.bf16 %v2125, %v1482
      %v2416 = vmul.bf16 %v2025, %v1480
      %v2417 = vmul.bf16 %v2026, %v1481
      %v2418 = vmul.bf16 %v2128, %v1482
      %v2419 = vmul.bf16 %v2027, %v1480
      %v2420 = vmul.bf16 %v2028, %v1481
      %v2421 = vmul.bf16 %v2131, %v1482
      %v2422 = vmul.bf16 %v2029, %v1480
      %v2423 = vmul.bf16 %v2030, %v1481
      %v2424 = vmul.bf16 %v2134, %v1482
      %v2425 = vmul.bf16 %v2031, %v1480
      %v2426 = vmul.bf16 %v2032, %v1481
      %v2427 = vmul.bf16 %v2137, %v1482
      %v2428 = vmul.bf16 %v2033, %v1480
      %v2429 = vmul.bf16 %v2034, %v1481
      %v2430 = vmul.bf16 %v2140, %v1482
      %v2431 = vmul.bf16 %v2035, %v1480
      %v2432 = vmul.bf16 %v2036, %v1481
      %v2433 = vmul.bf16 %v2143, %v1482
      %v2434 = vmul.bf16 %v2037, %v1480
      %v2435 = vmul.bf16 %v2038, %v1481
      %v2436 = vmul.bf16 %v2146, %v1482
      %v2437 = vmul.bf16 %v2039, %v1480
      %v2438 = vmul.bf16 %v2040, %v1481
      %v2439 = vmul.bf16 %v2149, %v1482
      %v2440 = vmul.bf16 %v2041, %v1480
      %v2441 = vmul.bf16 %v2042, %v1481
      %v2442 = vmul.bf16 %v2152, %v1482
      %v2443 = vmul.bf16 %v2043, %v1480
      %v2444 = vmul.bf16 %v2044, %v1481
      %v2445 = vmul.bf16 %v2155, %v1482
      %v2446 = vmul.bf16 %v2045, %v1480
      %v2447 = vmul.bf16 %v2046, %v1481
      %v2448 = vmul.bf16 %v2158, %v1482
      %v2449 = vmul.bf16 %v2047, %v1480
      %v2450 = vmul.bf16 %v2048, %v1481
      %v2451 = vmul.bf16 %v2161, %v1482
      %v2452 = vmul.bf16 %v2049, %v1480
      %v2453 = vmul.bf16 %v2050, %v1481
      %v2454 = vmul.bf16 %v2164, %v1482
      %v2455 = vmul.bf16 %v2051, %v1480
      %v2456 = vmul.bf16 %v2052, %v1481
      %v2457 = vmul.bf16 %v2167, %v1482
      %v2458 = vmul.bf16 %v2053, %v1480
      %v2459 = vmul.bf16 %v2054, %v1481
      %v2460 = vmul.bf16 %v2170, %v1482
      %v2461 = vmul.bf16 %v2055, %v1480
      %v2462 = vmul.bf16 %v2056, %v1481
      %v2463 = vmul.bf16 %v2173, %v1482
      %v2464 = vmul.bf16 %v2057, %v1480
      %v2465 = vmul.bf16 %v2058, %v1481
      %v2466 = vmul.bf16 %v2176, %v1482
      %v2467 = vmul.bf16 %v2059, %v1480
      %v2468 = vmul.bf16 %v2060, %v1481
      %v2469 = vmul.bf16 %v2179, %v1482
      %v2470 = vmul.bf16 %v2061, %v1480
      %v2471 = vmul.bf16 %v2062, %v1481
      %v2472 = vmul.bf16 %v2182, %v1482
      %2473 = vst [vmem:[#allocation2 + $0x480] sm:$0xff] %v2401
      %2474 = vst [vmem:[#allocation2 + $0x488] sm:$0xff] %v2402
      %2475 = vst.msk [vmem:[#allocation2 + $0x490] sm:$0xff] %vm2258, %v2403
      %2476 = vst [vmem:[#allocation2 + $0x498] sm:$0xff] %v2404
      %2477 = vst [vmem:[#allocation2 + $0x4a0] sm:$0xff] %v2405
      %2478 = vst.msk [vmem:[#allocation2 + $0x4a8] sm:$0xff] %vm2258, %v2406
      %2479 = vst [vmem:[#allocation2 + $0x4b0] sm:$0xff] %v2407
      %2480 = vst [vmem:[#allocation2 + $0x4b8] sm:$0xff] %v2408
      %2481 = vst.msk [vmem:[#allocation2 + $0x4c0] sm:$0xff] %vm2258, %v2409
      %2482 = vst [vmem:[#allocation2 + $0x4c8] sm:$0xff] %v2410
      %2483 = vst [vmem:[#allocation2 + $0x4d0] sm:$0xff] %v2411
      %2484 = vst.msk [vmem:[#allocation2 + $0x4d8] sm:$0xff] %vm2258, %v2412
      %2485 = vst [vmem:[#allocation2 + $0x4e0] sm:$0xff] %v2413
      %2486 = vst [vmem:[#allocation2 + $0x4e8] sm:$0xff] %v2414
      %2487 = vst.msk [vmem:[#allocation2 + $0x4f0] sm:$0xff] %vm2258, %v2415
      %2488 = vst [vmem:[#allocation2 + $0x4f8] sm:$0xff] %v2416
      %2489 = vst [vmem:[#allocation2 + $0x500] sm:$0xff] %v2417
      %2490 = vst.msk [vmem:[#allocation2 + $0x508] sm:$0xff] %vm2258, %v2418
      %2491 = vst [vmem:[#allocation2 + $0x510] sm:$0xff] %v2419
      %2492 = vst [vmem:[#allocation2 + $0x518] sm:$0xff] %v2420
      %2493 = vst.msk [vmem:[#allocation2 + $0x520] sm:$0xff] %vm2258, %v2421
      %2494 = vst [vmem:[#allocation2 + $0x528] sm:$0xff] %v2422
      %2495 = vst [vmem:[#allocation2 + $0x530] sm:$0xff] %v2423
      %2496 = vst.msk [vmem:[#allocation2 + $0x538] sm:$0xff] %vm2258, %v2424
      %2497 = vst [vmem:[#allocation2 + $0x540] sm:$0xff] %v2425
      %2498 = vst [vmem:[#allocation2 + $0x548] sm:$0xff] %v2426
      %2499 = vst.msk [vmem:[#allocation2 + $0x550] sm:$0xff] %vm2258, %v2427
      %2500 = vst [vmem:[#allocation2 + $0x558] sm:$0xff] %v2428
      %2501 = vst [vmem:[#allocation2 + $0x560] sm:$0xff] %v2429
      %2502 = vst.msk [vmem:[#allocation2 + $0x568] sm:$0xff] %vm2258, %v2430
      %2503 = vst [vmem:[#allocation2 + $0x570] sm:$0xff] %v2431
      %2504 = vst [vmem:[#allocation2 + $0x578] sm:$0xff] %v2432
      %2505 = vst.msk [vmem:[#allocation2 + $0x580] sm:$0xff] %vm2258, %v2433
      %2506 = vst [vmem:[#allocation2 + $0x588] sm:$0xff] %v2434
      %2507 = vst [vmem:[#allocation2 + $0x590] sm:$0xff] %v2435
      %2508 = vst.msk [vmem:[#allocation2 + $0x598] sm:$0xff] %vm2258, %v2436
      %2509 = vst [vmem:[#allocation2 + $0x5a0] sm:$0xff] %v2437
      %2510 = vst [vmem:[#allocation2 + $0x5a8] sm:$0xff] %v2438
      %2511 = vst.msk [vmem:[#allocation2 + $0x5b0] sm:$0xff] %vm2258, %v2439
      %2512 = vst [vmem:[#allocation2 + $0x5b8] sm:$0xff] %v2440
      %2513 = vst [vmem:[#allocation2 + $0x5c0] sm:$0xff] %v2441
      %2514 = vst.msk [vmem:[#allocation2 + $0x5c8] sm:$0xff] %vm2258, %v2442
      %2515 = vst [vmem:[#allocation2 + $0x5d0] sm:$0xff] %v2443
      %2516 = vst [vmem:[#allocation2 + $0x5d8] sm:$0xff] %v2444
      %2517 = vst.msk [vmem:[#allocation2 + $0x5e0] sm:$0xff] %vm2258, %v2445
      %2518 = vst [vmem:[#allocation2 + $0x5e8] sm:$0xff] %v2446
      %2519 = vst [vmem:[#allocation2 + $0x5f0] sm:$0xff] %v2447
      %2520 = vst.msk [vmem:[#allocation2 + $0x5f8] sm:$0xff] %vm2258, %v2448
      %2521 = vst [vmem:[#allocation2 + $0x600] sm:$0xff] %v2449
      %2522 = vst [vmem:[#allocation2 + $0x608] sm:$0xff] %v2450
      %2523 = vst.msk [vmem:[#allocation2 + $0x610] sm:$0xff] %vm2258, %v2451
      %2524 = vst [vmem:[#allocation2 + $0x618] sm:$0xff] %v2452
      %2525 = vst [vmem:[#allocation2 + $0x620] sm:$0xff] %v2453
      %2526 = vst.msk [vmem:[#allocation2 + $0x628] sm:$0xff] %vm2258, %v2454
      %2527 = vst [vmem:[#allocation2 + $0x630] sm:$0xff] %v2455
      %2528 = vst [vmem:[#allocation2 + $0x638] sm:$0xff] %v2456
      %2529 = vst.msk [vmem:[#allocation2 + $0x640] sm:$0xff] %vm2258, %v2457
      %2530 = vst [vmem:[#allocation2 + $0x648] sm:$0xff] %v2458
      %2531 = vst [vmem:[#allocation2 + $0x650] sm:$0xff] %v2459
      %2532 = vst.msk [vmem:[#allocation2 + $0x658] sm:$0xff] %vm2258, %v2460
      %2533 = vst [vmem:[#allocation2 + $0x660] sm:$0xff] %v2461
      %2534 = vst [vmem:[#allocation2 + $0x668] sm:$0xff] %v2462
      %2535 = vst.msk [vmem:[#allocation2 + $0x670] sm:$0xff] %vm2258, %v2463
      %2536 = vst [vmem:[#allocation2 + $0x678] sm:$0xff] %v2464
      %2537 = vst [vmem:[#allocation2 + $0x680] sm:$0xff] %v2465
      %2538 = vst.msk [vmem:[#allocation2 + $0x688] sm:$0xff] %vm2258, %v2466
      %2539 = vst [vmem:[#allocation2 + $0x690] sm:$0xff] %v2467
      %2540 = vst [vmem:[#allocation2 + $0x698] sm:$0xff] %v2468
      %2541 = vst.msk [vmem:[#allocation2 + $0x6a0] sm:$0xff] %vm2258, %v2469
      %2542 = vst [vmem:[#allocation2 + $0x6a8] sm:$0xff] %v2470
      %2543 = vst [vmem:[#allocation2 + $0x6b0] sm:$0xff] %v2471
      %2544 = vst.msk [vmem:[#allocation2 + $0x6b8] sm:$0xff] %vm2258, %v2472
      %v2545 = vld [vmem:[%s3] sm:$0xff]
      %v2546 = vld [vmem:[%s3 + $0x8] sm:$0xff]
      %v2547 = vld [vmem:[%s3 + $0x10] sm:$0xff]
      %v2548 = vld [vmem:[%s3 + $0x18] sm:$0xff]
      %v2549 = vld [vmem:[%s3 + $0x20] sm:$0xf]
      %v2550 = vld [vmem:[%s3 + $0x24] sm:$0xff]
      %v2551 = vld [vmem:[%s3 + $0x2c] sm:$0xff]
      %v2552 = vld [vmem:[%s3 + $0x34] sm:$0xff]
      %v2553 = vld [vmem:[%s3 + $0x3c] sm:$0xff]
      %v2554 = vld [vmem:[%s3 + $0x44] sm:$0xf]
      %v2555 = vld [vmem:[%s3 + $0x48] sm:$0xff]
      %v2556 = vld [vmem:[%s3 + $0x50] sm:$0xff]
      %v2557 = vld [vmem:[%s3 + $0x58] sm:$0xff]
      %v2558 = vld [vmem:[%s3 + $0x60] sm:$0xff]
      %v2559 = vld [vmem:[%s3 + $0x68] sm:$0xf]
      %v2560 = vld [vmem:[%s3 + $0x6c] sm:$0xff]
      %v2561 = vld [vmem:[%s3 + $0x74] sm:$0xff]
      %v2562 = vld [vmem:[%s3 + $0x7c] sm:$0xff]
      %v2563 = vld [vmem:[%s3 + $0x84] sm:$0xff]
      %v2564 = vld [vmem:[%s3 + $0x8c] sm:$0xf]
      %v2565 = vld [vmem:[%s3 + $0x90] sm:$0xff]
      %v2566 = vld [vmem:[%s3 + $0x98] sm:$0xff]
      %v2567 = vld [vmem:[%s3 + $0xa0] sm:$0xff]
      %v2568 = vld [vmem:[%s3 + $0xa8] sm:$0xff]
      %v2569 = vld [vmem:[%s3 + $0xb0] sm:$0xf]
      %v2570 = vld [vmem:[%s3 + $0xb4] sm:$0xff]
      %v2571 = vld [vmem:[%s3 + $0xbc] sm:$0xff]
      %v2572 = vld [vmem:[%s3 + $0xc4] sm:$0xff]
      %v2573 = vld [vmem:[%s3 + $0xcc] sm:$0xff]
      %v2574 = vld [vmem:[%s3 + $0xd4] sm:$0xf]
      %v2575 = vld [vmem:[%s3 + $0xd8] sm:$0xff]
      %v2576 = vld [vmem:[%s3 + $0xe0] sm:$0xff]
      %v2577 = vld [vmem:[%s3 + $0xe8] sm:$0xff]
      %v2578 = vld [vmem:[%s3 + $0xf0] sm:$0xff]
      %v2579 = vld [vmem:[%s3 + $0xf8] sm:$0xf]
      %v2580 = vld [vmem:[%s3 + $0xfc] sm:$0xff]
      %v2581 = vld [vmem:[%s3 + $0x104] sm:$0xff]
      %v2582 = vld [vmem:[%s3 + $0x10c] sm:$0xff]
      %v2583 = vld [vmem:[%s3 + $0x114] sm:$0xff]
      %v2584 = vld [vmem:[%s3 + $0x11c] sm:$0xf]
      %v2585 = vld [vmem:[%s3 + $0x120] sm:$0xff]
      %v2586 = vld [vmem:[%s3 + $0x128] sm:$0xff]
      %v2587 = vld [vmem:[%s3 + $0x130] sm:$0xff]
      %v2588 = vld [vmem:[%s3 + $0x138] sm:$0xff]
      %v2589 = vld [vmem:[%s3 + $0x140] sm:$0xf]
      %v2590 = vld [vmem:[%s3 + $0x144] sm:$0xff]
      %v2591 = vld [vmem:[%s3 + $0x14c] sm:$0xff]
      %v2592 = vld [vmem:[%s3 + $0x154] sm:$0xff]
      %v2593 = vld [vmem:[%s3 + $0x15c] sm:$0xff]
      %v2594 = vld [vmem:[%s3 + $0x164] sm:$0xf]
      %v2595 = vld [vmem:[%s3 + $0x168] sm:$0xff]
      %v2596 = vld [vmem:[%s3 + $0x170] sm:$0xff]
      %v2597 = vld [vmem:[%s3 + $0x178] sm:$0xff]
      %v2598 = vld [vmem:[%s3 + $0x180] sm:$0xff]
      %v2599 = vld [vmem:[%s3 + $0x188] sm:$0xf]
      %v2600 = vld [vmem:[%s3 + $0x18c] sm:$0xff]
      %v2601 = vld [vmem:[%s3 + $0x194] sm:$0xff]
      %v2602 = vld [vmem:[%s3 + $0x19c] sm:$0xff]
      %v2603 = vld [vmem:[%s3 + $0x1a4] sm:$0xff]
      %v2604 = vld [vmem:[%s3 + $0x1ac] sm:$0xf]
      %v2605 = vld [vmem:[%s3 + $0x1b0] sm:$0xff]
      %v2606 = vld [vmem:[%s3 + $0x1b8] sm:$0xff]
      %v2607 = vld [vmem:[%s3 + $0x1c0] sm:$0xff]
      %v2608 = vld [vmem:[%s3 + $0x1c8] sm:$0xff]
      %v2609 = vld [vmem:[%s3 + $0x1d0] sm:$0xf]
      %v2610 = vld [vmem:[%s3 + $0x1d4] sm:$0xff]
      %v2611 = vld [vmem:[%s3 + $0x1dc] sm:$0xff]
      %v2612 = vld [vmem:[%s3 + $0x1e4] sm:$0xff]
      %v2613 = vld [vmem:[%s3 + $0x1ec] sm:$0xff]
      %v2614 = vld [vmem:[%s3 + $0x1f4] sm:$0xf]
      %v2615 = vld [vmem:[%s3 + $0x1f8] sm:$0xff]
      %v2616 = vld [vmem:[%s3 + $0x200] sm:$0xff]
      %v2617 = vld [vmem:[%s3 + $0x208] sm:$0xff]
      %v2618 = vld [vmem:[%s3 + $0x210] sm:$0xff]
      %v2619 = vld [vmem:[%s3 + $0x218] sm:$0xf]
      %v2620 = vld [vmem:[%s3 + $0x21c] sm:$0xff]
      %v2621 = vld [vmem:[%s3 + $0x224] sm:$0xff]
      %v2622 = vld [vmem:[%s3 + $0x22c] sm:$0xff]
      %v2623 = vld [vmem:[%s3 + $0x234] sm:$0xff]
      %v2624 = vld [vmem:[%s3 + $0x23c] sm:$0xf]
      %v2625 = vld [vmem:[#allocation2] sm:$0xff]
      %v2626 = vld [vmem:[#allocation2 + $0x8] sm:$0xff]
      %v2627 = vld [vmem:[#allocation2 + $0x18] sm:$0xff]
      %v2628 = vld [vmem:[#allocation2 + $0x20] sm:$0xff]
      %v2629 = vld [vmem:[#allocation2 + $0x30] sm:$0xff]
      %v2630 = vld [vmem:[#allocation2 + $0x38] sm:$0xff]
      %v2631 = vld [vmem:[#allocation2 + $0x48] sm:$0xff]
      %v2632 = vld [vmem:[#allocation2 + $0x50] sm:$0xff]
      %v2633 = vld [vmem:[#allocation2 + $0x60] sm:$0xff]
      %v2634 = vld [vmem:[#allocation2 + $0x68] sm:$0xff]
      %v2635 = vld [vmem:[#allocation2 + $0x78] sm:$0xff]
      %v2636 = vld [vmem:[#allocation2 + $0x80] sm:$0xff]
      %v2637 = vld [vmem:[#allocation2 + $0x90] sm:$0xff]
      %v2638 = vld [vmem:[#allocation2 + $0x98] sm:$0xff]
      %v2639 = vld [vmem:[#allocation2 + $0xa8] sm:$0xff]
      %v2640 = vld [vmem:[#allocation2 + $0xb0] sm:$0xff]
      %v2641 = vld [vmem:[#allocation2 + $0xc0] sm:$0xff]
      %v2642 = vld [vmem:[#allocation2 + $0xc8] sm:$0xff]
      %v2643 = vld [vmem:[#allocation2 + $0xd8] sm:$0xff]
      %v2644 = vld [vmem:[#allocation2 + $0xe0] sm:$0xff]
      %v2645 = vld [vmem:[#allocation2 + $0xf0] sm:$0xff]
      %v2646 = vld [vmem:[#allocation2 + $0xf8] sm:$0xff]
      %v2647 = vld [vmem:[#allocation2 + $0x108] sm:$0xff]
      %v2648 = vld [vmem:[#allocation2 + $0x110] sm:$0xff]
      %v2649 = vld [vmem:[#allocation2 + $0x120] sm:$0xff]
      %v2650 = vld [vmem:[#allocation2 + $0x128] sm:$0xff]
      %v2651 = vld [vmem:[#allocation2 + $0x138] sm:$0xff]
      %v2652 = vld [vmem:[#allocation2 + $0x140] sm:$0xff]
      %v2653 = vld [vmem:[#allocation2 + $0x150] sm:$0xff]
      %v2654 = vld [vmem:[#allocation2 + $0x158] sm:$0xff]
      %v2655 = vld [vmem:[#allocation2 + $0x168] sm:$0xff]
      %v2656 = vld [vmem:[#allocation2 + $0x170] sm:$0xff]
      %v2657 = vld [vmem:[#allocation2 + $0x180] sm:$0xff]
      %v2658 = vld [vmem:[#allocation2 + $0x188] sm:$0xff]
      %v2659 = vld [vmem:[#allocation2 + $0x198] sm:$0xff]
      %v2660 = vld [vmem:[#allocation2 + $0x1a0] sm:$0xff]
      %v2661 = vld [vmem:[#allocation2 + $0x1b0] sm:$0xff]
      %v2662 = vld [vmem:[#allocation2 + $0x1b8] sm:$0xff]
      %v2663 = vld [vmem:[#allocation2 + $0x1c8] sm:$0xff]
      %v2664 = vld [vmem:[#allocation2 + $0x1d0] sm:$0xff]
      %v2665 = vld [vmem:[#allocation2 + $0x1e0] sm:$0xff]
      %v2666 = vld [vmem:[#allocation2 + $0x1e8] sm:$0xff]
      %v2667 = vld [vmem:[#allocation2 + $0x1f8] sm:$0xff]
      %v2668 = vld [vmem:[#allocation2 + $0x200] sm:$0xff]
      %v2669 = vld [vmem:[#allocation2 + $0x210] sm:$0xff]
      %v2670 = vld [vmem:[#allocation2 + $0x218] sm:$0xff]
      %v2671 = vld [vmem:[#allocation2 + $0x228] sm:$0xff]
      %v2672 = vld [vmem:[#allocation2 + $0x230] sm:$0xff]
      %v2673 = vld [vmem:[#allocation2 + $0x240] sm:$0xff]
      %v2674 = vld [vmem:[#allocation2 + $0x248] sm:$0xff]
      %v2675 = vld [vmem:[#allocation2 + $0x258] sm:$0xff]
      %v2676 = vld [vmem:[#allocation2 + $0x260] sm:$0xff]
      %v2677 = vld [vmem:[#allocation2 + $0x270] sm:$0xff]
      %v2678 = vld [vmem:[#allocation2 + $0x278] sm:$0xff]
      %v2679 = vld [vmem:[#allocation2 + $0x288] sm:$0xff]
      %v2680 = vld [vmem:[#allocation2 + $0x290] sm:$0xff]
      %v2681 = vld [vmem:[#allocation2 + $0x2a0] sm:$0xff]
      %v2682 = vld [vmem:[#allocation2 + $0x2a8] sm:$0xff]
      %v2683 = vld [vmem:[#allocation2 + $0x2b8] sm:$0xff]
      %v2684 = vld [vmem:[#allocation2 + $0x2c0] sm:$0xff]
      %v2685 = vld [vmem:[#allocation2 + $0x2d0] sm:$0xff]
      %v2686 = vld [vmem:[#allocation2 + $0x2d8] sm:$0xff]
      %v2687 = vld [vmem:[#allocation2 + $0x2e8] sm:$0xff]
      %v2688 = vld [vmem:[#allocation2 + $0x2f0] sm:$0xff]
      %v2689 = vld [vmem:[#allocation2 + $0x300] sm:$0xff]
      %v2690 = vld [vmem:[#allocation2 + $0x308] sm:$0xff]
      %v2691 = vld [vmem:[#allocation2 + $0x318] sm:$0xff]
      %v2692 = vld [vmem:[#allocation2 + $0x320] sm:$0xff]
      %v2693 = vld [vmem:[#allocation2 + $0x330] sm:$0xff]
      %v2694 = vld [vmem:[#allocation2 + $0x338] sm:$0xff]
      %v2695 = vld [vmem:[#allocation2 + $0x348] sm:$0xff]
      %v2696 = vld [vmem:[#allocation2 + $0x350] sm:$0xff]
      %v2697 = vld [vmem:[#allocation2 + $0x360] sm:$0xff]
      %v2698 = vld [vmem:[#allocation2 + $0x368] sm:$0xff]
      %v2699 = vld [vmem:[#allocation2 + $0x378] sm:$0xff]
      %v2700 = vld [vmem:[#allocation2 + $0x380] sm:$0xff]
      %v2701 = vld [vmem:[#allocation2 + $0x390] sm:$0xff]
      %v2702 = vld [vmem:[#allocation2 + $0x398] sm:$0xff]
      %v2703 = vld [vmem:[#allocation2 + $0x3a8] sm:$0xff]
      %v2704 = vld [vmem:[#allocation2 + $0x3b0] sm:$0xff]
      %v2705 = vld [vmem:[#allocation2 + $0x3c0] sm:$0xff]
      %v2706 = vld [vmem:[#allocation2 + $0x3c8] sm:$0xff]
      %v2707 = vld [vmem:[#allocation2 + $0x3d8] sm:$0xff]
      %v2708 = vld [vmem:[#allocation2 + $0x3e0] sm:$0xff]
      %v2709 = vld [vmem:[#allocation2 + $0x3f0] sm:$0xff]
      %v2710 = vld [vmem:[#allocation2 + $0x3f8] sm:$0xff]
      %v2711 = vld [vmem:[#allocation2 + $0x408] sm:$0xff]
      %v2712 = vld [vmem:[#allocation2 + $0x410] sm:$0xff]
      %v2713 = vld [vmem:[#allocation2 + $0x420] sm:$0xff]
      %v2714 = vld [vmem:[#allocation2 + $0x428] sm:$0xff]
      %v2715 = vld [vmem:[#allocation2 + $0x438] sm:$0xff]
      %v2716 = vld [vmem:[#allocation2 + $0x440] sm:$0xff]
      %v2717 = vld [vmem:[#allocation2 + $0x450] sm:$0xff]
      %v2718 = vld [vmem:[#allocation2 + $0x458] sm:$0xff]
      %v2719 = vld [vmem:[#allocation2 + $0x468] sm:$0xff]
      %v2720 = vld [vmem:[#allocation2 + $0x470] sm:$0xff]
      %v2721 = vld [vmem:[#allocation2 + $0x480] sm:$0xff]
      %v2722 = vld [vmem:[#allocation2 + $0x488] sm:$0xff]
      %v2723 = vld [vmem:[#allocation2 + $0x498] sm:$0xff]
      %v2724 = vld [vmem:[#allocation2 + $0x4a0] sm:$0xff]
      %v2725 = vld [vmem:[#allocation2 + $0x4b0] sm:$0xff]
      %v2726 = vld [vmem:[#allocation2 + $0x4b8] sm:$0xff]
      %v2727 = vld [vmem:[#allocation2 + $0x4c8] sm:$0xff]
      %v2728 = vld [vmem:[#allocation2 + $0x4d0] sm:$0xff]
      %v2729 = vld [vmem:[#allocation2 + $0x4e0] sm:$0xff]
      %v2730 = vld [vmem:[#allocation2 + $0x4e8] sm:$0xff]
      %v2731 = vld [vmem:[#allocation2 + $0x4f8] sm:$0xff]
      %v2732 = vld [vmem:[#allocation2 + $0x500] sm:$0xff]
      %v2733 = vld [vmem:[#allocation2 + $0x510] sm:$0xff]
      %v2734 = vld [vmem:[#allocation2 + $0x518] sm:$0xff]
      %v2735 = vld [vmem:[#allocation2 + $0x528] sm:$0xff]
      %v2736 = vld [vmem:[#allocation2 + $0x530] sm:$0xff]
      %v2737 = vld [vmem:[#allocation2 + $0x540] sm:$0xff]
      %v2738 = vld [vmem:[#allocation2 + $0x548] sm:$0xff]
      %v2739 = vld [vmem:[#allocation2 + $0x558] sm:$0xff]
      %v2740 = vld [vmem:[#allocation2 + $0x560] sm:$0xff]
      %v2741 = vld [vmem:[#allocation2 + $0x570] sm:$0xff]
      %v2742 = vld [vmem:[#allocation2 + $0x578] sm:$0xff]
      %v2743 = vld [vmem:[#allocation2 + $0x588] sm:$0xff]
      %v2744 = vld [vmem:[#allocation2 + $0x590] sm:$0xff]
      %v2745 = vld [vmem:[#allocation2 + $0x5a0] sm:$0xff]
      %v2746 = vld [vmem:[#allocation2 + $0x5a8] sm:$0xff]
      %v2747 = vld [vmem:[#allocation2 + $0x5b8] sm:$0xff]
      %v2748 = vld [vmem:[#allocation2 + $0x5c0] sm:$0xff]
      %v2749 = vld [vmem:[#allocation2 + $0x5d0] sm:$0xff]
      %v2750 = vld [vmem:[#allocation2 + $0x5d8] sm:$0xff]
      %v2751 = vld [vmem:[#allocation2 + $0x5e8] sm:$0xff]
      %v2752 = vld [vmem:[#allocation2 + $0x5f0] sm:$0xff]
      %v2753 = vld [vmem:[#allocation2 + $0x600] sm:$0xff]
      %v2754 = vld [vmem:[#allocation2 + $0x608] sm:$0xff]
      %v2755 = vld [vmem:[#allocation2 + $0x618] sm:$0xff]
      %v2756 = vld [vmem:[#allocation2 + $0x620] sm:$0xff]
      %v2757 = vld [vmem:[#allocation2 + $0x630] sm:$0xff]
      %v2758 = vld [vmem:[#allocation2 + $0x638] sm:$0xff]
      %v2759 = vld [vmem:[#allocation2 + $0x648] sm:$0xff]
      %v2760 = vld [vmem:[#allocation2 + $0x650] sm:$0xff]
      %v2761 = vld [vmem:[#allocation2 + $0x660] sm:$0xff]
      %v2762 = vld [vmem:[#allocation2 + $0x668] sm:$0xff]
      %v2763 = vld [vmem:[#allocation2 + $0x678] sm:$0xff]
      %v2764 = vld [vmem:[#allocation2 + $0x680] sm:$0xff]
      %v2765 = vld [vmem:[#allocation2 + $0x690] sm:$0xff]
      %v2766 = vld [vmem:[#allocation2 + $0x698] sm:$0xff]
      %v2767 = vld [vmem:[#allocation2 + $0x6a8] sm:$0xff]
      %v2768 = vld [vmem:[#allocation2 + $0x6b0] sm:$0xff]
      %s2769 = scalar_lea.vmem %s3, 576
      %v2770 = vld [vmem:[%s2769] sm:$0xff]
      %v2771 = vld [vmem:[%s2769 + $0x8] sm:$0xff]
      %v2772 = vld [vmem:[%s2769 + $0x10] sm:$0xff]
      %v2773 = vld [vmem:[%s2769 + $0x18] sm:$0xff]
      %v2774 = vld [vmem:[%s2769 + $0x20] sm:$0xf]
      %v2775 = vld [vmem:[%s2769 + $0x24] sm:$0xff]
      %v2776 = vld [vmem:[%s2769 + $0x2c] sm:$0xff]
      %v2777 = vld [vmem:[%s2769 + $0x34] sm:$0xff]
      %v2778 = vld [vmem:[%s2769 + $0x3c] sm:$0xff]
      %v2779 = vld [vmem:[%s2769 + $0x44] sm:$0xf]
      %v2780 = vld [vmem:[%s2769 + $0x48] sm:$0xff]
      %v2781 = vld [vmem:[%s2769 + $0x50] sm:$0xff]
      %v2782 = vld [vmem:[%s2769 + $0x58] sm:$0xff]
      %v2783 = vld [vmem:[%s2769 + $0x60] sm:$0xff]
      %v2784 = vld [vmem:[%s2769 + $0x68] sm:$0xf]
      %v2785 = vld [vmem:[%s2769 + $0x6c] sm:$0xff]
      %v2786 = vld [vmem:[%s2769 + $0x74] sm:$0xff]
      %v2787 = vld [vmem:[%s2769 + $0x7c] sm:$0xff]
      %v2788 = vld [vmem:[%s2769 + $0x84] sm:$0xff]
      %v2789 = vld [vmem:[%s2769 + $0x8c] sm:$0xf]
      %v2790 = vld [vmem:[%s2769 + $0x90] sm:$0xff]
      %v2791 = vld [vmem:[%s2769 + $0x98] sm:$0xff]
      %v2792 = vld [vmem:[%s2769 + $0xa0] sm:$0xff]
      %v2793 = vld [vmem:[%s2769 + $0xa8] sm:$0xff]
      %v2794 = vld [vmem:[%s2769 + $0xb0] sm:$0xf]
      %v2795 = vld [vmem:[%s2769 + $0xb4] sm:$0xff]
      %v2796 = vld [vmem:[%s2769 + $0xbc] sm:$0xff]
      %v2797 = vld [vmem:[%s2769 + $0xc4] sm:$0xff]
      %v2798 = vld [vmem:[%s2769 + $0xcc] sm:$0xff]
      %v2799 = vld [vmem:[%s2769 + $0xd4] sm:$0xf]
      %v2800 = vld [vmem:[%s2769 + $0xd8] sm:$0xff]
      %v2801 = vld [vmem:[%s2769 + $0xe0] sm:$0xff]
      %v2802 = vld [vmem:[%s2769 + $0xe8] sm:$0xff]
      %v2803 = vld [vmem:[%s2769 + $0xf0] sm:$0xff]
      %v2804 = vld [vmem:[%s2769 + $0xf8] sm:$0xf]
      %v2805 = vld [vmem:[%s2769 + $0xfc] sm:$0xff]
      %v2806 = vld [vmem:[%s2769 + $0x104] sm:$0xff]
      %v2807 = vld [vmem:[%s2769 + $0x10c] sm:$0xff]
      %v2808 = vld [vmem:[%s2769 + $0x114] sm:$0xff]
      %v2809 = vld [vmem:[%s2769 + $0x11c] sm:$0xf]
      %v2810 = vld [vmem:[%s2769 + $0x120] sm:$0xff]
      %v2811 = vld [vmem:[%s2769 + $0x128] sm:$0xff]
      %v2812 = vld [vmem:[%s2769 + $0x130] sm:$0xff]
      %v2813 = vld [vmem:[%s2769 + $0x138] sm:$0xff]
      %v2814 = vld [vmem:[%s2769 + $0x140] sm:$0xf]
      %v2815 = vld [vmem:[%s2769 + $0x144] sm:$0xff]
      %v2816 = vld [vmem:[%s2769 + $0x14c] sm:$0xff]
      %v2817 = vld [vmem:[%s2769 + $0x154] sm:$0xff]
      %v2818 = vld [vmem:[%s2769 + $0x15c] sm:$0xff]
      %v2819 = vld [vmem:[%s2769 + $0x164] sm:$0xf]
      %v2820 = vld [vmem:[%s2769 + $0x168] sm:$0xff]
      %v2821 = vld [vmem:[%s2769 + $0x170] sm:$0xff]
      %v2822 = vld [vmem:[%s2769 + $0x178] sm:$0xff]
      %v2823 = vld [vmem:[%s2769 + $0x180] sm:$0xff]
      %v2824 = vld [vmem:[%s2769 + $0x188] sm:$0xf]
      %v2825 = vld [vmem:[%s2769 + $0x18c] sm:$0xff]
      %v2826 = vld [vmem:[%s2769 + $0x194] sm:$0xff]
      %v2827 = vld [vmem:[%s2769 + $0x19c] sm:$0xff]
      %v2828 = vld [vmem:[%s2769 + $0x1a4] sm:$0xff]
      %v2829 = vld [vmem:[%s2769 + $0x1ac] sm:$0xf]
      %v2830 = vld [vmem:[%s2769 + $0x1b0] sm:$0xff]
      %v2831 = vld [vmem:[%s2769 + $0x1b8] sm:$0xff]
      %v2832 = vld [vmem:[%s2769 + $0x1c0] sm:$0xff]
      %v2833 = vld [vmem:[%s2769 + $0x1c8] sm:$0xff]
      %v2834 = vld [vmem:[%s2769 + $0x1d0] sm:$0xf]
      %v2835 = vld [vmem:[%s2769 + $0x1d4] sm:$0xff]
      %v2836 = vld [vmem:[%s2769 + $0x1dc] sm:$0xff]
      %v2837 = vld [vmem:[%s2769 + $0x1e4] sm:$0xff]
      %v2838 = vld [vmem:[%s2769 + $0x1ec] sm:$0xff]
      %v2839 = vld [vmem:[%s2769 + $0x1f4] sm:$0xf]
      %v2840 = vld [vmem:[%s2769 + $0x1f8] sm:$0xff]
      %v2841 = vld [vmem:[%s2769 + $0x200] sm:$0xff]
      %v2842 = vld [vmem:[%s2769 + $0x208] sm:$0xff]
      %v2843 = vld [vmem:[%s2769 + $0x210] sm:$0xff]
      %v2844 = vld [vmem:[%s2769 + $0x218] sm:$0xf]
      %v2845 = vld [vmem:[%s2769 + $0x21c] sm:$0xff]
      %v2846 = vld [vmem:[%s2769 + $0x224] sm:$0xff]
      %v2847 = vld [vmem:[%s2769 + $0x22c] sm:$0xff]
      %v2848 = vld [vmem:[%s2769 + $0x234] sm:$0xff]
      %v2849 = vld [vmem:[%s2769 + $0x23c] sm:$0xf]
      %v2850 = vld [vmem:[#allocation2 + $0x10] sm:$0xff]
      %v2851 = vld [vmem:[#allocation2 + $0x28] sm:$0xff]
      %v2852 = vld [vmem:[#allocation2 + $0x40] sm:$0xff]
      %v2853 = vld [vmem:[#allocation2 + $0x58] sm:$0xff]
      %v2854 = vld [vmem:[#allocation2 + $0x70] sm:$0xff]
      %v2855 = vld [vmem:[#allocation2 + $0x88] sm:$0xff]
      %v2856 = vld [vmem:[#allocation2 + $0xa0] sm:$0xff]
      %v2857 = vld [vmem:[#allocation2 + $0xb8] sm:$0xff]
      %v2858 = vld [vmem:[#allocation2 + $0xd0] sm:$0xff]
      %v2859 = vld [vmem:[#allocation2 + $0xe8] sm:$0xff]
      %v2860 = vld [vmem:[#allocation2 + $0x100] sm:$0xff]
      %v2861 = vld [vmem:[#allocation2 + $0x118] sm:$0xff]
      %v2862 = vld [vmem:[#allocation2 + $0x130] sm:$0xff]
      %v2863 = vld [vmem:[#allocation2 + $0x148] sm:$0xff]
      %v2864 = vld [vmem:[#allocation2 + $0x160] sm:$0xff]
      %v2865 = vld [vmem:[#allocation2 + $0x178] sm:$0xff]
      %v2866 = vld [vmem:[#allocation2 + $0x190] sm:$0xff]
      %v2867 = vld [vmem:[#allocation2 + $0x1a8] sm:$0xff]
      %v2868 = vld [vmem:[#allocation2 + $0x1c0] sm:$0xff]
      %v2869 = vld [vmem:[#allocation2 + $0x1d8] sm:$0xff]
      %v2870 = vld [vmem:[#allocation2 + $0x1f0] sm:$0xff]
      %v2871 = vld [vmem:[#allocation2 + $0x208] sm:$0xff]
      %v2872 = vld [vmem:[#allocation2 + $0x220] sm:$0xff]
      %v2873 = vld [vmem:[#allocation2 + $0x238] sm:$0xff]
      %v2874 = vld [vmem:[#allocation2 + $0x250] sm:$0xff]
      %v2875 = vld [vmem:[#allocation2 + $0x268] sm:$0xff]
      %v2876 = vld [vmem:[#allocation2 + $0x280] sm:$0xff]
      %v2877 = vld [vmem:[#allocation2 + $0x298] sm:$0xff]
      %v2878 = vld [vmem:[#allocation2 + $0x2b0] sm:$0xff]
      %v2879 = vld [vmem:[#allocation2 + $0x2c8] sm:$0xff]
      %v2880 = vld [vmem:[#allocation2 + $0x2e0] sm:$0xff]
      %v2881 = vld [vmem:[#allocation2 + $0x2f8] sm:$0xff]
      %v2882 = vld [vmem:[#allocation2 + $0x310] sm:$0xff]
      %v2883 = vld [vmem:[#allocation2 + $0x328] sm:$0xff]
      %v2884 = vld [vmem:[#allocation2 + $0x340] sm:$0xff]
      %v2885 = vld [vmem:[#allocation2 + $0x358] sm:$0xff]
      %v2886 = vld [vmem:[#allocation2 + $0x370] sm:$0xff]
      %v2887 = vld [vmem:[#allocation2 + $0x388] sm:$0xff]
      %v2888 = vld [vmem:[#allocation2 + $0x3a0] sm:$0xff]
      %v2889 = vld [vmem:[#allocation2 + $0x3b8] sm:$0xff]
      %v2890 = vld [vmem:[#allocation2 + $0x3d0] sm:$0xff]
      %v2891 = vld [vmem:[#allocation2 + $0x3e8] sm:$0xff]
      %v2892 = vld [vmem:[#allocation2 + $0x400] sm:$0xff]
      %v2893 = vld [vmem:[#allocation2 + $0x418] sm:$0xff]
      %v2894 = vld [vmem:[#allocation2 + $0x430] sm:$0xff]
      %v2895 = vld [vmem:[#allocation2 + $0x448] sm:$0xff]
      %v2896 = vld [vmem:[#allocation2 + $0x460] sm:$0xff]
      %v2897 = vld [vmem:[#allocation2 + $0x478] sm:$0xff]
      %v2898 = vld [vmem:[#allocation2 + $0x490] sm:$0xff]
      %v2899 = vld [vmem:[#allocation2 + $0x4a8] sm:$0xff]
      %v2900 = vld [vmem:[#allocation2 + $0x4c0] sm:$0xff]
      %v2901 = vld [vmem:[#allocation2 + $0x4d8] sm:$0xff]
      %v2902 = vld [vmem:[#allocation2 + $0x4f0] sm:$0xff]
      %v2903 = vld [vmem:[#allocation2 + $0x508] sm:$0xff]
      %v2904 = vld [vmem:[#allocation2 + $0x520] sm:$0xff]
      %v2905 = vld [vmem:[#allocation2 + $0x538] sm:$0xff]
      %v2906 = vld [vmem:[#allocation2 + $0x550] sm:$0xff]
      %v2907 = vld [vmem:[#allocation2 + $0x568] sm:$0xff]
      %v2908 = vld [vmem:[#allocation2 + $0x580] sm:$0xff]
      %v2909 = vld [vmem:[#allocation2 + $0x598] sm:$0xff]
      %v2910 = vld [vmem:[#allocation2 + $0x5b0] sm:$0xff]
      %v2911 = vld [vmem:[#allocation2 + $0x5c8] sm:$0xff]
      %v2912 = vld [vmem:[#allocation2 + $0x5e0] sm:$0xff]
      %v2913 = vld [vmem:[#allocation2 + $0x5f8] sm:$0xff]
      %v2914 = vld [vmem:[#allocation2 + $0x610] sm:$0xff]
      %v2915 = vld [vmem:[#allocation2 + $0x628] sm:$0xff]
      %v2916 = vld [vmem:[#allocation2 + $0x640] sm:$0xff]
      %v2917 = vld [vmem:[#allocation2 + $0x658] sm:$0xff]
      %v2918 = vld [vmem:[#allocation2 + $0x670] sm:$0xff]
      %v2919 = vld [vmem:[#allocation2 + $0x688] sm:$0xff]
      %v2920 = vld [vmem:[#allocation2 + $0x6a0] sm:$0xff]
      %v2921 = vld [vmem:[#allocation2 + $0x6b8] sm:$0xff]
      %v3002 = vunpack.c.l.b16 %v2770
      %v3003 = vunpack.c.h.b16 %v2770
      %v3004 = vunpack.c.l.b16 %v2771
      %v3005 = vunpack.c.h.b16 %v2771
      %v3006 = vunpack.c.l.b16 %v2772
      %v3007 = vunpack.c.h.b16 %v2772
      %v3008 = vunpack.c.l.b16 %v2773
      %v3009 = vunpack.c.h.b16 %v2773
      %v3010 = vunpack.c.l.b16 %v2774
      %v3011 = vunpack.c.l.b16 %v2775
      %v3012 = vunpack.c.h.b16 %v2775
      %v3013 = vunpack.c.l.b16 %v2776
      %v3014 = vunpack.c.h.b16 %v2776
      %v3015 = vunpack.c.l.b16 %v2777
      %v3016 = vunpack.c.h.b16 %v2777
      %v3017 = vunpack.c.l.b16 %v2778
      %v3018 = vunpack.c.h.b16 %v2778
      %v3019 = vunpack.c.l.b16 %v2779
      %v3020 = vunpack.c.l.b16 %v2780
      %v3021 = vunpack.c.h.b16 %v2780
      %v3022 = vunpack.c.l.b16 %v2781
      %v3023 = vunpack.c.h.b16 %v2781
      %v3024 = vunpack.c.l.b16 %v2782
      %v3025 = vunpack.c.h.b16 %v2782
      %v3026 = vunpack.c.l.b16 %v2783
      %v3027 = vunpack.c.h.b16 %v2783
      %v3028 = vunpack.c.l.b16 %v2784
      %v3029 = vunpack.c.l.b16 %v2785
      %v3030 = vunpack.c.h.b16 %v2785
      %v3031 = vunpack.c.l.b16 %v2786
      %v3032 = vunpack.c.h.b16 %v2786
      %v3033 = vunpack.c.l.b16 %v2787
      %v3034 = vunpack.c.h.b16 %v2787
      %v3035 = vunpack.c.l.b16 %v2788
      %v3036 = vunpack.c.h.b16 %v2788
      %v3037 = vunpack.c.l.b16 %v2789
      %v3038 = vunpack.c.l.b16 %v2790
      %v3039 = vunpack.c.h.b16 %v2790
      %v3040 = vunpack.c.l.b16 %v2791
      %v3041 = vunpack.c.h.b16 %v2791
      %v3042 = vunpack.c.l.b16 %v2792
      %v3043 = vunpack.c.h.b16 %v2792
      %v3044 = vunpack.c.l.b16 %v2793
      %v3045 = vunpack.c.h.b16 %v2793
      %v3046 = vunpack.c.l.b16 %v2794
      %v3047 = vunpack.c.l.b16 %v2795
      %v3048 = vunpack.c.h.b16 %v2795
      %v3049 = vunpack.c.l.b16 %v2796
      %v3050 = vunpack.c.h.b16 %v2796
      %v3051 = vunpack.c.l.b16 %v2797
      %v3052 = vunpack.c.h.b16 %v2797
      %v3053 = vunpack.c.l.b16 %v2798
      %v3054 = vunpack.c.h.b16 %v2798
      %v3055 = vunpack.c.l.b16 %v2799
      %v3056 = vunpack.c.l.b16 %v2800
      %v3057 = vunpack.c.h.b16 %v2800
      %v3058 = vunpack.c.l.b16 %v2801
      %v3059 = vunpack.c.h.b16 %v2801
      %v3060 = vunpack.c.l.b16 %v2802
      %v3061 = vunpack.c.h.b16 %v2802
      %v3062 = vunpack.c.l.b16 %v2803
      %v3063 = vunpack.c.h.b16 %v2803
      %v3064 = vunpack.c.l.b16 %v2804
      %v3065 = vunpack.c.l.b16 %v2805
      %v3066 = vunpack.c.h.b16 %v2805
      %v3067 = vunpack.c.l.b16 %v2806
      %v3068 = vunpack.c.h.b16 %v2806
      %v3069 = vunpack.c.l.b16 %v2807
      %v3070 = vunpack.c.h.b16 %v2807
      %v3071 = vunpack.c.l.b16 %v2808
      %v3072 = vunpack.c.h.b16 %v2808
      %v3073 = vunpack.c.l.b16 %v2809
      %v3074 = vunpack.c.l.b16 %v2810
      %v3075 = vunpack.c.h.b16 %v2810
      %v3076 = vunpack.c.l.b16 %v2811
      %v3077 = vunpack.c.h.b16 %v2811
      %v3078 = vunpack.c.l.b16 %v2812
      %v3079 = vunpack.c.h.b16 %v2812
      %v3080 = vunpack.c.l.b16 %v2813
      %v3081 = vunpack.c.h.b16 %v2813
      %v3082 = vunpack.c.l.b16 %v2814
      %v3083 = vunpack.c.l.b16 %v2815
      %v3084 = vunpack.c.h.b16 %v2815
      %v3085 = vunpack.c.l.b16 %v2816
      %v3086 = vunpack.c.h.b16 %v2816
      %v3087 = vunpack.c.l.b16 %v2817
      %v3088 = vunpack.c.h.b16 %v2817
      %v3089 = vunpack.c.l.b16 %v2818
      %v3090 = vunpack.c.h.b16 %v2818
      %v3091 = vunpack.c.l.b16 %v2819
      %v3092 = vunpack.c.l.b16 %v2820
      %v3093 = vunpack.c.h.b16 %v2820
      %v3094 = vunpack.c.l.b16 %v2821
      %v3095 = vunpack.c.h.b16 %v2821
      %v3096 = vunpack.c.l.b16 %v2822
      %v3097 = vunpack.c.h.b16 %v2822
      %v3098 = vunpack.c.l.b16 %v2823
      %v3099 = vunpack.c.h.b16 %v2823
      %v3100 = vunpack.c.l.b16 %v2824
      %v3101 = vunpack.c.l.b16 %v2825
      %v3102 = vunpack.c.h.b16 %v2825
      %v3103 = vunpack.c.l.b16 %v2826
      %v3104 = vunpack.c.h.b16 %v2826
      %v3105 = vunpack.c.l.b16 %v2827
      %v3106 = vunpack.c.h.b16 %v2827
      %v3107 = vunpack.c.l.b16 %v2828
      %v3108 = vunpack.c.h.b16 %v2828
      %v3109 = vunpack.c.l.b16 %v2829
      %v3110 = vunpack.c.l.b16 %v2830
      %v3111 = vunpack.c.h.b16 %v2830
      %v3112 = vunpack.c.l.b16 %v2831
      %v3113 = vunpack.c.h.b16 %v2831
      %v3114 = vunpack.c.l.b16 %v2832
      %v3115 = vunpack.c.h.b16 %v2832
      %v3116 = vunpack.c.l.b16 %v2833
      %v3117 = vunpack.c.h.b16 %v2833
      %v3118 = vunpack.c.l.b16 %v2834
      %v3119 = vunpack.c.l.b16 %v2835
      %v3120 = vunpack.c.h.b16 %v2835
      %v3121 = vunpack.c.l.b16 %v2836
      %v3122 = vunpack.c.h.b16 %v2836
      %v3123 = vunpack.c.l.b16 %v2837
      %v3124 = vunpack.c.h.b16 %v2837
      %v3125 = vunpack.c.l.b16 %v2838
      %v3126 = vunpack.c.h.b16 %v2838
      %v3127 = vunpack.c.l.b16 %v2839
      %v3128 = vunpack.c.l.b16 %v2840
      %v3129 = vunpack.c.h.b16 %v2840
      %v3130 = vunpack.c.l.b16 %v2841
      %v3131 = vunpack.c.h.b16 %v2841
      %v3132 = vunpack.c.l.b16 %v2842
      %v3133 = vunpack.c.h.b16 %v2842
      %v3134 = vunpack.c.l.b16 %v2843
      %v3135 = vunpack.c.h.b16 %v2843
      %v3136 = vunpack.c.l.b16 %v2844
      %v3137 = vunpack.c.l.b16 %v2845
      %v3138 = vunpack.c.h.b16 %v2845
      %v3139 = vunpack.c.l.b16 %v2846
      %v3140 = vunpack.c.h.b16 %v2846
      %v3141 = vunpack.c.l.b16 %v2847
      %v3142 = vunpack.c.h.b16 %v2847
      %v3143 = vunpack.c.l.b16 %v2848
      %v3144 = vunpack.c.h.b16 %v2848
      %v3145 = vunpack.c.l.b16 %v2849
      %v3146 = vpack.c.b16 %v3011, %v3002
      %v3147 = vpack.c.b16 %v3012, %v3003
      %v3148 = vpack.c.b16 %v3013, %v3004
      %v3149 = vpack.c.b16 %v3014, %v3005
      %v3150 = vpack.c.b16 %v3015, %v3006
      %v3151 = vpack.c.b16 %v3016, %v3007
      %v3152 = vpack.c.b16 %v3017, %v3008
      %v3153 = vpack.c.b16 %v3018, %v3009
      %v3154 = vpack.c.b16 %v3019, %v3010
      %v3155 = vpack.c.b16 %v3029, %v3020
      %v3156 = vpack.c.b16 %v3030, %v3021
      %v3157 = vpack.c.b16 %v3031, %v3022
      %v3158 = vpack.c.b16 %v3032, %v3023
      %v3159 = vpack.c.b16 %v3033, %v3024
      %v3160 = vpack.c.b16 %v3034, %v3025
      %v3161 = vpack.c.b16 %v3035, %v3026
      %v3162 = vpack.c.b16 %v3036, %v3027
      %v3163 = vpack.c.b16 %v3037, %v3028
      %v3164 = vpack.c.b16 %v3047, %v3038
      %v3165 = vpack.c.b16 %v3048, %v3039
      %v3166 = vpack.c.b16 %v3049, %v3040
      %v3167 = vpack.c.b16 %v3050, %v3041
      %v3168 = vpack.c.b16 %v3051, %v3042
      %v3169 = vpack.c.b16 %v3052, %v3043
      %v3170 = vpack.c.b16 %v3053, %v3044
      %v3171 = vpack.c.b16 %v3054, %v3045
      %v3172 = vpack.c.b16 %v3055, %v3046
      %v3173 = vpack.c.b16 %v3065, %v3056
      %v3174 = vpack.c.b16 %v3066, %v3057
      %v3175 = vpack.c.b16 %v3067, %v3058
      %v3176 = vpack.c.b16 %v3068, %v3059
      %v3177 = vpack.c.b16 %v3069, %v3060
      %v3178 = vpack.c.b16 %v3070, %v3061
      %v3179 = vpack.c.b16 %v3071, %v3062
      %v3180 = vpack.c.b16 %v3072, %v3063
      %v3181 = vpack.c.b16 %v3073, %v3064
      %v3182 = vpack.c.b16 %v3083, %v3074
      %v3183 = vpack.c.b16 %v3084, %v3075
      %v3184 = vpack.c.b16 %v3085, %v3076
      %v3185 = vpack.c.b16 %v3086, %v3077
      %v3186 = vpack.c.b16 %v3087, %v3078
      %v3187 = vpack.c.b16 %v3088, %v3079
      %v3188 = vpack.c.b16 %v3089, %v3080
      %v3189 = vpack.c.b16 %v3090, %v3081
      %v3190 = vpack.c.b16 %v3091, %v3082
      %v3191 = vpack.c.b16 %v3101, %v3092
      %v3192 = vpack.c.b16 %v3102, %v3093
      %v3193 = vpack.c.b16 %v3103, %v3094
      %v3194 = vpack.c.b16 %v3104, %v3095
      %v3195 = vpack.c.b16 %v3105, %v3096
      %v3196 = vpack.c.b16 %v3106, %v3097
      %v3197 = vpack.c.b16 %v3107, %v3098
      %v3198 = vpack.c.b16 %v3108, %v3099
      %v3199 = vpack.c.b16 %v3109, %v3100
      %v3200 = vpack.c.b16 %v3119, %v3110
      %v3201 = vpack.c.b16 %v3120, %v3111
      %v3202 = vpack.c.b16 %v3121, %v3112
      %v3203 = vpack.c.b16 %v3122, %v3113
      %v3204 = vpack.c.b16 %v3123, %v3114
      %v3205 = vpack.c.b16 %v3124, %v3115
      %v3206 = vpack.c.b16 %v3125, %v3116
      %v3207 = vpack.c.b16 %v3126, %v3117
      %v3208 = vpack.c.b16 %v3127, %v3118
      %v3209 = vpack.c.b16 %v3137, %v3128
      %v3210 = vpack.c.b16 %v3138, %v3129
      %v3211 = vpack.c.b16 %v3139, %v3130
      %v3212 = vpack.c.b16 %v3140, %v3131
      %v3213 = vpack.c.b16 %v3141, %v3132
      %v3214 = vpack.c.b16 %v3142, %v3133
      %v3215 = vpack.c.b16 %v3143, %v3134
      %v3216 = vpack.c.b16 %v3144, %v3135
      %v3217 = vpack.c.b16 %v3145, %v3136
      %3506 = vrot.lane.b32.xlu0 %v2625, 112
      %v3507 = vpop.permute.xlu0 %3506
      %3508 = vrot.lane.b32.xlu0 %v2626, 112
      %v3509 = vpop.permute.xlu0 %3508
      %3510 = vrot.lane.b32.xlu0 %v2850, 112
      %v3511 = vpop.permute.xlu0 %3510
      %3512 = vrot.lane.b32.xlu0 %v2627, 112
      %v3513 = vpop.permute.xlu0 %3512
      %3514 = vrot.lane.b32.xlu0 %v2628, 112
      %v3515 = vpop.permute.xlu0 %3514
      %3516 = vrot.lane.b32.xlu0 %v2851, 112
      %v3517 = vpop.permute.xlu0 %3516
      %3518 = vrot.lane.b32.xlu0 %v2629, 112
      %v3519 = vpop.permute.xlu0 %3518
      %3520 = vrot.lane.b32.xlu0 %v2630, 112
      %v3521 = vpop.permute.xlu0 %3520
      %3522 = vrot.lane.b32.xlu0 %v2852, 112
      %v3523 = vpop.permute.xlu0 %3522
      %3524 = vrot.lane.b32.xlu0 %v2631, 112
      %v3525 = vpop.permute.xlu0 %3524
      %3526 = vrot.lane.b32.xlu0 %v2632, 112
      %v3527 = vpop.permute.xlu0 %3526
      %3528 = vrot.lane.b32.xlu0 %v2853, 112
      %v3529 = vpop.permute.xlu0 %3528
      %3530 = vrot.lane.b32.xlu0 %v2633, 112
      %v3531 = vpop.permute.xlu0 %3530
      %3532 = vrot.lane.b32.xlu0 %v2634, 112
      %v3533 = vpop.permute.xlu0 %3532
      %3534 = vrot.lane.b32.xlu0 %v2854, 112
      %v3535 = vpop.permute.xlu0 %3534
      %3536 = vrot.lane.b32.xlu0 %v2635, 112
      %v3537 = vpop.permute.xlu0 %3536
      %3538 = vrot.lane.b32.xlu0 %v2636, 112
      %v3539 = vpop.permute.xlu0 %3538
      %3540 = vrot.lane.b32.xlu0 %v2855, 112
      %v3541 = vpop.permute.xlu0 %3540
      %3542 = vrot.lane.b32.xlu0 %v2637, 112
      %v3543 = vpop.permute.xlu0 %3542
      %3544 = vrot.lane.b32.xlu0 %v2638, 112
      %v3545 = vpop.permute.xlu0 %3544
      %3546 = vrot.lane.b32.xlu0 %v2856, 112
      %v3547 = vpop.permute.xlu0 %3546
      %3548 = vrot.lane.b32.xlu0 %v2639, 112
      %v3549 = vpop.permute.xlu0 %3548
      %3550 = vrot.lane.b32.xlu0 %v2640, 112
      %v3551 = vpop.permute.xlu0 %3550
      %3552 = vrot.lane.b32.xlu0 %v2857, 112
      %v3553 = vpop.permute.xlu0 %3552
      %3554 = vrot.lane.b32.xlu0 %v2641, 112
      %v3555 = vpop.permute.xlu0 %3554
      %3556 = vrot.lane.b32.xlu0 %v2642, 112
      %v3557 = vpop.permute.xlu0 %3556
      %3558 = vrot.lane.b32.xlu0 %v2858, 112
      %v3559 = vpop.permute.xlu0 %3558
      %3560 = vrot.lane.b32.xlu0 %v2643, 112
      %v3561 = vpop.permute.xlu0 %3560
      %3562 = vrot.lane.b32.xlu0 %v2644, 112
      %v3563 = vpop.permute.xlu0 %3562
      %3564 = vrot.lane.b32.xlu0 %v2859, 112
      %v3565 = vpop.permute.xlu0 %3564
      %3566 = vrot.lane.b32.xlu0 %v2645, 112
      %v3567 = vpop.permute.xlu0 %3566
      %3568 = vrot.lane.b32.xlu0 %v2646, 112
      %v3569 = vpop.permute.xlu0 %3568
      %3570 = vrot.lane.b32.xlu0 %v2860, 112
      %v3571 = vpop.permute.xlu0 %3570
      %3572 = vrot.lane.b32.xlu0 %v2647, 112
      %v3573 = vpop.permute.xlu0 %3572
      %3574 = vrot.lane.b32.xlu0 %v2648, 112
      %v3575 = vpop.permute.xlu0 %3574
      %3576 = vrot.lane.b32.xlu0 %v2861, 112
      %v3577 = vpop.permute.xlu0 %3576
      %3578 = vrot.lane.b32.xlu0 %v2649, 112
      %v3579 = vpop.permute.xlu0 %3578
      %3580 = vrot.lane.b32.xlu0 %v2650, 112
      %v3581 = vpop.permute.xlu0 %3580
      %3582 = vrot.lane.b32.xlu0 %v2862, 112
      %v3583 = vpop.permute.xlu0 %3582
      %3584 = vrot.lane.b32.xlu0 %v2651, 112
      %v3585 = vpop.permute.xlu0 %3584
      %3586 = vrot.lane.b32.xlu0 %v2652, 112
      %v3587 = vpop.permute.xlu0 %3586
      %3588 = vrot.lane.b32.xlu0 %v2863, 112
      %v3589 = vpop.permute.xlu0 %3588
      %3590 = vrot.lane.b32.xlu0 %v2653, 112
      %v3591 = vpop.permute.xlu0 %3590
      %3592 = vrot.lane.b32.xlu0 %v2654, 112
      %v3593 = vpop.permute.xlu0 %3592
      %3594 = vrot.lane.b32.xlu0 %v2864, 112
      %v3595 = vpop.permute.xlu0 %3594
      %3596 = vrot.lane.b32.xlu0 %v2655, 112
      %v3597 = vpop.permute.xlu0 %3596
      %3598 = vrot.lane.b32.xlu0 %v2656, 112
      %v3599 = vpop.permute.xlu0 %3598
      %3600 = vrot.lane.b32.xlu0 %v2865, 112
      %v3601 = vpop.permute.xlu0 %3600
      %3602 = vrot.lane.b32.xlu0 %v2657, 112
      %v3603 = vpop.permute.xlu0 %3602
      %3604 = vrot.lane.b32.xlu0 %v2658, 112
      %v3605 = vpop.permute.xlu0 %3604
      %3606 = vrot.lane.b32.xlu0 %v2866, 112
      %v3607 = vpop.permute.xlu0 %3606
      %3608 = vrot.lane.b32.xlu0 %v2659, 112
      %v3609 = vpop.permute.xlu0 %3608
      %3610 = vrot.lane.b32.xlu0 %v2660, 112
      %v3611 = vpop.permute.xlu0 %3610
      %3612 = vrot.lane.b32.xlu0 %v2867, 112
      %v3613 = vpop.permute.xlu0 %3612
      %3614 = vrot.lane.b32.xlu0 %v2661, 112
      %v3615 = vpop.permute.xlu0 %3614
      %3616 = vrot.lane.b32.xlu0 %v2662, 112
      %v3617 = vpop.permute.xlu0 %3616
      %3618 = vrot.lane.b32.xlu0 %v2868, 112
      %v3619 = vpop.permute.xlu0 %3618
      %3620 = vrot.lane.b32.xlu0 %v2663, 112
      %v3621 = vpop.permute.xlu0 %3620
      %3622 = vrot.lane.b32.xlu0 %v2664, 112
      %v3623 = vpop.permute.xlu0 %3622
      %3624 = vrot.lane.b32.xlu0 %v2869, 112
      %v3625 = vpop.permute.xlu0 %3624
      %3626 = vrot.lane.b32.xlu0 %v2665, 112
      %v3627 = vpop.permute.xlu0 %3626
      %3628 = vrot.lane.b32.xlu0 %v2666, 112
      %v3629 = vpop.permute.xlu0 %3628
      %3630 = vrot.lane.b32.xlu0 %v2870, 112
      %v3631 = vpop.permute.xlu0 %3630
      %3632 = vrot.lane.b32.xlu0 %v2667, 112
      %v3633 = vpop.permute.xlu0 %3632
      %3634 = vrot.lane.b32.xlu0 %v2668, 112
      %v3635 = vpop.permute.xlu0 %3634
      %3636 = vrot.lane.b32.xlu0 %v2871, 112
      %v3637 = vpop.permute.xlu0 %3636
      %3638 = vrot.lane.b32.xlu0 %v2669, 112
      %v3639 = vpop.permute.xlu0 %3638
      %3640 = vrot.lane.b32.xlu0 %v2670, 112
      %v3641 = vpop.permute.xlu0 %3640
      %3642 = vrot.lane.b32.xlu0 %v2872, 112
      %v3643 = vpop.permute.xlu0 %3642
      %3644 = vrot.lane.b32.xlu0 %v2671, 112
      %v3645 = vpop.permute.xlu0 %3644
      %3646 = vrot.lane.b32.xlu0 %v2672, 112
      %v3647 = vpop.permute.xlu0 %3646
      %3648 = vrot.lane.b32.xlu0 %v2873, 112
      %v3649 = vpop.permute.xlu0 %3648
      %3650 = vrot.lane.b32.xlu0 %v2673, 112
      %v3651 = vpop.permute.xlu0 %3650
      %3652 = vrot.lane.b32.xlu0 %v2674, 112
      %v3653 = vpop.permute.xlu0 %3652
      %3654 = vrot.lane.b32.xlu0 %v2874, 112
      %v3655 = vpop.permute.xlu0 %3654
      %3656 = vrot.lane.b32.xlu0 %v2675, 112
      %v3657 = vpop.permute.xlu0 %3656
      %3658 = vrot.lane.b32.xlu0 %v2676, 112
      %v3659 = vpop.permute.xlu0 %3658
      %3660 = vrot.lane.b32.xlu0 %v2875, 112
      %v3661 = vpop.permute.xlu0 %3660
      %3662 = vrot.lane.b32.xlu0 %v2677, 112
      %v3663 = vpop.permute.xlu0 %3662
      %3664 = vrot.lane.b32.xlu0 %v2678, 112
      %v3665 = vpop.permute.xlu0 %3664
      %3666 = vrot.lane.b32.xlu0 %v2876, 112
      %v3667 = vpop.permute.xlu0 %3666
      %3668 = vrot.lane.b32.xlu0 %v2679, 112
      %v3669 = vpop.permute.xlu0 %3668
      %3670 = vrot.lane.b32.xlu0 %v2680, 112
      %v3671 = vpop.permute.xlu0 %3670
      %3672 = vrot.lane.b32.xlu0 %v2877, 112
      %v3673 = vpop.permute.xlu0 %3672
      %3674 = vrot.lane.b32.xlu0 %v2681, 112
      %v3675 = vpop.permute.xlu0 %3674
      %3676 = vrot.lane.b32.xlu0 %v2682, 112
      %v3677 = vpop.permute.xlu0 %3676
      %3678 = vrot.lane.b32.xlu0 %v2878, 112
      %v3679 = vpop.permute.xlu0 %3678
      %3680 = vrot.lane.b32.xlu0 %v2683, 112
      %v3681 = vpop.permute.xlu0 %3680
      %3682 = vrot.lane.b32.xlu0 %v2684, 112
      %v3683 = vpop.permute.xlu0 %3682
      %3684 = vrot.lane.b32.xlu0 %v2879, 112
      %v3685 = vpop.permute.xlu0 %3684
      %3686 = vrot.lane.b32.xlu0 %v2685, 112
      %v3687 = vpop.permute.xlu0 %3686
      %3688 = vrot.lane.b32.xlu0 %v2686, 112
      %v3689 = vpop.permute.xlu0 %3688
      %3690 = vrot.lane.b32.xlu0 %v2880, 112
      %v3691 = vpop.permute.xlu0 %3690
      %3692 = vrot.lane.b32.xlu0 %v2687, 112
      %v3693 = vpop.permute.xlu0 %3692
      %3694 = vrot.lane.b32.xlu0 %v2688, 112
      %v3695 = vpop.permute.xlu0 %3694
      %3696 = vrot.lane.b32.xlu0 %v2881, 112
      %v3697 = vpop.permute.xlu0 %3696
      %3698 = vrot.lane.b32.xlu0 %v2689, 112
      %v3699 = vpop.permute.xlu0 %3698
      %3700 = vrot.lane.b32.xlu0 %v2690, 112
      %v3701 = vpop.permute.xlu0 %3700
      %3702 = vrot.lane.b32.xlu0 %v2882, 112
      %v3703 = vpop.permute.xlu0 %3702
      %3704 = vrot.lane.b32.xlu0 %v2691, 112
      %v3705 = vpop.permute.xlu0 %3704
      %3706 = vrot.lane.b32.xlu0 %v2692, 112
      %v3707 = vpop.permute.xlu0 %3706
      %3708 = vrot.lane.b32.xlu0 %v2883, 112
      %v3709 = vpop.permute.xlu0 %3708
      %3710 = vrot.lane.b32.xlu0 %v2693, 112
      %v3711 = vpop.permute.xlu0 %3710
      %3712 = vrot.lane.b32.xlu0 %v2694, 112
      %v3713 = vpop.permute.xlu0 %3712
      %3714 = vrot.lane.b32.xlu0 %v2884, 112
      %v3715 = vpop.permute.xlu0 %3714
      %3716 = vrot.lane.b32.xlu0 %v2695, 112
      %v3717 = vpop.permute.xlu0 %3716
      %3718 = vrot.lane.b32.xlu0 %v2696, 112
      %v3719 = vpop.permute.xlu0 %3718
      %3720 = vrot.lane.b32.xlu0 %v2885, 112
      %v3721 = vpop.permute.xlu0 %3720
      %3722 = vrot.lane.b32.xlu0 %v2697, 112
      %v3723 = vpop.permute.xlu0 %3722
      %3724 = vrot.lane.b32.xlu0 %v2698, 112
      %v3725 = vpop.permute.xlu0 %3724
      %3726 = vrot.lane.b32.xlu0 %v2886, 112
      %v3727 = vpop.permute.xlu0 %3726
      %3728 = vrot.lane.b32.xlu0 %v2699, 112
      %v3729 = vpop.permute.xlu0 %3728
      %3730 = vrot.lane.b32.xlu0 %v2700, 112
      %v3731 = vpop.permute.xlu0 %3730
      %3732 = vrot.lane.b32.xlu0 %v2887, 112
      %v3733 = vpop.permute.xlu0 %3732
      %3734 = vrot.lane.b32.xlu0 %v2701, 112
      %v3735 = vpop.permute.xlu0 %3734
      %3736 = vrot.lane.b32.xlu0 %v2702, 112
      %v3737 = vpop.permute.xlu0 %3736
      %3738 = vrot.lane.b32.xlu0 %v2888, 112
      %v3739 = vpop.permute.xlu0 %3738
      %3740 = vrot.lane.b32.xlu0 %v2703, 112
      %v3741 = vpop.permute.xlu0 %3740
      %3742 = vrot.lane.b32.xlu0 %v2704, 112
      %v3743 = vpop.permute.xlu0 %3742
      %3744 = vrot.lane.b32.xlu0 %v2889, 112
      %v3745 = vpop.permute.xlu0 %3744
      %3746 = vrot.lane.b32.xlu0 %v2705, 112
      %v3747 = vpop.permute.xlu0 %3746
      %3748 = vrot.lane.b32.xlu0 %v2706, 112
      %v3749 = vpop.permute.xlu0 %3748
      %3750 = vrot.lane.b32.xlu0 %v2890, 112
      %v3751 = vpop.permute.xlu0 %3750
      %3752 = vrot.lane.b32.xlu0 %v2707, 112
      %v3753 = vpop.permute.xlu0 %3752
      %3754 = vrot.lane.b32.xlu0 %v2708, 112
      %v3755 = vpop.permute.xlu0 %3754
      %3756 = vrot.lane.b32.xlu0 %v2891, 112
      %v3757 = vpop.permute.xlu0 %3756
      %3758 = vrot.lane.b32.xlu0 %v2709, 112
      %v3759 = vpop.permute.xlu0 %3758
      %3760 = vrot.lane.b32.xlu0 %v2710, 112
      %v3761 = vpop.permute.xlu0 %3760
      %3762 = vrot.lane.b32.xlu0 %v2892, 112
      %v3763 = vpop.permute.xlu0 %3762
      %3764 = vrot.lane.b32.xlu0 %v2711, 112
      %v3765 = vpop.permute.xlu0 %3764
      %3766 = vrot.lane.b32.xlu0 %v2712, 112
      %v3767 = vpop.permute.xlu0 %3766
      %3768 = vrot.lane.b32.xlu0 %v2893, 112
      %v3769 = vpop.permute.xlu0 %3768
      %3770 = vrot.lane.b32.xlu0 %v2713, 112
      %v3771 = vpop.permute.xlu0 %3770
      %3772 = vrot.lane.b32.xlu0 %v2714, 112
      %v3773 = vpop.permute.xlu0 %3772
      %3774 = vrot.lane.b32.xlu0 %v2894, 112
      %v3775 = vpop.permute.xlu0 %3774
      %3776 = vrot.lane.b32.xlu0 %v2715, 112
      %v3777 = vpop.permute.xlu0 %3776
      %3778 = vrot.lane.b32.xlu0 %v2716, 112
      %v3779 = vpop.permute.xlu0 %3778
      %3780 = vrot.lane.b32.xlu0 %v2895, 112
      %v3781 = vpop.permute.xlu0 %3780
      %3782 = vrot.lane.b32.xlu0 %v2717, 112
      %v3783 = vpop.permute.xlu0 %3782
      %3784 = vrot.lane.b32.xlu0 %v2718, 112
      %v3785 = vpop.permute.xlu0 %3784
      %3786 = vrot.lane.b32.xlu0 %v2896, 112
      %v3787 = vpop.permute.xlu0 %3786
      %3788 = vrot.lane.b32.xlu0 %v2719, 112
      %v3789 = vpop.permute.xlu0 %3788
      %3790 = vrot.lane.b32.xlu0 %v2720, 112
      %v3791 = vpop.permute.xlu0 %3790
      %3792 = vrot.lane.b32.xlu0 %v2897, 112
      %v3793 = vpop.permute.xlu0 %3792
      %3794 = vrot.lane.b32.xlu0 %v2721, 112
      %v3795 = vpop.permute.xlu0 %3794
      %3796 = vrot.lane.b32.xlu0 %v2722, 112
      %v3797 = vpop.permute.xlu0 %3796
      %3798 = vrot.lane.b32.xlu0 %v2898, 112
      %v3799 = vpop.permute.xlu0 %3798
      %3800 = vrot.lane.b32.xlu0 %v2723, 112
      %v3801 = vpop.permute.xlu0 %3800
      %3802 = vrot.lane.b32.xlu0 %v2724, 112
      %v3803 = vpop.permute.xlu0 %3802
      %3804 = vrot.lane.b32.xlu0 %v2899, 112
      %v3805 = vpop.permute.xlu0 %3804
      %3806 = vrot.lane.b32.xlu0 %v2725, 112
      %v3807 = vpop.permute.xlu0 %3806
      %3808 = vrot.lane.b32.xlu0 %v2726, 112
      %v3809 = vpop.permute.xlu0 %3808
      %3810 = vrot.lane.b32.xlu0 %v2900, 112
      %v3811 = vpop.permute.xlu0 %3810
      %3812 = vrot.lane.b32.xlu0 %v2727, 112
      %v3813 = vpop.permute.xlu0 %3812
      %3814 = vrot.lane.b32.xlu0 %v2728, 112
      %v3815 = vpop.permute.xlu0 %3814
      %3816 = vrot.lane.b32.xlu0 %v2901, 112
      %v3817 = vpop.permute.xlu0 %3816
      %3818 = vrot.lane.b32.xlu0 %v2729, 112
      %v3819 = vpop.permute.xlu0 %3818
      %3820 = vrot.lane.b32.xlu0 %v2730, 112
      %v3821 = vpop.permute.xlu0 %3820
      %3822 = vrot.lane.b32.xlu0 %v2902, 112
      %v3823 = vpop.permute.xlu0 %3822
      %3824 = vrot.lane.b32.xlu0 %v2731, 112
      %v3825 = vpop.permute.xlu0 %3824
      %3826 = vrot.lane.b32.xlu0 %v2732, 112
      %v3827 = vpop.permute.xlu0 %3826
      %3828 = vrot.lane.b32.xlu0 %v2903, 112
      %v3829 = vpop.permute.xlu0 %3828
      %3830 = vrot.lane.b32.xlu0 %v2733, 112
      %v3831 = vpop.permute.xlu0 %3830
      %3832 = vrot.lane.b32.xlu0 %v2734, 112
      %v3833 = vpop.permute.xlu0 %3832
      %3834 = vrot.lane.b32.xlu0 %v2904, 112
      %v3835 = vpop.permute.xlu0 %3834
      %3836 = vrot.lane.b32.xlu0 %v2735, 112
      %v3837 = vpop.permute.xlu0 %3836
      %3838 = vrot.lane.b32.xlu0 %v2736, 112
      %v3839 = vpop.permute.xlu0 %3838
      %3840 = vrot.lane.b32.xlu0 %v2905, 112
      %v3841 = vpop.permute.xlu0 %3840
      %3842 = vrot.lane.b32.xlu0 %v2737, 112
      %v3843 = vpop.permute.xlu0 %3842
      %3844 = vrot.lane.b32.xlu0 %v2738, 112
      %v3845 = vpop.permute.xlu0 %3844
      %3846 = vrot.lane.b32.xlu0 %v2906, 112
      %v3847 = vpop.permute.xlu0 %3846
      %3848 = vrot.lane.b32.xlu0 %v2739, 112
      %v3849 = vpop.permute.xlu0 %3848
      %3850 = vrot.lane.b32.xlu0 %v2740, 112
      %v3851 = vpop.permute.xlu0 %3850
      %3852 = vrot.lane.b32.xlu0 %v2907, 112
      %v3853 = vpop.permute.xlu0 %3852
      %3854 = vrot.lane.b32.xlu0 %v2741, 112
      %v3855 = vpop.permute.xlu0 %3854
      %3856 = vrot.lane.b32.xlu0 %v2742, 112
      %v3857 = vpop.permute.xlu0 %3856
      %3858 = vrot.lane.b32.xlu0 %v2908, 112
      %v3859 = vpop.permute.xlu0 %3858
      %3860 = vrot.lane.b32.xlu0 %v2743, 112
      %v3861 = vpop.permute.xlu0 %3860
      %3862 = vrot.lane.b32.xlu0 %v2744, 112
      %v3863 = vpop.permute.xlu0 %3862
      %3864 = vrot.lane.b32.xlu0 %v2909, 112
      %v3865 = vpop.permute.xlu0 %3864
      %3866 = vrot.lane.b32.xlu0 %v2745, 112
      %v3867 = vpop.permute.xlu0 %3866
      %3868 = vrot.lane.b32.xlu0 %v2746, 112
      %v3869 = vpop.permute.xlu0 %3868
      %3870 = vrot.lane.b32.xlu0 %v2910, 112
      %v3871 = vpop.permute.xlu0 %3870
      %3872 = vrot.lane.b32.xlu0 %v2747, 112
      %v3873 = vpop.permute.xlu0 %3872
      %3874 = vrot.lane.b32.xlu0 %v2748, 112
      %v3875 = vpop.permute.xlu0 %3874
      %3876 = vrot.lane.b32.xlu0 %v2911, 112
      %v3877 = vpop.permute.xlu0 %3876
      %3878 = vrot.lane.b32.xlu0 %v2749, 112
      %v3879 = vpop.permute.xlu0 %3878
      %3880 = vrot.lane.b32.xlu0 %v2750, 112
      %v3881 = vpop.permute.xlu0 %3880
      %3882 = vrot.lane.b32.xlu0 %v2912, 112
      %v3883 = vpop.permute.xlu0 %3882
      %3884 = vrot.lane.b32.xlu0 %v2751, 112
      %v3885 = vpop.permute.xlu0 %3884
      %3886 = vrot.lane.b32.xlu0 %v2752, 112
      %v3887 = vpop.permute.xlu0 %3886
      %3888 = vrot.lane.b32.xlu0 %v2913, 112
      %v3889 = vpop.permute.xlu0 %3888
      %3890 = vrot.lane.b32.xlu0 %v2753, 112
      %v3891 = vpop.permute.xlu0 %3890
      %3892 = vrot.lane.b32.xlu0 %v2754, 112
      %v3893 = vpop.permute.xlu0 %3892
      %3894 = vrot.lane.b32.xlu0 %v2914, 112
      %v3895 = vpop.permute.xlu0 %3894
      %3896 = vrot.lane.b32.xlu0 %v2755, 112
      %v3897 = vpop.permute.xlu0 %3896
      %3898 = vrot.lane.b32.xlu0 %v2756, 112
      %v3899 = vpop.permute.xlu0 %3898
      %3900 = vrot.lane.b32.xlu0 %v2915, 112
      %v3901 = vpop.permute.xlu0 %3900
      %3902 = vrot.lane.b32.xlu0 %v2757, 112
      %v3903 = vpop.permute.xlu0 %3902
      %3904 = vrot.lane.b32.xlu0 %v2758, 112
      %v3905 = vpop.permute.xlu0 %3904
      %3906 = vrot.lane.b32.xlu0 %v2916, 112
      %v3907 = vpop.permute.xlu0 %3906
      %3908 = vrot.lane.b32.xlu0 %v2759, 112
      %v3909 = vpop.permute.xlu0 %3908
      %3910 = vrot.lane.b32.xlu0 %v2760, 112
      %v3911 = vpop.permute.xlu0 %3910
      %3912 = vrot.lane.b32.xlu0 %v2917, 112
      %v3913 = vpop.permute.xlu0 %3912
      %3914 = vrot.lane.b32.xlu0 %v2761, 112
      %v3915 = vpop.permute.xlu0 %3914
      %3916 = vrot.lane.b32.xlu0 %v2762, 112
      %v3917 = vpop.permute.xlu0 %3916
      %3918 = vrot.lane.b32.xlu0 %v2918, 112
      %v3919 = vpop.permute.xlu0 %3918
      %3920 = vrot.lane.b32.xlu0 %v2763, 112
      %v3921 = vpop.permute.xlu0 %3920
      %3922 = vrot.lane.b32.xlu0 %v2764, 112
      %v3923 = vpop.permute.xlu0 %3922
      %3924 = vrot.lane.b32.xlu0 %v2919, 112
      %v3925 = vpop.permute.xlu0 %3924
      %3926 = vrot.lane.b32.xlu0 %v2765, 112
      %v3927 = vpop.permute.xlu0 %3926
      %3928 = vrot.lane.b32.xlu0 %v2766, 112
      %v3929 = vpop.permute.xlu0 %3928
      %3930 = vrot.lane.b32.xlu0 %v2920, 112
      %v3931 = vpop.permute.xlu0 %3930
      %3932 = vrot.lane.b32.xlu0 %v2767, 112
      %v3933 = vpop.permute.xlu0 %3932
      %3934 = vrot.lane.b32.xlu0 %v2768, 112
      %v3935 = vpop.permute.xlu0 %3934
      %3936 = vrot.lane.b32.xlu0 %v2921, 112
      %v3937 = vpop.permute.xlu0 %3936
      %vm3938 = vcmask 916480
      %v3939 = vsel %vm3938, %v3507, %v3509
      %v3940 = vsel %vm3938, %v3509, %v3511
      %v3941 = vsel %vm3938, %v3513, %v3515
      %v3942 = vsel %vm3938, %v3515, %v3517
      %v3943 = vsel %vm3938, %v3519, %v3521
      %v3944 = vsel %vm3938, %v3521, %v3523
      %v3945 = vsel %vm3938, %v3525, %v3527
      %v3946 = vsel %vm3938, %v3527, %v3529
      %v3947 = vsel %vm3938, %v3531, %v3533
      %v3948 = vsel %vm3938, %v3533, %v3535
      %v3949 = vsel %vm3938, %v3537, %v3539
      %v3950 = vsel %vm3938, %v3539, %v3541
      %v3951 = vsel %vm3938, %v3543, %v3545
      %v3952 = vsel %vm3938, %v3545, %v3547
      %v3953 = vsel %vm3938, %v3549, %v3551
      %v3954 = vsel %vm3938, %v3551, %v3553
      %v3955 = vsel %vm3938, %v3555, %v3557
      %v3956 = vsel %vm3938, %v3557, %v3559
      %v3957 = vsel %vm3938, %v3561, %v3563
      %v3958 = vsel %vm3938, %v3563, %v3565
      %v3959 = vsel %vm3938, %v3567, %v3569
      %v3960 = vsel %vm3938, %v3569, %v3571
      %v3961 = vsel %vm3938, %v3573, %v3575
      %v3962 = vsel %vm3938, %v3575, %v3577
      %v3963 = vsel %vm3938, %v3579, %v3581
      %v3964 = vsel %vm3938, %v3581, %v3583
      %v3965 = vsel %vm3938, %v3585, %v3587
      %v3966 = vsel %vm3938, %v3587, %v3589
      %v3967 = vsel %vm3938, %v3591, %v3593
      %v3968 = vsel %vm3938, %v3593, %v3595
      %v3969 = vsel %vm3938, %v3597, %v3599
      %v3970 = vsel %vm3938, %v3599, %v3601
      %v3971 = vsel %vm3938, %v3603, %v3605
      %v3972 = vsel %vm3938, %v3605, %v3607
      %v3973 = vsel %vm3938, %v3609, %v3611
      %v3974 = vsel %vm3938, %v3611, %v3613
      %v3975 = vsel %vm3938, %v3615, %v3617
      %v3976 = vsel %vm3938, %v3617, %v3619
      %v3977 = vsel %vm3938, %v3621, %v3623
      %v3978 = vsel %vm3938, %v3623, %v3625
      %v3979 = vsel %vm3938, %v3627, %v3629
      %v3980 = vsel %vm3938, %v3629, %v3631
      %v3981 = vsel %vm3938, %v3633, %v3635
      %v3982 = vsel %vm3938, %v3635, %v3637
      %v3983 = vsel %vm3938, %v3639, %v3641
      %v3984 = vsel %vm3938, %v3641, %v3643
      %v3985 = vsel %vm3938, %v3645, %v3647
      %v3986 = vsel %vm3938, %v3647, %v3649
      %v3987 = vsel %vm3938, %v3651, %v3653
      %v3988 = vsel %vm3938, %v3653, %v3655
      %v3989 = vsel %vm3938, %v3657, %v3659
      %v3990 = vsel %vm3938, %v3659, %v3661
      %v3991 = vsel %vm3938, %v3663, %v3665
      %v3992 = vsel %vm3938, %v3665, %v3667
      %v3993 = vsel %vm3938, %v3669, %v3671
      %v3994 = vsel %vm3938, %v3671, %v3673
      %v3995 = vsel %vm3938, %v3675, %v3677
      %v3996 = vsel %vm3938, %v3677, %v3679
      %v3997 = vsel %vm3938, %v3681, %v3683
      %v3998 = vsel %vm3938, %v3683, %v3685
      %v3999 = vsel %vm3938, %v3687, %v3689
      %v4000 = vsel %vm3938, %v3689, %v3691
      %v4001 = vsel %vm3938, %v3693, %v3695
      %v4002 = vsel %vm3938, %v3695, %v3697
      %v4003 = vsel %vm3938, %v3699, %v3701
      %v4004 = vsel %vm3938, %v3701, %v3703
      %v4005 = vsel %vm3938, %v3705, %v3707
      %v4006 = vsel %vm3938, %v3707, %v3709
      %v4007 = vsel %vm3938, %v3711, %v3713
      %v4008 = vsel %vm3938, %v3713, %v3715
      %v4009 = vsel %vm3938, %v3717, %v3719
      %v4010 = vsel %vm3938, %v3719, %v3721
      %v4011 = vsel %vm3938, %v3723, %v3725
      %v4012 = vsel %vm3938, %v3725, %v3727
      %v4013 = vsel %vm3938, %v3729, %v3731
      %v4014 = vsel %vm3938, %v3731, %v3733
      %v4015 = vsel %vm3938, %v3735, %v3737
      %v4016 = vsel %vm3938, %v3737, %v3739
      %v4017 = vsel %vm3938, %v3741, %v3743
      %v4018 = vsel %vm3938, %v3743, %v3745
      %v4019 = vsel %vm3938, %v3747, %v3749
      %v4020 = vsel %vm3938, %v3749, %v3751
      %v4021 = vsel %vm3938, %v3753, %v3755
      %v4022 = vsel %vm3938, %v3755, %v3757
      %v4023 = vsel %vm3938, %v3759, %v3761
      %v4024 = vsel %vm3938, %v3761, %v3763
      %v4025 = vsel %vm3938, %v3765, %v3767
      %v4026 = vsel %vm3938, %v3767, %v3769
      %v4027 = vsel %vm3938, %v3771, %v3773
      %v4028 = vsel %vm3938, %v3773, %v3775
      %v4029 = vsel %vm3938, %v3777, %v3779
      %v4030 = vsel %vm3938, %v3779, %v3781
      %v4031 = vsel %vm3938, %v3783, %v3785
      %v4032 = vsel %vm3938, %v3785, %v3787
      %v4033 = vsel %vm3938, %v3789, %v3791
      %v4034 = vsel %vm3938, %v3791, %v3793
      %v4035 = vsel %vm3938, %v3795, %v3797
      %v4036 = vsel %vm3938, %v3797, %v3799
      %v4037 = vsel %vm3938, %v3801, %v3803
      %v4038 = vsel %vm3938, %v3803, %v3805
      %v4039 = vsel %vm3938, %v3807, %v3809
      %v4040 = vsel %vm3938, %v3809, %v3811
      %v4041 = vsel %vm3938, %v3813, %v3815
      %v4042 = vsel %vm3938, %v3815, %v3817
      %v4043 = vsel %vm3938, %v3819, %v3821
      %v4044 = vsel %vm3938, %v3821, %v3823
      %v4045 = vsel %vm3938, %v3825, %v3827
      %v4046 = vsel %vm3938, %v3827, %v3829
      %v4047 = vsel %vm3938, %v3831, %v3833
      %v4048 = vsel %vm3938, %v3833, %v3835
      %v4049 = vsel %vm3938, %v3837, %v3839
      %v4050 = vsel %vm3938, %v3839, %v3841
      %v4051 = vsel %vm3938, %v3843, %v3845
      %v4052 = vsel %vm3938, %v3845, %v3847
      %v4053 = vsel %vm3938, %v3849, %v3851
      %v4054 = vsel %vm3938, %v3851, %v3853
      %v4055 = vsel %vm3938, %v3855, %v3857
      %v4056 = vsel %vm3938, %v3857, %v3859
      %v4057 = vsel %vm3938, %v3861, %v3863
      %v4058 = vsel %vm3938, %v3863, %v3865
      %v4059 = vsel %vm3938, %v3867, %v3869
      %v4060 = vsel %vm3938, %v3869, %v3871
      %v4061 = vsel %vm3938, %v3873, %v3875
      %v4062 = vsel %vm3938, %v3875, %v3877
      %v4063 = vsel %vm3938, %v3879, %v3881
      %v4064 = vsel %vm3938, %v3881, %v3883
      %v4065 = vsel %vm3938, %v3885, %v3887
      %v4066 = vsel %vm3938, %v3887, %v3889
      %v4067 = vsel %vm3938, %v3891, %v3893
      %v4068 = vsel %vm3938, %v3893, %v3895
      %v4069 = vsel %vm3938, %v3897, %v3899
      %v4070 = vsel %vm3938, %v3899, %v3901
      %v4071 = vsel %vm3938, %v3903, %v3905
      %v4072 = vsel %vm3938, %v3905, %v3907
      %v4073 = vsel %vm3938, %v3909, %v3911
      %v4074 = vsel %vm3938, %v3911, %v3913
      %v4075 = vsel %vm3938, %v3915, %v3917
      %v4076 = vsel %vm3938, %v3917, %v3919
      %v4077 = vsel %vm3938, %v3921, %v3923
      %v4078 = vsel %vm3938, %v3923, %v3925
      %v4079 = vsel %vm3938, %v3927, %v3929
      %v4080 = vsel %vm3938, %v3929, %v3931
      %v4081 = vsel %vm3938, %v3933, %v3935
      %v4082 = vsel %vm3938, %v3935, %v3937
      %4227 = vmatprep.subr.bf16.mxu0 %v3940
      %4228 = vmatpush1.bf16.msra.mxu0 %v3939
      %4229 = vmatprep.subr.bf16.mxu0 %v3942
      %4230 = vmatpush1.bf16.msra.mxu0 %v3941
      %4231 = vmatprep.subr.bf16.mxu0 %v3944
      %4232 = vmatpush1.bf16.msra.mxu0 %v3943
      %4233 = vmatprep.subr.bf16.mxu0 %v3946
      %4234 = vmatpush1.bf16.msra.mxu0 %v3945
      %4235 = vmatprep.subr.bf16.mxu0 %v3948
      %4236 = vmatpush1.bf16.msra.mxu0 %v3947
      %4237 = vmatprep.subr.bf16.mxu0 %v3950
      %4238 = vmatpush1.bf16.msra.mxu0 %v3949
      %4239 = vmatprep.subr.bf16.mxu0 %v3952
      %4240 = vmatpush1.bf16.msra.mxu0 %v3951
      %4241 = vmatprep.subr.bf16.mxu0 %v3954
      %4242 = vmatpush1.bf16.msra.mxu0 %v3953
      %4243 = vmatprep.subr.bf16.mxu0 %v3956
      %4244 = vmatpush1.bf16.msra.mxu0 %v3955
      %4245 = vmatprep.subr.bf16.mxu0 %v3958
      %4246 = vmatpush1.bf16.msra.mxu0 %v3957
      %4247 = vmatprep.subr.bf16.mxu0 %v3960
      %4248 = vmatpush1.bf16.msra.mxu0 %v3959
      %4249 = vmatprep.subr.bf16.mxu0 %v3962
      %4250 = vmatpush1.bf16.msra.mxu0 %v3961
      %4251 = vmatprep.subr.bf16.mxu0 %v3964
      %4252 = vmatpush1.bf16.msra.mxu0 %v3963
      %4253 = vmatprep.subr.bf16.mxu0 %v3966
      %4254 = vmatpush1.bf16.msra.mxu0 %v3965
      %4255 = vmatprep.subr.bf16.mxu0 %v3968
      %4256 = vmatpush1.bf16.msra.mxu0 %v3967
      %4257 = vmatprep.subr.bf16.mxu0 %v3970
      %4258 = vmatpush1.bf16.msra.mxu0 %v3969
      %4259 = vmatprep.mubr.bf16.mxu0 %v3147
      %4260 = vmatmul.mubr.bf16.gmra.mrb[0].mxu0 %v3146
      %v4261 = vpop.f32.mrb[0].mxu0
      %v4262 = vadd.f32 0.0, %v4261
      %v4263 = vpop.f32.mrb[0].mxu0
      %v4264 = vadd.f32 0.0, %v4263
      %v4265 = vpop.f32.mrb[0].mxu0
      %v4266 = vadd.f32 0.0, %v4265
      %v4267 = vpop.f32.mrb[0].mxu0
      %v4268 = vadd.f32 0.0, %v4267
      %4269 = vmatprep.mubr.bf16.mxu0 %v3156
      %4270 = vmatmul.mubr.bf16.gmra.mrb[0].mxu0 %v3155
      %v4271 = vpop.f32.mrb[0].mxu0
      %v4272 = vadd.f32 0.0, %v4271
      %v4273 = vpop.f32.mrb[0].mxu0
      %v4274 = vadd.f32 0.0, %v4273
      %v4275 = vpop.f32.mrb[0].mxu0
      %v4276 = vadd.f32 0.0, %v4275
      %v4277 = vpop.f32.mrb[0].mxu0
      %v4278 = vadd.f32 0.0, %v4277
      %4279 = vmatprep.mubr.bf16.mxu0 %v3165
      %4280 = vmatmul.mubr.bf16.gmra.mrb[0].mxu0 %v3164
      %v4281 = vpop.f32.mrb[0].mxu0
      %v4282 = vadd.f32 0.0, %v4281
      %v4283 = vpop.f32.mrb[0].mxu0
      %v4284 = vadd.f32 0.0, %v4283
      %v4285 = vpop.f32.mrb[0].mxu0
      %v4286 = vadd.f32 0.0, %v4285
      %v4287 = vpop.f32.mrb[0].mxu0
      %v4288 = vadd.f32 0.0, %v4287
      %4289 = vmatprep.mubr.bf16.mxu0 %v3174
      %4290 = vmatmul.mubr.bf16.gmra.mrb[0].mxu0 %v3173
      %v4291 = vpop.f32.mrb[0].mxu0
      %v4292 = vadd.f32 0.0, %v4291
      %v4293 = vpop.f32.mrb[0].mxu0
      %v4294 = vadd.f32 0.0, %v4293
      %v4295 = vpop.f32.mrb[0].mxu0
      %v4296 = vadd.f32 0.0, %v4295
      %v4297 = vpop.f32.mrb[0].mxu0
      %v4298 = vadd.f32 0.0, %v4297
      %4299 = vmatprep.mubr.bf16.mxu0 %v3183
      %4300 = vmatmul.mubr.bf16.gmra.mrb[0].mxu0 %v3182
      %v4301 = vpop.f32.mrb[0].mxu0
      %v4302 = vadd.f32 0.0, %v4301
      %v4303 = vpop.f32.mrb[0].mxu0
      %v4304 = vadd.f32 0.0, %v4303
      %v4305 = vpop.f32.mrb[0].mxu0
      %v4306 = vadd.f32 0.0, %v4305
      %v4307 = vpop.f32.mrb[0].mxu0
      %v4308 = vadd.f32 0.0, %v4307
      %4309 = vmatprep.mubr.bf16.mxu0 %v3192
      %4310 = vmatmul.mubr.bf16.gmra.mrb[0].mxu0 %v3191
      %v4311 = vpop.f32.mrb[0].mxu0
      %v4312 = vadd.f32 0.0, %v4311
      %v4313 = vpop.f32.mrb[0].mxu0
      %v4314 = vadd.f32 0.0, %v4313
      %v4315 = vpop.f32.mrb[0].mxu0
      %v4316 = vadd.f32 0.0, %v4315
      %v4317 = vpop.f32.mrb[0].mxu0
      %v4318 = vadd.f32 0.0, %v4317
      %4319 = vmatprep.mubr.bf16.mxu0 %v3201
      %4320 = vmatmul.mubr.bf16.gmra.mrb[0].mxu0 %v3200
      %v4321 = vpop.f32.mrb[0].mxu0
      %v4322 = vadd.f32 0.0, %v4321
      %v4323 = vpop.f32.mrb[0].mxu0
      %v4324 = vadd.f32 0.0, %v4323
      %v4325 = vpop.f32.mrb[0].mxu0
      %v4326 = vadd.f32 0.0, %v4325
      %v4327 = vpop.f32.mrb[0].mxu0
      %v4328 = vadd.f32 0.0, %v4327
      %4329 = vmatprep.mubr.bf16.mxu0 %v3210
      %4330 = vmatmul.mubr.bf16.gmra.mrb[0].mxu0 %v3209
      %v4331 = vpop.f32.mrb[0].mxu0
      %v4332 = vadd.f32 0.0, %v4331
      %v4333 = vpop.f32.mrb[0].mxu0
      %v4334 = vadd.f32 0.0, %v4333
      %v4335 = vpop.f32.mrb[0].mxu0
      %v4336 = vadd.f32 0.0, %v4335
      %v4337 = vpop.f32.mrb[0].mxu0
      %v4338 = vadd.f32 0.0, %v4337
      %4339 = vdwg.mxu0
      %4340 = vmatprep.subr.bf16.mxu0 %v3972
      %4341 = vmatpush1.bf16.msra.mxu0 %v3971
      %4342 = vmatprep.subr.bf16.mxu0 %v3974
      %4343 = vmatpush1.bf16.msra.mxu0 %v3973
      %4344 = vmatprep.subr.bf16.mxu0 %v3976
      %4345 = vmatpush1.bf16.msra.mxu0 %v3975
      %4346 = vmatprep.subr.bf16.mxu0 %v3978
      %4347 = vmatpush1.bf16.msra.mxu0 %v3977
      %4348 = vmatprep.subr.bf16.mxu0 %v3980
      %4349 = vmatpush1.bf16.msra.mxu0 %v3979
      %4350 = vmatprep.subr.bf16.mxu0 %v3982
      %4351 = vmatpush1.bf16.msra.mxu0 %v3981
      %4352 = vmatprep.subr.bf16.mxu0 %v3984
      %4353 = vmatpush1.bf16.msra.mxu0 %v3983
      %4354 = vmatprep.subr.bf16.mxu0 %v3986
      %4355 = vmatpush1.bf16.msra.mxu0 %v3985
      %4356 = vmatprep.subr.bf16.mxu0 %v3988
      %4357 = vmatpush1.bf16.msra.mxu0 %v3987
      %4358 = vmatprep.subr.bf16.mxu0 %v3990
      %4359 = vmatpush1.bf16.msra.mxu0 %v3989
      %4360 = vmatprep.subr.bf16.mxu0 %v3992
      %4361 = vmatpush1.bf16.msra.mxu0 %v3991
      %4362 = vmatprep.subr.bf16.mxu0 %v3994
      %4363 = vmatpush1.bf16.msra.mxu0 %v3993
      %4364 = vmatprep.subr.bf16.mxu0 %v3996
      %4365 = vmatpush1.bf16.msra.mxu0 %v3995
      %4366 = vmatprep.subr.bf16.mxu0 %v3998
      %4367 = vmatpush1.bf16.msra.mxu0 %v3997
      %4368 = vmatprep.subr.bf16.mxu0 %v4000
      %4369 = vmatpush1.bf16.msra.mxu0 %v3999
      %4370 = vmatprep.subr.bf16.mxu0 %v4002
      %4371 = vmatpush1.bf16.msra.mxu0 %v4001
      %4372 = vmatprep.mubr.bf16.mxu0 %v3149
      %4373 = vmatmul.mubr.bf16.gmra.mrb[0].mxu0 %v3148
      %v4374 = vpop.f32.mrb[0].mxu0
      %v4375 = vadd.f32 %v4262, %v4374
      %v4376 = vpop.f32.mrb[0].mxu0
      %v4377 = vadd.f32 %v4264, %v4376
      %v4378 = vpop.f32.mrb[0].mxu0
      %v4379 = vadd.f32 %v4266, %v4378
      %v4380 = vpop.f32.mrb[0].mxu0
      %v4381 = vadd.f32 %v4268, %v4380
      %4382 = vmatprep.mubr.bf16.mxu0 %v3158
      %4383 = vmatmul.mubr.bf16.gmra.mrb[0].mxu0 %v3157
      %v4384 = vpop.f32.mrb[0].mxu0
      %v4385 = vadd.f32 %v4272, %v4384
      %v4386 = vpop.f32.mrb[0].mxu0
      %v4387 = vadd.f32 %v4274, %v4386
      %v4388 = vpop.f32.mrb[0].mxu0
      %v4389 = vadd.f32 %v4276, %v4388
      %v4390 = vpop.f32.mrb[0].mxu0
      %v4391 = vadd.f32 %v4278, %v4390
      %4392 = vmatprep.mubr.bf16.mxu0 %v3167
      %4393 = vmatmul.mubr.bf16.gmra.mrb[0].mxu0 %v3166
      %v4394 = vpop.f32.mrb[0].mxu0
      %v4395 = vadd.f32 %v4282, %v4394
      %v4396 = vpop.f32.mrb[0].mxu0
      %v4397 = vadd.f32 %v4284, %v4396
      %v4398 = vpop.f32.mrb[0].mxu0
      %v4399 = vadd.f32 %v4286, %v4398
      %v4400 = vpop.f32.mrb[0].mxu0
      %v4401 = vadd.f32 %v4288, %v4400
      %4402 = vmatprep.mubr.bf16.mxu0 %v3176
      %4403 = vmatmul.mubr.bf16.gmra.mrb[0].mxu0 %v3175
      %v4404 = vpop.f32.mrb[0].mxu0
      %v4405 = vadd.f32 %v4292, %v4404
      %v4406 = vpop.f32.mrb[0].mxu0
      %v4407 = vadd.f32 %v4294, %v4406
      %v4408 = vpop.f32.mrb[0].mxu0
      %v4409 = vadd.f32 %v4296, %v4408
      %v4410 = vpop.f32.mrb[0].mxu0
      %v4411 = vadd.f32 %v4298, %v4410
      %4412 = vmatprep.mubr.bf16.mxu0 %v3185
      %4413 = vmatmul.mubr.bf16.gmra.mrb[0].mxu0 %v3184
      %v4414 = vpop.f32.mrb[0].mxu0
      %v4415 = vadd.f32 %v4302, %v4414
      %v4416 = vpop.f32.mrb[0].mxu0
      %v4417 = vadd.f32 %v4304, %v4416
      %v4418 = vpop.f32.mrb[0].mxu0
      %v4419 = vadd.f32 %v4306, %v4418
      %v4420 = vpop.f32.mrb[0].mxu0
      %v4421 = vadd.f32 %v4308, %v4420
      %4422 = vmatprep.mubr.bf16.mxu0 %v3194
      %4423 = vmatmul.mubr.bf16.gmra.mrb[0].mxu0 %v3193
      %v4424 = vpop.f32.mrb[0].mxu0
      %v4425 = vadd.f32 %v4312, %v4424
      %v4426 = vpop.f32.mrb[0].mxu0
      %v4427 = vadd.f32 %v4314, %v4426
      %v4428 = vpop.f32.mrb[0].mxu0
      %v4429 = vadd.f32 %v4316, %v4428
      %v4430 = vpop.f32.mrb[0].mxu0
      %v4431 = vadd.f32 %v4318, %v4430
      %4432 = vmatprep.mubr.bf16.mxu0 %v3203
      %4433 = vmatmul.mubr.bf16.gmra.mrb[0].mxu0 %v3202
      %v4434 = vpop.f32.mrb[0].mxu0
      %v4435 = vadd.f32 %v4322, %v4434
      %v4436 = vpop.f32.mrb[0].mxu0
      %v4437 = vadd.f32 %v4324, %v4436
      %v4438 = vpop.f32.mrb[0].mxu0
      %v4439 = vadd.f32 %v4326, %v4438
      %v4440 = vpop.f32.mrb[0].mxu0
      %v4441 = vadd.f32 %v4328, %v4440
      %4442 = vmatprep.mubr.bf16.mxu0 %v3212
      %4443 = vmatmul.mubr.bf16.gmra.mrb[0].mxu0 %v3211
      %v4444 = vpop.f32.mrb[0].mxu0
      %v4445 = vadd.f32 %v4332, %v4444
      %v4446 = vpop.f32.mrb[0].mxu0
      %v4447 = vadd.f32 %v4334, %v4446
      %v4448 = vpop.f32.mrb[0].mxu0
      %v4449 = vadd.f32 %v4336, %v4448
      %v4450 = vpop.f32.mrb[0].mxu0
      %v4451 = vadd.f32 %v4338, %v4450
      %4452 = vdwg.mxu0
      %4453 = vmatprep.subr.bf16.mxu0 %v4004
      %4454 = vmatpush1.bf16.msra.mxu0 %v4003
      %4455 = vmatprep.subr.bf16.mxu0 %v4006
      %4456 = vmatpush1.bf16.msra.mxu0 %v4005
      %4457 = vmatprep.subr.bf16.mxu0 %v4008
      %4458 = vmatpush1.bf16.msra.mxu0 %v4007
      %4459 = vmatprep.subr.bf16.mxu0 %v4010
      %4460 = vmatpush1.bf16.msra.mxu0 %v4009
      %4461 = vmatprep.subr.bf16.mxu0 %v4012
      %4462 = vmatpush1.bf16.msra.mxu0 %v4011
      %4463 = vmatprep.subr.bf16.mxu0 %v4014
      %4464 = vmatpush1.bf16.msra.mxu0 %v4013
      %4465 = vmatprep.subr.bf16.mxu0 %v4016
      %4466 = vmatpush1.bf16.msra.mxu0 %v4015
      %4467 = vmatprep.subr.bf16.mxu0 %v4018
      %4468 = vmatpush1.bf16.msra.mxu0 %v4017
      %4469 = vmatprep.subr.bf16.mxu0 %v4020
      %4470 = vmatpush1.bf16.msra.mxu0 %v4019
      %4471 = vmatprep.subr.bf16.mxu0 %v4022
      %4472 = vmatpush1.bf16.msra.mxu0 %v4021
      %4473 = vmatprep.subr.bf16.mxu0 %v4024
      %4474 = vmatpush1.bf16.msra.mxu0 %v4023
      %4475 = vmatprep.subr.bf16.mxu0 %v4026
      %4476 = vmatpush1.bf16.msra.mxu0 %v4025
      %4477 = vmatprep.subr.bf16.mxu0 %v4028
      %4478 = vmatpush1.bf16.msra.mxu0 %v4027
      %4479 = vmatprep.subr.bf16.mxu0 %v4030
      %4480 = vmatpush1.bf16.msra.mxu0 %v4029
      %4481 = vmatprep.subr.bf16.mxu0 %v4032
      %4482 = vmatpush1.bf16.msra.mxu0 %v4031
      %4483 = vmatprep.subr.bf16.mxu0 %v4034
      %4484 = vmatpush1.bf16.msra.mxu0 %v4033
      %4485 = vmatprep.mubr.bf16.mxu0 %v3151
      %4486 = vmatmul.mubr.bf16.gmra.mrb[0].mxu0 %v3150
      %v4487 = vpop.f32.mrb[0].mxu0
      %v4488 = vadd.f32 %v4375, %v4487
      %v4489 = vpop.f32.mrb[0].mxu0
      %v4490 = vadd.f32 %v4377, %v4489
      %v4491 = vpop.f32.mrb[0].mxu0
      %v4492 = vadd.f32 %v4379, %v4491
      %v4493 = vpop.f32.mrb[0].mxu0
      %v4494 = vadd.f32 %v4381, %v4493
      %4495 = vmatprep.mubr.bf16.mxu0 %v3160
      %4496 = vmatmul.mubr.bf16.gmra.mrb[0].mxu0 %v3159
      %v4497 = vpop.f32.mrb[0].mxu0
      %v4498 = vadd.f32 %v4385, %v4497
      %v4499 = vpop.f32.mrb[0].mxu0
      %v4500 = vadd.f32 %v4387, %v4499
      %v4501 = vpop.f32.mrb[0].mxu0
      %v4502 = vadd.f32 %v4389, %v4501
      %v4503 = vpop.f32.mrb[0].mxu0
      %v4504 = vadd.f32 %v4391, %v4503
      %4505 = vmatprep.mubr.bf16.mxu0 %v3169
      %4506 = vmatmul.mubr.bf16.gmra.mrb[0].mxu0 %v3168
      %v4507 = vpop.f32.mrb[0].mxu0
      %v4508 = vadd.f32 %v4395, %v4507
      %v4509 = vpop.f32.mrb[0].mxu0
      %v4510 = vadd.f32 %v4397, %v4509
      %v4511 = vpop.f32.mrb[0].mxu0
      %v4512 = vadd.f32 %v4399, %v4511
      %v4513 = vpop.f32.mrb[0].mxu0
      %v4514 = vadd.f32 %v4401, %v4513
      %4515 = vmatprep.mubr.bf16.mxu0 %v3178
      %4516 = vmatmul.mubr.bf16.gmra.mrb[0].mxu0 %v3177
      %v4517 = vpop.f32.mrb[0].mxu0
      %v4518 = vadd.f32 %v4405, %v4517
      %v4519 = vpop.f32.mrb[0].mxu0
      %v4520 = vadd.f32 %v4407, %v4519
      %v4521 = vpop.f32.mrb[0].mxu0
      %v4522 = vadd.f32 %v4409, %v4521
      %v4523 = vpop.f32.mrb[0].mxu0
      %v4524 = vadd.f32 %v4411, %v4523
      %4525 = vmatprep.mubr.bf16.mxu0 %v3187
      %4526 = vmatmul.mubr.bf16.gmra.mrb[0].mxu0 %v3186
      %v4527 = vpop.f32.mrb[0].mxu0
      %v4528 = vadd.f32 %v4415, %v4527
      %v4529 = vpop.f32.mrb[0].mxu0
      %v4530 = vadd.f32 %v4417, %v4529
      %v4531 = vpop.f32.mrb[0].mxu0
      %v4532 = vadd.f32 %v4419, %v4531
      %v4533 = vpop.f32.mrb[0].mxu0
      %v4534 = vadd.f32 %v4421, %v4533
      %4535 = vmatprep.mubr.bf16.mxu0 %v3196
      %4536 = vmatmul.mubr.bf16.gmra.mrb[0].mxu0 %v3195
      %v4537 = vpop.f32.mrb[0].mxu0
      %v4538 = vadd.f32 %v4425, %v4537
      %v4539 = vpop.f32.mrb[0].mxu0
      %v4540 = vadd.f32 %v4427, %v4539
      %v4541 = vpop.f32.mrb[0].mxu0
      %v4542 = vadd.f32 %v4429, %v4541
      %v4543 = vpop.f32.mrb[0].mxu0
      %v4544 = vadd.f32 %v4431, %v4543
      %4545 = vmatprep.mubr.bf16.mxu0 %v3205
      %4546 = vmatmul.mubr.bf16.gmra.mrb[0].mxu0 %v3204
      %v4547 = vpop.f32.mrb[0].mxu0
      %v4548 = vadd.f32 %v4435, %v4547
      %v4549 = vpop.f32.mrb[0].mxu0
      %v4550 = vadd.f32 %v4437, %v4549
      %v4551 = vpop.f32.mrb[0].mxu0
      %v4552 = vadd.f32 %v4439, %v4551
      %v4553 = vpop.f32.mrb[0].mxu0
      %v4554 = vadd.f32 %v4441, %v4553
      %4555 = vmatprep.mubr.bf16.mxu0 %v3214
      %4556 = vmatmul.mubr.bf16.gmra.mrb[0].mxu0 %v3213
      %v4557 = vpop.f32.mrb[0].mxu0
      %v4558 = vadd.f32 %v4445, %v4557
      %v4559 = vpop.f32.mrb[0].mxu0
      %v4560 = vadd.f32 %v4447, %v4559
      %v4561 = vpop.f32.mrb[0].mxu0
      %v4562 = vadd.f32 %v4449, %v4561
      %v4563 = vpop.f32.mrb[0].mxu0
      %v4564 = vadd.f32 %v4451, %v4563
      %4565 = vdwg.mxu0
      %4566 = vmatprep.subr.bf16.mxu0 %v4036
      %4567 = vmatpush1.bf16.msra.mxu0 %v4035
      %4568 = vmatprep.subr.bf16.mxu0 %v4038
      %4569 = vmatpush1.bf16.msra.mxu0 %v4037
      %4570 = vmatprep.subr.bf16.mxu0 %v4040
      %4571 = vmatpush1.bf16.msra.mxu0 %v4039
      %4572 = vmatprep.subr.bf16.mxu0 %v4042
      %4573 = vmatpush1.bf16.msra.mxu0 %v4041
      %4574 = vmatprep.subr.bf16.mxu0 %v4044
      %4575 = vmatpush1.bf16.msra.mxu0 %v4043
      %4576 = vmatprep.subr.bf16.mxu0 %v4046
      %4577 = vmatpush1.bf16.msra.mxu0 %v4045
      %4578 = vmatprep.subr.bf16.mxu0 %v4048
      %4579 = vmatpush1.bf16.msra.mxu0 %v4047
      %4580 = vmatprep.subr.bf16.mxu0 %v4050
      %4581 = vmatpush1.bf16.msra.mxu0 %v4049
      %4582 = vmatprep.subr.bf16.mxu0 %v4052
      %4583 = vmatpush1.bf16.msra.mxu0 %v4051
      %4584 = vmatprep.subr.bf16.mxu0 %v4054
      %4585 = vmatpush1.bf16.msra.mxu0 %v4053
      %4586 = vmatprep.subr.bf16.mxu0 %v4056
      %4587 = vmatpush1.bf16.msra.mxu0 %v4055
      %4588 = vmatprep.subr.bf16.mxu0 %v4058
      %4589 = vmatpush1.bf16.msra.mxu0 %v4057
      %4590 = vmatprep.subr.bf16.mxu0 %v4060
      %4591 = vmatpush1.bf16.msra.mxu0 %v4059
      %4592 = vmatprep.subr.bf16.mxu0 %v4062
      %4593 = vmatpush1.bf16.msra.mxu0 %v4061
      %4594 = vmatprep.subr.bf16.mxu0 %v4064
      %4595 = vmatpush1.bf16.msra.mxu0 %v4063
      %4596 = vmatprep.subr.bf16.mxu0 %v4066
      %4597 = vmatpush1.bf16.msra.mxu0 %v4065
      %4598 = vmatprep.mubr.bf16.mxu0 %v3153
      %4599 = vmatmul.mubr.bf16.gmra.mrb[0].mxu0 %v3152
      %v4600 = vpop.f32.mrb[0].mxu0
      %v4601 = vadd.f32 %v4488, %v4600
      %v4602 = vpop.f32.mrb[0].mxu0
      %v4603 = vadd.f32 %v4490, %v4602
      %v4604 = vpop.f32.mrb[0].mxu0
      %v4605 = vadd.f32 %v4492, %v4604
      %v4606 = vpop.f32.mrb[0].mxu0
      %v4607 = vadd.f32 %v4494, %v4606
      %4608 = vmatprep.mubr.bf16.mxu0 %v3162
      %4609 = vmatmul.mubr.bf16.gmra.mrb[0].mxu0 %v3161
      %v4610 = vpop.f32.mrb[0].mxu0
      %v4611 = vadd.f32 %v4498, %v4610
      %v4612 = vpop.f32.mrb[0].mxu0
      %v4613 = vadd.f32 %v4500, %v4612
      %v4614 = vpop.f32.mrb[0].mxu0
      %v4615 = vadd.f32 %v4502, %v4614
      %v4616 = vpop.f32.mrb[0].mxu0
      %v4617 = vadd.f32 %v4504, %v4616
      %4618 = vmatprep.mubr.bf16.mxu0 %v3171
      %4619 = vmatmul.mubr.bf16.gmra.mrb[0].mxu0 %v3170
      %v4620 = vpop.f32.mrb[0].mxu0
      %v4621 = vadd.f32 %v4508, %v4620
      %v4622 = vpop.f32.mrb[0].mxu0
      %v4623 = vadd.f32 %v4510, %v4622
      %v4624 = vpop.f32.mrb[0].mxu0
      %v4625 = vadd.f32 %v4512, %v4624
      %v4626 = vpop.f32.mrb[0].mxu0
      %v4627 = vadd.f32 %v4514, %v4626
      %4628 = vmatprep.mubr.bf16.mxu0 %v3180
      %4629 = vmatmul.mubr.bf16.gmra.mrb[0].mxu0 %v3179
      %v4630 = vpop.f32.mrb[0].mxu0
      %v4631 = vadd.f32 %v4518, %v4630
      %v4632 = vpop.f32.mrb[0].mxu0
      %v4633 = vadd.f32 %v4520, %v4632
      %v4634 = vpop.f32.mrb[0].mxu0
      %v4635 = vadd.f32 %v4522, %v4634
      %v4636 = vpop.f32.mrb[0].mxu0
      %v4637 = vadd.f32 %v4524, %v4636
      %4638 = vmatprep.mubr.bf16.mxu0 %v3189
      %4639 = vmatmul.mubr.bf16.gmra.mrb[0].mxu0 %v3188
      %v4640 = vpop.f32.mrb[0].mxu0
      %v4641 = vadd.f32 %v4528, %v4640
      %v4642 = vpop.f32.mrb[0].mxu0
      %v4643 = vadd.f32 %v4530, %v4642
      %v4644 = vpop.f32.mrb[0].mxu0
      %v4645 = vadd.f32 %v4532, %v4644
      %v4646 = vpop.f32.mrb[0].mxu0
      %v4647 = vadd.f32 %v4534, %v4646
      %4648 = vmatprep.mubr.bf16.mxu0 %v3198
      %4649 = vmatmul.mubr.bf16.gmra.mrb[0].mxu0 %v3197
      %v4650 = vpop.f32.mrb[0].mxu0
      %v4651 = vadd.f32 %v4538, %v4650
      %v4652 = vpop.f32.mrb[0].mxu0
      %v4653 = vadd.f32 %v4540, %v4652
      %v4654 = vpop.f32.mrb[0].mxu0
      %v4655 = vadd.f32 %v4542, %v4654
      %v4656 = vpop.f32.mrb[0].mxu0
      %v4657 = vadd.f32 %v4544, %v4656
      %4658 = vmatprep.mubr.bf16.mxu0 %v3207
      %4659 = vmatmul.mubr.bf16.gmra.mrb[0].mxu0 %v3206
      %v4660 = vpop.f32.mrb[0].mxu0
      %v4661 = vadd.f32 %v4548, %v4660
      %v4662 = vpop.f32.mrb[0].mxu0
      %v4663 = vadd.f32 %v4550, %v4662
      %v4664 = vpop.f32.mrb[0].mxu0
      %v4665 = vadd.f32 %v4552, %v4664
      %v4666 = vpop.f32.mrb[0].mxu0
      %v4667 = vadd.f32 %v4554, %v4666
      %4668 = vmatprep.mubr.bf16.mxu0 %v3216
      %4669 = vmatmul.mubr.bf16.gmra.mrb[0].mxu0 %v3215
      %v4670 = vpop.f32.mrb[0].mxu0
      %v4671 = vadd.f32 %v4558, %v4670
      %v4672 = vpop.f32.mrb[0].mxu0
      %v4673 = vadd.f32 %v4560, %v4672
      %v4674 = vpop.f32.mrb[0].mxu0
      %v4675 = vadd.f32 %v4562, %v4674
      %v4676 = vpop.f32.mrb[0].mxu0
      %v4677 = vadd.f32 %v4564, %v4676
      %4678 = vdwg.mxu0
      %4679 = vmatprep.subr.bf16.mxu0 %v4068
      %4680 = vmatpush1.bf16.msra.mxu0 %v4067
      %4681 = vmatprep.subr.bf16.mxu0 %v4070
      %4682 = vmatpush1.bf16.msra.mxu0 %v4069
      %4683 = vmatprep.subr.bf16.mxu0 %v4072
      %4684 = vmatpush1.bf16.msra.mxu0 %v4071
      %4685 = vmatprep.subr.bf16.mxu0 %v4074
      %4686 = vmatpush1.bf16.msra.mxu0 %v4073
      %4687 = vmatprep.subr.bf16.mxu0 %v4076
      %4688 = vmatpush1.bf16.msra.mxu0 %v4075
      %4689 = vmatprep.subr.bf16.mxu0 %v4078
      %4690 = vmatpush1.bf16.msra.mxu0 %v4077
      %4691 = vmatprep.subr.bf16.mxu0 %v4080
      %4692 = vmatpush1.bf16.msra.mxu0 %v4079
      %4693 = vmatprep.subr.bf16.mxu0 %v4082
      %4694 = vmatpush1.bf16.msra.mxu0 %v4081
      %4695 = vmatprep.subr.bf16.mxu0 0
      %4696 = vmatpush1.bf16.msra.mxu0 0
      %4697 = vmatprep.subr.bf16.mxu0 0
      %4698 = vmatpush1.bf16.msra.mxu0 0
      %4699 = vmatprep.subr.bf16.mxu0 0
      %4700 = vmatpush1.bf16.msra.mxu0 0
      %4701 = vmatprep.subr.bf16.mxu0 0
      %4702 = vmatpush1.bf16.msra.mxu0 0
      %4703 = vmatprep.subr.bf16.mxu0 0
      %4704 = vmatpush1.bf16.msra.mxu0 0
      %4705 = vmatprep.subr.bf16.mxu0 0
      %4706 = vmatpush1.bf16.msra.mxu0 0
      %4707 = vmatprep.subr.bf16.mxu0 0
      %4708 = vmatpush1.bf16.msra.mxu0 0
      %4709 = vmatprep.subr.bf16.mxu0 0
      %4710 = vmatpush1.bf16.msra.mxu0 0
      %4711 = vmatprep.mubr.bf16.mxu0 0
      %4712 = vmatmul.mubr.bf16.gmra.mrb[0].mxu0 %v3154
      %v4713 = vpop.f32.mrb[0].mxu0
      %v4714 = vadd.f32 %v4601, %v4713
      %v4715 = vpop.f32.mrb[0].mxu0
      %v4716 = vadd.f32 %v4603, %v4715
      %v4717 = vpop.f32.mrb[0].mxu0
      %v4718 = vadd.f32 %v4605, %v4717
      %v4719 = vpop.f32.mrb[0].mxu0
      %v4720 = vadd.f32 %v4607, %v4719
      %4721 = vmatprep.mubr.bf16.mxu0 0
      %4722 = vmatmul.mubr.bf16.gmra.mrb[0].mxu0 %v3163
      %v4723 = vpop.f32.mrb[0].mxu0
      %v4724 = vadd.f32 %v4611, %v4723
      %v4725 = vpop.f32.mrb[0].mxu0
      %v4726 = vadd.f32 %v4613, %v4725
      %v4727 = vpop.f32.mrb[0].mxu0
      %v4728 = vadd.f32 %v4615, %v4727
      %v4729 = vpop.f32.mrb[0].mxu0
      %v4730 = vadd.f32 %v4617, %v4729
      %4731 = vmatprep.mubr.bf16.mxu0 0
      %4732 = vmatmul.mubr.bf16.gmra.mrb[0].mxu0 %v3172
      %v4733 = vpop.f32.mrb[0].mxu0
      %v4734 = vadd.f32 %v4621, %v4733
      %v4735 = vpop.f32.mrb[0].mxu0
      %v4736 = vadd.f32 %v4623, %v4735
      %v4737 = vpop.f32.mrb[0].mxu0
      %v4738 = vadd.f32 %v4625, %v4737
      %v4739 = vpop.f32.mrb[0].mxu0
      %v4740 = vadd.f32 %v4627, %v4739
      %4741 = vmatprep.mubr.bf16.mxu0 0
      %4742 = vmatmul.mubr.bf16.gmra.mrb[0].mxu0 %v3181
      %v4743 = vpop.f32.mrb[0].mxu0
      %v4744 = vadd.f32 %v4631, %v4743
      %v4745 = vpop.f32.mrb[0].mxu0
      %v4746 = vadd.f32 %v4633, %v4745
      %v4747 = vpop.f32.mrb[0].mxu0
      %v4748 = vadd.f32 %v4635, %v4747
      %v4749 = vpop.f32.mrb[0].mxu0
      %v4750 = vadd.f32 %v4637, %v4749
      %4751 = vmatprep.mubr.bf16.mxu0 0
      %4752 = vmatmul.mubr.bf16.gmra.mrb[0].mxu0 %v3190
      %v4753 = vpop.f32.mrb[0].mxu0
      %v4754 = vadd.f32 %v4641, %v4753
      %v4755 = vpop.f32.mrb[0].mxu0
      %v4756 = vadd.f32 %v4643, %v4755
      %v4757 = vpop.f32.mrb[0].mxu0
      %v4758 = vadd.f32 %v4645, %v4757
      %v4759 = vpop.f32.mrb[0].mxu0
      %v4760 = vadd.f32 %v4647, %v4759
      %4761 = vmatprep.mubr.bf16.mxu0 0
      %4762 = vmatmul.mubr.bf16.gmra.mrb[0].mxu0 %v3199
      %v4763 = vpop.f32.mrb[0].mxu0
      %v4764 = vadd.f32 %v4651, %v4763
      %v4765 = vpop.f32.mrb[0].mxu0
      %v4766 = vadd.f32 %v4653, %v4765
      %v4767 = vpop.f32.mrb[0].mxu0
      %v4768 = vadd.f32 %v4655, %v4767
      %v4769 = vpop.f32.mrb[0].mxu0
      %v4770 = vadd.f32 %v4657, %v4769
      %4771 = vmatprep.mubr.bf16.mxu0 0
      %4772 = vmatmul.mubr.bf16.gmra.mrb[0].mxu0 %v3208
      %v4773 = vpop.f32.mrb[0].mxu0
      %v4774 = vadd.f32 %v4661, %v4773
      %v4775 = vpop.f32.mrb[0].mxu0
      %v4776 = vadd.f32 %v4663, %v4775
      %v4777 = vpop.f32.mrb[0].mxu0
      %v4778 = vadd.f32 %v4665, %v4777
      %v4779 = vpop.f32.mrb[0].mxu0
      %v4780 = vadd.f32 %v4667, %v4779
      %4781 = vmatprep.mubr.bf16.mxu0 0
      %4782 = vmatmul.mubr.bf16.gmra.mrb[0].mxu0 %v3217
      %v4783 = vpop.f32.mrb[0].mxu0
      %v4784 = vadd.f32 %v4671, %v4783
      %v4785 = vpop.f32.mrb[0].mxu0
      %v4786 = vadd.f32 %v4673, %v4785
      %v4787 = vpop.f32.mrb[0].mxu0
      %v4788 = vadd.f32 %v4675, %v4787
      %v4789 = vpop.f32.mrb[0].mxu0
      %v4790 = vadd.f32 %v4677, %v4789
      %4791 = vdwg.mxu0
      %v4872 = vunpack.c.l.b16 %v2545
      %v4873 = vunpack.c.h.b16 %v2545
      %v4874 = vunpack.c.l.b16 %v2546
      %v4875 = vunpack.c.h.b16 %v2546
      %v4876 = vunpack.c.l.b16 %v2547
      %v4877 = vunpack.c.h.b16 %v2547
      %v4878 = vunpack.c.l.b16 %v2548
      %v4879 = vunpack.c.h.b16 %v2548
      %v4880 = vunpack.c.l.b16 %v2549
      %v4881 = vunpack.c.l.b16 %v2550
      %v4882 = vunpack.c.h.b16 %v2550
      %v4883 = vunpack.c.l.b16 %v2551
      %v4884 = vunpack.c.h.b16 %v2551
      %v4885 = vunpack.c.l.b16 %v2552
      %v4886 = vunpack.c.h.b16 %v2552
      %v4887 = vunpack.c.l.b16 %v2553
      %v4888 = vunpack.c.h.b16 %v2553
      %v4889 = vunpack.c.l.b16 %v2554
      %v4890 = vunpack.c.l.b16 %v2555
      %v4891 = vunpack.c.h.b16 %v2555
      %v4892 = vunpack.c.l.b16 %v2556
      %v4893 = vunpack.c.h.b16 %v2556
      %v4894 = vunpack.c.l.b16 %v2557
      %v4895 = vunpack.c.h.b16 %v2557
      %v4896 = vunpack.c.l.b16 %v2558
      %v4897 = vunpack.c.h.b16 %v2558
      %v4898 = vunpack.c.l.b16 %v2559
      %v4899 = vunpack.c.l.b16 %v2560
      %v4900 = vunpack.c.h.b16 %v2560
      %v4901 = vunpack.c.l.b16 %v2561
      %v4902 = vunpack.c.h.b16 %v2561
      %v4903 = vunpack.c.l.b16 %v2562
      %v4904 = vunpack.c.h.b16 %v2562
      %v4905 = vunpack.c.l.b16 %v2563
      %v4906 = vunpack.c.h.b16 %v2563
      %v4907 = vunpack.c.l.b16 %v2564
      %v4908 = vunpack.c.l.b16 %v2565
      %v4909 = vunpack.c.h.b16 %v2565
      %v4910 = vunpack.c.l.b16 %v2566
      %v4911 = vunpack.c.h.b16 %v2566
      %v4912 = vunpack.c.l.b16 %v2567
      %v4913 = vunpack.c.h.b16 %v2567
      %v4914 = vunpack.c.l.b16 %v2568
      %v4915 = vunpack.c.h.b16 %v2568
      %v4916 = vunpack.c.l.b16 %v2569
      %v4917 = vunpack.c.l.b16 %v2570
      %v4918 = vunpack.c.h.b16 %v2570
      %v4919 = vunpack.c.l.b16 %v2571
      %v4920 = vunpack.c.h.b16 %v2571
      %v4921 = vunpack.c.l.b16 %v2572
      %v4922 = vunpack.c.h.b16 %v2572
      %v4923 = vunpack.c.l.b16 %v2573
      %v4924 = vunpack.c.h.b16 %v2573
      %v4925 = vunpack.c.l.b16 %v2574
      %v4926 = vunpack.c.l.b16 %v2575
      %v4927 = vunpack.c.h.b16 %v2575
      %v4928 = vunpack.c.l.b16 %v2576
      %v4929 = vunpack.c.h.b16 %v2576
      %v4930 = vunpack.c.l.b16 %v2577
      %v4931 = vunpack.c.h.b16 %v2577
      %v4932 = vunpack.c.l.b16 %v2578
      %v4933 = vunpack.c.h.b16 %v2578
      %v4934 = vunpack.c.l.b16 %v2579
      %v4935 = vunpack.c.l.b16 %v2580
      %v4936 = vunpack.c.h.b16 %v2580
      %v4937 = vunpack.c.l.b16 %v2581
      %v4938 = vunpack.c.h.b16 %v2581
      %v4939 = vunpack.c.l.b16 %v2582
      %v4940 = vunpack.c.h.b16 %v2582
      %v4941 = vunpack.c.l.b16 %v2583
      %v4942 = vunpack.c.h.b16 %v2583
      %v4943 = vunpack.c.l.b16 %v2584
      %v4944 = vunpack.c.l.b16 %v2585
      %v4945 = vunpack.c.h.b16 %v2585
      %v4946 = vunpack.c.l.b16 %v2586
      %v4947 = vunpack.c.h.b16 %v2586
      %v4948 = vunpack.c.l.b16 %v2587
      %v4949 = vunpack.c.h.b16 %v2587
      %v4950 = vunpack.c.l.b16 %v2588
      %v4951 = vunpack.c.h.b16 %v2588
      %v4952 = vunpack.c.l.b16 %v2589
      %v4953 = vunpack.c.l.b16 %v2590
      %v4954 = vunpack.c.h.b16 %v2590
      %v4955 = vunpack.c.l.b16 %v2591
      %v4956 = vunpack.c.h.b16 %v2591
      %v4957 = vunpack.c.l.b16 %v2592
      %v4958 = vunpack.c.h.b16 %v2592
      %v4959 = vunpack.c.l.b16 %v2593
      %v4960 = vunpack.c.h.b16 %v2593
      %v4961 = vunpack.c.l.b16 %v2594
      %v4962 = vunpack.c.l.b16 %v2595
      %v4963 = vunpack.c.h.b16 %v2595
      %v4964 = vunpack.c.l.b16 %v2596
      %v4965 = vunpack.c.h.b16 %v2596
      %v4966 = vunpack.c.l.b16 %v2597
      %v4967 = vunpack.c.h.b16 %v2597
      %v4968 = vunpack.c.l.b16 %v2598
      %v4969 = vunpack.c.h.b16 %v2598
      %v4970 = vunpack.c.l.b16 %v2599
      %v4971 = vunpack.c.l.b16 %v2600
      %v4972 = vunpack.c.h.b16 %v2600
      %v4973 = vunpack.c.l.b16 %v2601
      %v4974 = vunpack.c.h.b16 %v2601
      %v4975 = vunpack.c.l.b16 %v2602
      %v4976 = vunpack.c.h.b16 %v2602
      %v4977 = vunpack.c.l.b16 %v2603
      %v4978 = vunpack.c.h.b16 %v2603
      %v4979 = vunpack.c.l.b16 %v2604
      %v4980 = vunpack.c.l.b16 %v2605
      %v4981 = vunpack.c.h.b16 %v2605
      %v4982 = vunpack.c.l.b16 %v2606
      %v4983 = vunpack.c.h.b16 %v2606
      %v4984 = vunpack.c.l.b16 %v2607
      %v4985 = vunpack.c.h.b16 %v2607
      %v4986 = vunpack.c.l.b16 %v2608
      %v4987 = vunpack.c.h.b16 %v2608
      %v4988 = vunpack.c.l.b16 %v2609
      %v4989 = vunpack.c.l.b16 %v2610
      %v4990 = vunpack.c.h.b16 %v2610
      %v4991 = vunpack.c.l.b16 %v2611
      %v4992 = vunpack.c.h.b16 %v2611
      %v4993 = vunpack.c.l.b16 %v2612
      %v4994 = vunpack.c.h.b16 %v2612
      %v4995 = vunpack.c.l.b16 %v2613
      %v4996 = vunpack.c.h.b16 %v2613
      %v4997 = vunpack.c.l.b16 %v2614
      %v4998 = vunpack.c.l.b16 %v2615
      %v4999 = vunpack.c.h.b16 %v2615
      %v5000 = vunpack.c.l.b16 %v2616
      %v5001 = vunpack.c.h.b16 %v2616
      %v5002 = vunpack.c.l.b16 %v2617
      %v5003 = vunpack.c.h.b16 %v2617
      %v5004 = vunpack.c.l.b16 %v2618
      %v5005 = vunpack.c.h.b16 %v2618
      %v5006 = vunpack.c.l.b16 %v2619
      %v5007 = vunpack.c.l.b16 %v2620
      %v5008 = vunpack.c.h.b16 %v2620
      %v5009 = vunpack.c.l.b16 %v2621
      %v5010 = vunpack.c.h.b16 %v2621
      %v5011 = vunpack.c.l.b16 %v2622
      %v5012 = vunpack.c.h.b16 %v2622
      %v5013 = vunpack.c.l.b16 %v2623
      %v5014 = vunpack.c.h.b16 %v2623
      %v5015 = vunpack.c.l.b16 %v2624
      %v5016 = vpack.c.b16 %v4881, %v4872
      %v5017 = vpack.c.b16 %v4882, %v4873
      %v5018 = vpack.c.b16 %v4883, %v4874
      %v5019 = vpack.c.b16 %v4884, %v4875
      %v5020 = vpack.c.b16 %v4885, %v4876
      %v5021 = vpack.c.b16 %v4886, %v4877
      %v5022 = vpack.c.b16 %v4887, %v4878
      %v5023 = vpack.c.b16 %v4888, %v4879
      %v5024 = vpack.c.b16 %v4889, %v4880
      %v5025 = vpack.c.b16 %v4899, %v4890
      %v5026 = vpack.c.b16 %v4900, %v4891
      %v5027 = vpack.c.b16 %v4901, %v4892
      %v5028 = vpack.c.b16 %v4902, %v4893
      %v5029 = vpack.c.b16 %v4903, %v4894
      %v5030 = vpack.c.b16 %v4904, %v4895
      %v5031 = vpack.c.b16 %v4905, %v4896
      %v5032 = vpack.c.b16 %v4906, %v4897
      %v5033 = vpack.c.b16 %v4907, %v4898
      %v5034 = vpack.c.b16 %v4917, %v4908
      %v5035 = vpack.c.b16 %v4918, %v4909
      %v5036 = vpack.c.b16 %v4919, %v4910
      %v5037 = vpack.c.b16 %v4920, %v4911
      %v5038 = vpack.c.b16 %v4921, %v4912
      %v5039 = vpack.c.b16 %v4922, %v4913
      %v5040 = vpack.c.b16 %v4923, %v4914
      %v5041 = vpack.c.b16 %v4924, %v4915
      %v5042 = vpack.c.b16 %v4925, %v4916
      %v5043 = vpack.c.b16 %v4935, %v4926
      %v5044 = vpack.c.b16 %v4936, %v4927
      %v5045 = vpack.c.b16 %v4937, %v4928
      %v5046 = vpack.c.b16 %v4938, %v4929
      %v5047 = vpack.c.b16 %v4939, %v4930
      %v5048 = vpack.c.b16 %v4940, %v4931
      %v5049 = vpack.c.b16 %v4941, %v4932
      %v5050 = vpack.c.b16 %v4942, %v4933
      %v5051 = vpack.c.b16 %v4943, %v4934
      %v5052 = vpack.c.b16 %v4953, %v4944
      %v5053 = vpack.c.b16 %v4954, %v4945
      %v5054 = vpack.c.b16 %v4955, %v4946
      %v5055 = vpack.c.b16 %v4956, %v4947
      %v5056 = vpack.c.b16 %v4957, %v4948
      %v5057 = vpack.c.b16 %v4958, %v4949
      %v5058 = vpack.c.b16 %v4959, %v4950
      %v5059 = vpack.c.b16 %v4960, %v4951
      %v5060 = vpack.c.b16 %v4961, %v4952
      %v5061 = vpack.c.b16 %v4971, %v4962
      %v5062 = vpack.c.b16 %v4972, %v4963
      %v5063 = vpack.c.b16 %v4973, %v4964
      %v5064 = vpack.c.b16 %v4974, %v4965
      %v5065 = vpack.c.b16 %v4975, %v4966
      %v5066 = vpack.c.b16 %v4976, %v4967
      %v5067 = vpack.c.b16 %v4977, %v4968
      %v5068 = vpack.c.b16 %v4978, %v4969
      %v5069 = vpack.c.b16 %v4979, %v4970
      %v5070 = vpack.c.b16 %v4989, %v4980
      %v5071 = vpack.c.b16 %v4990, %v4981
      %v5072 = vpack.c.b16 %v4991, %v4982
      %v5073 = vpack.c.b16 %v4992, %v4983
      %v5074 = vpack.c.b16 %v4993, %v4984
      %v5075 = vpack.c.b16 %v4994, %v4985
      %v5076 = vpack.c.b16 %v4995, %v4986
      %v5077 = vpack.c.b16 %v4996, %v4987
      %v5078 = vpack.c.b16 %v4997, %v4988
      %v5079 = vpack.c.b16 %v5007, %v4998
      %v5080 = vpack.c.b16 %v5008, %v4999
      %v5081 = vpack.c.b16 %v5009, %v5000
      %v5082 = vpack.c.b16 %v5010, %v5001
      %v5083 = vpack.c.b16 %v5011, %v5002
      %v5084 = vpack.c.b16 %v5012, %v5003
      %v5085 = vpack.c.b16 %v5013, %v5004
      %v5086 = vpack.c.b16 %v5014, %v5005
      %v5087 = vpack.c.b16 %v5015, %v5006
      %5160 = vmatprep.subr.bf16.mxu0 %v2626
      %5161 = vmatpush1.bf16.msra.mxu0 %v2625
      %5162 = vmatprep.subr.bf16.mxu0 %v2628
      %5163 = vmatpush1.bf16.msra.mxu0 %v2627
      %5164 = vmatprep.subr.bf16.mxu0 %v2630
      %5165 = vmatpush1.bf16.msra.mxu0 %v2629
      %5166 = vmatprep.subr.bf16.mxu0 %v2632
      %5167 = vmatpush1.bf16.msra.mxu0 %v2631
      %5168 = vmatprep.subr.bf16.mxu0 %v2634
      %5169 = vmatpush1.bf16.msra.mxu0 %v2633
      %5170 = vmatprep.subr.bf16.mxu0 %v2636
      %5171 = vmatpush1.bf16.msra.mxu0 %v2635
      %5172 = vmatprep.subr.bf16.mxu0 %v2638
      %5173 = vmatpush1.bf16.msra.mxu0 %v2637
      %5174 = vmatprep.subr.bf16.mxu0 %v2640
      %5175 = vmatpush1.bf16.msra.mxu0 %v2639
      %5176 = vmatprep.subr.bf16.mxu0 %v2642
      %5177 = vmatpush1.bf16.msra.mxu0 %v2641
      %5178 = vmatprep.subr.bf16.mxu0 %v2644
      %5179 = vmatpush1.bf16.msra.mxu0 %v2643
      %5180 = vmatprep.subr.bf16.mxu0 %v2646
      %5181 = vmatpush1.bf16.msra.mxu0 %v2645
      %5182 = vmatprep.subr.bf16.mxu0 %v2648
      %5183 = vmatpush1.bf16.msra.mxu0 %v2647
      %5184 = vmatprep.subr.bf16.mxu0 %v2650
      %5185 = vmatpush1.bf16.msra.mxu0 %v2649
      %5186 = vmatprep.subr.bf16.mxu0 %v2652
      %5187 = vmatpush1.bf16.msra.mxu0 %v2651
      %5188 = vmatprep.subr.bf16.mxu0 %v2654
      %5189 = vmatpush1.bf16.msra.mxu0 %v2653
      %5190 = vmatprep.subr.bf16.mxu0 %v2656
      %5191 = vmatpush1.bf16.msra.mxu0 %v2655
      %5192 = vmatprep.mubr.bf16.mxu0 %v5017
      %5193 = vmatmul.mubr.bf16.gmra.mrb[0].mxu0 %v5016
      %v5194 = vpop.f32.mrb[0].mxu0
      %v5195 = vadd.f32 %v4714, %v5194
      %v5196 = vpop.f32.mrb[0].mxu0
      %v5197 = vadd.f32 %v4716, %v5196
      %v5198 = vpop.f32.mrb[0].mxu0
      %v5199 = vadd.f32 %v4718, %v5198
      %v5200 = vpop.f32.mrb[0].mxu0
      %v5201 = vadd.f32 %v4720, %v5200
      %5202 = vmatprep.mubr.bf16.mxu0 %v5026
      %5203 = vmatmul.mubr.bf16.gmra.mrb[0].mxu0 %v5025
      %v5204 = vpop.f32.mrb[0].mxu0
      %v5205 = vadd.f32 %v4724, %v5204
      %v5206 = vpop.f32.mrb[0].mxu0
      %v5207 = vadd.f32 %v4726, %v5206
      %v5208 = vpop.f32.mrb[0].mxu0
      %v5209 = vadd.f32 %v4728, %v5208
      %v5210 = vpop.f32.mrb[0].mxu0
      %v5211 = vadd.f32 %v4730, %v5210
      %5212 = vmatprep.mubr.bf16.mxu0 %v5035
      %5213 = vmatmul.mubr.bf16.gmra.mrb[0].mxu0 %v5034
      %v5214 = vpop.f32.mrb[0].mxu0
      %v5215 = vadd.f32 %v4734, %v5214
      %v5216 = vpop.f32.mrb[0].mxu0
      %v5217 = vadd.f32 %v4736, %v5216
      %v5218 = vpop.f32.mrb[0].mxu0
      %v5219 = vadd.f32 %v4738, %v5218
      %v5220 = vpop.f32.mrb[0].mxu0
      %v5221 = vadd.f32 %v4740, %v5220
      %5222 = vmatprep.mubr.bf16.mxu0 %v5044
      %5223 = vmatmul.mubr.bf16.gmra.mrb[0].mxu0 %v5043
      %v5224 = vpop.f32.mrb[0].mxu0
      %v5225 = vadd.f32 %v4744, %v5224
      %v5226 = vpop.f32.mrb[0].mxu0
      %v5227 = vadd.f32 %v4746, %v5226
      %v5228 = vpop.f32.mrb[0].mxu0
      %v5229 = vadd.f32 %v4748, %v5228
      %v5230 = vpop.f32.mrb[0].mxu0
      %v5231 = vadd.f32 %v4750, %v5230
      %5232 = vmatprep.mubr.bf16.mxu0 %v5053
      %5233 = vmatmul.mubr.bf16.gmra.mrb[0].mxu0 %v5052
      %v5234 = vpop.f32.mrb[0].mxu0
      %v5235 = vadd.f32 %v4754, %v5234
      %v5236 = vpop.f32.mrb[0].mxu0
      %v5237 = vadd.f32 %v4756, %v5236
      %v5238 = vpop.f32.mrb[0].mxu0
      %v5239 = vadd.f32 %v4758, %v5238
      %v5240 = vpop.f32.mrb[0].mxu0
      %v5241 = vadd.f32 %v4760, %v5240
      %5242 = vmatprep.mubr.bf16.mxu0 %v5062
      %5243 = vmatmul.mubr.bf16.gmra.mrb[0].mxu0 %v5061
      %v5244 = vpop.f32.mrb[0].mxu0
      %v5245 = vadd.f32 %v4764, %v5244
      %v5246 = vpop.f32.mrb[0].mxu0
      %v5247 = vadd.f32 %v4766, %v5246
      %v5248 = vpop.f32.mrb[0].mxu0
      %v5249 = vadd.f32 %v4768, %v5248
      %v5250 = vpop.f32.mrb[0].mxu0
      %v5251 = vadd.f32 %v4770, %v5250
      %5252 = vmatprep.mubr.bf16.mxu0 %v5071
      %5253 = vmatmul.mubr.bf16.gmra.mrb[0].mxu0 %v5070
      %v5254 = vpop.f32.mrb[0].mxu0
      %v5255 = vadd.f32 %v4774, %v5254
      %v5256 = vpop.f32.mrb[0].mxu0
      %v5257 = vadd.f32 %v4776, %v5256
      %v5258 = vpop.f32.mrb[0].mxu0
      %v5259 = vadd.f32 %v4778, %v5258
      %v5260 = vpop.f32.mrb[0].mxu0
      %v5261 = vadd.f32 %v4780, %v5260
      %5262 = vmatprep.mubr.bf16.mxu0 %v5080
      %5263 = vmatmul.mubr.bf16.gmra.mrb[0].mxu0 %v5079
      %v5264 = vpop.f32.mrb[0].mxu0
      %v5265 = vadd.f32 %v4784, %v5264
      %v5266 = vpop.f32.mrb[0].mxu0
      %v5267 = vadd.f32 %v4786, %v5266
      %v5268 = vpop.f32.mrb[0].mxu0
      %v5269 = vadd.f32 %v4788, %v5268
      %v5270 = vpop.f32.mrb[0].mxu0
      %v5271 = vadd.f32 %v4790, %v5270
      %5272 = vdwg.mxu0
      %5273 = vmatprep.subr.bf16.mxu0 %v2658
      %5274 = vmatpush1.bf16.msra.mxu0 %v2657
      %5275 = vmatprep.subr.bf16.mxu0 %v2660
      %5276 = vmatpush1.bf16.msra.mxu0 %v2659
      %5277 = vmatprep.subr.bf16.mxu0 %v2662
      %5278 = vmatpush1.bf16.msra.mxu0 %v2661
      %5279 = vmatprep.subr.bf16.mxu0 %v2664
      %5280 = vmatpush1.bf16.msra.mxu0 %v2663
      %5281 = vmatprep.subr.bf16.mxu0 %v2666
      %5282 = vmatpush1.bf16.msra.mxu0 %v2665
      %5283 = vmatprep.subr.bf16.mxu0 %v2668
      %5284 = vmatpush1.bf16.msra.mxu0 %v2667
      %5285 = vmatprep.subr.bf16.mxu0 %v2670
      %5286 = vmatpush1.bf16.msra.mxu0 %v2669
      %5287 = vmatprep.subr.bf16.mxu0 %v2672
      %5288 = vmatpush1.bf16.msra.mxu0 %v2671
      %5289 = vmatprep.subr.bf16.mxu0 %v2674
      %5290 = vmatpush1.bf16.msra.mxu0 %v2673
      %5291 = vmatprep.subr.bf16.mxu0 %v2676
      %5292 = vmatpush1.bf16.msra.mxu0 %v2675
      %5293 = vmatprep.subr.bf16.mxu0 %v2678
      %5294 = vmatpush1.bf16.msra.mxu0 %v2677
      %5295 = vmatprep.subr.bf16.mxu0 %v2680
      %5296 = vmatpush1.bf16.msra.mxu0 %v2679
      %5297 = vmatprep.subr.bf16.mxu0 %v2682
      %5298 = vmatpush1.bf16.msra.mxu0 %v2681
      %5299 = vmatprep.subr.bf16.mxu0 %v2684
      %5300 = vmatpush1.bf16.msra.mxu0 %v2683
      %5301 = vmatprep.subr.bf16.mxu0 %v2686
      %5302 = vmatpush1.bf16.msra.mxu0 %v2685
      %5303 = vmatprep.subr.bf16.mxu0 %v2688
      %5304 = vmatpush1.bf16.msra.mxu0 %v2687
      %5305 = vmatprep.mubr.bf16.mxu0 %v5019
      %5306 = vmatmul.mubr.bf16.gmra.mrb[0].mxu0 %v5018
      %v5307 = vpop.f32.mrb[0].mxu0
      %v5308 = vadd.f32 %v5195, %v5307
      %v5309 = vpop.f32.mrb[0].mxu0
      %v5310 = vadd.f32 %v5197, %v5309
      %v5311 = vpop.f32.mrb[0].mxu0
      %v5312 = vadd.f32 %v5199, %v5311
      %v5313 = vpop.f32.mrb[0].mxu0
      %v5314 = vadd.f32 %v5201, %v5313
      %5315 = vmatprep.mubr.bf16.mxu0 %v5028
      %5316 = vmatmul.mubr.bf16.gmra.mrb[0].mxu0 %v5027
      %v5317 = vpop.f32.mrb[0].mxu0
      %v5318 = vadd.f32 %v5205, %v5317
      %v5319 = vpop.f32.mrb[0].mxu0
      %v5320 = vadd.f32 %v5207, %v5319
      %v5321 = vpop.f32.mrb[0].mxu0
      %v5322 = vadd.f32 %v5209, %v5321
      %v5323 = vpop.f32.mrb[0].mxu0
      %v5324 = vadd.f32 %v5211, %v5323
      %5325 = vmatprep.mubr.bf16.mxu0 %v5037
      %5326 = vmatmul.mubr.bf16.gmra.mrb[0].mxu0 %v5036
      %v5327 = vpop.f32.mrb[0].mxu0
      %v5328 = vadd.f32 %v5215, %v5327
      %v5329 = vpop.f32.mrb[0].mxu0
      %v5330 = vadd.f32 %v5217, %v5329
      %v5331 = vpop.f32.mrb[0].mxu0
      %v5332 = vadd.f32 %v5219, %v5331
      %v5333 = vpop.f32.mrb[0].mxu0
      %v5334 = vadd.f32 %v5221, %v5333
      %5335 = vmatprep.mubr.bf16.mxu0 %v5046
      %5336 = vmatmul.mubr.bf16.gmra.mrb[0].mxu0 %v5045
      %v5337 = vpop.f32.mrb[0].mxu0
      %v5338 = vadd.f32 %v5225, %v5337
      %v5339 = vpop.f32.mrb[0].mxu0
      %v5340 = vadd.f32 %v5227, %v5339
      %v5341 = vpop.f32.mrb[0].mxu0
      %v5342 = vadd.f32 %v5229, %v5341
      %v5343 = vpop.f32.mrb[0].mxu0
      %v5344 = vadd.f32 %v5231, %v5343
      %5345 = vmatprep.mubr.bf16.mxu0 %v5055
      %5346 = vmatmul.mubr.bf16.gmra.mrb[0].mxu0 %v5054
      %v5347 = vpop.f32.mrb[0].mxu0
      %v5348 = vadd.f32 %v5235, %v5347
      %v5349 = vpop.f32.mrb[0].mxu0
      %v5350 = vadd.f32 %v5237, %v5349
      %v5351 = vpop.f32.mrb[0].mxu0
      %v5352 = vadd.f32 %v5239, %v5351
      %v5353 = vpop.f32.mrb[0].mxu0
      %v5354 = vadd.f32 %v5241, %v5353
      %5355 = vmatprep.mubr.bf16.mxu0 %v5064
      %5356 = vmatmul.mubr.bf16.gmra.mrb[0].mxu0 %v5063
      %v5357 = vpop.f32.mrb[0].mxu0
      %v5358 = vadd.f32 %v5245, %v5357
      %v5359 = vpop.f32.mrb[0].mxu0
      %v5360 = vadd.f32 %v5247, %v5359
      %v5361 = vpop.f32.mrb[0].mxu0
      %v5362 = vadd.f32 %v5249, %v5361
      %v5363 = vpop.f32.mrb[0].mxu0
      %v5364 = vadd.f32 %v5251, %v5363
      %5365 = vmatprep.mubr.bf16.mxu0 %v5073
      %5366 = vmatmul.mubr.bf16.gmra.mrb[0].mxu0 %v5072
      %v5367 = vpop.f32.mrb[0].mxu0
      %v5368 = vadd.f32 %v5255, %v5367
      %v5369 = vpop.f32.mrb[0].mxu0
      %v5370 = vadd.f32 %v5257, %v5369
      %v5371 = vpop.f32.mrb[0].mxu0
      %v5372 = vadd.f32 %v5259, %v5371
      %v5373 = vpop.f32.mrb[0].mxu0
      %v5374 = vadd.f32 %v5261, %v5373
      %5375 = vmatprep.mubr.bf16.mxu0 %v5082
      %5376 = vmatmul.mubr.bf16.gmra.mrb[0].mxu0 %v5081
      %v5377 = vpop.f32.mrb[0].mxu0
      %v5378 = vadd.f32 %v5265, %v5377
      %v5379 = vpop.f32.mrb[0].mxu0
      %v5380 = vadd.f32 %v5267, %v5379
      %v5381 = vpop.f32.mrb[0].mxu0
      %v5382 = vadd.f32 %v5269, %v5381
      %v5383 = vpop.f32.mrb[0].mxu0
      %v5384 = vadd.f32 %v5271, %v5383
      %5385 = vdwg.mxu0
      %5386 = vmatprep.subr.bf16.mxu0 %v2690
      %5387 = vmatpush1.bf16.msra.mxu0 %v2689
      %5388 = vmatprep.subr.bf16.mxu0 %v2692
      %5389 = vmatpush1.bf16.msra.mxu0 %v2691
      %5390 = vmatprep.subr.bf16.mxu0 %v2694
      %5391 = vmatpush1.bf16.msra.mxu0 %v2693
      %5392 = vmatprep.subr.bf16.mxu0 %v2696
      %5393 = vmatpush1.bf16.msra.mxu0 %v2695
      %5394 = vmatprep.subr.bf16.mxu0 %v2698
      %5395 = vmatpush1.bf16.msra.mxu0 %v2697
      %5396 = vmatprep.subr.bf16.mxu0 %v2700
      %5397 = vmatpush1.bf16.msra.mxu0 %v2699
      %5398 = vmatprep.subr.bf16.mxu0 %v2702
      %5399 = vmatpush1.bf16.msra.mxu0 %v2701
      %5400 = vmatprep.subr.bf16.mxu0 %v2704
      %5401 = vmatpush1.bf16.msra.mxu0 %v2703
      %5402 = vmatprep.subr.bf16.mxu0 %v2706
      %5403 = vmatpush1.bf16.msra.mxu0 %v2705
      %5404 = vmatprep.subr.bf16.mxu0 %v2708
      %5405 = vmatpush1.bf16.msra.mxu0 %v2707
      %5406 = vmatprep.subr.bf16.mxu0 %v2710
      %5407 = vmatpush1.bf16.msra.mxu0 %v2709
      %5408 = vmatprep.subr.bf16.mxu0 %v2712
      %5409 = vmatpush1.bf16.msra.mxu0 %v2711
      %5410 = vmatprep.subr.bf16.mxu0 %v2714
      %5411 = vmatpush1.bf16.msra.mxu0 %v2713
      %5412 = vmatprep.subr.bf16.mxu0 %v2716
      %5413 = vmatpush1.bf16.msra.mxu0 %v2715
      %5414 = vmatprep.subr.bf16.mxu0 %v2718
      %5415 = vmatpush1.bf16.msra.mxu0 %v2717
      %5416 = vmatprep.subr.bf16.mxu0 %v2720
      %5417 = vmatpush1.bf16.msra.mxu0 %v2719
      %5418 = vmatprep.mubr.bf16.mxu0 %v5021
      %5419 = vmatmul.mubr.bf16.gmra.mrb[0].mxu0 %v5020
      %v5420 = vpop.f32.mrb[0].mxu0
      %v5421 = vadd.f32 %v5308, %v5420
      %v5422 = vpop.f32.mrb[0].mxu0
      %v5423 = vadd.f32 %v5310, %v5422
      %v5424 = vpop.f32.mrb[0].mxu0
      %v5425 = vadd.f32 %v5312, %v5424
      %v5426 = vpop.f32.mrb[0].mxu0
      %v5427 = vadd.f32 %v5314, %v5426
      %5428 = vmatprep.mubr.bf16.mxu0 %v5030
      %5429 = vmatmul.mubr.bf16.gmra.mrb[0].mxu0 %v5029
      %v5430 = vpop.f32.mrb[0].mxu0
      %v5431 = vadd.f32 %v5318, %v5430
      %v5432 = vpop.f32.mrb[0].mxu0
      %v5433 = vadd.f32 %v5320, %v5432
      %v5434 = vpop.f32.mrb[0].mxu0
      %v5435 = vadd.f32 %v5322, %v5434
      %v5436 = vpop.f32.mrb[0].mxu0
      %v5437 = vadd.f32 %v5324, %v5436
      %5438 = vmatprep.mubr.bf16.mxu0 %v5039
      %5439 = vmatmul.mubr.bf16.gmra.mrb[0].mxu0 %v5038
      %v5440 = vpop.f32.mrb[0].mxu0
      %v5441 = vadd.f32 %v5328, %v5440
      %v5442 = vpop.f32.mrb[0].mxu0
      %v5443 = vadd.f32 %v5330, %v5442
      %v5444 = vpop.f32.mrb[0].mxu0
      %v5445 = vadd.f32 %v5332, %v5444
      %v5446 = vpop.f32.mrb[0].mxu0
      %v5447 = vadd.f32 %v5334, %v5446
      %5448 = vmatprep.mubr.bf16.mxu0 %v5048
      %5449 = vmatmul.mubr.bf16.gmra.mrb[0].mxu0 %v5047
      %v5450 = vpop.f32.mrb[0].mxu0
      %v5451 = vadd.f32 %v5338, %v5450
      %v5452 = vpop.f32.mrb[0].mxu0
      %v5453 = vadd.f32 %v5340, %v5452
      %v5454 = vpop.f32.mrb[0].mxu0
      %v5455 = vadd.f32 %v5342, %v5454
      %v5456 = vpop.f32.mrb[0].mxu0
      %v5457 = vadd.f32 %v5344, %v5456
      %5458 = vmatprep.mubr.bf16.mxu0 %v5057
      %5459 = vmatmul.mubr.bf16.gmra.mrb[0].mxu0 %v5056
      %v5460 = vpop.f32.mrb[0].mxu0
      %v5461 = vadd.f32 %v5348, %v5460
      %v5462 = vpop.f32.mrb[0].mxu0
      %v5463 = vadd.f32 %v5350, %v5462
      %v5464 = vpop.f32.mrb[0].mxu0
      %v5465 = vadd.f32 %v5352, %v5464
      %v5466 = vpop.f32.mrb[0].mxu0
      %v5467 = vadd.f32 %v5354, %v5466
      %5468 = vmatprep.mubr.bf16.mxu0 %v5066
      %5469 = vmatmul.mubr.bf16.gmra.mrb[0].mxu0 %v5065
      %v5470 = vpop.f32.mrb[0].mxu0
      %v5471 = vadd.f32 %v5358, %v5470
      %v5472 = vpop.f32.mrb[0].mxu0
      %v5473 = vadd.f32 %v5360, %v5472
      %v5474 = vpop.f32.mrb[0].mxu0
      %v5475 = vadd.f32 %v5362, %v5474
      %v5476 = vpop.f32.mrb[0].mxu0
      %v5477 = vadd.f32 %v5364, %v5476
      %5478 = vmatprep.mubr.bf16.mxu0 %v5075
      %5479 = vmatmul.mubr.bf16.gmra.mrb[0].mxu0 %v5074
      %v5480 = vpop.f32.mrb[0].mxu0
      %v5481 = vadd.f32 %v5368, %v5480
      %v5482 = vpop.f32.mrb[0].mxu0
      %v5483 = vadd.f32 %v5370, %v5482
      %v5484 = vpop.f32.mrb[0].mxu0
      %v5485 = vadd.f32 %v5372, %v5484
      %v5486 = vpop.f32.mrb[0].mxu0
      %v5487 = vadd.f32 %v5374, %v5486
      %5488 = vmatprep.mubr.bf16.mxu0 %v5084
      %5489 = vmatmul.mubr.bf16.gmra.mrb[0].mxu0 %v5083
      %v5490 = vpop.f32.mrb[0].mxu0
      %v5491 = vadd.f32 %v5378, %v5490
      %v5492 = vpop.f32.mrb[0].mxu0
      %v5493 = vadd.f32 %v5380, %v5492
      %v5494 = vpop.f32.mrb[0].mxu0
      %v5495 = vadd.f32 %v5382, %v5494
      %v5496 = vpop.f32.mrb[0].mxu0
      %v5497 = vadd.f32 %v5384, %v5496
      %5498 = vdwg.mxu0
      %5499 = vmatprep.subr.bf16.mxu0 %v2722
      %5500 = vmatpush1.bf16.msra.mxu0 %v2721
      %5501 = vmatprep.subr.bf16.mxu0 %v2724
      %5502 = vmatpush1.bf16.msra.mxu0 %v2723
      %5503 = vmatprep.subr.bf16.mxu0 %v2726
      %5504 = vmatpush1.bf16.msra.mxu0 %v2725
      %5505 = vmatprep.subr.bf16.mxu0 %v2728
      %5506 = vmatpush1.bf16.msra.mxu0 %v2727
      %5507 = vmatprep.subr.bf16.mxu0 %v2730
      %5508 = vmatpush1.bf16.msra.mxu0 %v2729
      %5509 = vmatprep.subr.bf16.mxu0 %v2732
      %5510 = vmatpush1.bf16.msra.mxu0 %v2731
      %5511 = vmatprep.subr.bf16.mxu0 %v2734
      %5512 = vmatpush1.bf16.msra.mxu0 %v2733
      %5513 = vmatprep.subr.bf16.mxu0 %v2736
      %5514 = vmatpush1.bf16.msra.mxu0 %v2735
      %5515 = vmatprep.subr.bf16.mxu0 %v2738
      %5516 = vmatpush1.bf16.msra.mxu0 %v2737
      %5517 = vmatprep.subr.bf16.mxu0 %v2740
      %5518 = vmatpush1.bf16.msra.mxu0 %v2739
      %5519 = vmatprep.subr.bf16.mxu0 %v2742
      %5520 = vmatpush1.bf16.msra.mxu0 %v2741
      %5521 = vmatprep.subr.bf16.mxu0 %v2744
      %5522 = vmatpush1.bf16.msra.mxu0 %v2743
      %5523 = vmatprep.subr.bf16.mxu0 %v2746
      %5524 = vmatpush1.bf16.msra.mxu0 %v2745
      %5525 = vmatprep.subr.bf16.mxu0 %v2748
      %5526 = vmatpush1.bf16.msra.mxu0 %v2747
      %5527 = vmatprep.subr.bf16.mxu0 %v2750
      %5528 = vmatpush1.bf16.msra.mxu0 %v2749
      %5529 = vmatprep.subr.bf16.mxu0 %v2752
      %5530 = vmatpush1.bf16.msra.mxu0 %v2751
      %5531 = vmatprep.mubr.bf16.mxu0 %v5023
      %5532 = vmatmul.mubr.bf16.gmra.mrb[0].mxu0 %v5022
      %v5533 = vpop.f32.mrb[0].mxu0
      %v5534 = vadd.f32 %v5421, %v5533
      %v5535 = vpop.f32.mrb[0].mxu0
      %v5536 = vadd.f32 %v5423, %v5535
      %v5537 = vpop.f32.mrb[0].mxu0
      %v5538 = vadd.f32 %v5425, %v5537
      %v5539 = vpop.f32.mrb[0].mxu0
      %v5540 = vadd.f32 %v5427, %v5539
      %5541 = vmatprep.mubr.bf16.mxu0 %v5032
      %5542 = vmatmul.mubr.bf16.gmra.mrb[0].mxu0 %v5031
      %v5543 = vpop.f32.mrb[0].mxu0
      %v5544 = vadd.f32 %v5431, %v5543
      %v5545 = vpop.f32.mrb[0].mxu0
      %v5546 = vadd.f32 %v5433, %v5545
      %v5547 = vpop.f32.mrb[0].mxu0
      %v5548 = vadd.f32 %v5435, %v5547
      %v5549 = vpop.f32.mrb[0].mxu0
      %v5550 = vadd.f32 %v5437, %v5549
      %5551 = vmatprep.mubr.bf16.mxu0 %v5041
      %5552 = vmatmul.mubr.bf16.gmra.mrb[0].mxu0 %v5040
      %v5553 = vpop.f32.mrb[0].mxu0
      %v5554 = vadd.f32 %v5441, %v5553
      %v5555 = vpop.f32.mrb[0].mxu0
      %v5556 = vadd.f32 %v5443, %v5555
      %v5557 = vpop.f32.mrb[0].mxu0
      %v5558 = vadd.f32 %v5445, %v5557
      %v5559 = vpop.f32.mrb[0].mxu0
      %v5560 = vadd.f32 %v5447, %v5559
      %5561 = vmatprep.mubr.bf16.mxu0 %v5050
      %5562 = vmatmul.mubr.bf16.gmra.mrb[0].mxu0 %v5049
      %v5563 = vpop.f32.mrb[0].mxu0
      %v5564 = vadd.f32 %v5451, %v5563
      %v5565 = vpop.f32.mrb[0].mxu0
      %v5566 = vadd.f32 %v5453, %v5565
      %v5567 = vpop.f32.mrb[0].mxu0
      %v5568 = vadd.f32 %v5455, %v5567
      %v5569 = vpop.f32.mrb[0].mxu0
      %v5570 = vadd.f32 %v5457, %v5569
      %5571 = vmatprep.mubr.bf16.mxu0 %v5059
      %5572 = vmatmul.mubr.bf16.gmra.mrb[0].mxu0 %v5058
      %v5573 = vpop.f32.mrb[0].mxu0
      %v5574 = vadd.f32 %v5461, %v5573
      %v5575 = vpop.f32.mrb[0].mxu0
      %v5576 = vadd.f32 %v5463, %v5575
      %v5577 = vpop.f32.mrb[0].mxu0
      %v5578 = vadd.f32 %v5465, %v5577
      %v5579 = vpop.f32.mrb[0].mxu0
      %v5580 = vadd.f32 %v5467, %v5579
      %5581 = vmatprep.mubr.bf16.mxu0 %v5068
      %5582 = vmatmul.mubr.bf16.gmra.mrb[0].mxu0 %v5067
      %v5583 = vpop.f32.mrb[0].mxu0
      %v5584 = vadd.f32 %v5471, %v5583
      %v5585 = vpop.f32.mrb[0].mxu0
      %v5586 = vadd.f32 %v5473, %v5585
      %v5587 = vpop.f32.mrb[0].mxu0
      %v5588 = vadd.f32 %v5475, %v5587
      %v5589 = vpop.f32.mrb[0].mxu0
      %v5590 = vadd.f32 %v5477, %v5589
      %5591 = vmatprep.mubr.bf16.mxu0 %v5077
      %5592 = vmatmul.mubr.bf16.gmra.mrb[0].mxu0 %v5076
      %v5593 = vpop.f32.mrb[0].mxu0
      %v5594 = vadd.f32 %v5481, %v5593
      %v5595 = vpop.f32.mrb[0].mxu0
      %v5596 = vadd.f32 %v5483, %v5595
      %v5597 = vpop.f32.mrb[0].mxu0
      %v5598 = vadd.f32 %v5485, %v5597
      %v5599 = vpop.f32.mrb[0].mxu0
      %v5600 = vadd.f32 %v5487, %v5599
      %5601 = vmatprep.mubr.bf16.mxu0 %v5086
      %5602 = vmatmul.mubr.bf16.gmra.mrb[0].mxu0 %v5085
      %v5603 = vpop.f32.mrb[0].mxu0
      %v5604 = vadd.f32 %v5491, %v5603
      %v5605 = vpop.f32.mrb[0].mxu0
      %v5606 = vadd.f32 %v5493, %v5605
      %v5607 = vpop.f32.mrb[0].mxu0
      %v5608 = vadd.f32 %v5495, %v5607
      %v5609 = vpop.f32.mrb[0].mxu0
      %v5610 = vadd.f32 %v5497, %v5609
      %5611 = vdwg.mxu0
      %5612 = vmatprep.subr.bf16.mxu0 %v2754
      %5613 = vmatpush1.bf16.msra.mxu0 %v2753
      %5614 = vmatprep.subr.bf16.mxu0 %v2756
      %5615 = vmatpush1.bf16.msra.mxu0 %v2755
      %5616 = vmatprep.subr.bf16.mxu0 %v2758
      %5617 = vmatpush1.bf16.msra.mxu0 %v2757
      %5618 = vmatprep.subr.bf16.mxu0 %v2760
      %5619 = vmatpush1.bf16.msra.mxu0 %v2759
      %5620 = vmatprep.subr.bf16.mxu0 %v2762
      %5621 = vmatpush1.bf16.msra.mxu0 %v2761
      %5622 = vmatprep.subr.bf16.mxu0 %v2764
      %5623 = vmatpush1.bf16.msra.mxu0 %v2763
      %5624 = vmatprep.subr.bf16.mxu0 %v2766
      %5625 = vmatpush1.bf16.msra.mxu0 %v2765
      %5626 = vmatprep.subr.bf16.mxu0 %v2768
      %5627 = vmatpush1.bf16.msra.mxu0 %v2767
      %5628 = vmatprep.subr.bf16.mxu0 0
      %5629 = vmatpush1.bf16.msra.mxu0 0
      %5630 = vmatprep.subr.bf16.mxu0 0
      %5631 = vmatpush1.bf16.msra.mxu0 0
      %5632 = vmatprep.subr.bf16.mxu0 0
      %5633 = vmatpush1.bf16.msra.mxu0 0
      %5634 = vmatprep.subr.bf16.mxu0 0
      %5635 = vmatpush1.bf16.msra.mxu0 0
      %5636 = vmatprep.subr.bf16.mxu0 0
      %5637 = vmatpush1.bf16.msra.mxu0 0
      %5638 = vmatprep.subr.bf16.mxu0 0
      %5639 = vmatpush1.bf16.msra.mxu0 0
      %5640 = vmatprep.subr.bf16.mxu0 0
      %5641 = vmatpush1.bf16.msra.mxu0 0
      %5642 = vmatprep.subr.bf16.mxu0 0
      %5643 = vmatpush1.bf16.msra.mxu0 0
      %5644 = vmatprep.mubr.bf16.mxu0 0
      %5645 = vmatmul.mubr.bf16.gmra.mrb[0].mxu0 %v5024
      %v5646 = vpop.f32.mrb[0].mxu0
      %v5647 = vadd.f32 %v5534, %v5646
      %v5648 = vpop.f32.mrb[0].mxu0
      %v5649 = vadd.f32 %v5536, %v5648
      %v5650 = vpop.f32.mrb[0].mxu0
      %v5651 = vadd.f32 %v5538, %v5650
      %v5652 = vpop.f32.mrb[0].mxu0
      %v5653 = vadd.f32 %v5540, %v5652
      %5654 = vmatprep.mubr.bf16.mxu0 0
      %5655 = vmatmul.mubr.bf16.gmra.mrb[0].mxu0 %v5033
      %v5656 = vpop.f32.mrb[0].mxu0
      %v5657 = vadd.f32 %v5544, %v5656
      %v5658 = vpop.f32.mrb[0].mxu0
      %v5659 = vadd.f32 %v5546, %v5658
      %v5660 = vpop.f32.mrb[0].mxu0
      %v5661 = vadd.f32 %v5548, %v5660
      %v5662 = vpop.f32.mrb[0].mxu0
      %v5663 = vadd.f32 %v5550, %v5662
      %5664 = vmatprep.mubr.bf16.mxu0 0
      %5665 = vmatmul.mubr.bf16.gmra.mrb[0].mxu0 %v5042
      %v5666 = vpop.f32.mrb[0].mxu0
      %v5667 = vadd.f32 %v5554, %v5666
      %v5668 = vpop.f32.mrb[0].mxu0
      %v5669 = vadd.f32 %v5556, %v5668
      %v5670 = vpop.f32.mrb[0].mxu0
      %v5671 = vadd.f32 %v5558, %v5670
      %v5672 = vpop.f32.mrb[0].mxu0
      %v5673 = vadd.f32 %v5560, %v5672
      %5674 = vmatprep.mubr.bf16.mxu0 0
      %5675 = vmatmul.mubr.bf16.gmra.mrb[0].mxu0 %v5051
      %v5676 = vpop.f32.mrb[0].mxu0
      %v5677 = vadd.f32 %v5564, %v5676
      %v5678 = vpop.f32.mrb[0].mxu0
      %v5679 = vadd.f32 %v5566, %v5678
      %v5680 = vpop.f32.mrb[0].mxu0
      %v5681 = vadd.f32 %v5568, %v5680
      %v5682 = vpop.f32.mrb[0].mxu0
      %v5683 = vadd.f32 %v5570, %v5682
      %5684 = vmatprep.mubr.bf16.mxu0 0
      %5685 = vmatmul.mubr.bf16.gmra.mrb[0].mxu0 %v5060
      %v5686 = vpop.f32.mrb[0].mxu0
      %v5687 = vadd.f32 %v5574, %v5686
      %v5688 = vpop.f32.mrb[0].mxu0
      %v5689 = vadd.f32 %v5576, %v5688
      %v5690 = vpop.f32.mrb[0].mxu0
      %v5691 = vadd.f32 %v5578, %v5690
      %v5692 = vpop.f32.mrb[0].mxu0
      %v5693 = vadd.f32 %v5580, %v5692
      %5694 = vmatprep.mubr.bf16.mxu0 0
      %5695 = vmatmul.mubr.bf16.gmra.mrb[0].mxu0 %v5069
      %v5696 = vpop.f32.mrb[0].mxu0
      %v5697 = vadd.f32 %v5584, %v5696
      %v5698 = vpop.f32.mrb[0].mxu0
      %v5699 = vadd.f32 %v5586, %v5698
      %v5700 = vpop.f32.mrb[0].mxu0
      %v5701 = vadd.f32 %v5588, %v5700
      %v5702 = vpop.f32.mrb[0].mxu0
      %v5703 = vadd.f32 %v5590, %v5702
      %5704 = vmatprep.mubr.bf16.mxu0 0
      %5705 = vmatmul.mubr.bf16.gmra.mrb[0].mxu0 %v5078
      %v5706 = vpop.f32.mrb[0].mxu0
      %v5707 = vadd.f32 %v5594, %v5706
      %v5708 = vpop.f32.mrb[0].mxu0
      %v5709 = vadd.f32 %v5596, %v5708
      %v5710 = vpop.f32.mrb[0].mxu0
      %v5711 = vadd.f32 %v5598, %v5710
      %v5712 = vpop.f32.mrb[0].mxu0
      %v5713 = vadd.f32 %v5600, %v5712
      %5714 = vmatprep.mubr.bf16.mxu0 0
      %5715 = vmatmul.mubr.bf16.gmra.mrb[0].mxu0 %v5087
      %v5716 = vpop.f32.mrb[0].mxu0
      %v5717 = vadd.f32 %v5604, %v5716
      %v5718 = vpop.f32.mrb[0].mxu0
      %v5719 = vadd.f32 %v5606, %v5718
      %v5720 = vpop.f32.mrb[0].mxu0
      %v5721 = vadd.f32 %v5608, %v5720
      %v5722 = vpop.f32.mrb[0].mxu0
      %v5723 = vadd.f32 %v5610, %v5722
      %5724 = vdwg.mxu0
      %s5725 = scalar_lea.vmem %s3, 1152
      %v5726 = vld [vmem:[%s5725] sm:$0xff]
      %v5727 = vld [vmem:[%s5725 + $0x8] sm:$0xff]
      %v5728 = vld [vmem:[%s5725 + $0x10] sm:$0xff]
      %v5729 = vld [vmem:[%s5725 + $0x18] sm:$0xff]
      %v5730 = vld [vmem:[%s5725 + $0x20] sm:$0xf]
      %v5731 = vld [vmem:[%s5725 + $0x24] sm:$0xff]
      %v5732 = vld [vmem:[%s5725 + $0x2c] sm:$0xff]
      %v5733 = vld [vmem:[%s5725 + $0x34] sm:$0xff]
      %v5734 = vld [vmem:[%s5725 + $0x3c] sm:$0xff]
      %v5735 = vld [vmem:[%s5725 + $0x44] sm:$0xf]
      %v5736 = vld [vmem:[%s5725 + $0x48] sm:$0xff]
      %v5737 = vld [vmem:[%s5725 + $0x50] sm:$0xff]
      %v5738 = vld [vmem:[%s5725 + $0x58] sm:$0xff]
      %v5739 = vld [vmem:[%s5725 + $0x60] sm:$0xff]
      %v5740 = vld [vmem:[%s5725 + $0x68] sm:$0xf]
      %v5741 = vld [vmem:[%s5725 + $0x6c] sm:$0xff]
      %v5742 = vld [vmem:[%s5725 + $0x74] sm:$0xff]
      %v5743 = vld [vmem:[%s5725 + $0x7c] sm:$0xff]
      %v5744 = vld [vmem:[%s5725 + $0x84] sm:$0xff]
      %v5745 = vld [vmem:[%s5725 + $0x8c] sm:$0xf]
      %v5746 = vld [vmem:[%s5725 + $0x90] sm:$0xff]
      %v5747 = vld [vmem:[%s5725 + $0x98] sm:$0xff]
      %v5748 = vld [vmem:[%s5725 + $0xa0] sm:$0xff]
      %v5749 = vld [vmem:[%s5725 + $0xa8] sm:$0xff]
      %v5750 = vld [vmem:[%s5725 + $0xb0] sm:$0xf]
      %v5751 = vld [vmem:[%s5725 + $0xb4] sm:$0xff]
      %v5752 = vld [vmem:[%s5725 + $0xbc] sm:$0xff]
      %v5753 = vld [vmem:[%s5725 + $0xc4] sm:$0xff]
      %v5754 = vld [vmem:[%s5725 + $0xcc] sm:$0xff]
      %v5755 = vld [vmem:[%s5725 + $0xd4] sm:$0xf]
      %v5756 = vld [vmem:[%s5725 + $0xd8] sm:$0xff]
      %v5757 = vld [vmem:[%s5725 + $0xe0] sm:$0xff]
      %v5758 = vld [vmem:[%s5725 + $0xe8] sm:$0xff]
      %v5759 = vld [vmem:[%s5725 + $0xf0] sm:$0xff]
      %v5760 = vld [vmem:[%s5725 + $0xf8] sm:$0xf]
      %v5761 = vld [vmem:[%s5725 + $0xfc] sm:$0xff]
      %v5762 = vld [vmem:[%s5725 + $0x104] sm:$0xff]
      %v5763 = vld [vmem:[%s5725 + $0x10c] sm:$0xff]
      %v5764 = vld [vmem:[%s5725 + $0x114] sm:$0xff]
      %v5765 = vld [vmem:[%s5725 + $0x11c] sm:$0xf]
      %v5766 = vld [vmem:[%s5725 + $0x120] sm:$0xff]
      %v5767 = vld [vmem:[%s5725 + $0x128] sm:$0xff]
      %v5768 = vld [vmem:[%s5725 + $0x130] sm:$0xff]
      %v5769 = vld [vmem:[%s5725 + $0x138] sm:$0xff]
      %v5770 = vld [vmem:[%s5725 + $0x140] sm:$0xf]
      %v5771 = vld [vmem:[%s5725 + $0x144] sm:$0xff]
      %v5772 = vld [vmem:[%s5725 + $0x14c] sm:$0xff]
      %v5773 = vld [vmem:[%s5725 + $0x154] sm:$0xff]
      %v5774 = vld [vmem:[%s5725 + $0x15c] sm:$0xff]
      %v5775 = vld [vmem:[%s5725 + $0x164] sm:$0xf]
      %v5776 = vld [vmem:[%s5725 + $0x168] sm:$0xff]
      %v5777 = vld [vmem:[%s5725 + $0x170] sm:$0xff]
      %v5778 = vld [vmem:[%s5725 + $0x178] sm:$0xff]
      %v5779 = vld [vmem:[%s5725 + $0x180] sm:$0xff]
      %v5780 = vld [vmem:[%s5725 + $0x188] sm:$0xf]
      %v5781 = vld [vmem:[%s5725 + $0x18c] sm:$0xff]
      %v5782 = vld [vmem:[%s5725 + $0x194] sm:$0xff]
      %v5783 = vld [vmem:[%s5725 + $0x19c] sm:$0xff]
      %v5784 = vld [vmem:[%s5725 + $0x1a4] sm:$0xff]
      %v5785 = vld [vmem:[%s5725 + $0x1ac] sm:$0xf]
      %v5786 = vld [vmem:[%s5725 + $0x1b0] sm:$0xff]
      %v5787 = vld [vmem:[%s5725 + $0x1b8] sm:$0xff]
      %v5788 = vld [vmem:[%s5725 + $0x1c0] sm:$0xff]
      %v5789 = vld [vmem:[%s5725 + $0x1c8] sm:$0xff]
      %v5790 = vld [vmem:[%s5725 + $0x1d0] sm:$0xf]
      %v5791 = vld [vmem:[%s5725 + $0x1d4] sm:$0xff]
      %v5792 = vld [vmem:[%s5725 + $0x1dc] sm:$0xff]
      %v5793 = vld [vmem:[%s5725 + $0x1e4] sm:$0xff]
      %v5794 = vld [vmem:[%s5725 + $0x1ec] sm:$0xff]
      %v5795 = vld [vmem:[%s5725 + $0x1f4] sm:$0xf]
      %v5796 = vld [vmem:[%s5725 + $0x1f8] sm:$0xff]
      %v5797 = vld [vmem:[%s5725 + $0x200] sm:$0xff]
      %v5798 = vld [vmem:[%s5725 + $0x208] sm:$0xff]
      %v5799 = vld [vmem:[%s5725 + $0x210] sm:$0xff]
      %v5800 = vld [vmem:[%s5725 + $0x218] sm:$0xf]
      %v5801 = vld [vmem:[%s5725 + $0x21c] sm:$0xff]
      %v5802 = vld [vmem:[%s5725 + $0x224] sm:$0xff]
      %v5803 = vld [vmem:[%s5725 + $0x22c] sm:$0xff]
      %v5804 = vld [vmem:[%s5725 + $0x234] sm:$0xff]
      %v5805 = vld [vmem:[%s5725 + $0x23c] sm:$0xf]
      %v5886 = vunpack.c.l.b16 %v5726
      %v5887 = vunpack.c.h.b16 %v5726
      %v5888 = vunpack.c.l.b16 %v5727
      %v5889 = vunpack.c.h.b16 %v5727
      %v5890 = vunpack.c.l.b16 %v5728
      %v5891 = vunpack.c.h.b16 %v5728
      %v5892 = vunpack.c.l.b16 %v5729
      %v5893 = vunpack.c.h.b16 %v5729
      %v5894 = vunpack.c.l.b16 %v5730
      %v5895 = vunpack.c.l.b16 %v5731
      %v5896 = vunpack.c.h.b16 %v5731
      %v5897 = vunpack.c.l.b16 %v5732
      %v5898 = vunpack.c.h.b16 %v5732
      %v5899 = vunpack.c.l.b16 %v5733
      %v5900 = vunpack.c.h.b16 %v5733
      %v5901 = vunpack.c.l.b16 %v5734
      %v5902 = vunpack.c.h.b16 %v5734
      %v5903 = vunpack.c.l.b16 %v5735
      %v5904 = vunpack.c.l.b16 %v5736
      %v5905 = vunpack.c.h.b16 %v5736
      %v5906 = vunpack.c.l.b16 %v5737
      %v5907 = vunpack.c.h.b16 %v5737
      %v5908 = vunpack.c.l.b16 %v5738
      %v5909 = vunpack.c.h.b16 %v5738
      %v5910 = vunpack.c.l.b16 %v5739
      %v5911 = vunpack.c.h.b16 %v5739
      %v5912 = vunpack.c.l.b16 %v5740
      %v5913 = vunpack.c.l.b16 %v5741
      %v5914 = vunpack.c.h.b16 %v5741
      %v5915 = vunpack.c.l.b16 %v5742
      %v5916 = vunpack.c.h.b16 %v5742
      %v5917 = vunpack.c.l.b16 %v5743
      %v5918 = vunpack.c.h.b16 %v5743
      %v5919 = vunpack.c.l.b16 %v5744
      %v5920 = vunpack.c.h.b16 %v5744
      %v5921 = vunpack.c.l.b16 %v5745
      %v5922 = vunpack.c.l.b16 %v5746
      %v5923 = vunpack.c.h.b16 %v5746
      %v5924 = vunpack.c.l.b16 %v5747
      %v5925 = vunpack.c.h.b16 %v5747
      %v5926 = vunpack.c.l.b16 %v5748
      %v5927 = vunpack.c.h.b16 %v5748
      %v5928 = vunpack.c.l.b16 %v5749
      %v5929 = vunpack.c.h.b16 %v5749
      %v5930 = vunpack.c.l.b16 %v5750
      %v5931 = vunpack.c.l.b16 %v5751
      %v5932 = vunpack.c.h.b16 %v5751
      %v5933 = vunpack.c.l.b16 %v5752
      %v5934 = vunpack.c.h.b16 %v5752
      %v5935 = vunpack.c.l.b16 %v5753
      %v5936 = vunpack.c.h.b16 %v5753
      %v5937 = vunpack.c.l.b16 %v5754
      %v5938 = vunpack.c.h.b16 %v5754
      %v5939 = vunpack.c.l.b16 %v5755
      %v5940 = vunpack.c.l.b16 %v5756
      %v5941 = vunpack.c.h.b16 %v5756
      %v5942 = vunpack.c.l.b16 %v5757
      %v5943 = vunpack.c.h.b16 %v5757
      %v5944 = vunpack.c.l.b16 %v5758
      %v5945 = vunpack.c.h.b16 %v5758
      %v5946 = vunpack.c.l.b16 %v5759
      %v5947 = vunpack.c.h.b16 %v5759
      %v5948 = vunpack.c.l.b16 %v5760
      %v5949 = vunpack.c.l.b16 %v5761
      %v5950 = vunpack.c.h.b16 %v5761
      %v5951 = vunpack.c.l.b16 %v5762
      %v5952 = vunpack.c.h.b16 %v5762
      %v5953 = vunpack.c.l.b16 %v5763
      %v5954 = vunpack.c.h.b16 %v5763
      %v5955 = vunpack.c.l.b16 %v5764
      %v5956 = vunpack.c.h.b16 %v5764
      %v5957 = vunpack.c.l.b16 %v5765
      %v5958 = vunpack.c.l.b16 %v5766
      %v5959 = vunpack.c.h.b16 %v5766
      %v5960 = vunpack.c.l.b16 %v5767
      %v5961 = vunpack.c.h.b16 %v5767
      %v5962 = vunpack.c.l.b16 %v5768
      %v5963 = vunpack.c.h.b16 %v5768
      %v5964 = vunpack.c.l.b16 %v5769
      %v5965 = vunpack.c.h.b16 %v5769
      %v5966 = vunpack.c.l.b16 %v5770
      %v5967 = vunpack.c.l.b16 %v5771
      %v5968 = vunpack.c.h.b16 %v5771
      %v5969 = vunpack.c.l.b16 %v5772
      %v5970 = vunpack.c.h.b16 %v5772
      %v5971 = vunpack.c.l.b16 %v5773
      %v5972 = vunpack.c.h.b16 %v5773
      %v5973 = vunpack.c.l.b16 %v5774
      %v5974 = vunpack.c.h.b16 %v5774
      %v5975 = vunpack.c.l.b16 %v5775
      %v5976 = vunpack.c.l.b16 %v5776
      %v5977 = vunpack.c.h.b16 %v5776
      %v5978 = vunpack.c.l.b16 %v5777
      %v5979 = vunpack.c.h.b16 %v5777
      %v5980 = vunpack.c.l.b16 %v5778
      %v5981 = vunpack.c.h.b16 %v5778
      %v5982 = vunpack.c.l.b16 %v5779
      %v5983 = vunpack.c.h.b16 %v5779
      %v5984 = vunpack.c.l.b16 %v5780
      %v5985 = vunpack.c.l.b16 %v5781
      %v5986 = vunpack.c.h.b16 %v5781
      %v5987 = vunpack.c.l.b16 %v5782
      %v5988 = vunpack.c.h.b16 %v5782
      %v5989 = vunpack.c.l.b16 %v5783
      %v5990 = vunpack.c.h.b16 %v5783
      %v5991 = vunpack.c.l.b16 %v5784
      %v5992 = vunpack.c.h.b16 %v5784
      %v5993 = vunpack.c.l.b16 %v5785
      %v5994 = vunpack.c.l.b16 %v5786
      %v5995 = vunpack.c.h.b16 %v5786
      %v5996 = vunpack.c.l.b16 %v5787
      %v5997 = vunpack.c.h.b16 %v5787
      %v5998 = vunpack.c.l.b16 %v5788
      %v5999 = vunpack.c.h.b16 %v5788
      %v6000 = vunpack.c.l.b16 %v5789
      %v6001 = vunpack.c.h.b16 %v5789
      %v6002 = vunpack.c.l.b16 %v5790
      %v6003 = vunpack.c.l.b16 %v5791
      %v6004 = vunpack.c.h.b16 %v5791
      %v6005 = vunpack.c.l.b16 %v5792
      %v6006 = vunpack.c.h.b16 %v5792
      %v6007 = vunpack.c.l.b16 %v5793
      %v6008 = vunpack.c.h.b16 %v5793
      %v6009 = vunpack.c.l.b16 %v5794
      %v6010 = vunpack.c.h.b16 %v5794
      %v6011 = vunpack.c.l.b16 %v5795
      %v6012 = vunpack.c.l.b16 %v5796
      %v6013 = vunpack.c.h.b16 %v5796
      %v6014 = vunpack.c.l.b16 %v5797
      %v6015 = vunpack.c.h.b16 %v5797
      %v6016 = vunpack.c.l.b16 %v5798
      %v6017 = vunpack.c.h.b16 %v5798
      %v6018 = vunpack.c.l.b16 %v5799
      %v6019 = vunpack.c.h.b16 %v5799
      %v6020 = vunpack.c.l.b16 %v5800
      %v6021 = vunpack.c.l.b16 %v5801
      %v6022 = vunpack.c.h.b16 %v5801
      %v6023 = vunpack.c.l.b16 %v5802
      %v6024 = vunpack.c.h.b16 %v5802
      %v6025 = vunpack.c.l.b16 %v5803
      %v6026 = vunpack.c.h.b16 %v5803
      %v6027 = vunpack.c.l.b16 %v5804
      %v6028 = vunpack.c.h.b16 %v5804
      %v6029 = vunpack.c.l.b16 %v5805
      %v6030 = vpack.c.b16 %v5895, %v5886
      %v6031 = vpack.c.b16 %v5896, %v5887
      %v6032 = vpack.c.b16 %v5897, %v5888
      %v6033 = vpack.c.b16 %v5898, %v5889
      %v6034 = vpack.c.b16 %v5899, %v5890
      %v6035 = vpack.c.b16 %v5900, %v5891
      %v6036 = vpack.c.b16 %v5901, %v5892
      %v6037 = vpack.c.b16 %v5902, %v5893
      %v6038 = vpack.c.b16 %v5903, %v5894
      %v6039 = vpack.c.b16 %v5913, %v5904
      %v6040 = vpack.c.b16 %v5914, %v5905
      %v6041 = vpack.c.b16 %v5915, %v5906
      %v6042 = vpack.c.b16 %v5916, %v5907
      %v6043 = vpack.c.b16 %v5917, %v5908
      %v6044 = vpack.c.b16 %v5918, %v5909
      %v6045 = vpack.c.b16 %v5919, %v5910
      %v6046 = vpack.c.b16 %v5920, %v5911
      %v6047 = vpack.c.b16 %v5921, %v5912
      %v6048 = vpack.c.b16 %v5931, %v5922
      %v6049 = vpack.c.b16 %v5932, %v5923
      %v6050 = vpack.c.b16 %v5933, %v5924
      %v6051 = vpack.c.b16 %v5934, %v5925
      %v6052 = vpack.c.b16 %v5935, %v5926
      %v6053 = vpack.c.b16 %v5936, %v5927
      %v6054 = vpack.c.b16 %v5937, %v5928
      %v6055 = vpack.c.b16 %v5938, %v5929
      %v6056 = vpack.c.b16 %v5939, %v5930
      %v6057 = vpack.c.b16 %v5949, %v5940
      %v6058 = vpack.c.b16 %v5950, %v5941
      %v6059 = vpack.c.b16 %v5951, %v5942
      %v6060 = vpack.c.b16 %v5952, %v5943
      %v6061 = vpack.c.b16 %v5953, %v5944
      %v6062 = vpack.c.b16 %v5954, %v5945
      %v6063 = vpack.c.b16 %v5955, %v5946
      %v6064 = vpack.c.b16 %v5956, %v5947
      %v6065 = vpack.c.b16 %v5957, %v5948
      %v6066 = vpack.c.b16 %v5967, %v5958
      %v6067 = vpack.c.b16 %v5968, %v5959
      %v6068 = vpack.c.b16 %v5969, %v5960
      %v6069 = vpack.c.b16 %v5970, %v5961
      %v6070 = vpack.c.b16 %v5971, %v5962
      %v6071 = vpack.c.b16 %v5972, %v5963
      %v6072 = vpack.c.b16 %v5973, %v5964
      %v6073 = vpack.c.b16 %v5974, %v5965
      %v6074 = vpack.c.b16 %v5975, %v5966
      %v6075 = vpack.c.b16 %v5985, %v5976
      %v6076 = vpack.c.b16 %v5986, %v5977
      %v6077 = vpack.c.b16 %v5987, %v5978
      %v6078 = vpack.c.b16 %v5988, %v5979
      %v6079 = vpack.c.b16 %v5989, %v5980
      %v6080 = vpack.c.b16 %v5990, %v5981
      %v6081 = vpack.c.b16 %v5991, %v5982
      %v6082 = vpack.c.b16 %v5992, %v5983
      %v6083 = vpack.c.b16 %v5993, %v5984
      %v6084 = vpack.c.b16 %v6003, %v5994
      %v6085 = vpack.c.b16 %v6004, %v5995
      %v6086 = vpack.c.b16 %v6005, %v5996
      %v6087 = vpack.c.b16 %v6006, %v5997
      %v6088 = vpack.c.b16 %v6007, %v5998
      %v6089 = vpack.c.b16 %v6008, %v5999
      %v6090 = vpack.c.b16 %v6009, %v6000
      %v6091 = vpack.c.b16 %v6010, %v6001
      %v6092 = vpack.c.b16 %v6011, %v6002
      %v6093 = vpack.c.b16 %v6021, %v6012
      %v6094 = vpack.c.b16 %v6022, %v6013
      %v6095 = vpack.c.b16 %v6023, %v6014
      %v6096 = vpack.c.b16 %v6024, %v6015
      %v6097 = vpack.c.b16 %v6025, %v6016
      %v6098 = vpack.c.b16 %v6026, %v6017
      %v6099 = vpack.c.b16 %v6027, %v6018
      %v6100 = vpack.c.b16 %v6028, %v6019
      %v6101 = vpack.c.b16 %v6029, %v6020
      %6174 = vrot.lane.b32.xlu0 %v2625, 96
      %v6175 = vpop.permute.xlu0 %6174
      %6176 = vrot.lane.b32.xlu0 %v2626, 96
      %v6177 = vpop.permute.xlu0 %6176
      %6178 = vrot.lane.b32.xlu0 %v2850, 96
      %v6179 = vpop.permute.xlu0 %6178
      %6180 = vrot.lane.b32.xlu0 %v2627, 96
      %v6181 = vpop.permute.xlu0 %6180
      %6182 = vrot.lane.b32.xlu0 %v2628, 96
      %v6183 = vpop.permute.xlu0 %6182
      %6184 = vrot.lane.b32.xlu0 %v2851, 96
      %v6185 = vpop.permute.xlu0 %6184
      %6186 = vrot.lane.b32.xlu0 %v2629, 96
      %v6187 = vpop.permute.xlu0 %6186
      %6188 = vrot.lane.b32.xlu0 %v2630, 96
      %v6189 = vpop.permute.xlu0 %6188
      %6190 = vrot.lane.b32.xlu0 %v2852, 96
      %v6191 = vpop.permute.xlu0 %6190
      %6192 = vrot.lane.b32.xlu0 %v2631, 96
      %v6193 = vpop.permute.xlu0 %6192
      %6194 = vrot.lane.b32.xlu0 %v2632, 96
      %v6195 = vpop.permute.xlu0 %6194
      %6196 = vrot.lane.b32.xlu0 %v2853, 96
      %v6197 = vpop.permute.xlu0 %6196
      %6198 = vrot.lane.b32.xlu0 %v2633, 96
      %v6199 = vpop.permute.xlu0 %6198
      %6200 = vrot.lane.b32.xlu0 %v2634, 96
      %v6201 = vpop.permute.xlu0 %6200
      %6202 = vrot.lane.b32.xlu0 %v2854, 96
      %v6203 = vpop.permute.xlu0 %6202
      %6204 = vrot.lane.b32.xlu0 %v2635, 96
      %v6205 = vpop.permute.xlu0 %6204
      %6206 = vrot.lane.b32.xlu0 %v2636, 96
      %v6207 = vpop.permute.xlu0 %6206
      %6208 = vrot.lane.b32.xlu0 %v2855, 96
      %v6209 = vpop.permute.xlu0 %6208
      %6210 = vrot.lane.b32.xlu0 %v2637, 96
      %v6211 = vpop.permute.xlu0 %6210
      %6212 = vrot.lane.b32.xlu0 %v2638, 96
      %v6213 = vpop.permute.xlu0 %6212
      %6214 = vrot.lane.b32.xlu0 %v2856, 96
      %v6215 = vpop.permute.xlu0 %6214
      %6216 = vrot.lane.b32.xlu0 %v2639, 96
      %v6217 = vpop.permute.xlu0 %6216
      %6218 = vrot.lane.b32.xlu0 %v2640, 96
      %v6219 = vpop.permute.xlu0 %6218
      %6220 = vrot.lane.b32.xlu0 %v2857, 96
      %v6221 = vpop.permute.xlu0 %6220
      %6222 = vrot.lane.b32.xlu0 %v2641, 96
      %v6223 = vpop.permute.xlu0 %6222
      %6224 = vrot.lane.b32.xlu0 %v2642, 96
      %v6225 = vpop.permute.xlu0 %6224
      %6226 = vrot.lane.b32.xlu0 %v2858, 96
      %v6227 = vpop.permute.xlu0 %6226
      %6228 = vrot.lane.b32.xlu0 %v2643, 96
      %v6229 = vpop.permute.xlu0 %6228
      %6230 = vrot.lane.b32.xlu0 %v2644, 96
      %v6231 = vpop.permute.xlu0 %6230
      %6232 = vrot.lane.b32.xlu0 %v2859, 96
      %v6233 = vpop.permute.xlu0 %6232
      %6234 = vrot.lane.b32.xlu0 %v2645, 96
      %v6235 = vpop.permute.xlu0 %6234
      %6236 = vrot.lane.b32.xlu0 %v2646, 96
      %v6237 = vpop.permute.xlu0 %6236
      %6238 = vrot.lane.b32.xlu0 %v2860, 96
      %v6239 = vpop.permute.xlu0 %6238
      %6240 = vrot.lane.b32.xlu0 %v2647, 96
      %v6241 = vpop.permute.xlu0 %6240
      %6242 = vrot.lane.b32.xlu0 %v2648, 96
      %v6243 = vpop.permute.xlu0 %6242
      %6244 = vrot.lane.b32.xlu0 %v2861, 96
      %v6245 = vpop.permute.xlu0 %6244
      %6246 = vrot.lane.b32.xlu0 %v2649, 96
      %v6247 = vpop.permute.xlu0 %6246
      %6248 = vrot.lane.b32.xlu0 %v2650, 96
      %v6249 = vpop.permute.xlu0 %6248
      %6250 = vrot.lane.b32.xlu0 %v2862, 96
      %v6251 = vpop.permute.xlu0 %6250
      %6252 = vrot.lane.b32.xlu0 %v2651, 96
      %v6253 = vpop.permute.xlu0 %6252
      %6254 = vrot.lane.b32.xlu0 %v2652, 96
      %v6255 = vpop.permute.xlu0 %6254
      %6256 = vrot.lane.b32.xlu0 %v2863, 96
      %v6257 = vpop.permute.xlu0 %6256
      %6258 = vrot.lane.b32.xlu0 %v2653, 96
      %v6259 = vpop.permute.xlu0 %6258
      %6260 = vrot.lane.b32.xlu0 %v2654, 96
      %v6261 = vpop.permute.xlu0 %6260
      %6262 = vrot.lane.b32.xlu0 %v2864, 96
      %v6263 = vpop.permute.xlu0 %6262
      %6264 = vrot.lane.b32.xlu0 %v2655, 96
      %v6265 = vpop.permute.xlu0 %6264
      %6266 = vrot.lane.b32.xlu0 %v2656, 96
      %v6267 = vpop.permute.xlu0 %6266
      %6268 = vrot.lane.b32.xlu0 %v2865, 96
      %v6269 = vpop.permute.xlu0 %6268
      %6270 = vrot.lane.b32.xlu0 %v2657, 96
      %v6271 = vpop.permute.xlu0 %6270
      %6272 = vrot.lane.b32.xlu0 %v2658, 96
      %v6273 = vpop.permute.xlu0 %6272
      %6274 = vrot.lane.b32.xlu0 %v2866, 96
      %v6275 = vpop.permute.xlu0 %6274
      %6276 = vrot.lane.b32.xlu0 %v2659, 96
      %v6277 = vpop.permute.xlu0 %6276
      %6278 = vrot.lane.b32.xlu0 %v2660, 96
      %v6279 = vpop.permute.xlu0 %6278
      %6280 = vrot.lane.b32.xlu0 %v2867, 96
      %v6281 = vpop.permute.xlu0 %6280
      %6282 = vrot.lane.b32.xlu0 %v2661, 96
      %v6283 = vpop.permute.xlu0 %6282
      %6284 = vrot.lane.b32.xlu0 %v2662, 96
      %v6285 = vpop.permute.xlu0 %6284
      %6286 = vrot.lane.b32.xlu0 %v2868, 96
      %v6287 = vpop.permute.xlu0 %6286
      %6288 = vrot.lane.b32.xlu0 %v2663, 96
      %v6289 = vpop.permute.xlu0 %6288
      %6290 = vrot.lane.b32.xlu0 %v2664, 96
      %v6291 = vpop.permute.xlu0 %6290
      %6292 = vrot.lane.b32.xlu0 %v2869, 96
      %v6293 = vpop.permute.xlu0 %6292
      %6294 = vrot.lane.b32.xlu0 %v2665, 96
      %v6295 = vpop.permute.xlu0 %6294
      %6296 = vrot.lane.b32.xlu0 %v2666, 96
      %v6297 = vpop.permute.xlu0 %6296
      %6298 = vrot.lane.b32.xlu0 %v2870, 96
      %v6299 = vpop.permute.xlu0 %6298
      %6300 = vrot.lane.b32.xlu0 %v2667, 96
      %v6301 = vpop.permute.xlu0 %6300
      %6302 = vrot.lane.b32.xlu0 %v2668, 96
      %v6303 = vpop.permute.xlu0 %6302
      %6304 = vrot.lane.b32.xlu0 %v2871, 96
      %v6305 = vpop.permute.xlu0 %6304
      %6306 = vrot.lane.b32.xlu0 %v2669, 96
      %v6307 = vpop.permute.xlu0 %6306
      %6308 = vrot.lane.b32.xlu0 %v2670, 96
      %v6309 = vpop.permute.xlu0 %6308
      %6310 = vrot.lane.b32.xlu0 %v2872, 96
      %v6311 = vpop.permute.xlu0 %6310
      %6312 = vrot.lane.b32.xlu0 %v2671, 96
      %v6313 = vpop.permute.xlu0 %6312
      %6314 = vrot.lane.b32.xlu0 %v2672, 96
      %v6315 = vpop.permute.xlu0 %6314
      %6316 = vrot.lane.b32.xlu0 %v2873, 96
      %v6317 = vpop.permute.xlu0 %6316
      %6318 = vrot.lane.b32.xlu0 %v2673, 96
      %v6319 = vpop.permute.xlu0 %6318
      %6320 = vrot.lane.b32.xlu0 %v2674, 96
      %v6321 = vpop.permute.xlu0 %6320
      %6322 = vrot.lane.b32.xlu0 %v2874, 96
      %v6323 = vpop.permute.xlu0 %6322
      %6324 = vrot.lane.b32.xlu0 %v2675, 96
      %v6325 = vpop.permute.xlu0 %6324
      %6326 = vrot.lane.b32.xlu0 %v2676, 96
      %v6327 = vpop.permute.xlu0 %6326
      %6328 = vrot.lane.b32.xlu0 %v2875, 96
      %v6329 = vpop.permute.xlu0 %6328
      %6330 = vrot.lane.b32.xlu0 %v2677, 96
      %v6331 = vpop.permute.xlu0 %6330
      %6332 = vrot.lane.b32.xlu0 %v2678, 96
      %v6333 = vpop.permute.xlu0 %6332
      %6334 = vrot.lane.b32.xlu0 %v2876, 96
      %v6335 = vpop.permute.xlu0 %6334
      %6336 = vrot.lane.b32.xlu0 %v2679, 96
      %v6337 = vpop.permute.xlu0 %6336
      %6338 = vrot.lane.b32.xlu0 %v2680, 96
      %v6339 = vpop.permute.xlu0 %6338
      %6340 = vrot.lane.b32.xlu0 %v2877, 96
      %v6341 = vpop.permute.xlu0 %6340
      %6342 = vrot.lane.b32.xlu0 %v2681, 96
      %v6343 = vpop.permute.xlu0 %6342
      %6344 = vrot.lane.b32.xlu0 %v2682, 96
      %v6345 = vpop.permute.xlu0 %6344
      %6346 = vrot.lane.b32.xlu0 %v2878, 96
      %v6347 = vpop.permute.xlu0 %6346
      %6348 = vrot.lane.b32.xlu0 %v2683, 96
      %v6349 = vpop.permute.xlu0 %6348
      %6350 = vrot.lane.b32.xlu0 %v2684, 96
      %v6351 = vpop.permute.xlu0 %6350
      %6352 = vrot.lane.b32.xlu0 %v2879, 96
      %v6353 = vpop.permute.xlu0 %6352
      %6354 = vrot.lane.b32.xlu0 %v2685, 96
      %v6355 = vpop.permute.xlu0 %6354
      %6356 = vrot.lane.b32.xlu0 %v2686, 96
      %v6357 = vpop.permute.xlu0 %6356
      %6358 = vrot.lane.b32.xlu0 %v2880, 96
      %v6359 = vpop.permute.xlu0 %6358
      %6360 = vrot.lane.b32.xlu0 %v2687, 96
      %v6361 = vpop.permute.xlu0 %6360
      %6362 = vrot.lane.b32.xlu0 %v2688, 96
      %v6363 = vpop.permute.xlu0 %6362
      %6364 = vrot.lane.b32.xlu0 %v2881, 96
      %v6365 = vpop.permute.xlu0 %6364
      %6366 = vrot.lane.b32.xlu0 %v2689, 96
      %v6367 = vpop.permute.xlu0 %6366
      %6368 = vrot.lane.b32.xlu0 %v2690, 96
      %v6369 = vpop.permute.xlu0 %6368
      %6370 = vrot.lane.b32.xlu0 %v2882, 96
      %v6371 = vpop.permute.xlu0 %6370
      %6372 = vrot.lane.b32.xlu0 %v2691, 96
      %v6373 = vpop.permute.xlu0 %6372
      %6374 = vrot.lane.b32.xlu0 %v2692, 96
      %v6375 = vpop.permute.xlu0 %6374
      %6376 = vrot.lane.b32.xlu0 %v2883, 96
      %v6377 = vpop.permute.xlu0 %6376
      %6378 = vrot.lane.b32.xlu0 %v2693, 96
      %v6379 = vpop.permute.xlu0 %6378
      %6380 = vrot.lane.b32.xlu0 %v2694, 96
      %v6381 = vpop.permute.xlu0 %6380
      %6382 = vrot.lane.b32.xlu0 %v2884, 96
      %v6383 = vpop.permute.xlu0 %6382
      %6384 = vrot.lane.b32.xlu0 %v2695, 96
      %v6385 = vpop.permute.xlu0 %6384
      %6386 = vrot.lane.b32.xlu0 %v2696, 96
      %v6387 = vpop.permute.xlu0 %6386
      %6388 = vrot.lane.b32.xlu0 %v2885, 96
      %v6389 = vpop.permute.xlu0 %6388
      %6390 = vrot.lane.b32.xlu0 %v2697, 96
      %v6391 = vpop.permute.xlu0 %6390
      %6392 = vrot.lane.b32.xlu0 %v2698, 96
      %v6393 = vpop.permute.xlu0 %6392
      %6394 = vrot.lane.b32.xlu0 %v2886, 96
      %v6395 = vpop.permute.xlu0 %6394
      %6396 = vrot.lane.b32.xlu0 %v2699, 96
      %v6397 = vpop.permute.xlu0 %6396
      %6398 = vrot.lane.b32.xlu0 %v2700, 96
      %v6399 = vpop.permute.xlu0 %6398
      %6400 = vrot.lane.b32.xlu0 %v2887, 96
      %v6401 = vpop.permute.xlu0 %6400
      %6402 = vrot.lane.b32.xlu0 %v2701, 96
      %v6403 = vpop.permute.xlu0 %6402
      %6404 = vrot.lane.b32.xlu0 %v2702, 96
      %v6405 = vpop.permute.xlu0 %6404
      %6406 = vrot.lane.b32.xlu0 %v2888, 96
      %v6407 = vpop.permute.xlu0 %6406
      %6408 = vrot.lane.b32.xlu0 %v2703, 96
      %v6409 = vpop.permute.xlu0 %6408
      %6410 = vrot.lane.b32.xlu0 %v2704, 96
      %v6411 = vpop.permute.xlu0 %6410
      %6412 = vrot.lane.b32.xlu0 %v2889, 96
      %v6413 = vpop.permute.xlu0 %6412
      %6414 = vrot.lane.b32.xlu0 %v2705, 96
      %v6415 = vpop.permute.xlu0 %6414
      %6416 = vrot.lane.b32.xlu0 %v2706, 96
      %v6417 = vpop.permute.xlu0 %6416
      %6418 = vrot.lane.b32.xlu0 %v2890, 96
      %v6419 = vpop.permute.xlu0 %6418
      %6420 = vrot.lane.b32.xlu0 %v2707, 96
      %v6421 = vpop.permute.xlu0 %6420
      %6422 = vrot.lane.b32.xlu0 %v2708, 96
      %v6423 = vpop.permute.xlu0 %6422
      %6424 = vrot.lane.b32.xlu0 %v2891, 96
      %v6425 = vpop.permute.xlu0 %6424
      %6426 = vrot.lane.b32.xlu0 %v2709, 96
      %v6427 = vpop.permute.xlu0 %6426
      %6428 = vrot.lane.b32.xlu0 %v2710, 96
      %v6429 = vpop.permute.xlu0 %6428
      %6430 = vrot.lane.b32.xlu0 %v2892, 96
      %v6431 = vpop.permute.xlu0 %6430
      %6432 = vrot.lane.b32.xlu0 %v2711, 96
      %v6433 = vpop.permute.xlu0 %6432
      %6434 = vrot.lane.b32.xlu0 %v2712, 96
      %v6435 = vpop.permute.xlu0 %6434
      %6436 = vrot.lane.b32.xlu0 %v2893, 96
      %v6437 = vpop.permute.xlu0 %6436
      %6438 = vrot.lane.b32.xlu0 %v2713, 96
      %v6439 = vpop.permute.xlu0 %6438
      %6440 = vrot.lane.b32.xlu0 %v2714, 96
      %v6441 = vpop.permute.xlu0 %6440
      %6442 = vrot.lane.b32.xlu0 %v2894, 96
      %v6443 = vpop.permute.xlu0 %6442
      %6444 = vrot.lane.b32.xlu0 %v2715, 96
      %v6445 = vpop.permute.xlu0 %6444
      %6446 = vrot.lane.b32.xlu0 %v2716, 96
      %v6447 = vpop.permute.xlu0 %6446
      %6448 = vrot.lane.b32.xlu0 %v2895, 96
      %v6449 = vpop.permute.xlu0 %6448
      %6450 = vrot.lane.b32.xlu0 %v2717, 96
      %v6451 = vpop.permute.xlu0 %6450
      %6452 = vrot.lane.b32.xlu0 %v2718, 96
      %v6453 = vpop.permute.xlu0 %6452
      %6454 = vrot.lane.b32.xlu0 %v2896, 96
      %v6455 = vpop.permute.xlu0 %6454
      %6456 = vrot.lane.b32.xlu0 %v2719, 96
      %v6457 = vpop.permute.xlu0 %6456
      %6458 = vrot.lane.b32.xlu0 %v2720, 96
      %v6459 = vpop.permute.xlu0 %6458
      %6460 = vrot.lane.b32.xlu0 %v2897, 96
      %v6461 = vpop.permute.xlu0 %6460
      %6462 = vrot.lane.b32.xlu0 %v2721, 96
      %v6463 = vpop.permute.xlu0 %6462
      %6464 = vrot.lane.b32.xlu0 %v2722, 96
      %v6465 = vpop.permute.xlu0 %6464
      %6466 = vrot.lane.b32.xlu0 %v2898, 96
      %v6467 = vpop.permute.xlu0 %6466
      %6468 = vrot.lane.b32.xlu0 %v2723, 96
      %v6469 = vpop.permute.xlu0 %6468
      %6470 = vrot.lane.b32.xlu0 %v2724, 96
      %v6471 = vpop.permute.xlu0 %6470
      %6472 = vrot.lane.b32.xlu0 %v2899, 96
      %v6473 = vpop.permute.xlu0 %6472
      %6474 = vrot.lane.b32.xlu0 %v2725, 96
      %v6475 = vpop.permute.xlu0 %6474
      %6476 = vrot.lane.b32.xlu0 %v2726, 96
      %v6477 = vpop.permute.xlu0 %6476
      %6478 = vrot.lane.b32.xlu0 %v2900, 96
      %v6479 = vpop.permute.xlu0 %6478
      %6480 = vrot.lane.b32.xlu0 %v2727, 96
      %v6481 = vpop.permute.xlu0 %6480
      %6482 = vrot.lane.b32.xlu0 %v2728, 96
      %v6483 = vpop.permute.xlu0 %6482
      %6484 = vrot.lane.b32.xlu0 %v2901, 96
      %v6485 = vpop.permute.xlu0 %6484
      %6486 = vrot.lane.b32.xlu0 %v2729, 96
      %v6487 = vpop.permute.xlu0 %6486
      %6488 = vrot.lane.b32.xlu0 %v2730, 96
      %v6489 = vpop.permute.xlu0 %6488
      %6490 = vrot.lane.b32.xlu0 %v2902, 96
      %v6491 = vpop.permute.xlu0 %6490
      %6492 = vrot.lane.b32.xlu0 %v2731, 96
      %v6493 = vpop.permute.xlu0 %6492
      %6494 = vrot.lane.b32.xlu0 %v2732, 96
      %v6495 = vpop.permute.xlu0 %6494
      %6496 = vrot.lane.b32.xlu0 %v2903, 96
      %v6497 = vpop.permute.xlu0 %6496
      %6498 = vrot.lane.b32.xlu0 %v2733, 96
      %v6499 = vpop.permute.xlu0 %6498
      %6500 = vrot.lane.b32.xlu0 %v2734, 96
      %v6501 = vpop.permute.xlu0 %6500
      %6502 = vrot.lane.b32.xlu0 %v2904, 96
      %v6503 = vpop.permute.xlu0 %6502
      %6504 = vrot.lane.b32.xlu0 %v2735, 96
      %v6505 = vpop.permute.xlu0 %6504
      %6506 = vrot.lane.b32.xlu0 %v2736, 96
      %v6507 = vpop.permute.xlu0 %6506
      %6508 = vrot.lane.b32.xlu0 %v2905, 96
      %v6509 = vpop.permute.xlu0 %6508
      %6510 = vrot.lane.b32.xlu0 %v2737, 96
      %v6511 = vpop.permute.xlu0 %6510
      %6512 = vrot.lane.b32.xlu0 %v2738, 96
      %v6513 = vpop.permute.xlu0 %6512
      %6514 = vrot.lane.b32.xlu0 %v2906, 96
      %v6515 = vpop.permute.xlu0 %6514
      %6516 = vrot.lane.b32.xlu0 %v2739, 96
      %v6517 = vpop.permute.xlu0 %6516
      %6518 = vrot.lane.b32.xlu0 %v2740, 96
      %v6519 = vpop.permute.xlu0 %6518
      %6520 = vrot.lane.b32.xlu0 %v2907, 96
      %v6521 = vpop.permute.xlu0 %6520
      %6522 = vrot.lane.b32.xlu0 %v2741, 96
      %v6523 = vpop.permute.xlu0 %6522
      %6524 = vrot.lane.b32.xlu0 %v2742, 96
      %v6525 = vpop.permute.xlu0 %6524
      %6526 = vrot.lane.b32.xlu0 %v2908, 96
      %v6527 = vpop.permute.xlu0 %6526
      %6528 = vrot.lane.b32.xlu0 %v2743, 96
      %v6529 = vpop.permute.xlu0 %6528
      %6530 = vrot.lane.b32.xlu0 %v2744, 96
      %v6531 = vpop.permute.xlu0 %6530
      %6532 = vrot.lane.b32.xlu0 %v2909, 96
      %v6533 = vpop.permute.xlu0 %6532
      %6534 = vrot.lane.b32.xlu0 %v2745, 96
      %v6535 = vpop.permute.xlu0 %6534
      %6536 = vrot.lane.b32.xlu0 %v2746, 96
      %v6537 = vpop.permute.xlu0 %6536
      %6538 = vrot.lane.b32.xlu0 %v2910, 96
      %v6539 = vpop.permute.xlu0 %6538
      %6540 = vrot.lane.b32.xlu0 %v2747, 96
      %v6541 = vpop.permute.xlu0 %6540
      %6542 = vrot.lane.b32.xlu0 %v2748, 96
      %v6543 = vpop.permute.xlu0 %6542
      %6544 = vrot.lane.b32.xlu0 %v2911, 96
      %v6545 = vpop.permute.xlu0 %6544
      %6546 = vrot.lane.b32.xlu0 %v2749, 96
      %v6547 = vpop.permute.xlu0 %6546
      %6548 = vrot.lane.b32.xlu0 %v2750, 96
      %v6549 = vpop.permute.xlu0 %6548
      %6550 = vrot.lane.b32.xlu0 %v2912, 96
      %v6551 = vpop.permute.xlu0 %6550
      %6552 = vrot.lane.b32.xlu0 %v2751, 96
      %v6553 = vpop.permute.xlu0 %6552
      %6554 = vrot.lane.b32.xlu0 %v2752, 96
      %v6555 = vpop.permute.xlu0 %6554
      %6556 = vrot.lane.b32.xlu0 %v2913, 96
      %v6557 = vpop.permute.xlu0 %6556
      %6558 = vrot.lane.b32.xlu0 %v2753, 96
      %v6559 = vpop.permute.xlu0 %6558
      %6560 = vrot.lane.b32.xlu0 %v2754, 96
      %v6561 = vpop.permute.xlu0 %6560
      %6562 = vrot.lane.b32.xlu0 %v2914, 96
      %v6563 = vpop.permute.xlu0 %6562
      %6564 = vrot.lane.b32.xlu0 %v2755, 96
      %v6565 = vpop.permute.xlu0 %6564
      %6566 = vrot.lane.b32.xlu0 %v2756, 96
      %v6567 = vpop.permute.xlu0 %6566
      %6568 = vrot.lane.b32.xlu0 %v2915, 96
      %v6569 = vpop.permute.xlu0 %6568
      %6570 = vrot.lane.b32.xlu0 %v2757, 96
      %v6571 = vpop.permute.xlu0 %6570
      %6572 = vrot.lane.b32.xlu0 %v2758, 96
      %v6573 = vpop.permute.xlu0 %6572
      %6574 = vrot.lane.b32.xlu0 %v2916, 96
      %v6575 = vpop.permute.xlu0 %6574
      %6576 = vrot.lane.b32.xlu0 %v2759, 96
      %v6577 = vpop.permute.xlu0 %6576
      %6578 = vrot.lane.b32.xlu0 %v2760, 96
      %v6579 = vpop.permute.xlu0 %6578
      %6580 = vrot.lane.b32.xlu0 %v2917, 96
      %v6581 = vpop.permute.xlu0 %6580
      %6582 = vrot.lane.b32.xlu0 %v2761, 96
      %v6583 = vpop.permute.xlu0 %6582
      %6584 = vrot.lane.b32.xlu0 %v2762, 96
      %v6585 = vpop.permute.xlu0 %6584
      %6586 = vrot.lane.b32.xlu0 %v2918, 96
      %v6587 = vpop.permute.xlu0 %6586
      %6588 = vrot.lane.b32.xlu0 %v2763, 96
      %v6589 = vpop.permute.xlu0 %6588
      %6590 = vrot.lane.b32.xlu0 %v2764, 96
      %v6591 = vpop.permute.xlu0 %6590
      %6592 = vrot.lane.b32.xlu0 %v2919, 96
      %v6593 = vpop.permute.xlu0 %6592
      %6594 = vrot.lane.b32.xlu0 %v2765, 96
      %v6595 = vpop.permute.xlu0 %6594
      %6596 = vrot.lane.b32.xlu0 %v2766, 96
      %v6597 = vpop.permute.xlu0 %6596
      %6598 = vrot.lane.b32.xlu0 %v2920, 96
      %v6599 = vpop.permute.xlu0 %6598
      %6600 = vrot.lane.b32.xlu0 %v2767, 96
      %v6601 = vpop.permute.xlu0 %6600
      %6602 = vrot.lane.b32.xlu0 %v2768, 96
      %v6603 = vpop.permute.xlu0 %6602
      %6604 = vrot.lane.b32.xlu0 %v2921, 96
      %v6605 = vpop.permute.xlu0 %6604
      %vm6606 = vcmask 785408
      %v6607 = vsel %vm6606, %v6175, %v6177
      %v6608 = vsel %vm6606, %v6177, %v6179
      %v6609 = vsel %vm6606, %v6181, %v6183
      %v6610 = vsel %vm6606, %v6183, %v6185
      %v6611 = vsel %vm6606, %v6187, %v6189
      %v6612 = vsel %vm6606, %v6189, %v6191
      %v6613 = vsel %vm6606, %v6193, %v6195
      %v6614 = vsel %vm6606, %v6195, %v6197
      %v6615 = vsel %vm6606, %v6199, %v6201
      %v6616 = vsel %vm6606, %v6201, %v6203
      %v6617 = vsel %vm6606, %v6205, %v6207
      %v6618 = vsel %vm6606, %v6207, %v6209
      %v6619 = vsel %vm6606, %v6211, %v6213
      %v6620 = vsel %vm6606, %v6213, %v6215
      %v6621 = vsel %vm6606, %v6217, %v6219
      %v6622 = vsel %vm6606, %v6219, %v6221
      %v6623 = vsel %vm6606, %v6223, %v6225
      %v6624 = vsel %vm6606, %v6225, %v6227
      %v6625 = vsel %vm6606, %v6229, %v6231
      %v6626 = vsel %vm6606, %v6231, %v6233
      %v6627 = vsel %vm6606, %v6235, %v6237
      %v6628 = vsel %vm6606, %v6237, %v6239
      %v6629 = vsel %vm6606, %v6241, %v6243
      %v6630 = vsel %vm6606, %v6243, %v6245
      %v6631 = vsel %vm6606, %v6247, %v6249
      %v6632 = vsel %vm6606, %v6249, %v6251
      %v6633 = vsel %vm6606, %v6253, %v6255
      %v6634 = vsel %vm6606, %v6255, %v6257
      %v6635 = vsel %vm6606, %v6259, %v6261
      %v6636 = vsel %vm6606, %v6261, %v6263
      %v6637 = vsel %vm6606, %v6265, %v6267
      %v6638 = vsel %vm6606, %v6267, %v6269
      %v6639 = vsel %vm6606, %v6271, %v6273
      %v6640 = vsel %vm6606, %v6273, %v6275
      %v6641 = vsel %vm6606, %v6277, %v6279
      %v6642 = vsel %vm6606, %v6279, %v6281
      %v6643 = vsel %vm6606, %v6283, %v6285
      %v6644 = vsel %vm6606, %v6285, %v6287
      %v6645 = vsel %vm6606, %v6289, %v6291
      %v6646 = vsel %vm6606, %v6291, %v6293
      %v6647 = vsel %vm6606, %v6295, %v6297
      %v6648 = vsel %vm6606, %v6297, %v6299
      %v6649 = vsel %vm6606, %v6301, %v6303
      %v6650 = vsel %vm6606, %v6303, %v6305
      %v6651 = vsel %vm6606, %v6307, %v6309
      %v6652 = vsel %vm6606, %v6309, %v6311
      %v6653 = vsel %vm6606, %v6313, %v6315
      %v6654 = vsel %vm6606, %v6315, %v6317
      %v6655 = vsel %vm6606, %v6319, %v6321
      %v6656 = vsel %vm6606, %v6321, %v6323
      %v6657 = vsel %vm6606, %v6325, %v6327
      %v6658 = vsel %vm6606, %v6327, %v6329
      %v6659 = vsel %vm6606, %v6331, %v6333
      %v6660 = vsel %vm6606, %v6333, %v6335
      %v6661 = vsel %vm6606, %v6337, %v6339
      %v6662 = vsel %vm6606, %v6339, %v6341
      %v6663 = vsel %vm6606, %v6343, %v6345
      %v6664 = vsel %vm6606, %v6345, %v6347
      %v6665 = vsel %vm6606, %v6349, %v6351
      %v6666 = vsel %vm6606, %v6351, %v6353
      %v6667 = vsel %vm6606, %v6355, %v6357
      %v6668 = vsel %vm6606, %v6357, %v6359
      %v6669 = vsel %vm6606, %v6361, %v6363
      %v6670 = vsel %vm6606, %v6363, %v6365
      %v6671 = vsel %vm6606, %v6367, %v6369
      %v6672 = vsel %vm6606, %v6369, %v6371
      %v6673 = vsel %vm6606, %v6373, %v6375
      %v6674 = vsel %vm6606, %v6375, %v6377
      %v6675 = vsel %vm6606, %v6379, %v6381
      %v6676 = vsel %vm6606, %v6381, %v6383
      %v6677 = vsel %vm6606, %v6385, %v6387
      %v6678 = vsel %vm6606, %v6387, %v6389
      %v6679 = vsel %vm6606, %v6391, %v6393
      %v6680 = vsel %vm6606, %v6393, %v6395
      %v6681 = vsel %vm6606, %v6397, %v6399
      %v6682 = vsel %vm6606, %v6399, %v6401
      %v6683 = vsel %vm6606, %v6403, %v6405
      %v6684 = vsel %vm6606, %v6405, %v6407
      %v6685 = vsel %vm6606, %v6409, %v6411
      %v6686 = vsel %vm6606, %v6411, %v6413
      %v6687 = vsel %vm6606, %v6415, %v6417
      %v6688 = vsel %vm6606, %v6417, %v6419
      %v6689 = vsel %vm6606, %v6421, %v6423
      %v6690 = vsel %vm6606, %v6423, %v6425
      %v6691 = vsel %vm6606, %v6427, %v6429
      %v6692 = vsel %vm6606, %v6429, %v6431
      %v6693 = vsel %vm6606, %v6433, %v6435
      %v6694 = vsel %vm6606, %v6435, %v6437
      %v6695 = vsel %vm6606, %v6439, %v6441
      %v6696 = vsel %vm6606, %v6441, %v6443
      %v6697 = vsel %vm6606, %v6445, %v6447
      %v6698 = vsel %vm6606, %v6447, %v6449
      %v6699 = vsel %vm6606, %v6451, %v6453
      %v6700 = vsel %vm6606, %v6453, %v6455
      %v6701 = vsel %vm6606, %v6457, %v6459
      %v6702 = vsel %vm6606, %v6459, %v6461
      %v6703 = vsel %vm6606, %v6463, %v6465
      %v6704 = vsel %vm6606, %v6465, %v6467
      %v6705 = vsel %vm6606, %v6469, %v6471
      %v6706 = vsel %vm6606, %v6471, %v6473
      %v6707 = vsel %vm6606, %v6475, %v6477
      %v6708 = vsel %vm6606, %v6477, %v6479
      %v6709 = vsel %vm6606, %v6481, %v6483
      %v6710 = vsel %vm6606, %v6483, %v6485
      %v6711 = vsel %vm6606, %v6487, %v6489
      %v6712 = vsel %vm6606, %v6489, %v6491
      %v6713 = vsel %vm6606, %v6493, %v6495
      %v6714 = vsel %vm6606, %v6495, %v6497
      %v6715 = vsel %vm6606, %v6499, %v6501
      %v6716 = vsel %vm6606, %v6501, %v6503
      %v6717 = vsel %vm6606, %v6505, %v6507
      %v6718 = vsel %vm6606, %v6507, %v6509
      %v6719 = vsel %vm6606, %v6511, %v6513
      %v6720 = vsel %vm6606, %v6513, %v6515
      %v6721 = vsel %vm6606, %v6517, %v6519
      %v6722 = vsel %vm6606, %v6519, %v6521
      %v6723 = vsel %vm6606, %v6523, %v6525
      %v6724 = vsel %vm6606, %v6525, %v6527
      %v6725 = vsel %vm6606, %v6529, %v6531
      %v6726 = vsel %vm6606, %v6531, %v6533
      %v6727 = vsel %vm6606, %v6535, %v6537
      %v6728 = vsel %vm6606, %v6537, %v6539
      %v6729 = vsel %vm6606, %v6541, %v6543
      %v6730 = vsel %vm6606, %v6543, %v6545
      %v6731 = vsel %vm6606, %v6547, %v6549
      %v6732 = vsel %vm6606, %v6549, %v6551
      %v6733 = vsel %vm6606, %v6553, %v6555
      %v6734 = vsel %vm6606, %v6555, %v6557
      %v6735 = vsel %vm6606, %v6559, %v6561
      %v6736 = vsel %vm6606, %v6561, %v6563
      %v6737 = vsel %vm6606, %v6565, %v6567
      %v6738 = vsel %vm6606, %v6567, %v6569
      %v6739 = vsel %vm6606, %v6571, %v6573
      %v6740 = vsel %vm6606, %v6573, %v6575
      %v6741 = vsel %vm6606, %v6577, %v6579
      %v6742 = vsel %vm6606, %v6579, %v6581
      %v6743 = vsel %vm6606, %v6583, %v6585
      %v6744 = vsel %vm6606, %v6585, %v6587
      %v6745 = vsel %vm6606, %v6589, %v6591
      %v6746 = vsel %vm6606, %v6591, %v6593
      %v6747 = vsel %vm6606, %v6595, %v6597
      %v6748 = vsel %vm6606, %v6597, %v6599
      %v6749 = vsel %vm6606, %v6601, %v6603
      %v6750 = vsel %vm6606, %v6603, %v6605
      %6895 = vmatprep.subr.bf16.mxu0 %v6608
      %6896 = vmatpush1.bf16.msra.mxu0 %v6607
      %6897 = vmatprep.subr.bf16.mxu0 %v6610
      %6898 = vmatpush1.bf16.msra.mxu0 %v6609
      %6899 = vmatprep.subr.bf16.mxu0 %v6612
      %6900 = vmatpush1.bf16.msra.mxu0 %v6611
      %6901 = vmatprep.subr.bf16.mxu0 %v6614
      %6902 = vmatpush1.bf16.msra.mxu0 %v6613
      %6903 = vmatprep.subr.bf16.mxu0 %v6616
      %6904 = vmatpush1.bf16.msra.mxu0 %v6615
      %6905 = vmatprep.subr.bf16.mxu0 %v6618
      %6906 = vmatpush1.bf16.msra.mxu0 %v6617
      %6907 = vmatprep.subr.bf16.mxu0 %v6620
      %6908 = vmatpush1.bf16.msra.mxu0 %v6619
      %6909 = vmatprep.subr.bf16.mxu0 %v6622
      %6910 = vmatpush1.bf16.msra.mxu0 %v6621
      %6911 = vmatprep.subr.bf16.mxu0 %v6624
      %6912 = vmatpush1.bf16.msra.mxu0 %v6623
      %6913 = vmatprep.subr.bf16.mxu0 %v6626
      %6914 = vmatpush1.bf16.msra.mxu0 %v6625
      %6915 = vmatprep.subr.bf16.mxu0 %v6628
      %6916 = vmatpush1.bf16.msra.mxu0 %v6627
      %6917 = vmatprep.subr.bf16.mxu0 %v6630
      %6918 = vmatpush1.bf16.msra.mxu0 %v6629
      %6919 = vmatprep.subr.bf16.mxu0 %v6632
      %6920 = vmatpush1.bf16.msra.mxu0 %v6631
      %6921 = vmatprep.subr.bf16.mxu0 %v6634
      %6922 = vmatpush1.bf16.msra.mxu0 %v6633
      %6923 = vmatprep.subr.bf16.mxu0 %v6636
      %6924 = vmatpush1.bf16.msra.mxu0 %v6635
      %6925 = vmatprep.subr.bf16.mxu0 %v6638
      %6926 = vmatpush1.bf16.msra.mxu0 %v6637
      %6927 = vmatprep.mubr.bf16.mxu0 %v6031
      %6928 = vmatmul.mubr.bf16.gmra.mrb[0].mxu0 %v6030
      %v6929 = vpop.f32.mrb[0].mxu0
      %v6930 = vadd.f32 0.0, %v6929
      %v6931 = vpop.f32.mrb[0].mxu0
      %v6932 = vadd.f32 0.0, %v6931
      %v6933 = vpop.f32.mrb[0].mxu0
      %v6934 = vadd.f32 0.0, %v6933
      %v6935 = vpop.f32.mrb[0].mxu0
      %v6936 = vadd.f32 0.0, %v6935
      %6937 = vmatprep.mubr.bf16.mxu0 %v6040
      %6938 = vmatmul.mubr.bf16.gmra.mrb[0].mxu0 %v6039
      %v6939 = vpop.f32.mrb[0].mxu0
      %v6940 = vadd.f32 0.0, %v6939
      %v6941 = vpop.f32.mrb[0].mxu0
      %v6942 = vadd.f32 0.0, %v6941
      %v6943 = vpop.f32.mrb[0].mxu0
      %v6944 = vadd.f32 0.0, %v6943
      %v6945 = vpop.f32.mrb[0].mxu0
      %v6946 = vadd.f32 0.0, %v6945
      %6947 = vmatprep.mubr.bf16.mxu0 %v6049
      %6948 = vmatmul.mubr.bf16.gmra.mrb[0].mxu0 %v6048
      %v6949 = vpop.f32.mrb[0].mxu0
      %v6950 = vadd.f32 0.0, %v6949
      %v6951 = vpop.f32.mrb[0].mxu0
      %v6952 = vadd.f32 0.0, %v6951
      %v6953 = vpop.f32.mrb[0].mxu0
      %v6954 = vadd.f32 0.0, %v6953
      %v6955 = vpop.f32.mrb[0].mxu0
      %v6956 = vadd.f32 0.0, %v6955
      %6957 = vmatprep.mubr.bf16.mxu0 %v6058
      %6958 = vmatmul.mubr.bf16.gmra.mrb[0].mxu0 %v6057
      %v6959 = vpop.f32.mrb[0].mxu0
      %v6960 = vadd.f32 0.0, %v6959
      %v6961 = vpop.f32.mrb[0].mxu0
      %v6962 = vadd.f32 0.0, %v6961
      %v6963 = vpop.f32.mrb[0].mxu0
      %v6964 = vadd.f32 0.0, %v6963
      %v6965 = vpop.f32.mrb[0].mxu0
      %v6966 = vadd.f32 0.0, %v6965
      %6967 = vmatprep.mubr.bf16.mxu0 %v6067
      %6968 = vmatmul.mubr.bf16.gmra.mrb[0].mxu0 %v6066
      %v6969 = vpop.f32.mrb[0].mxu0
      %v6970 = vadd.f32 0.0, %v6969
      %v6971 = vpop.f32.mrb[0].mxu0
      %v6972 = vadd.f32 0.0, %v6971
      %v6973 = vpop.f32.mrb[0].mxu0
      %v6974 = vadd.f32 0.0, %v6973
      %v6975 = vpop.f32.mrb[0].mxu0
      %v6976 = vadd.f32 0.0, %v6975
      %6977 = vmatprep.mubr.bf16.mxu0 %v6076
      %6978 = vmatmul.mubr.bf16.gmra.mrb[0].mxu0 %v6075
      %v6979 = vpop.f32.mrb[0].mxu0
      %v6980 = vadd.f32 0.0, %v6979
      %v6981 = vpop.f32.mrb[0].mxu0
      %v6982 = vadd.f32 0.0, %v6981
      %v6983 = vpop.f32.mrb[0].mxu0
      %v6984 = vadd.f32 0.0, %v6983
      %v6985 = vpop.f32.mrb[0].mxu0
      %v6986 = vadd.f32 0.0, %v6985
      %6987 = vmatprep.mubr.bf16.mxu0 %v6085
      %6988 = vmatmul.mubr.bf16.gmra.mrb[0].mxu0 %v6084
      %v6989 = vpop.f32.mrb[0].mxu0
      %v6990 = vadd.f32 0.0, %v6989
      %v6991 = vpop.f32.mrb[0].mxu0
      %v6992 = vadd.f32 0.0, %v6991
      %v6993 = vpop.f32.mrb[0].mxu0
      %v6994 = vadd.f32 0.0, %v6993
      %v6995 = vpop.f32.mrb[0].mxu0
      %v6996 = vadd.f32 0.0, %v6995
      %6997 = vmatprep.mubr.bf16.mxu0 %v6094
      %6998 = vmatmul.mubr.bf16.gmra.mrb[0].mxu0 %v6093
      %v6999 = vpop.f32.mrb[0].mxu0
      %v7000 = vadd.f32 0.0, %v6999
      %v7001 = vpop.f32.mrb[0].mxu0
      %v7002 = vadd.f32 0.0, %v7001
      %v7003 = vpop.f32.mrb[0].mxu0
      %v7004 = vadd.f32 0.0, %v7003
      %v7005 = vpop.f32.mrb[0].mxu0
      %v7006 = vadd.f32 0.0, %v7005
      %7007 = vdwg.mxu0
      %7008 = vmatprep.subr.bf16.mxu0 %v6640
      %7009 = vmatpush1.bf16.msra.mxu0 %v6639
      %7010 = vmatprep.subr.bf16.mxu0 %v6642
      %7011 = vmatpush1.bf16.msra.mxu0 %v6641
      %7012 = vmatprep.subr.bf16.mxu0 %v6644
      %7013 = vmatpush1.bf16.msra.mxu0 %v6643
      %7014 = vmatprep.subr.bf16.mxu0 %v6646
      %7015 = vmatpush1.bf16.msra.mxu0 %v6645
      %7016 = vmatprep.subr.bf16.mxu0 %v6648
      %7017 = vmatpush1.bf16.msra.mxu0 %v6647
      %7018 = vmatprep.subr.bf16.mxu0 %v6650
      %7019 = vmatpush1.bf16.msra.mxu0 %v6649
      %7020 = vmatprep.subr.bf16.mxu0 %v6652
      %7021 = vmatpush1.bf16.msra.mxu0 %v6651
      %7022 = vmatprep.subr.bf16.mxu0 %v6654
      %7023 = vmatpush1.bf16.msra.mxu0 %v6653
      %7024 = vmatprep.subr.bf16.mxu0 %v6656
      %7025 = vmatpush1.bf16.msra.mxu0 %v6655
      %7026 = vmatprep.subr.bf16.mxu0 %v6658
      %7027 = vmatpush1.bf16.msra.mxu0 %v6657
      %7028 = vmatprep.subr.bf16.mxu0 %v6660
      %7029 = vmatpush1.bf16.msra.mxu0 %v6659
      %7030 = vmatprep.subr.bf16.mxu0 %v6662
      %7031 = vmatpush1.bf16.msra.mxu0 %v6661
      %7032 = vmatprep.subr.bf16.mxu0 %v6664
      %7033 = vmatpush1.bf16.msra.mxu0 %v6663
      %7034 = vmatprep.subr.bf16.mxu0 %v6666
      %7035 = vmatpush1.bf16.msra.mxu0 %v6665
      %7036 = vmatprep.subr.bf16.mxu0 %v6668
      %7037 = vmatpush1.bf16.msra.mxu0 %v6667
      %7038 = vmatprep.subr.bf16.mxu0 %v6670
      %7039 = vmatpush1.bf16.msra.mxu0 %v6669
      %7040 = vmatprep.mubr.bf16.mxu0 %v6033
      %7041 = vmatmul.mubr.bf16.gmra.mrb[0].mxu0 %v6032
      %v7042 = vpop.f32.mrb[0].mxu0
      %v7043 = vadd.f32 %v6930, %v7042
      %v7044 = vpop.f32.mrb[0].mxu0
      %v7045 = vadd.f32 %v6932, %v7044
      %v7046 = vpop.f32.mrb[0].mxu0
      %v7047 = vadd.f32 %v6934, %v7046
      %v7048 = vpop.f32.mrb[0].mxu0
      %v7049 = vadd.f32 %v6936, %v7048
      %7050 = vmatprep.mubr.bf16.mxu0 %v6042
      %7051 = vmatmul.mubr.bf16.gmra.mrb[0].mxu0 %v6041
      %v7052 = vpop.f32.mrb[0].mxu0
      %v7053 = vadd.f32 %v6940, %v7052
      %v7054 = vpop.f32.mrb[0].mxu0
      %v7055 = vadd.f32 %v6942, %v7054
      %v7056 = vpop.f32.mrb[0].mxu0
      %v7057 = vadd.f32 %v6944, %v7056
      %v7058 = vpop.f32.mrb[0].mxu0
      %v7059 = vadd.f32 %v6946, %v7058
      %7060 = vmatprep.mubr.bf16.mxu0 %v6051
      %7061 = vmatmul.mubr.bf16.gmra.mrb[0].mxu0 %v6050
      %v7062 = vpop.f32.mrb[0].mxu0
      %v7063 = vadd.f32 %v6950, %v7062
      %v7064 = vpop.f32.mrb[0].mxu0
      %v7065 = vadd.f32 %v6952, %v7064
      %v7066 = vpop.f32.mrb[0].mxu0
      %v7067 = vadd.f32 %v6954, %v7066
      %v7068 = vpop.f32.mrb[0].mxu0
      %v7069 = vadd.f32 %v6956, %v7068
      %7070 = vmatprep.mubr.bf16.mxu0 %v6060
      %7071 = vmatmul.mubr.bf16.gmra.mrb[0].mxu0 %v6059
      %v7072 = vpop.f32.mrb[0].mxu0
      %v7073 = vadd.f32 %v6960, %v7072
      %v7074 = vpop.f32.mrb[0].mxu0
      %v7075 = vadd.f32 %v6962, %v7074
      %v7076 = vpop.f32.mrb[0].mxu0
      %v7077 = vadd.f32 %v6964, %v7076
      %v7078 = vpop.f32.mrb[0].mxu0
      %v7079 = vadd.f32 %v6966, %v7078
      %7080 = vmatprep.mubr.bf16.mxu0 %v6069
      %7081 = vmatmul.mubr.bf16.gmra.mrb[0].mxu0 %v6068
      %v7082 = vpop.f32.mrb[0].mxu0
      %v7083 = vadd.f32 %v6970, %v7082
      %v7084 = vpop.f32.mrb[0].mxu0
      %v7085 = vadd.f32 %v6972, %v7084
      %v7086 = vpop.f32.mrb[0].mxu0
      %v7087 = vadd.f32 %v6974, %v7086
      %v7088 = vpop.f32.mrb[0].mxu0
      %v7089 = vadd.f32 %v6976, %v7088
      %7090 = vmatprep.mubr.bf16.mxu0 %v6078
      %7091 = vmatmul.mubr.bf16.gmra.mrb[0].mxu0 %v6077
      %v7092 = vpop.f32.mrb[0].mxu0
      %v7093 = vadd.f32 %v6980, %v7092
      %v7094 = vpop.f32.mrb[0].mxu0
      %v7095 = vadd.f32 %v6982, %v7094
      %v7096 = vpop.f32.mrb[0].mxu0
      %v7097 = vadd.f32 %v6984, %v7096
      %v7098 = vpop.f32.mrb[0].mxu0
      %v7099 = vadd.f32 %v6986, %v7098
      %7100 = vmatprep.mubr.bf16.mxu0 %v6087
      %7101 = vmatmul.mubr.bf16.gmra.mrb[0].mxu0 %v6086
      %v7102 = vpop.f32.mrb[0].mxu0
      %v7103 = vadd.f32 %v6990, %v7102
      %v7104 = vpop.f32.mrb[0].mxu0
      %v7105 = vadd.f32 %v6992, %v7104
      %v7106 = vpop.f32.mrb[0].mxu0
      %v7107 = vadd.f32 %v6994, %v7106
      %v7108 = vpop.f32.mrb[0].mxu0
      %v7109 = vadd.f32 %v6996, %v7108
      %7110 = vmatprep.mubr.bf16.mxu0 %v6096
      %7111 = vmatmul.mubr.bf16.gmra.mrb[0].mxu0 %v6095
      %v7112 = vpop.f32.mrb[0].mxu0
      %v7113 = vadd.f32 %v7000, %v7112
      %v7114 = vpop.f32.mrb[0].mxu0
      %v7115 = vadd.f32 %v7002, %v7114
      %v7116 = vpop.f32.mrb[0].mxu0
      %v7117 = vadd.f32 %v7004, %v7116
      %v7118 = vpop.f32.mrb[0].mxu0
      %v7119 = vadd.f32 %v7006, %v7118
      %7120 = vdwg.mxu0
      %7121 = vmatprep.subr.bf16.mxu0 %v6672
      %7122 = vmatpush1.bf16.msra.mxu0 %v6671
      %7123 = vmatprep.subr.bf16.mxu0 %v6674
      %7124 = vmatpush1.bf16.msra.mxu0 %v6673
      %7125 = vmatprep.subr.bf16.mxu0 %v6676
      %7126 = vmatpush1.bf16.msra.mxu0 %v6675
      %7127 = vmatprep.subr.bf16.mxu0 %v6678
      %7128 = vmatpush1.bf16.msra.mxu0 %v6677
      %7129 = vmatprep.subr.bf16.mxu0 %v6680
      %7130 = vmatpush1.bf16.msra.mxu0 %v6679
      %7131 = vmatprep.subr.bf16.mxu0 %v6682
      %7132 = vmatpush1.bf16.msra.mxu0 %v6681
      %7133 = vmatprep.subr.bf16.mxu0 %v6684
      %7134 = vmatpush1.bf16.msra.mxu0 %v6683
      %7135 = vmatprep.subr.bf16.mxu0 %v6686
      %7136 = vmatpush1.bf16.msra.mxu0 %v6685
      %7137 = vmatprep.subr.bf16.mxu0 %v6688
      %7138 = vmatpush1.bf16.msra.mxu0 %v6687
      %7139 = vmatprep.subr.bf16.mxu0 %v6690
      %7140 = vmatpush1.bf16.msra.mxu0 %v6689
      %7141 = vmatprep.subr.bf16.mxu0 %v6692
      %7142 = vmatpush1.bf16.msra.mxu0 %v6691
      %7143 = vmatprep.subr.bf16.mxu0 %v6694
      %7144 = vmatpush1.bf16.msra.mxu0 %v6693
      %7145 = vmatprep.subr.bf16.mxu0 %v6696
      %7146 = vmatpush1.bf16.msra.mxu0 %v6695
      %7147 = vmatprep.subr.bf16.mxu0 %v6698
      %7148 = vmatpush1.bf16.msra.mxu0 %v6697
      %7149 = vmatprep.subr.bf16.mxu0 %v6700
      %7150 = vmatpush1.bf16.msra.mxu0 %v6699
      %7151 = vmatprep.subr.bf16.mxu0 %v6702
      %7152 = vmatpush1.bf16.msra.mxu0 %v6701
      %7153 = vmatprep.mubr.bf16.mxu0 %v6035
      %7154 = vmatmul.mubr.bf16.gmra.mrb[0].mxu0 %v6034
      %v7155 = vpop.f32.mrb[0].mxu0
      %v7156 = vadd.f32 %v7043, %v7155
      %v7157 = vpop.f32.mrb[0].mxu0
      %v7158 = vadd.f32 %v7045, %v7157
      %v7159 = vpop.f32.mrb[0].mxu0
      %v7160 = vadd.f32 %v7047, %v7159
      %v7161 = vpop.f32.mrb[0].mxu0
      %v7162 = vadd.f32 %v7049, %v7161
      %7163 = vmatprep.mubr.bf16.mxu0 %v6044
      %7164 = vmatmul.mubr.bf16.gmra.mrb[0].mxu0 %v6043
      %v7165 = vpop.f32.mrb[0].mxu0
      %v7166 = vadd.f32 %v7053, %v7165
      %v7167 = vpop.f32.mrb[0].mxu0
      %v7168 = vadd.f32 %v7055, %v7167
      %v7169 = vpop.f32.mrb[0].mxu0
      %v7170 = vadd.f32 %v7057, %v7169
      %v7171 = vpop.f32.mrb[0].mxu0
      %v7172 = vadd.f32 %v7059, %v7171
      %7173 = vmatprep.mubr.bf16.mxu0 %v6053
      %7174 = vmatmul.mubr.bf16.gmra.mrb[0].mxu0 %v6052
      %v7175 = vpop.f32.mrb[0].mxu0
      %v7176 = vadd.f32 %v7063, %v7175
      %v7177 = vpop.f32.mrb[0].mxu0
      %v7178 = vadd.f32 %v7065, %v7177
      %v7179 = vpop.f32.mrb[0].mxu0
      %v7180 = vadd.f32 %v7067, %v7179
      %v7181 = vpop.f32.mrb[0].mxu0
      %v7182 = vadd.f32 %v7069, %v7181
      %7183 = vmatprep.mubr.bf16.mxu0 %v6062
      %7184 = vmatmul.mubr.bf16.gmra.mrb[0].mxu0 %v6061
      %v7185 = vpop.f32.mrb[0].mxu0
      %v7186 = vadd.f32 %v7073, %v7185
      %v7187 = vpop.f32.mrb[0].mxu0
      %v7188 = vadd.f32 %v7075, %v7187
      %v7189 = vpop.f32.mrb[0].mxu0
      %v7190 = vadd.f32 %v7077, %v7189
      %v7191 = vpop.f32.mrb[0].mxu0
      %v7192 = vadd.f32 %v7079, %v7191
      %7193 = vmatprep.mubr.bf16.mxu0 %v6071
      %7194 = vmatmul.mubr.bf16.gmra.mrb[0].mxu0 %v6070
      %v7195 = vpop.f32.mrb[0].mxu0
      %v7196 = vadd.f32 %v7083, %v7195
      %v7197 = vpop.f32.mrb[0].mxu0
      %v7198 = vadd.f32 %v7085, %v7197
      %v7199 = vpop.f32.mrb[0].mxu0
      %v7200 = vadd.f32 %v7087, %v7199
      %v7201 = vpop.f32.mrb[0].mxu0
      %v7202 = vadd.f32 %v7089, %v7201
      %7203 = vmatprep.mubr.bf16.mxu0 %v6080
      %7204 = vmatmul.mubr.bf16.gmra.mrb[0].mxu0 %v6079
      %v7205 = vpop.f32.mrb[0].mxu0
      %v7206 = vadd.f32 %v7093, %v7205
      %v7207 = vpop.f32.mrb[0].mxu0
      %v7208 = vadd.f32 %v7095, %v7207
      %v7209 = vpop.f32.mrb[0].mxu0
      %v7210 = vadd.f32 %v7097, %v7209
      %v7211 = vpop.f32.mrb[0].mxu0
      %v7212 = vadd.f32 %v7099, %v7211
      %7213 = vmatprep.mubr.bf16.mxu0 %v6089
      %7214 = vmatmul.mubr.bf16.gmra.mrb[0].mxu0 %v6088
      %v7215 = vpop.f32.mrb[0].mxu0
      %v7216 = vadd.f32 %v7103, %v7215
      %v7217 = vpop.f32.mrb[0].mxu0
      %v7218 = vadd.f32 %v7105, %v7217
      %v7219 = vpop.f32.mrb[0].mxu0
      %v7220 = vadd.f32 %v7107, %v7219
      %v7221 = vpop.f32.mrb[0].mxu0
      %v7222 = vadd.f32 %v7109, %v7221
      %7223 = vmatprep.mubr.bf16.mxu0 %v6098
      %7224 = vmatmul.mubr.bf16.gmra.mrb[0].mxu0 %v6097
      %v7225 = vpop.f32.mrb[0].mxu0
      %v7226 = vadd.f32 %v7113, %v7225
      %v7227 = vpop.f32.mrb[0].mxu0
      %v7228 = vadd.f32 %v7115, %v7227
      %v7229 = vpop.f32.mrb[0].mxu0
      %v7230 = vadd.f32 %v7117, %v7229
      %v7231 = vpop.f32.mrb[0].mxu0
      %v7232 = vadd.f32 %v7119, %v7231
      %7233 = vdwg.mxu0
      %7234 = vmatprep.subr.bf16.mxu0 %v6704
      %7235 = vmatpush1.bf16.msra.mxu0 %v6703
      %7236 = vmatprep.subr.bf16.mxu0 %v6706
      %7237 = vmatpush1.bf16.msra.mxu0 %v6705
      %7238 = vmatprep.subr.bf16.mxu0 %v6708
      %7239 = vmatpush1.bf16.msra.mxu0 %v6707
      %7240 = vmatprep.subr.bf16.mxu0 %v6710
      %7241 = vmatpush1.bf16.msra.mxu0 %v6709
      %7242 = vmatprep.subr.bf16.mxu0 %v6712
      %7243 = vmatpush1.bf16.msra.mxu0 %v6711
      %7244 = vmatprep.subr.bf16.mxu0 %v6714
      %7245 = vmatpush1.bf16.msra.mxu0 %v6713
      %7246 = vmatprep.subr.bf16.mxu0 %v6716
      %7247 = vmatpush1.bf16.msra.mxu0 %v6715
      %7248 = vmatprep.subr.bf16.mxu0 %v6718
      %7249 = vmatpush1.bf16.msra.mxu0 %v6717
      %7250 = vmatprep.subr.bf16.mxu0 %v6720
      %7251 = vmatpush1.bf16.msra.mxu0 %v6719
      %7252 = vmatprep.subr.bf16.mxu0 %v6722
      %7253 = vmatpush1.bf16.msra.mxu0 %v6721
      %7254 = vmatprep.subr.bf16.mxu0 %v6724
      %7255 = vmatpush1.bf16.msra.mxu0 %v6723
      %7256 = vmatprep.subr.bf16.mxu0 %v6726
      %7257 = vmatpush1.bf16.msra.mxu0 %v6725
      %7258 = vmatprep.subr.bf16.mxu0 %v6728
      %7259 = vmatpush1.bf16.msra.mxu0 %v6727
      %7260 = vmatprep.subr.bf16.mxu0 %v6730
      %7261 = vmatpush1.bf16.msra.mxu0 %v6729
      %7262 = vmatprep.subr.bf16.mxu0 %v6732
      %7263 = vmatpush1.bf16.msra.mxu0 %v6731
      %7264 = vmatprep.subr.bf16.mxu0 %v6734
      %7265 = vmatpush1.bf16.msra.mxu0 %v6733
      %7266 = vmatprep.mubr.bf16.mxu0 %v6037
      %7267 = vmatmul.mubr.bf16.gmra.mrb[0].mxu0 %v6036
      %v7268 = vpop.f32.mrb[0].mxu0
      %v7269 = vadd.f32 %v7156, %v7268
      %v7270 = vpop.f32.mrb[0].mxu0
      %v7271 = vadd.f32 %v7158, %v7270
      %v7272 = vpop.f32.mrb[0].mxu0
      %v7273 = vadd.f32 %v7160, %v7272
      %v7274 = vpop.f32.mrb[0].mxu0
      %v7275 = vadd.f32 %v7162, %v7274
      %7276 = vmatprep.mubr.bf16.mxu0 %v6046
      %7277 = vmatmul.mubr.bf16.gmra.mrb[0].mxu0 %v6045
      %v7278 = vpop.f32.mrb[0].mxu0
      %v7279 = vadd.f32 %v7166, %v7278
      %v7280 = vpop.f32.mrb[0].mxu0
      %v7281 = vadd.f32 %v7168, %v7280
      %v7282 = vpop.f32.mrb[0].mxu0
      %v7283 = vadd.f32 %v7170, %v7282
      %v7284 = vpop.f32.mrb[0].mxu0
      %v7285 = vadd.f32 %v7172, %v7284
      %7286 = vmatprep.mubr.bf16.mxu0 %v6055
      %7287 = vmatmul.mubr.bf16.gmra.mrb[0].mxu0 %v6054
      %v7288 = vpop.f32.mrb[0].mxu0
      %v7289 = vadd.f32 %v7176, %v7288
      %v7290 = vpop.f32.mrb[0].mxu0
      %v7291 = vadd.f32 %v7178, %v7290
      %v7292 = vpop.f32.mrb[0].mxu0
      %v7293 = vadd.f32 %v7180, %v7292
      %v7294 = vpop.f32.mrb[0].mxu0
      %v7295 = vadd.f32 %v7182, %v7294
      %7296 = vmatprep.mubr.bf16.mxu0 %v6064
      %7297 = vmatmul.mubr.bf16.gmra.mrb[0].mxu0 %v6063
      %v7298 = vpop.f32.mrb[0].mxu0
      %v7299 = vadd.f32 %v7186, %v7298
      %v7300 = vpop.f32.mrb[0].mxu0
      %v7301 = vadd.f32 %v7188, %v7300
      %v7302 = vpop.f32.mrb[0].mxu0
      %v7303 = vadd.f32 %v7190, %v7302
      %v7304 = vpop.f32.mrb[0].mxu0
      %v7305 = vadd.f32 %v7192, %v7304
      %7306 = vmatprep.mubr.bf16.mxu0 %v6073
      %7307 = vmatmul.mubr.bf16.gmra.mrb[0].mxu0 %v6072
      %v7308 = vpop.f32.mrb[0].mxu0
      %v7309 = vadd.f32 %v7196, %v7308
      %v7310 = vpop.f32.mrb[0].mxu0
      %v7311 = vadd.f32 %v7198, %v7310
      %v7312 = vpop.f32.mrb[0].mxu0
      %v7313 = vadd.f32 %v7200, %v7312
      %v7314 = vpop.f32.mrb[0].mxu0
      %v7315 = vadd.f32 %v7202, %v7314
      %7316 = vmatprep.mubr.bf16.mxu0 %v6082
      %7317 = vmatmul.mubr.bf16.gmra.mrb[0].mxu0 %v6081
      %v7318 = vpop.f32.mrb[0].mxu0
      %v7319 = vadd.f32 %v7206, %v7318
      %v7320 = vpop.f32.mrb[0].mxu0
      %v7321 = vadd.f32 %v7208, %v7320
      %v7322 = vpop.f32.mrb[0].mxu0
      %v7323 = vadd.f32 %v7210, %v7322
      %v7324 = vpop.f32.mrb[0].mxu0
      %v7325 = vadd.f32 %v7212, %v7324
      %7326 = vmatprep.mubr.bf16.mxu0 %v6091
      %7327 = vmatmul.mubr.bf16.gmra.mrb[0].mxu0 %v6090
      %v7328 = vpop.f32.mrb[0].mxu0
      %v7329 = vadd.f32 %v7216, %v7328
      %v7330 = vpop.f32.mrb[0].mxu0
      %v7331 = vadd.f32 %v7218, %v7330
      %v7332 = vpop.f32.mrb[0].mxu0
      %v7333 = vadd.f32 %v7220, %v7332
      %v7334 = vpop.f32.mrb[0].mxu0
      %v7335 = vadd.f32 %v7222, %v7334
      %7336 = vmatprep.mubr.bf16.mxu0 %v6100
      %7337 = vmatmul.mubr.bf16.gmra.mrb[0].mxu0 %v6099
      %v7338 = vpop.f32.mrb[0].mxu0
      %v7339 = vadd.f32 %v7226, %v7338
      %v7340 = vpop.f32.mrb[0].mxu0
      %v7341 = vadd.f32 %v7228, %v7340
      %v7342 = vpop.f32.mrb[0].mxu0
      %v7343 = vadd.f32 %v7230, %v7342
      %v7344 = vpop.f32.mrb[0].mxu0
      %v7345 = vadd.f32 %v7232, %v7344
      %7346 = vdwg.mxu0
      %7347 = vmatprep.subr.bf16.mxu0 %v6736
      %7348 = vmatpush1.bf16.msra.mxu0 %v6735
      %7349 = vmatprep.subr.bf16.mxu0 %v6738
      %7350 = vmatpush1.bf16.msra.mxu0 %v6737
      %7351 = vmatprep.subr.bf16.mxu0 %v6740
      %7352 = vmatpush1.bf16.msra.mxu0 %v6739
      %7353 = vmatprep.subr.bf16.mxu0 %v6742
      %7354 = vmatpush1.bf16.msra.mxu0 %v6741
      %7355 = vmatprep.subr.bf16.mxu0 %v6744
      %7356 = vmatpush1.bf16.msra.mxu0 %v6743
      %7357 = vmatprep.subr.bf16.mxu0 %v6746
      %7358 = vmatpush1.bf16.msra.mxu0 %v6745
      %7359 = vmatprep.subr.bf16.mxu0 %v6748
      %7360 = vmatpush1.bf16.msra.mxu0 %v6747
      %7361 = vmatprep.subr.bf16.mxu0 %v6750
      %7362 = vmatpush1.bf16.msra.mxu0 %v6749
      %7363 = vmatprep.subr.bf16.mxu0 0
      %7364 = vmatpush1.bf16.msra.mxu0 0
      %7365 = vmatprep.subr.bf16.mxu0 0
      %7366 = vmatpush1.bf16.msra.mxu0 0
      %7367 = vmatprep.subr.bf16.mxu0 0
      %7368 = vmatpush1.bf16.msra.mxu0 0
      %7369 = vmatprep.subr.bf16.mxu0 0
      %7370 = vmatpush1.bf16.msra.mxu0 0
      %7371 = vmatprep.subr.bf16.mxu0 0
      %7372 = vmatpush1.bf16.msra.mxu0 0
      %7373 = vmatprep.subr.bf16.mxu0 0
      %7374 = vmatpush1.bf16.msra.mxu0 0
      %7375 = vmatprep.subr.bf16.mxu0 0
      %7376 = vmatpush1.bf16.msra.mxu0 0
      %7377 = vmatprep.subr.bf16.mxu0 0
      %7378 = vmatpush1.bf16.msra.mxu0 0
      %7379 = vmatprep.mubr.bf16.mxu0 0
      %7380 = vmatmul.mubr.bf16.gmra.mrb[0].mxu0 %v6038
      %v7381 = vpop.f32.mrb[0].mxu0
      %v7382 = vadd.f32 %v7269, %v7381
      %v7383 = vpop.f32.mrb[0].mxu0
      %v7384 = vadd.f32 %v7271, %v7383
      %v7385 = vpop.f32.mrb[0].mxu0
      %v7386 = vadd.f32 %v7273, %v7385
      %v7387 = vpop.f32.mrb[0].mxu0
      %v7388 = vadd.f32 %v7275, %v7387
      %7389 = vmatprep.mubr.bf16.mxu0 0
      %7390 = vmatmul.mubr.bf16.gmra.mrb[0].mxu0 %v6047
      %v7391 = vpop.f32.mrb[0].mxu0
      %v7392 = vadd.f32 %v7279, %v7391
      %v7393 = vpop.f32.mrb[0].mxu0
      %v7394 = vadd.f32 %v7281, %v7393
      %v7395 = vpop.f32.mrb[0].mxu0
      %v7396 = vadd.f32 %v7283, %v7395
      %v7397 = vpop.f32.mrb[0].mxu0
      %v7398 = vadd.f32 %v7285, %v7397
      %7399 = vmatprep.mubr.bf16.mxu0 0
      %7400 = vmatmul.mubr.bf16.gmra.mrb[0].mxu0 %v6056
      %v7401 = vpop.f32.mrb[0].mxu0
      %v7402 = vadd.f32 %v7289, %v7401
      %v7403 = vpop.f32.mrb[0].mxu0
      %v7404 = vadd.f32 %v7291, %v7403
      %v7405 = vpop.f32.mrb[0].mxu0
      %v7406 = vadd.f32 %v7293, %v7405
      %v7407 = vpop.f32.mrb[0].mxu0
      %v7408 = vadd.f32 %v7295, %v7407
      %7409 = vmatprep.mubr.bf16.mxu0 0
      %7410 = vmatmul.mubr.bf16.gmra.mrb[0].mxu0 %v6065
      %v7411 = vpop.f32.mrb[0].mxu0
      %v7412 = vadd.f32 %v7299, %v7411
      %v7413 = vpop.f32.mrb[0].mxu0
      %v7414 = vadd.f32 %v7301, %v7413
      %v7415 = vpop.f32.mrb[0].mxu0
      %v7416 = vadd.f32 %v7303, %v7415
      %v7417 = vpop.f32.mrb[0].mxu0
      %v7418 = vadd.f32 %v7305, %v7417
      %7419 = vmatprep.mubr.bf16.mxu0 0
      %7420 = vmatmul.mubr.bf16.gmra.mrb[0].mxu0 %v6074
      %v7421 = vpop.f32.mrb[0].mxu0
      %v7422 = vadd.f32 %v7309, %v7421
      %v7423 = vpop.f32.mrb[0].mxu0
      %v7424 = vadd.f32 %v7311, %v7423
      %v7425 = vpop.f32.mrb[0].mxu0
      %v7426 = vadd.f32 %v7313, %v7425
      %v7427 = vpop.f32.mrb[0].mxu0
      %v7428 = vadd.f32 %v7315, %v7427
      %7429 = vmatprep.mubr.bf16.mxu0 0
      %7430 = vmatmul.mubr.bf16.gmra.mrb[0].mxu0 %v6083
      %v7431 = vpop.f32.mrb[0].mxu0
      %v7432 = vadd.f32 %v7319, %v7431
      %v7433 = vpop.f32.mrb[0].mxu0
      %v7434 = vadd.f32 %v7321, %v7433
      %v7435 = vpop.f32.mrb[0].mxu0
      %v7436 = vadd.f32 %v7323, %v7435
      %v7437 = vpop.f32.mrb[0].mxu0
      %v7438 = vadd.f32 %v7325, %v7437
      %7439 = vmatprep.mubr.bf16.mxu0 0
      %7440 = vmatmul.mubr.bf16.gmra.mrb[0].mxu0 %v6092
      %v7441 = vpop.f32.mrb[0].mxu0
      %v7442 = vadd.f32 %v7329, %v7441
      %v7443 = vpop.f32.mrb[0].mxu0
      %v7444 = vadd.f32 %v7331, %v7443
      %v7445 = vpop.f32.mrb[0].mxu0
      %v7446 = vadd.f32 %v7333, %v7445
      %v7447 = vpop.f32.mrb[0].mxu0
      %v7448 = vadd.f32 %v7335, %v7447
      %7449 = vmatprep.mubr.bf16.mxu0 0
      %7450 = vmatmul.mubr.bf16.gmra.mrb[0].mxu0 %v6101
      %v7451 = vpop.f32.mrb[0].mxu0
      %v7452 = vadd.f32 %v7339, %v7451
      %v7453 = vpop.f32.mrb[0].mxu0
      %v7454 = vadd.f32 %v7341, %v7453
      %v7455 = vpop.f32.mrb[0].mxu0
      %v7456 = vadd.f32 %v7343, %v7455
      %v7457 = vpop.f32.mrb[0].mxu0
      %v7458 = vadd.f32 %v7345, %v7457
      %7459 = vdwg.mxu0
      %v7460 = vadd.f32 %v5647, %v7382
      %v7461 = vadd.f32 %v5649, %v7384
      %v7462 = vadd.f32 %v5651, %v7386
      %v7463 = vadd.f32 %v5653, %v7388
      %v7464 = vadd.f32 %v5657, %v7392
      %v7465 = vadd.f32 %v5659, %v7394
      %v7466 = vadd.f32 %v5661, %v7396
      %v7467 = vadd.f32 %v5663, %v7398
      %v7468 = vadd.f32 %v5667, %v7402
      %v7469 = vadd.f32 %v5669, %v7404
      %v7470 = vadd.f32 %v5671, %v7406
      %v7471 = vadd.f32 %v5673, %v7408
      %v7472 = vadd.f32 %v5677, %v7412
      %v7473 = vadd.f32 %v5679, %v7414
      %v7474 = vadd.f32 %v5681, %v7416
      %v7475 = vadd.f32 %v5683, %v7418
      %v7476 = vadd.f32 %v5687, %v7422
      %v7477 = vadd.f32 %v5689, %v7424
      %v7478 = vadd.f32 %v5691, %v7426
      %v7479 = vadd.f32 %v5693, %v7428
      %v7480 = vadd.f32 %v5697, %v7432
      %v7481 = vadd.f32 %v5699, %v7434
      %v7482 = vadd.f32 %v5701, %v7436
      %v7483 = vadd.f32 %v5703, %v7438
      %v7484 = vadd.f32 %v5707, %v7442
      %v7485 = vadd.f32 %v5709, %v7444
      %v7486 = vadd.f32 %v5711, %v7446
      %v7487 = vadd.f32 %v5713, %v7448
      %v7488 = vadd.f32 %v5717, %v7452
      %v7489 = vadd.f32 %v5719, %v7454
      %v7490 = vadd.f32 %v5721, %v7456
      %v7491 = vadd.f32 %v5723, %v7458
      %v7492 = vld [vmem:[%s4] sm:$0xff]
      %v7493 = vld [vmem:[%s4 + $0x8] sm:$0xff]
      %v7494 = vld [vmem:[%s4 + $0x10] sm:$0xff]
      %v7495 = vld [vmem:[%s4 + $0x18] sm:$0xff]
      %v7496 = vld [vmem:[%s4 + $0x20] sm:$0xff]
      %v7497 = vld [vmem:[%s4 + $0x28] sm:$0xff]
      %v7498 = vld [vmem:[%s4 + $0x30] sm:$0xff]
      %v7499 = vld [vmem:[%s4 + $0x38] sm:$0xff]
      %v7500 = vld [vmem:[%s4 + $0x40] sm:$0xff]
      %v7501 = vld [vmem:[%s4 + $0x48] sm:$0xff]
      %v7502 = vld [vmem:[%s4 + $0x50] sm:$0xff]
      %v7503 = vld [vmem:[%s4 + $0x58] sm:$0xff]
      %v7504 = vld [vmem:[%s4 + $0x60] sm:$0xff]
      %v7505 = vld [vmem:[%s4 + $0x68] sm:$0xff]
      %v7506 = vld [vmem:[%s4 + $0x70] sm:$0xff]
      %v7507 = vld [vmem:[%s4 + $0x78] sm:$0xff]
      %7509 = vset.pattern.permute.xlu0 0
      %7510 = vperm.xlu0 %7509, %v7492
      %v7511 = vpop.permute.xlu0 %7510
      %7514 = vset.pattern.permute.xlu0 0
      %7515 = vperm.xlu0 %7514, %v7493
      %v7516 = vpop.permute.xlu0 %7515
      %7519 = vset.pattern.permute.xlu0 0
      %7520 = vperm.xlu0 %7519, %v7494
      %v7521 = vpop.permute.xlu0 %7520
      %7524 = vset.pattern.permute.xlu0 0
      %7525 = vperm.xlu0 %7524, %v7495
      %v7526 = vpop.permute.xlu0 %7525
      %7529 = vset.pattern.permute.xlu0 0
      %7530 = vperm.xlu0 %7529, %v7496
      %v7531 = vpop.permute.xlu0 %7530
      %7534 = vset.pattern.permute.xlu0 0
      %7535 = vperm.xlu0 %7534, %v7497
      %v7536 = vpop.permute.xlu0 %7535
      %7539 = vset.pattern.permute.xlu0 0
      %7540 = vperm.xlu0 %7539, %v7498
      %v7541 = vpop.permute.xlu0 %7540
      %7544 = vset.pattern.permute.xlu0 0
      %7545 = vperm.xlu0 %7544, %v7499
      %v7546 = vpop.permute.xlu0 %7545
      %7549 = vset.pattern.permute.xlu0 0
      %7550 = vperm.xlu0 %7549, %v7500
      %v7551 = vpop.permute.xlu0 %7550
      %7554 = vset.pattern.permute.xlu0 0
      %7555 = vperm.xlu0 %7554, %v7501
      %v7556 = vpop.permute.xlu0 %7555
      %7559 = vset.pattern.permute.xlu0 0
      %7560 = vperm.xlu0 %7559, %v7502
      %v7561 = vpop.permute.xlu0 %7560
      %7564 = vset.pattern.permute.xlu0 0
      %7565 = vperm.xlu0 %7564, %v7503
      %v7566 = vpop.permute.xlu0 %7565
      %7569 = vset.pattern.permute.xlu0 0
      %7570 = vperm.xlu0 %7569, %v7504
      %v7571 = vpop.permute.xlu0 %7570
      %7574 = vset.pattern.permute.xlu0 0
      %7575 = vperm.xlu0 %7574, %v7505
      %v7576 = vpop.permute.xlu0 %7575
      %7579 = vset.pattern.permute.xlu0 0
      %7580 = vperm.xlu0 %7579, %v7506
      %v7581 = vpop.permute.xlu0 %7580
      %7584 = vset.pattern.permute.xlu0 0
      %7585 = vperm.xlu0 %7584, %v7507
      %v7586 = vpop.permute.xlu0 %7585
      %v7588 = vadd.f32 %v7460, %v7511
      %v7589 = vadd.f32 %v7461, %v7511
      %v7590 = vadd.f32 %v7462, %v7516
      %v7591 = vadd.f32 %v7463, %v7516
      %v7592 = vadd.f32 %v7464, %v7521
      %v7593 = vadd.f32 %v7465, %v7521
      %v7594 = vadd.f32 %v7466, %v7526
      %v7595 = vadd.f32 %v7467, %v7526
      %v7596 = vadd.f32 %v7468, %v7531
      %v7597 = vadd.f32 %v7469, %v7531
      %v7598 = vadd.f32 %v7470, %v7536
      %v7599 = vadd.f32 %v7471, %v7536
      %v7600 = vadd.f32 %v7472, %v7541
      %v7601 = vadd.f32 %v7473, %v7541
      %v7602 = vadd.f32 %v7474, %v7546
      %v7603 = vadd.f32 %v7475, %v7546
      %v7604 = vadd.f32 %v7476, %v7551
      %v7605 = vadd.f32 %v7477, %v7551
      %v7606 = vadd.f32 %v7478, %v7556
      %v7607 = vadd.f32 %v7479, %v7556
      %v7608 = vadd.f32 %v7480, %v7561
      %v7609 = vadd.f32 %v7481, %v7561
      %v7610 = vadd.f32 %v7482, %v7566
      %v7611 = vadd.f32 %v7483, %v7566
      %v7612 = vadd.f32 %v7484, %v7571
      %v7613 = vadd.f32 %v7485, %v7571
      %v7614 = vadd.f32 %v7486, %v7576
      %v7615 = vadd.f32 %v7487, %v7576
      %v7616 = vadd.f32 %v7488, %v7581
      %v7617 = vadd.f32 %v7489, %v7581
      %v7618 = vadd.f32 %v7490, %v7586
      %v7619 = vadd.f32 %v7491, %v7586
      %v7620 = vmul.f32 %v7588, 0.70710677
      %v7621 = vmul.f32 %v7589, 0.70710677
      %v7622 = vmul.f32 %v7590, 0.70710677
      %v7623 = vmul.f32 %v7591, 0.70710677
      %v7624 = vmul.f32 %v7592, 0.70710677
      %v7625 = vmul.f32 %v7593, 0.70710677
      %v7626 = vmul.f32 %v7594, 0.70710677
      %v7627 = vmul.f32 %v7595, 0.70710677
      %v7628 = vmul.f32 %v7596, 0.70710677
      %v7629 = vmul.f32 %v7597, 0.70710677
      %v7630 = vmul.f32 %v7598, 0.70710677
      %v7631 = vmul.f32 %v7599, 0.70710677
      %v7632 = vmul.f32 %v7600, 0.70710677
      %v7633 = vmul.f32 %v7601, 0.70710677
      %v7634 = vmul.f32 %v7602, 0.70710677
      %v7635 = vmul.f32 %v7603, 0.70710677
      %v7636 = vmul.f32 %v7604, 0.70710677
      %v7637 = vmul.f32 %v7605, 0.70710677
      %v7638 = vmul.f32 %v7606, 0.70710677
      %v7639 = vmul.f32 %v7607, 0.70710677
      %v7640 = vmul.f32 %v7608, 0.70710677
      %v7641 = vmul.f32 %v7609, 0.70710677
      %v7642 = vmul.f32 %v7610, 0.70710677
      %v7643 = vmul.f32 %v7611, 0.70710677
      %v7644 = vmul.f32 %v7612, 0.70710677
      %v7645 = vmul.f32 %v7613, 0.70710677
      %v7646 = vmul.f32 %v7614, 0.70710677
      %v7647 = vmul.f32 %v7615, 0.70710677
      %v7648 = vmul.f32 %v7616, 0.70710677
      %v7649 = vmul.f32 %v7617, 0.70710677
      %v7650 = vmul.f32 %v7618, 0.70710677
      %v7651 = vmul.f32 %v7619, 0.70710677
      %v7652 = vand.u32 2147483647, %v7620
      %v7653 = vand.u32 2147483647, %v7621
      %v7654 = vand.u32 2147483647, %v7622
      %v7655 = vand.u32 2147483647, %v7623
      %v7656 = vand.u32 2147483647, %v7624
      %v7657 = vand.u32 2147483647, %v7625
      %v7658 = vand.u32 2147483647, %v7626
      %v7659 = vand.u32 2147483647, %v7627
      %v7660 = vand.u32 2147483647, %v7628
      %v7661 = vand.u32 2147483647, %v7629
      %v7662 = vand.u32 2147483647, %v7630
      %v7663 = vand.u32 2147483647, %v7631
      %v7664 = vand.u32 2147483647, %v7632
      %v7665 = vand.u32 2147483647, %v7633
      %v7666 = vand.u32 2147483647, %v7634
      %v7667 = vand.u32 2147483647, %v7635
      %v7668 = vand.u32 2147483647, %v7636
      %v7669 = vand.u32 2147483647, %v7637
      %v7670 = vand.u32 2147483647, %v7638
      %v7671 = vand.u32 2147483647, %v7639
      %v7672 = vand.u32 2147483647, %v7640
      %v7673 = vand.u32 2147483647, %v7641
      %v7674 = vand.u32 2147483647, %v7642
      %v7675 = vand.u32 2147483647, %v7643
      %v7676 = vand.u32 2147483647, %v7644
      %v7677 = vand.u32 2147483647, %v7645
      %v7678 = vand.u32 2147483647, %v7646
      %v7679 = vand.u32 2147483647, %v7647
      %v7680 = vand.u32 2147483647, %v7648
      %v7681 = vand.u32 2147483647, %v7649
      %v7682 = vand.u32 2147483647, %v7650
      %v7683 = vand.u32 2147483647, %v7651
      %v7684 = vmul.f32 %v7652, 0.3275911
      %v7685 = vmul.f32 %v7653, 0.3275911
      %v7686 = vmul.f32 %v7654, 0.3275911
      %v7687 = vmul.f32 %v7655, 0.3275911
      %v7688 = vmul.f32 %v7656, 0.3275911
      %v7689 = vmul.f32 %v7657, 0.3275911
      %v7690 = vmul.f32 %v7658, 0.3275911
      %v7691 = vmul.f32 %v7659, 0.3275911
      %v7692 = vmul.f32 %v7660, 0.3275911
      %v7693 = vmul.f32 %v7661, 0.3275911
      %v7694 = vmul.f32 %v7662, 0.3275911
      %v7695 = vmul.f32 %v7663, 0.3275911
      %v7696 = vmul.f32 %v7664, 0.3275911
      %v7697 = vmul.f32 %v7665, 0.3275911
      %v7698 = vmul.f32 %v7666, 0.3275911
      %v7699 = vmul.f32 %v7667, 0.3275911
      %v7700 = vmul.f32 %v7668, 0.3275911
      %v7701 = vmul.f32 %v7669, 0.3275911
      %v7702 = vmul.f32 %v7670, 0.3275911
      %v7703 = vmul.f32 %v7671, 0.3275911
      %v7704 = vmul.f32 %v7672, 0.3275911
      %v7705 = vmul.f32 %v7673, 0.3275911
      %v7706 = vmul.f32 %v7674, 0.3275911
      %v7707 = vmul.f32 %v7675, 0.3275911
      %v7708 = vmul.f32 %v7676, 0.3275911
      %v7709 = vmul.f32 %v7677, 0.3275911
      %v7710 = vmul.f32 %v7678, 0.3275911
      %v7711 = vmul.f32 %v7679, 0.3275911
      %v7712 = vmul.f32 %v7680, 0.3275911
      %v7713 = vmul.f32 %v7681, 0.3275911
      %v7714 = vmul.f32 %v7682, 0.3275911
      %v7715 = vmul.f32 %v7683, 0.3275911
      %v7716 = vadd.f32 %v7684, 1.0
      %v7717 = vadd.f32 %v7685, 1.0
      %v7718 = vadd.f32 %v7686, 1.0
      %v7719 = vadd.f32 %v7687, 1.0
      %v7720 = vadd.f32 %v7688, 1.0
      %v7721 = vadd.f32 %v7689, 1.0
      %v7722 = vadd.f32 %v7690, 1.0
      %v7723 = vadd.f32 %v7691, 1.0
      %v7724 = vadd.f32 %v7692, 1.0
      %v7725 = vadd.f32 %v7693, 1.0
      %v7726 = vadd.f32 %v7694, 1.0
      %v7727 = vadd.f32 %v7695, 1.0
      %v7728 = vadd.f32 %v7696, 1.0
      %v7729 = vadd.f32 %v7697, 1.0
      %v7730 = vadd.f32 %v7698, 1.0
      %v7731 = vadd.f32 %v7699, 1.0
      %v7732 = vadd.f32 %v7700, 1.0
      %v7733 = vadd.f32 %v7701, 1.0
      %v7734 = vadd.f32 %v7702, 1.0
      %v7735 = vadd.f32 %v7703, 1.0
      %v7736 = vadd.f32 %v7704, 1.0
      %v7737 = vadd.f32 %v7705, 1.0
      %v7738 = vadd.f32 %v7706, 1.0
      %v7739 = vadd.f32 %v7707, 1.0
      %v7740 = vadd.f32 %v7708, 1.0
      %v7741 = vadd.f32 %v7709, 1.0
      %v7742 = vadd.f32 %v7710, 1.0
      %v7743 = vadd.f32 %v7711, 1.0
      %v7744 = vadd.f32 %v7712, 1.0
      %v7745 = vadd.f32 %v7713, 1.0
      %v7746 = vadd.f32 %v7714, 1.0
      %v7747 = vadd.f32 %v7715, 1.0
      %v7748 = vrcp.pop %v7716
      %v7749 = vrcp.pop %v7717
      %v7750 = vrcp.pop %v7718
      %v7751 = vrcp.pop %v7719
      %v7752 = vrcp.pop %v7720
      %v7753 = vrcp.pop %v7721
      %v7754 = vrcp.pop %v7722
      %v7755 = vrcp.pop %v7723
      %v7756 = vrcp.pop %v7724
      %v7757 = vrcp.pop %v7725
      %v7758 = vrcp.pop %v7726
      %v7759 = vrcp.pop %v7727
      %v7760 = vrcp.pop %v7728
      %v7761 = vrcp.pop %v7729
      %v7762 = vrcp.pop %v7730
      %v7763 = vrcp.pop %v7731
      %v7764 = vrcp.pop %v7732
      %v7765 = vrcp.pop %v7733
      %v7766 = vrcp.pop %v7734
      %v7767 = vrcp.pop %v7735
      %v7768 = vrcp.pop %v7736
      %v7769 = vrcp.pop %v7737
      %v7770 = vrcp.pop %v7738
      %v7771 = vrcp.pop %v7739
      %v7772 = vrcp.pop %v7740
      %v7773 = vrcp.pop %v7741
      %v7774 = vrcp.pop %v7742
      %v7775 = vrcp.pop %v7743
      %v7776 = vrcp.pop %v7744
      %v7777 = vrcp.pop %v7745
      %v7778 = vrcp.pop %v7746
      %v7779 = vrcp.pop %v7747
      %v7780 = vmul.f32 %v7748, 1.0614054
      %v7781 = vmul.f32 %v7749, 1.0614054
      %v7782 = vmul.f32 %v7750, 1.0614054
      %v7783 = vmul.f32 %v7751, 1.0614054
      %v7784 = vmul.f32 %v7752, 1.0614054
      %v7785 = vmul.f32 %v7753, 1.0614054
      %v7786 = vmul.f32 %v7754, 1.0614054
      %v7787 = vmul.f32 %v7755, 1.0614054
      %v7788 = vmul.f32 %v7756, 1.0614054
      %v7789 = vmul.f32 %v7757, 1.0614054
      %v7790 = vmul.f32 %v7758, 1.0614054
      %v7791 = vmul.f32 %v7759, 1.0614054
      %v7792 = vmul.f32 %v7760, 1.0614054
      %v7793 = vmul.f32 %v7761, 1.0614054
      %v7794 = vmul.f32 %v7762, 1.0614054
      %v7795 = vmul.f32 %v7763, 1.0614054
      %v7796 = vmul.f32 %v7764, 1.0614054
      %v7797 = vmul.f32 %v7765, 1.0614054
      %v7798 = vmul.f32 %v7766, 1.0614054
      %v7799 = vmul.f32 %v7767, 1.0614054
      %v7800 = vmul.f32 %v7768, 1.0614054
      %v7801 = vmul.f32 %v7769, 1.0614054
      %v7802 = vmul.f32 %v7770, 1.0614054
      %v7803 = vmul.f32 %v7771, 1.0614054
      %v7804 = vmul.f32 %v7772, 1.0614054
      %v7805 = vmul.f32 %v7773, 1.0614054
      %v7806 = vmul.f32 %v7774, 1.0614054
      %v7807 = vmul.f32 %v7775, 1.0614054
      %v7808 = vmul.f32 %v7776, 1.0614054
      %v7809 = vmul.f32 %v7777, 1.0614054
      %v7810 = vmul.f32 %v7778, 1.0614054
      %v7811 = vmul.f32 %v7779, 1.0614054
      %v7812 = vadd.f32 %v7780, -1.4531521
      %v7813 = vadd.f32 %v7781, -1.4531521
      %v7814 = vadd.f32 %v7782, -1.4531521
      %v7815 = vadd.f32 %v7783, -1.4531521
      %v7816 = vadd.f32 %v7784, -1.4531521
      %v7817 = vadd.f32 %v7785, -1.4531521
      %v7818 = vadd.f32 %v7786, -1.4531521
      %v7819 = vadd.f32 %v7787, -1.4531521
      %v7820 = vadd.f32 %v7788, -1.4531521
      %v7821 = vadd.f32 %v7789, -1.4531521
      %v7822 = vadd.f32 %v7790, -1.4531521
      %v7823 = vadd.f32 %v7791, -1.4531521
      %v7824 = vadd.f32 %v7792, -1.4531521
      %v7825 = vadd.f32 %v7793, -1.4531521
      %v7826 = vadd.f32 %v7794, -1.4531521
      %v7827 = vadd.f32 %v7795, -1.4531521
      %v7828 = vadd.f32 %v7796, -1.4531521
      %v7829 = vadd.f32 %v7797, -1.4531521
      %v7830 = vadd.f32 %v7798, -1.4531521
      %v7831 = vadd.f32 %v7799, -1.4531521
      %v7832 = vadd.f32 %v7800, -1.4531521
      %v7833 = vadd.f32 %v7801, -1.4531521
      %v7834 = vadd.f32 %v7802, -1.4531521
      %v7835 = vadd.f32 %v7803, -1.4531521
      %v7836 = vadd.f32 %v7804, -1.4531521
      %v7837 = vadd.f32 %v7805, -1.4531521
      %v7838 = vadd.f32 %v7806, -1.4531521
      %v7839 = vadd.f32 %v7807, -1.4531521
      %v7840 = vadd.f32 %v7808, -1.4531521
      %v7841 = vadd.f32 %v7809, -1.4531521
      %v7842 = vadd.f32 %v7810, -1.4531521
      %v7843 = vadd.f32 %v7811, -1.4531521
      %v7844 = vmul.f32 %v7748, %v7812
      %v7845 = vmul.f32 %v7749, %v7813
      %v7846 = vmul.f32 %v7750, %v7814
      %v7847 = vmul.f32 %v7751, %v7815
      %v7848 = vmul.f32 %v7752, %v7816
      %v7849 = vmul.f32 %v7753, %v7817
      %v7850 = vmul.f32 %v7754, %v7818
      %v7851 = vmul.f32 %v7755, %v7819
      %v7852 = vmul.f32 %v7756, %v7820
      %v7853 = vmul.f32 %v7757, %v7821
      %v7854 = vmul.f32 %v7758, %v7822
      %v7855 = vmul.f32 %v7759, %v7823
      %v7856 = vmul.f32 %v7760, %v7824
      %v7857 = vmul.f32 %v7761, %v7825
      %v7858 = vmul.f32 %v7762, %v7826
      %v7859 = vmul.f32 %v7763, %v7827
      %v7860 = vmul.f32 %v7764, %v7828
      %v7861 = vmul.f32 %v7765, %v7829
      %v7862 = vmul.f32 %v7766, %v7830
      %v7863 = vmul.f32 %v7767, %v7831
      %v7864 = vmul.f32 %v7768, %v7832
      %v7865 = vmul.f32 %v7769, %v7833
      %v7866 = vmul.f32 %v7770, %v7834
      %v7867 = vmul.f32 %v7771, %v7835
      %v7868 = vmul.f32 %v7772, %v7836
      %v7869 = vmul.f32 %v7773, %v7837
      %v7870 = vmul.f32 %v7774, %v7838
      %v7871 = vmul.f32 %v7775, %v7839
      %v7872 = vmul.f32 %v7776, %v7840
      %v7873 = vmul.f32 %v7777, %v7841
      %v7874 = vmul.f32 %v7778, %v7842
      %v7875 = vmul.f32 %v7779, %v7843
      %v7876 = vadd.f32 %v7844, 1.4214138
      %v7877 = vadd.f32 %v7845, 1.4214138
      %v7878 = vadd.f32 %v7846, 1.4214138
      %v7879 = vadd.f32 %v7847, 1.4214138
      %v7880 = vadd.f32 %v7848, 1.4214138
      %v7881 = vadd.f32 %v7849, 1.4214138
      %v7882 = vadd.f32 %v7850, 1.4214138
      %v7883 = vadd.f32 %v7851, 1.4214138
      %v7884 = vadd.f32 %v7852, 1.4214138
      %v7885 = vadd.f32 %v7853, 1.4214138
      %v7886 = vadd.f32 %v7854, 1.4214138
      %v7887 = vadd.f32 %v7855, 1.4214138
      %v7888 = vadd.f32 %v7856, 1.4214138
      %v7889 = vadd.f32 %v7857, 1.4214138
      %v7890 = vadd.f32 %v7858, 1.4214138
      %v7891 = vadd.f32 %v7859, 1.4214138
      %v7892 = vadd.f32 %v7860, 1.4214138
      %v7893 = vadd.f32 %v7861, 1.4214138
      %v7894 = vadd.f32 %v7862, 1.4214138
      %v7895 = vadd.f32 %v7863, 1.4214138
      %v7896 = vadd.f32 %v7864, 1.4214138
      %v7897 = vadd.f32 %v7865, 1.4214138
      %v7898 = vadd.f32 %v7866, 1.4214138
      %v7899 = vadd.f32 %v7867, 1.4214138
      %v7900 = vadd.f32 %v7868, 1.4214138
      %v7901 = vadd.f32 %v7869, 1.4214138
      %v7902 = vadd.f32 %v7870, 1.4214138
      %v7903 = vadd.f32 %v7871, 1.4214138
      %v7904 = vadd.f32 %v7872, 1.4214138
      %v7905 = vadd.f32 %v7873, 1.4214138
      %v7906 = vadd.f32 %v7874, 1.4214138
      %v7907 = vadd.f32 %v7875, 1.4214138
      %v7908 = vmul.f32 %v7748, %v7876
      %v7909 = vmul.f32 %v7749, %v7877
      %v7910 = vmul.f32 %v7750, %v7878
      %v7911 = vmul.f32 %v7751, %v7879
      %v7912 = vmul.f32 %v7752, %v7880
      %v7913 = vmul.f32 %v7753, %v7881
      %v7914 = vmul.f32 %v7754, %v7882
      %v7915 = vmul.f32 %v7755, %v7883
      %v7916 = vmul.f32 %v7756, %v7884
      %v7917 = vmul.f32 %v7757, %v7885
      %v7918 = vmul.f32 %v7758, %v7886
      %v7919 = vmul.f32 %v7759, %v7887
      %v7920 = vmul.f32 %v7760, %v7888
      %v7921 = vmul.f32 %v7761, %v7889
      %v7922 = vmul.f32 %v7762, %v7890
      %v7923 = vmul.f32 %v7763, %v7891
      %v7924 = vmul.f32 %v7764, %v7892
      %v7925 = vmul.f32 %v7765, %v7893
      %v7926 = vmul.f32 %v7766, %v7894
      %v7927 = vmul.f32 %v7767, %v7895
      %v7928 = vmul.f32 %v7768, %v7896
      %v7929 = vmul.f32 %v7769, %v7897
      %v7930 = vmul.f32 %v7770, %v7898
      %v7931 = vmul.f32 %v7771, %v7899
      %v7932 = vmul.f32 %v7772, %v7900
      %v7933 = vmul.f32 %v7773, %v7901
      %v7934 = vmul.f32 %v7774, %v7902
      %v7935 = vmul.f32 %v7775, %v7903
      %v7936 = vmul.f32 %v7776, %v7904
      %v7937 = vmul.f32 %v7777, %v7905
      %v7938 = vmul.f32 %v7778, %v7906
      %v7939 = vmul.f32 %v7779, %v7907
      %v7940 = vadd.f32 %v7908, -0.28449672
      %v7941 = vadd.f32 %v7909, -0.28449672
      %v7942 = vadd.f32 %v7910, -0.28449672
      %v7943 = vadd.f32 %v7911, -0.28449672
      %v7944 = vadd.f32 %v7912, -0.28449672
      %v7945 = vadd.f32 %v7913, -0.28449672
      %v7946 = vadd.f32 %v7914, -0.28449672
      %v7947 = vadd.f32 %v7915, -0.28449672
      %v7948 = vadd.f32 %v7916, -0.28449672
      %v7949 = vadd.f32 %v7917, -0.28449672
      %v7950 = vadd.f32 %v7918, -0.28449672
      %v7951 = vadd.f32 %v7919, -0.28449672
      %v7952 = vadd.f32 %v7920, -0.28449672
      %v7953 = vadd.f32 %v7921, -0.28449672
      %v7954 = vadd.f32 %v7922, -0.28449672
      %v7955 = vadd.f32 %v7923, -0.28449672
      %v7956 = vadd.f32 %v7924, -0.28449672
      %v7957 = vadd.f32 %v7925, -0.28449672
      %v7958 = vadd.f32 %v7926, -0.28449672
      %v7959 = vadd.f32 %v7927, -0.28449672
      %v7960 = vadd.f32 %v7928, -0.28449672
      %v7961 = vadd.f32 %v7929, -0.28449672
      %v7962 = vadd.f32 %v7930, -0.28449672
      %v7963 = vadd.f32 %v7931, -0.28449672
      %v7964 = vadd.f32 %v7932, -0.28449672
      %v7965 = vadd.f32 %v7933, -0.28449672
      %v7966 = vadd.f32 %v7934, -0.28449672
      %v7967 = vadd.f32 %v7935, -0.28449672
      %v7968 = vadd.f32 %v7936, -0.28449672
      %v7969 = vadd.f32 %v7937, -0.28449672
      %v7970 = vadd.f32 %v7938, -0.28449672
      %v7971 = vadd.f32 %v7939, -0.28449672
      %v7972 = vmul.f32 %v7748, %v7940
      %v7973 = vmul.f32 %v7749, %v7941
      %v7974 = vmul.f32 %v7750, %v7942
      %v7975 = vmul.f32 %v7751, %v7943
      %v7976 = vmul.f32 %v7752, %v7944
      %v7977 = vmul.f32 %v7753, %v7945
      %v7978 = vmul.f32 %v7754, %v7946
      %v7979 = vmul.f32 %v7755, %v7947
      %v7980 = vmul.f32 %v7756, %v7948
      %v7981 = vmul.f32 %v7757, %v7949
      %v7982 = vmul.f32 %v7758, %v7950
      %v7983 = vmul.f32 %v7759, %v7951
      %v7984 = vmul.f32 %v7760, %v7952
      %v7985 = vmul.f32 %v7761, %v7953
      %v7986 = vmul.f32 %v7762, %v7954
      %v7987 = vmul.f32 %v7763, %v7955
      %v7988 = vmul.f32 %v7764, %v7956
      %v7989 = vmul.f32 %v7765, %v7957
      %v7990 = vmul.f32 %v7766, %v7958
      %v7991 = vmul.f32 %v7767, %v7959
      %v7992 = vmul.f32 %v7768, %v7960
      %v7993 = vmul.f32 %v7769, %v7961
      %v7994 = vmul.f32 %v7770, %v7962
      %v7995 = vmul.f32 %v7771, %v7963
      %v7996 = vmul.f32 %v7772, %v7964
      %v7997 = vmul.f32 %v7773, %v7965
      %v7998 = vmul.f32 %v7774, %v7966
      %v7999 = vmul.f32 %v7775, %v7967
      %v8000 = vmul.f32 %v7776, %v7968
      %v8001 = vmul.f32 %v7777, %v7969
      %v8002 = vmul.f32 %v7778, %v7970
      %v8003 = vmul.f32 %v7779, %v7971
      %v8004 = vadd.f32 %v7972, 0.2548296
      %v8005 = vadd.f32 %v7973, 0.2548296
      %v8006 = vadd.f32 %v7974, 0.2548296
      %v8007 = vadd.f32 %v7975, 0.2548296
      %v8008 = vadd.f32 %v7976, 0.2548296
      %v8009 = vadd.f32 %v7977, 0.2548296
      %v8010 = vadd.f32 %v7978, 0.2548296
      %v8011 = vadd.f32 %v7979, 0.2548296
      %v8012 = vadd.f32 %v7980, 0.2548296
      %v8013 = vadd.f32 %v7981, 0.2548296
      %v8014 = vadd.f32 %v7982, 0.2548296
      %v8015 = vadd.f32 %v7983, 0.2548296
      %v8016 = vadd.f32 %v7984, 0.2548296
      %v8017 = vadd.f32 %v7985, 0.2548296
      %v8018 = vadd.f32 %v7986, 0.2548296
      %v8019 = vadd.f32 %v7987, 0.2548296
      %v8020 = vadd.f32 %v7988, 0.2548296
      %v8021 = vadd.f32 %v7989, 0.2548296
      %v8022 = vadd.f32 %v7990, 0.2548296
      %v8023 = vadd.f32 %v7991, 0.2548296
      %v8024 = vadd.f32 %v7992, 0.2548296
      %v8025 = vadd.f32 %v7993, 0.2548296
      %v8026 = vadd.f32 %v7994, 0.2548296
      %v8027 = vadd.f32 %v7995, 0.2548296
      %v8028 = vadd.f32 %v7996, 0.2548296
      %v8029 = vadd.f32 %v7997, 0.2548296
      %v8030 = vadd.f32 %v7998, 0.2548296
      %v8031 = vadd.f32 %v7999, 0.2548296
      %v8032 = vadd.f32 %v8000, 0.2548296
      %v8033 = vadd.f32 %v8001, 0.2548296
      %v8034 = vadd.f32 %v8002, 0.2548296
      %v8035 = vadd.f32 %v8003, 0.2548296
      %v8036 = vmul.f32 %v7748, %v8004
      %v8037 = vmul.f32 %v7749, %v8005
      %v8038 = vmul.f32 %v7750, %v8006
      %v8039 = vmul.f32 %v7751, %v8007
      %v8040 = vmul.f32 %v7752, %v8008
      %v8041 = vmul.f32 %v7753, %v8009
      %v8042 = vmul.f32 %v7754, %v8010
      %v8043 = vmul.f32 %v7755, %v8011
      %v8044 = vmul.f32 %v7756, %v8012
      %v8045 = vmul.f32 %v7757, %v8013
      %v8046 = vmul.f32 %v7758, %v8014
      %v8047 = vmul.f32 %v7759, %v8015
      %v8048 = vmul.f32 %v7760, %v8016
      %v8049 = vmul.f32 %v7761, %v8017
      %v8050 = vmul.f32 %v7762, %v8018
      %v8051 = vmul.f32 %v7763, %v8019
      %v8052 = vmul.f32 %v7764, %v8020
      %v8053 = vmul.f32 %v7765, %v8021
      %v8054 = vmul.f32 %v7766, %v8022
      %v8055 = vmul.f32 %v7767, %v8023
      %v8056 = vmul.f32 %v7768, %v8024
      %v8057 = vmul.f32 %v7769, %v8025
      %v8058 = vmul.f32 %v7770, %v8026
      %v8059 = vmul.f32 %v7771, %v8027
      %v8060 = vmul.f32 %v7772, %v8028
      %v8061 = vmul.f32 %v7773, %v8029
      %v8062 = vmul.f32 %v7774, %v8030
      %v8063 = vmul.f32 %v7775, %v8031
      %v8064 = vmul.f32 %v7776, %v8032
      %v8065 = vmul.f32 %v7777, %v8033
      %v8066 = vmul.f32 %v7778, %v8034
      %v8067 = vmul.f32 %v7779, %v8035
      %v8068 = vsub.f32 0.0, %v7652
      %v8069 = vsub.f32 0.0, %v7653
      %v8070 = vsub.f32 0.0, %v7654
      %v8071 = vsub.f32 0.0, %v7655
      %v8072 = vsub.f32 0.0, %v7656
      %v8073 = vsub.f32 0.0, %v7657
      %v8074 = vsub.f32 0.0, %v7658
      %v8075 = vsub.f32 0.0, %v7659
      %v8076 = vsub.f32 0.0, %v7660
      %v8077 = vsub.f32 0.0, %v7661
      %v8078 = vsub.f32 0.0, %v7662
      %v8079 = vsub.f32 0.0, %v7663
      %v8080 = vsub.f32 0.0, %v7664
      %v8081 = vsub.f32 0.0, %v7665
      %v8082 = vsub.f32 0.0, %v7666
      %v8083 = vsub.f32 0.0, %v7667
      %v8084 = vsub.f32 0.0, %v7668
      %v8085 = vsub.f32 0.0, %v7669
      %v8086 = vsub.f32 0.0, %v7670
      %v8087 = vsub.f32 0.0, %v7671
      %v8088 = vsub.f32 0.0, %v7672
      %v8089 = vsub.f32 0.0, %v7673
      %v8090 = vsub.f32 0.0, %v7674
      %v8091 = vsub.f32 0.0, %v7675
      %v8092 = vsub.f32 0.0, %v7676
      %v8093 = vsub.f32 0.0, %v7677
      %v8094 = vsub.f32 0.0, %v7678
      %v8095 = vsub.f32 0.0, %v7679
      %v8096 = vsub.f32 0.0, %v7680
      %v8097 = vsub.f32 0.0, %v7681
      %v8098 = vsub.f32 0.0, %v7682
      %v8099 = vsub.f32 0.0, %v7683
      %v8100 = vmul.f32 %v8068, %v7652
      %v8101 = vmul.f32 %v8069, %v7653
      %v8102 = vmul.f32 %v8070, %v7654
      %v8103 = vmul.f32 %v8071, %v7655
      %v8104 = vmul.f32 %v8072, %v7656
      %v8105 = vmul.f32 %v8073, %v7657
      %v8106 = vmul.f32 %v8074, %v7658
      %v8107 = vmul.f32 %v8075, %v7659
      %v8108 = vmul.f32 %v8076, %v7660
      %v8109 = vmul.f32 %v8077, %v7661
      %v8110 = vmul.f32 %v8078, %v7662
      %v8111 = vmul.f32 %v8079, %v7663
      %v8112 = vmul.f32 %v8080, %v7664
      %v8113 = vmul.f32 %v8081, %v7665
      %v8114 = vmul.f32 %v8082, %v7666
      %v8115 = vmul.f32 %v8083, %v7667
      %v8116 = vmul.f32 %v8084, %v7668
      %v8117 = vmul.f32 %v8085, %v7669
      %v8118 = vmul.f32 %v8086, %v7670
      %v8119 = vmul.f32 %v8087, %v7671
      %v8120 = vmul.f32 %v8088, %v7672
      %v8121 = vmul.f32 %v8089, %v7673
      %v8122 = vmul.f32 %v8090, %v7674
      %v8123 = vmul.f32 %v8091, %v7675
      %v8124 = vmul.f32 %v8092, %v7676
      %v8125 = vmul.f32 %v8093, %v7677
      %v8126 = vmul.f32 %v8094, %v7678
      %v8127 = vmul.f32 %v8095, %v7679
      %v8128 = vmul.f32 %v8096, %v7680
      %v8129 = vmul.f32 %v8097, %v7681
      %v8130 = vmul.f32 %v8098, %v7682
      %v8131 = vmul.f32 %v8099, %v7683
      %v8132 = vmul.f32 %v8100, 1.442695
      %v8133 = vpow.pop %v8132
      %v8134 = vmul.f32 %v8101, 1.442695
      %v8135 = vpow.pop %v8134
      %v8136 = vmul.f32 %v8102, 1.442695
      %v8137 = vpow.pop %v8136
      %v8138 = vmul.f32 %v8103, 1.442695
      %v8139 = vpow.pop %v8138
      %v8140 = vmul.f32 %v8104, 1.442695
      %v8141 = vpow.pop %v8140
      %v8142 = vmul.f32 %v8105, 1.442695
      %v8143 = vpow.pop %v8142
      %v8144 = vmul.f32 %v8106, 1.442695
      %v8145 = vpow.pop %v8144
      %v8146 = vmul.f32 %v8107, 1.442695
      %v8147 = vpow.pop %v8146
      %v8148 = vmul.f32 %v8108, 1.442695
      %v8149 = vpow.pop %v8148
      %v8150 = vmul.f32 %v8109, 1.442695
      %v8151 = vpow.pop %v8150
      %v8152 = vmul.f32 %v8110, 1.442695
      %v8153 = vpow.pop %v8152
      %v8154 = vmul.f32 %v8111, 1.442695
      %v8155 = vpow.pop %v8154
      %v8156 = vmul.f32 %v8112, 1.442695
      %v8157 = vpow.pop %v8156
      %v8158 = vmul.f32 %v8113, 1.442695
      %v8159 = vpow.pop %v8158
      %v8160 = vmul.f32 %v8114, 1.442695
      %v8161 = vpow.pop %v8160
      %v8162 = vmul.f32 %v8115, 1.442695
      %v8163 = vpow.pop %v8162
      %v8164 = vmul.f32 %v8116, 1.442695
      %v8165 = vpow.pop %v8164
      %v8166 = vmul.f32 %v8117, 1.442695
      %v8167 = vpow.pop %v8166
      %v8168 = vmul.f32 %v8118, 1.442695
      %v8169 = vpow.pop %v8168
      %v8170 = vmul.f32 %v8119, 1.442695
      %v8171 = vpow.pop %v8170
      %v8172 = vmul.f32 %v8120, 1.442695
      %v8173 = vpow.pop %v8172
      %v8174 = vmul.f32 %v8121, 1.442695
      %v8175 = vpow.pop %v8174
      %v8176 = vmul.f32 %v8122, 1.442695
      %v8177 = vpow.pop %v8176
      %v8178 = vmul.f32 %v8123, 1.442695
      %v8179 = vpow.pop %v8178
      %v8180 = vmul.f32 %v8124, 1.442695
      %v8181 = vpow.pop %v8180
      %v8182 = vmul.f32 %v8125, 1.442695
      %v8183 = vpow.pop %v8182
      %v8184 = vmul.f32 %v8126, 1.442695
      %v8185 = vpow.pop %v8184
      %v8186 = vmul.f32 %v8127, 1.442695
      %v8187 = vpow.pop %v8186
      %v8188 = vmul.f32 %v8128, 1.442695
      %v8189 = vpow.pop %v8188
      %v8190 = vmul.f32 %v8129, 1.442695
      %v8191 = vpow.pop %v8190
      %v8192 = vmul.f32 %v8130, 1.442695
      %v8193 = vpow.pop %v8192
      %v8194 = vmul.f32 %v8131, 1.442695
      %v8195 = vpow.pop %v8194
      %v8196 = vmul.f32 %v8036, %v8133
      %v8197 = vmul.f32 %v8037, %v8135
      %v8198 = vmul.f32 %v8038, %v8137
      %v8199 = vmul.f32 %v8039, %v8139
      %v8200 = vmul.f32 %v8040, %v8141
      %v8201 = vmul.f32 %v8041, %v8143
      %v8202 = vmul.f32 %v8042, %v8145
      %v8203 = vmul.f32 %v8043, %v8147
      %v8204 = vmul.f32 %v8044, %v8149
      %v8205 = vmul.f32 %v8045, %v8151
      %v8206 = vmul.f32 %v8046, %v8153
      %v8207 = vmul.f32 %v8047, %v8155
      %v8208 = vmul.f32 %v8048, %v8157
      %v8209 = vmul.f32 %v8049, %v8159
      %v8210 = vmul.f32 %v8050, %v8161
      %v8211 = vmul.f32 %v8051, %v8163
      %v8212 = vmul.f32 %v8052, %v8165
      %v8213 = vmul.f32 %v8053, %v8167
      %v8214 = vmul.f32 %v8054, %v8169
      %v8215 = vmul.f32 %v8055, %v8171
      %v8216 = vmul.f32 %v8056, %v8173
      %v8217 = vmul.f32 %v8057, %v8175
      %v8218 = vmul.f32 %v8058, %v8177
      %v8219 = vmul.f32 %v8059, %v8179
      %v8220 = vmul.f32 %v8060, %v8181
      %v8221 = vmul.f32 %v8061, %v8183
      %v8222 = vmul.f32 %v8062, %v8185
      %v8223 = vmul.f32 %v8063, %v8187
      %v8224 = vmul.f32 %v8064, %v8189
      %v8225 = vmul.f32 %v8065, %v8191
      %v8226 = vmul.f32 %v8066, %v8193
      %v8227 = vmul.f32 %v8067, %v8195
      %v8228 = vsub.f32 1.0, %v8196
      %v8229 = vsub.f32 1.0, %v8197
      %v8230 = vsub.f32 1.0, %v8198
      %v8231 = vsub.f32 1.0, %v8199
      %v8232 = vsub.f32 1.0, %v8200
      %v8233 = vsub.f32 1.0, %v8201
      %v8234 = vsub.f32 1.0, %v8202
      %v8235 = vsub.f32 1.0, %v8203
      %v8236 = vsub.f32 1.0, %v8204
      %v8237 = vsub.f32 1.0, %v8205
      %v8238 = vsub.f32 1.0, %v8206
      %v8239 = vsub.f32 1.0, %v8207
      %v8240 = vsub.f32 1.0, %v8208
      %v8241 = vsub.f32 1.0, %v8209
      %v8242 = vsub.f32 1.0, %v8210
      %v8243 = vsub.f32 1.0, %v8211
      %v8244 = vsub.f32 1.0, %v8212
      %v8245 = vsub.f32 1.0, %v8213
      %v8246 = vsub.f32 1.0, %v8214
      %v8247 = vsub.f32 1.0, %v8215
      %v8248 = vsub.f32 1.0, %v8216
      %v8249 = vsub.f32 1.0, %v8217
      %v8250 = vsub.f32 1.0, %v8218
      %v8251 = vsub.f32 1.0, %v8219
      %v8252 = vsub.f32 1.0, %v8220
      %v8253 = vsub.f32 1.0, %v8221
      %v8254 = vsub.f32 1.0, %v8222
      %v8255 = vsub.f32 1.0, %v8223
      %v8256 = vsub.f32 1.0, %v8224
      %v8257 = vsub.f32 1.0, %v8225
      %v8258 = vsub.f32 1.0, %v8226
      %v8259 = vsub.f32 1.0, %v8227
      %vm8260 = vcmp.ge.f32.partialorder %v7620, 0.0
      %vm8261 = vcmp.ge.f32.partialorder %v7621, 0.0
      %vm8262 = vcmp.ge.f32.partialorder %v7622, 0.0
      %vm8263 = vcmp.ge.f32.partialorder %v7623, 0.0
      %vm8264 = vcmp.ge.f32.partialorder %v7624, 0.0
      %vm8265 = vcmp.ge.f32.partialorder %v7625, 0.0
      %vm8266 = vcmp.ge.f32.partialorder %v7626, 0.0
      %vm8267 = vcmp.ge.f32.partialorder %v7627, 0.0
      %vm8268 = vcmp.ge.f32.partialorder %v7628, 0.0
      %vm8269 = vcmp.ge.f32.partialorder %v7629, 0.0
      %vm8270 = vcmp.ge.f32.partialorder %v7630, 0.0
      %vm8271 = vcmp.ge.f32.partialorder %v7631, 0.0
      %vm8272 = vcmp.ge.f32.partialorder %v7632, 0.0
      %vm8273 = vcmp.ge.f32.partialorder %v7633, 0.0
      %vm8274 = vcmp.ge.f32.partialorder %v7634, 0.0
      %vm8275 = vcmp.ge.f32.partialorder %v7635, 0.0
      %vm8276 = vcmp.ge.f32.partialorder %v7636, 0.0
      %vm8277 = vcmp.ge.f32.partialorder %v7637, 0.0
      %vm8278 = vcmp.ge.f32.partialorder %v7638, 0.0
      %vm8279 = vcmp.ge.f32.partialorder %v7639, 0.0
      %vm8280 = vcmp.ge.f32.partialorder %v7640, 0.0
      %vm8281 = vcmp.ge.f32.partialorder %v7641, 0.0
      %vm8282 = vcmp.ge.f32.partialorder %v7642, 0.0
      %vm8283 = vcmp.ge.f32.partialorder %v7643, 0.0
      %vm8284 = vcmp.ge.f32.partialorder %v7644, 0.0
      %vm8285 = vcmp.ge.f32.partialorder %v7645, 0.0
      %vm8286 = vcmp.ge.f32.partialorder %v7646, 0.0
      %vm8287 = vcmp.ge.f32.partialorder %v7647, 0.0
      %vm8288 = vcmp.ge.f32.partialorder %v7648, 0.0
      %vm8289 = vcmp.ge.f32.partialorder %v7649, 0.0
      %vm8290 = vcmp.ge.f32.partialorder %v7650, 0.0
      %vm8291 = vcmp.ge.f32.partialorder %v7651, 0.0
      %v8292 = vsub.f32 0.0, %v8228
      %v8293 = vsub.f32 0.0, %v8229
      %v8294 = vsub.f32 0.0, %v8230
      %v8295 = vsub.f32 0.0, %v8231
      %v8296 = vsub.f32 0.0, %v8232
      %v8297 = vsub.f32 0.0, %v8233
      %v8298 = vsub.f32 0.0, %v8234
      %v8299 = vsub.f32 0.0, %v8235
      %v8300 = vsub.f32 0.0, %v8236
      %v8301 = vsub.f32 0.0, %v8237
      %v8302 = vsub.f32 0.0, %v8238
      %v8303 = vsub.f32 0.0, %v8239
      %v8304 = vsub.f32 0.0, %v8240
      %v8305 = vsub.f32 0.0, %v8241
      %v8306 = vsub.f32 0.0, %v8242
      %v8307 = vsub.f32 0.0, %v8243
      %v8308 = vsub.f32 0.0, %v8244
      %v8309 = vsub.f32 0.0, %v8245
      %v8310 = vsub.f32 0.0, %v8246
      %v8311 = vsub.f32 0.0, %v8247
      %v8312 = vsub.f32 0.0, %v8248
      %v8313 = vsub.f32 0.0, %v8249
      %v8314 = vsub.f32 0.0, %v8250
      %v8315 = vsub.f32 0.0, %v8251
      %v8316 = vsub.f32 0.0, %v8252
      %v8317 = vsub.f32 0.0, %v8253
      %v8318 = vsub.f32 0.0, %v8254
      %v8319 = vsub.f32 0.0, %v8255
      %v8320 = vsub.f32 0.0, %v8256
      %v8321 = vsub.f32 0.0, %v8257
      %v8322 = vsub.f32 0.0, %v8258
      %v8323 = vsub.f32 0.0, %v8259
      %v8324 = vsel %vm8260, %v8228, %v8292
      %v8325 = vsel %vm8261, %v8229, %v8293
      %v8326 = vsel %vm8262, %v8230, %v8294
      %v8327 = vsel %vm8263, %v8231, %v8295
      %v8328 = vsel %vm8264, %v8232, %v8296
      %v8329 = vsel %vm8265, %v8233, %v8297
      %v8330 = vsel %vm8266, %v8234, %v8298
      %v8331 = vsel %vm8267, %v8235, %v8299
      %v8332 = vsel %vm8268, %v8236, %v8300
      %v8333 = vsel %vm8269, %v8237, %v8301
      %v8334 = vsel %vm8270, %v8238, %v8302
      %v8335 = vsel %vm8271, %v8239, %v8303
      %v8336 = vsel %vm8272, %v8240, %v8304
      %v8337 = vsel %vm8273, %v8241, %v8305
      %v8338 = vsel %vm8274, %v8242, %v8306
      %v8339 = vsel %vm8275, %v8243, %v8307
      %v8340 = vsel %vm8276, %v8244, %v8308
      %v8341 = vsel %vm8277, %v8245, %v8309
      %v8342 = vsel %vm8278, %v8246, %v8310
      %v8343 = vsel %vm8279, %v8247, %v8311
      %v8344 = vsel %vm8280, %v8248, %v8312
      %v8345 = vsel %vm8281, %v8249, %v8313
      %v8346 = vsel %vm8282, %v8250, %v8314
      %v8347 = vsel %vm8283, %v8251, %v8315
      %v8348 = vsel %vm8284, %v8252, %v8316
      %v8349 = vsel %vm8285, %v8253, %v8317
      %v8350 = vsel %vm8286, %v8254, %v8318
      %v8351 = vsel %vm8287, %v8255, %v8319
      %v8352 = vsel %vm8288, %v8256, %v8320
      %v8353 = vsel %vm8289, %v8257, %v8321
      %v8354 = vsel %vm8290, %v8258, %v8322
      %v8355 = vsel %vm8291, %v8259, %v8323
      %v8356 = vmul.f32 %v7588, 0.5
      %v8357 = vmul.f32 %v7589, 0.5
      %v8358 = vmul.f32 %v7590, 0.5
      %v8359 = vmul.f32 %v7591, 0.5
      %v8360 = vmul.f32 %v7592, 0.5
      %v8361 = vmul.f32 %v7593, 0.5
      %v8362 = vmul.f32 %v7594, 0.5
      %v8363 = vmul.f32 %v7595, 0.5
      %v8364 = vmul.f32 %v7596, 0.5
      %v8365 = vmul.f32 %v7597, 0.5
      %v8366 = vmul.f32 %v7598, 0.5
      %v8367 = vmul.f32 %v7599, 0.5
      %v8368 = vmul.f32 %v7600, 0.5
      %v8369 = vmul.f32 %v7601, 0.5
      %v8370 = vmul.f32 %v7602, 0.5
      %v8371 = vmul.f32 %v7603, 0.5
      %v8372 = vmul.f32 %v7604, 0.5
      %v8373 = vmul.f32 %v7605, 0.5
      %v8374 = vmul.f32 %v7606, 0.5
      %v8375 = vmul.f32 %v7607, 0.5
      %v8376 = vmul.f32 %v7608, 0.5
      %v8377 = vmul.f32 %v7609, 0.5
      %v8378 = vmul.f32 %v7610, 0.5
      %v8379 = vmul.f32 %v7611, 0.5
      %v8380 = vmul.f32 %v7612, 0.5
      %v8381 = vmul.f32 %v7613, 0.5
      %v8382 = vmul.f32 %v7614, 0.5
      %v8383 = vmul.f32 %v7615, 0.5
      %v8384 = vmul.f32 %v7616, 0.5
      %v8385 = vmul.f32 %v7617, 0.5
      %v8386 = vmul.f32 %v7618, 0.5
      %v8387 = vmul.f32 %v7619, 0.5
      %v8388 = vadd.f32 %v8324, 1.0
      %v8389 = vadd.f32 %v8325, 1.0
      %v8390 = vadd.f32 %v8326, 1.0
      %v8391 = vadd.f32 %v8327, 1.0
      %v8392 = vadd.f32 %v8328, 1.0
      %v8393 = vadd.f32 %v8329, 1.0
      %v8394 = vadd.f32 %v8330, 1.0
      %v8395 = vadd.f32 %v8331, 1.0
      %v8396 = vadd.f32 %v8332, 1.0
      %v8397 = vadd.f32 %v8333, 1.0
      %v8398 = vadd.f32 %v8334, 1.0
      %v8399 = vadd.f32 %v8335, 1.0
      %v8400 = vadd.f32 %v8336, 1.0
      %v8401 = vadd.f32 %v8337, 1.0
      %v8402 = vadd.f32 %v8338, 1.0
      %v8403 = vadd.f32 %v8339, 1.0
      %v8404 = vadd.f32 %v8340, 1.0
      %v8405 = vadd.f32 %v8341, 1.0
      %v8406 = vadd.f32 %v8342, 1.0
      %v8407 = vadd.f32 %v8343, 1.0
      %v8408 = vadd.f32 %v8344, 1.0
      %v8409 = vadd.f32 %v8345, 1.0
      %v8410 = vadd.f32 %v8346, 1.0
      %v8411 = vadd.f32 %v8347, 1.0
      %v8412 = vadd.f32 %v8348, 1.0
      %v8413 = vadd.f32 %v8349, 1.0
      %v8414 = vadd.f32 %v8350, 1.0
      %v8415 = vadd.f32 %v8351, 1.0
      %v8416 = vadd.f32 %v8352, 1.0
      %v8417 = vadd.f32 %v8353, 1.0
      %v8418 = vadd.f32 %v8354, 1.0
      %v8419 = vadd.f32 %v8355, 1.0
      %v8420 = vmul.f32 %v8356, %v8388
      %v8421 = vmul.f32 %v8357, %v8389
      %v8422 = vmul.f32 %v8358, %v8390
      %v8423 = vmul.f32 %v8359, %v8391
      %v8424 = vmul.f32 %v8360, %v8392
      %v8425 = vmul.f32 %v8361, %v8393
      %v8426 = vmul.f32 %v8362, %v8394
      %v8427 = vmul.f32 %v8363, %v8395
      %v8428 = vmul.f32 %v8364, %v8396
      %v8429 = vmul.f32 %v8365, %v8397
      %v8430 = vmul.f32 %v8366, %v8398
      %v8431 = vmul.f32 %v8367, %v8399
      %v8432 = vmul.f32 %v8368, %v8400
      %v8433 = vmul.f32 %v8369, %v8401
      %v8434 = vmul.f32 %v8370, %v8402
      %v8435 = vmul.f32 %v8371, %v8403
      %v8436 = vmul.f32 %v8372, %v8404
      %v8437 = vmul.f32 %v8373, %v8405
      %v8438 = vmul.f32 %v8374, %v8406
      %v8439 = vmul.f32 %v8375, %v8407
      %v8440 = vmul.f32 %v8376, %v8408
      %v8441 = vmul.f32 %v8377, %v8409
      %v8442 = vmul.f32 %v8378, %v8410
      %v8443 = vmul.f32 %v8379, %v8411
      %v8444 = vmul.f32 %v8380, %v8412
      %v8445 = vmul.f32 %v8381, %v8413
      %v8446 = vmul.f32 %v8382, %v8414
      %v8447 = vmul.f32 %v8383, %v8415
      %v8448 = vmul.f32 %v8384, %v8416
      %v8449 = vmul.f32 %v8385, %v8417
      %v8450 = vmul.f32 %v8386, %v8418
      %v8451 = vmul.f32 %v8387, %v8419
      %v8452 = vld [vmem:[%s5] sm:$0x3]
      %v8453 = vld [vmem:[%s6] sm:$0x3]
      %8455 = vset.pattern.permute.xlu0 0
      %8456 = vperm.xlu0 %8455, %v8453
      %v8457 = vpop.permute.xlu0 %8456
      %8459 = vmatprep.subr.mxu0 %v8421
      %8460 = vmatpush1.msra.mxu0 %v8420
      %8461 = vmatprep.subr.mxu0 %v8423
      %8462 = vmatpush1.msra.mxu0 %v8422
      %8463 = vmatprep.subr.mxu0 %v8425
      %8464 = vmatpush1.msra.mxu0 %v8424
      %8465 = vmatprep.subr.mxu0 %v8427
      %8466 = vmatpush1.msra.mxu0 %v8426
      %8467 = vmatprep.subr.mxu0 %v8429
      %8468 = vmatpush1.msra.mxu0 %v8428
      %8469 = vmatprep.subr.mxu0 %v8431
      %8470 = vmatpush1.msra.mxu0 %v8430
      %8471 = vmatprep.subr.mxu0 %v8433
      %8472 = vmatpush1.msra.mxu0 %v8432
      %8473 = vmatprep.subr.mxu0 %v8435
      %8474 = vmatpush1.msra.mxu0 %v8434
      %8475 = vmatprep.subr.mxu0 %v8437
      %8476 = vmatpush1.msra.mxu0 %v8436
      %8477 = vmatprep.subr.mxu0 %v8439
      %8478 = vmatpush1.msra.mxu0 %v8438
      %8479 = vmatprep.subr.mxu0 %v8441
      %8480 = vmatpush1.msra.mxu0 %v8440
      %8481 = vmatprep.subr.mxu0 %v8443
      %8482 = vmatpush1.msra.mxu0 %v8442
      %8483 = vmatprep.subr.mxu0 %v8445
      %8484 = vmatpush1.msra.mxu0 %v8444
      %8485 = vmatprep.subr.mxu0 %v8447
      %8486 = vmatpush1.msra.mxu0 %v8446
      %8487 = vmatprep.subr.mxu0 %v8449
      %8488 = vmatpush1.msra.mxu0 %v8448
      %8489 = vmatprep.subr.mxu0 %v8451
      %8490 = vmatpush1.msra.mxu0 %v8450
      %8491 = vmatprep.subr.mxu0 0.0
      %8492 = vmatpush1.msra.mxu0 0.0
      %8493 = vmatprep.subr.mxu0 0.0
      %8494 = vmatpush1.msra.mxu0 0.0
      %8495 = vmatprep.subr.mxu0 0.0
      %8496 = vmatpush1.msra.mxu0 0.0
      %8497 = vmatprep.subr.mxu0 0.0
      %8498 = vmatpush1.msra.mxu0 0.0
      %8499 = vmatprep.subr.mxu0 0.0
      %8500 = vmatpush1.msra.mxu0 0.0
      %8501 = vmatprep.subr.mxu0 0.0
      %8502 = vmatpush1.msra.mxu0 0.0
      %8503 = vmatprep.subr.mxu0 0.0
      %8504 = vmatpush1.msra.mxu0 0.0
      %8505 = vmatprep.subr.mxu0 0.0
      %8506 = vmatpush1.msra.mxu0 0.0
      %8507 = vmatprep.subr.mxu0 0.0
      %8508 = vmatpush1.msra.mxu0 0.0
      %8509 = vmatprep.subr.mxu0 0.0
      %8510 = vmatpush1.msra.mxu0 0.0
      %8511 = vmatprep.subr.mxu0 0.0
      %8512 = vmatpush1.msra.mxu0 0.0
      %8513 = vmatprep.subr.mxu0 0.0
      %8514 = vmatpush1.msra.mxu0 0.0
      %8515 = vmatprep.subr.mxu0 0.0
      %8516 = vmatpush1.msra.mxu0 0.0
      %8517 = vmatprep.subr.mxu0 0.0
      %8518 = vmatpush1.msra.mxu0 0.0
      %8519 = vmatprep.subr.mxu0 0.0
      %8520 = vmatpush1.msra.mxu0 0.0
      %8521 = vmatprep.subr.mxu0 0.0
      %8522 = vmatpush1.msra.mxu0 0.0
      %8523 = vmatprep.mubr.f32.mxu0 0.0
      %8524 = vmatmul.mubr.f32.gmra.mrb[0].mxu0 %v8452
      %v8525 = vpop.f32.mrb[0].mxu0
      %v8526 = vadd.f32 %v8457, %v8525
      %v8527 = vpop.f32.mrb[0].mxu0
      %v8528 = vadd.f32 %v8457, %v8527
      %8529 = vdwg.mxu0
      %v8532 = vcombine.low %v8526, %v8528
      %v8534 = vunpack.c.l.s4 1983009808
      %v8535 = vunpack.c.0.s8 %v8534
      %v8536 = vlaneseq
      %v8537 = vshrl.u32 %v8536, 7
      %v8538 = vsub.s32 %v8535, %v8537
      %v8539 = vrot.slane %v8532, %v8538
      %8541 = vst [vmem:[%s384] sm:$0xf] %v8539
      %p8542 = scmp.lt.s32.totalorder %s22, 1
      %s8543 = scalar_select %p8542, %s22, 1
      %p8544 = scmp.lt.s32.totalorder %s23, 0
      %s8545 = scalar_select %p8544, %s23, 0
      %s8546 = smul.addr %s8545, 2
      %s8547 = smul.addr %s8543, 2
      %s8548 = sadd.s32 %s8546, %s8547
      %s8549 = smul.addr %s8548, 2
      %s8550 = scalar_lea.vmem %s7, %s8549
      // Predicated region
      $region49: #{image_mask_predictor_forward.1} parent=47 // pred_check
        %p8551 = pneg %p218
      $region50: #{image_mask_predictor_forward.1} parent=47 // pred_check_branch
        %8553 = sbr.rel (%p8551) target = $region52
      $region51: #{image_mask_predictor_forward.1} parent=47 // pred_region
        _
      $region52: #{image_mask_predictor_forward.1} parent=47 // pred_fallthru
        _
    $region48: #{image_mask_predictor_forward.1} parent=5 // pred_fallthru
      _
    %p8554 = scmp.le.s32.totalorder 2, %s13
    // Predicated region
    $region53: #{image_mask_predictor_forward.1} parent=5 // pred_check
      %p8555 = pneg %p8554
    $region54: #{image_mask_predictor_forward.1} parent=5 // pred_check_branch
      %8557 = sbr.rel (%p8555) target = $region56
    $region55: #{image_mask_predictor_forward.1} parent=5 // pred_region
      %s8558 = ssub.s32 %s13, 2
      // Predicated region
      $region57: #{image_mask_predictor_forward.1} parent=55 // pred_check
        %p8559 = pneg %p224
      $region58: #{image_mask_predictor_forward.1} parent=55 // pred_check_branch
        %8561 = sbr.rel (%p8559) target = $region60
      $region59: #{image_mask_predictor_forward.1} parent=55 // pred_region
        %p8562 = scmp.lt.s32.totalorder %s24, 1
        %s8563 = scalar_select %p8562, %s24, 1
        %p8564 = scmp.lt.s32.totalorder %s25, 0
        %s8565 = scalar_select %p8564, %s25, 0
        %s8566 = smul.addr %s8565, 2
        %s8567 = smul.addr %s8563, 2
        %s8568 = sadd.s32 %s8566, %s8567
        %s8569 = smul.addr %s8568, 2
        %s8570 = scalar_lea.vmem %s7, %s8569
      $region60: #{image_mask_predictor_forward.1} parent=55 // pred_fallthru
        _
    $region56: #{image_mask_predictor_forward.1} parent=5 // pred_fallthru
      _
  $region6: #{image_mask_predictor_forward.1} parent=0 // loop_footer
    %s17 = sadd.s32 1, %s13
  $region7: #{image_mask_predictor_forward.1} parent=0 // loop_footer_branch
    %12 = sbr.rel target = $region3
  $region8: #{image_mask_predictor_forward.1} parent=0 // loop_exit
    _

</llo_original>
